<compile_context>
chip_gen: v7x
topology: tpu7x:2x2x1
jax: 0.10.0
libtpu: 0.0.40
codegen_flags: <defaults>
</compile_context>

<pallas_src>
import jax
import jax.numpy as jnp
from jax import lax
from jax.experimental import pallas as pl
from jax.experimental.pallas import tpu as pltpu
import numpy as np

# ----------------- problem sizes (small, consistent with the module) -----------------
B = 2
N_FEAT = 16
SCALE_UNET = 16
RED = 4                               # CALayer reduction (so C // RED >= 1 everywhere)
H1 = W1 = 16
H2, W2 = H1 // 2, W1 // 2
H3, W3 = H2 // 2, W2 // 2
C1 = N_FEAT
C2 = N_FEAT + SCALE_UNET
C3 = N_FEAT + 2 * SCALE_UNET
R1, R2, R3 = B * H1 * W1, B * H2 * W2, B * H3 * W3        # 512, 128, 32 pixel columns


# ----------------------------- host-side static tables -------------------------------
def _tap_masks(batch, hh, ww):
    """(16, batch*hh*ww) f32; rows 0..8 hold the per-3x3-tap validity mask
    (zero padding at image borders; also blocks roll wrap-around across images)."""
    r = batch * hh * ww
    m = np.zeros((16, r), np.float32)
    tap = 0
    for dy in (-1, 0, 1):
        for dx in (-1, 0, 1):
            for b in range(batch):
                for h in range(hh):
                    for w in range(ww):
                        if 0 <= h + dy < hh and 0 <= w + dx < ww:
                            m[tap, b * hh * ww + h * ww + w] = 1.0
            tap += 1
    return jnp.asarray(m)


def _seg_bcast(batch, hh, ww):
    """(batch, batch*hh*ww) 0/1 per-image membership matrix (bf16, exact)."""
    npix = hh * ww
    s = np.zeros((batch, batch * npix), np.float32)
    for b in range(batch):
        s[b, b * npix:(b + 1) * npix] = 1.0
    return jnp.asarray(s, dtype=jnp.bfloat16)


def _pool_matrix_T(batch, hh, ww):
    """(R_in, R_out) bf16 matrix implementing the 2x2 average pool (== torch bilinear
    x0.5, align_corners=False) in the channels-first layout: pooled = x @ P."""
    ho, wo = hh // 2, ww // 2
    p = np.zeros((batch * hh * ww, batch * ho * wo), np.float32)
    for b in range(batch):
        for i in range(ho):
            for j in range(wo):
                col = b * ho * wo + i * wo + j
                for di in range(2):
                    for dj in range(2):
                        row = b * hh * ww + (2 * i + di) * ww + (2 * j + dj)
                        p[row, col] = 0.25
    return jnp.asarray(p, dtype=jnp.bfloat16)


# ------------------------------------ kernel ------------------------------------------
def _sigmoid(x):
    # numerically stable sigmoid via tanh (EUP slot); avoids exp overflow for large |x|
    return 0.5 * (jnp.tanh(0.5 * x) + 1.0)


def _conv3x3(x, w, m, stack_ref, cin, width, total):
    """Fused im2col 3x3 'same' conv in the channels-first flattened layout.

    x         : (cin, total) f32 activations, columns ordered (b, h, w) row-major.
    w         : (cout, 9*cin) bf16 repacked weight, column block tap*cin, tap=(dy+1)*3+(dx+1).
    m         : (16, total) f32 per-tap validity masks (rows 0..8), static.
    stack_ref : (9*cin, total) bf16 VMEM scratch holding the im2col stack.
    """
    tap = 0
    for dy in (-1, 0, 1):
        for dx in (-1, 0, 1):
            off = dy * width + dx
            if off == 0:
                xm = x                                           # center tap: mask all ones
            else:
                xm = pltpu.roll(x, shift=(-off) % total, axis=1) * m[tap:tap + 1, :]
            stack_ref[tap * cin:(tap + 1) * cin, :] = xm.astype(jnp.bfloat16)
            tap += 1
    # One MXU matmul with contraction depth 9*cin (144/288/432) instead of 9 K=cin ones.
    return jnp.dot(w, stack_ref[...], preferred_element_type=jnp.float32)


def _cab(x, cw_ref, k0, caA, caB, m, sbb, stack_ref, cin, inv_npix, width, total):
    """One CAB block: x + CA(conv3x3(relu(conv3x3(x))))."""
    bf16 = jnp.bfloat16
    f32 = jnp.float32
    r = _conv3x3(x, cw_ref[k0], m, stack_ref, cin, width, total)
    r = jnp.maximum(r, 0.0)                                              # act = ReLU
    r = _conv3x3(r, cw_ref[k0 + 1], m, stack_ref, cin, width, total)
    # channel attention (per-image squeeze-excite); per-image mean = lane-axis
    # contraction with the 0/1 membership matrix, scaled by 1/npix.
    y = lax.dot_general(r.astype(bf16), sbb, (((1,), (1,)), ((), ())),
                        preferred_element_type=f32) * inv_npix           # (C, B)
    y = jnp.maximum(jnp.dot(caA, y.astype(bf16), preferred_element_type=f32), 0.0)
    y = _sigmoid(jnp.dot(caB, y.astype(bf16), preferred_element_type=f32))
    scale = jnp.dot(y.astype(bf16), sbb, preferred_element_type=f32)     # (C, total)
    return r * scale + x


def _level(x, cw_ref, caA_ref, caB_ref, m_ref, sbb_ref, stack_ref, cin, width, npix, total):
    m = m_ref[...]
    sbb = sbb_ref[...]
    inv_npix = 1.0 / float(npix)
    x = _cab(x, cw_ref, 0, caA_ref[0], caB_ref[0], m, sbb, stack_ref,
             cin, inv_npix, width, total)
    x = _cab(x, cw_ref, 2, caA_ref[1], caB_ref[1], m, sbb, stack_ref,
             cin, inv_npix, width, total)
    return x


def encoder_kernel(x_ref,
                   cw1, caA1, caB1, msk1, sbb1,
                   p12, wd12,
                   cw2, caA2, caB2, msk2, sbb2,
                   p23, wd23,
                   cw3, caA3, caB3, msk3, sbb3,
                   enc1_ref, enc2_ref, enc3_ref,
                   stk1, stk2, stk3):
    bf16 = jnp.bfloat16
    f32 = jnp.float32
    # ---------------- level 1 ----------------
    x1 = _level(x_ref[...], cw1, caA1, caB1, msk1, sbb1, stk1, C1, W1, H1 * W1, R1)
    enc1_ref[...] = x1
    # ------- down 1 -> 2 : 2x2 avg pool (== bilinear x0.5) + 1x1 conv -------
    pooled = jnp.dot(x1.astype(bf16), p12[...], preferred_element_type=f32)    # (C1, R2)
    x2 = jnp.dot(wd12[...], pooled.astype(bf16), preferred_element_type=f32)   # (C2, R2)
    # ---------------- level 2 ----------------
    x2 = _level(x2, cw2, caA2, caB2, msk2, sbb2, stk2, C2, W2, H2 * W2, R2)
    enc2_ref[...] = x2
    # ------- down 2 -> 3 -------
    pooled = jnp.dot(x2.astype(bf16), p23[...], preferred_element_type=f32)    # (C2, R3)
    x3 = jnp.dot(wd23[...], pooled.astype(bf16), preferred_element_type=f32)   # (C3, R3)
    # ---------------- level 3 ----------------
    x3 = _level(x3, cw3, caA3, caB3, msk3, sbb3, stk3, C3, W3, H3 * W3, R3)
    enc3_ref[...] = x3


# --------------------------------- wrapper --------------------------------------------
def _cost_estimate(inputs, out_shape):
    flops = 0
    for r, c in ((R1, C1), (R2, C2), (R3, C3)):
        flops += 4 * 2 * c * (9 * c) * r                        # 4 fused im2col convs
        flops += 2 * (2 * 2 * c * B * r)                        # CA mean + gate broadcast
        flops += 2 * (2 * 2 * c * (c // RED) * B)               # CA 1x1 convs
        flops += 2 * 9 * c * r + 2 * 5 * c * r                  # mask-mul + elementwise
    flops += 2 * C1 * R1 * R2 + 2 * C2 * C1 * R2                # down 1->2
    flops += 2 * C2 * R2 * R3 + 2 * C3 * C2 * R3                # down 2->3
    transcendentals = 2 * B * (C1 + C2 + C3)                    # sigmoid gates
    nbytes = sum(int(np.prod(a.shape)) * a.dtype.itemsize for a in inputs)
    nbytes += sum(int(np.prod(s.shape)) * s.dtype.itemsize for s in out_shape)
    return pl.CostEstimate(flops=int(flops), transcendentals=int(transcendentals),
                           bytes_accessed=int(nbytes))


@jax.jit
def encoder_forward(x_nchw, k):
    # NCHW -> channels-first flattened (C, B*H*W); layout plumbing outside the kernel.
    xf = jnp.transpose(x_nchw, (1, 0, 2, 3)).reshape(C1, R1)
    inputs = [xf,
              k['cw1'], k['caA1'], k['caB1'], k['msk1'], k['sbb1'],
              k['p12'], k['wd12'],
              k['cw2'], k['caA2'], k['caB2'], k['msk2'], k['sbb2'],
              k['p23'], k['wd23'],
              k['cw3'], k['caA3'], k['caB3'], k['msk3'], k['sbb3']]
    out_shape = (jax.ShapeDtypeStruct((C1, R1), jnp.float32),
                 jax.ShapeDtypeStruct((C2, R2), jnp.float32),
                 jax.ShapeDtypeStruct((C3, R3), jnp.float32))
    enc1f, enc2f, enc3f = pl.pallas_call(
        encoder_kernel,
        out_shape=out_shape,
        # No grid: a single invocation with all (small) operands resident in VMEM once
        # (no double-buffering of constants); intermediates never round-trip HBM.
        scratch_shapes=[pltpu.VMEM((9 * C1, R1), jnp.bfloat16),     # im2col stacks
                        pltpu.VMEM((9 * C2, R2), jnp.bfloat16),
                        pltpu.VMEM((9 * C3, R3), jnp.bfloat16)],
        cost_estimate=_cost_estimate(inputs, out_shape),
    )(*inputs)
    enc1 = jnp.transpose(enc1f.reshape(C1, B, H1, W1), (1, 0, 2, 3))
    enc2 = jnp.transpose(enc2f.reshape(C2, B, H2, W2), (1, 0, 2, 3))
    enc3 = jnp.transpose(enc3f.reshape(C3, B, H3, W3), (1, 0, 2, 3))
    return enc1, enc2, enc3


# --------------------------- parameters (PyTorch layout) -------------------------------
def init_params(key):
    keys = iter(jax.random.split(key, 26))

    def w3(c):                                   # Conv2d(c, c, 3) weight, OIHW, Kaiming
        std = (2.0 / (9 * c)) ** 0.5
        return (std * jax.random.normal(next(keys), (c, c, 3, 3))).astype(jnp.float32)

    def w1(co, ci):                              # Conv2d(ci, co, 1) weight, OIHW
        std = (2.0 / ci) ** 0.5
        return (std * jax.random.normal(next(keys), (co, ci, 1, 1))).astype(jnp.float32)

    levels = []
    for c in (C1, C2, C3):
        cabs = []
        for _ in range(2):
            cabs.append({'w1': w3(c), 'w2': w3(c),
                         'ca1': w1(c // RED, c), 'ca2': w1(c, c // RED)})
        levels.append(cabs)
    down = [w1(C2, C1), w1(C3, C2)]              # DownSample 1x1 convs (bias=False)
    return {'levels': levels, 'down': down}


def _im2col_weight(w):
    """OIHW (Co, Ci, 3, 3) -> (Co, 9*Ci); column block tap*Ci + i with tap = ky*3 + kx."""
    co, ci = w.shape[0], w.shape[1]
    return jnp.transpose(w, (0, 2, 3, 1)).reshape(co, 9 * ci)


def pack_kernel_inputs(p):
    bf16 = jnp.bfloat16
    k = {}
    dims = ((C1, H1, W1), (C2, H2, W2), (C3, H3, W3))
    for li, (c, hh, ww) in enumerate(dims):
        cabs = p['levels'][li]
        k[f'cw{li + 1}'] = jnp.stack(
            [_im2col_weight(cabs[0]['w1']), _im2col_weight(cabs[0]['w2']),
             _im2col_weight(cabs[1]['w1']), _im2col_weight(cabs[1]['w2'])]).astype(bf16)
        k[f'caA{li + 1}'] = jnp.stack([cabs[0]['ca1'][:, :, 0, 0],
                                       cabs[1]['ca1'][:, :, 0, 0]]).astype(bf16)
        k[f'caB{li + 1}'] = jnp.stack([cabs[0]['ca2'][:, :, 0, 0],
                                       cabs[1]['ca2'][:, :, 0, 0]]).astype(bf16)
        k[f'msk{li + 1}'] = _tap_masks(B, hh, ww)                 # (16, R) f32
        k[f'sbb{li + 1}'] = _seg_bcast(B, hh, ww)                 # (B, R) bf16
    k['p12'] = _pool_matrix_T(B, H1, W1)                          # (R1, R2) bf16
    k['wd12'] = p['down'][0][:, :, 0, 0].astype(bf16)             # (C2, C1)
    k['p23'] = _pool_matrix_T(B, H2, W2)                          # (R2, R3) bf16
    k['wd23'] = p['down'][1][:, :, 0, 0].astype(bf16)             # (C3, C2)
    return k


# --------------------------- pure-JAX reference (NCHW, f32) ----------------------------
_HP = lax.Precision.HIGHEST


def _conv3_ref(x, w):
    return lax.conv_general_dilated(x, w, (1, 1), ((1, 1), (1, 1)),
                                    dimension_numbers=('NCHW', 'OIHW', 'NCHW'),
                                    precision=_HP)


def _conv1_ref(x, w):
    return jnp.einsum('bchw,dc->bdhw', x, w[:, :, 0, 0], precision=_HP)


def _cab_ref(x, q):
    r = _conv3_ref(x, q['w1'])
    r = jnp.maximum(r, 0.0)                       # act = ReLU
    r = _conv3_ref(r, q['w2'])
    y = r.mean(axis=(2, 3), keepdims=True)        # AdaptiveAvgPool2d(1)
    y = jnp.maximum(_conv1_ref(y, q['ca1']), 0.0)
    y = jax.nn.sigmoid(_conv1_ref(y, q['ca2']))
    return r * y + x


def _down_ref(x, w):
    b, c, hh, ww = x.shape
    # torch bilinear, scale_factor=0.5, align_corners=False  ==  exact 2x2 average pool
    xp = x.reshape(b, c, hh // 2, 2, ww // 2, 2).mean(axis=(3, 5))
    return _conv1_ref(xp, w)


@jax.jit
def encoder_reference(x, p):
    enc1 = _cab_ref(_cab_ref(x, p['levels'][0][0]), p['levels'][0][1])
    x2 = _down_ref(enc1, p['down'][0])
    enc2 = _cab_ref(_cab_ref(x2, p['levels'][1][0]), p['levels'][1][1])
    x3 = _down_ref(enc2, p['down'][1])
    enc3 = _cab_ref(_cab_ref(x3, p['levels'][2][0]), p['levels'][2][1])
    return enc1, enc2, enc3


if __name__ == "__main__":
    key = jax.random.PRNGKey(0)
    kx, kp = jax.random.split(key)
    x = jax.random.normal(kx, (B, C1, H1, W1), dtype=jnp.float32)   # NCHW, like the module
    params = init_params(kp)
    packed = pack_kernel_inputs(params)

    outs = encoder_forward(x, packed)
    jax.block_until_ready(outs)

    refs = encoder_reference(x, params)
    # Kernel uses bf16 MXU operands (f32 accumulation) over a ~14-matmul-deep path, so
    # tolerances reflect bf16 rounding; structural errors would be O(1).
    for got, want in zip(outs, refs):
        np.testing.assert_allclose(np.asarray(got), np.asarray(want),
                                   atol=1e-1, rtol=5e-2)
    print("KERNEL_OK")
</pallas_src>

<mosaic_0001>
module attributes {stable_mosaic.version = 11 : i64} {
  func.func @encoder_kernel(%arg0: memref<16x512xf32, #tpu.memory_space<vmem>>, %arg1: memref<4x16x144xbf16, #tpu.memory_space<vmem>>, %arg2: memref<2x4x16xbf16, #tpu.memory_space<vmem>>, %arg3: memref<2x16x4xbf16, #tpu.memory_space<vmem>>, %arg4: memref<16x512xf32, #tpu.memory_space<vmem>>, %arg5: memref<2x512xbf16, #tpu.memory_space<vmem>>, %arg6: memref<512x128xbf16, #tpu.memory_space<vmem>>, %arg7: memref<32x16xbf16, #tpu.memory_space<vmem>>, %arg8: memref<4x32x288xbf16, #tpu.memory_space<vmem>>, %arg9: memref<2x8x32xbf16, #tpu.memory_space<vmem>>, %arg10: memref<2x32x8xbf16, #tpu.memory_space<vmem>>, %arg11: memref<16x128xf32, #tpu.memory_space<vmem>>, %arg12: memref<2x128xbf16, #tpu.memory_space<vmem>>, %arg13: memref<128x32xbf16, #tpu.memory_space<vmem>>, %arg14: memref<48x32xbf16, #tpu.memory_space<vmem>>, %arg15: memref<4x48x432xbf16, #tpu.memory_space<vmem>>, %arg16: memref<2x12x48xbf16, #tpu.memory_space<vmem>>, %arg17: memref<2x48x12xbf16, #tpu.memory_space<vmem>>, %arg18: memref<16x32xf32, #tpu.memory_space<vmem>>, %arg19: memref<2x32xbf16, #tpu.memory_space<vmem>>, %arg20: memref<16x512xf32, #tpu.memory_space<vmem>>, %arg21: memref<32x128xf32, #tpu.memory_space<vmem>>, %arg22: memref<48x32xf32, #tpu.memory_space<vmem>>, %arg23: memref<144x512xbf16, #tpu.memory_space<vmem>>, %arg24: memref<288x128xbf16, #tpu.memory_space<vmem>>, %arg25: memref<432x32xbf16, #tpu.memory_space<vmem>>) attributes {dimension_semantics = [], scalar_prefetch = 0 : i64, scratch_operands = 3 : i64, tpu.core_type = #tpu.core_type<tc>} {
    %c0 = arith.constant 0 : index
    %c0_0 = arith.constant 0 : index
    %0 = vector.load %arg0[%c0, %c0_0] : memref<16x512xf32, #tpu.memory_space<vmem>>, vector<16x512xf32>
    %c0_1 = arith.constant 0 : index
    %c0_2 = arith.constant 0 : index
    %1 = vector.load %arg4[%c0_1, %c0_2] : memref<16x512xf32, #tpu.memory_space<vmem>>, vector<16x512xf32>
    %c0_3 = arith.constant 0 : index
    %c0_4 = arith.constant 0 : index
    %2 = vector.load %arg5[%c0_3, %c0_4] : memref<2x512xbf16, #tpu.memory_space<vmem>>, vector<2x512xbf16>
    %c0_5 = arith.constant 0 : index
    %c0_6 = arith.constant 0 : index
    %c0_7 = arith.constant 0 : index
    %3 = vector.load %arg2[%c0_5, %c0_6, %c0_7] : memref<2x4x16xbf16, #tpu.memory_space<vmem>>, vector<1x4x16xbf16>
    %4 = vector.shape_cast %3 : vector<1x4x16xbf16> to vector<4x16xbf16>
    %c0_8 = arith.constant 0 : index
    %c0_9 = arith.constant 0 : index
    %c0_10 = arith.constant 0 : index
    %5 = vector.load %arg3[%c0_8, %c0_9, %c0_10] : memref<2x16x4xbf16, #tpu.memory_space<vmem>>, vector<1x16x4xbf16>
    %6 = vector.shape_cast %5 : vector<1x16x4xbf16> to vector<16x4xbf16>
    %c0_11 = arith.constant 0 : index
    %c0_12 = arith.constant 0 : index
    %c0_13 = arith.constant 0 : index
    %7 = vector.load %arg1[%c0_11, %c0_12, %c0_13] : memref<4x16x144xbf16, #tpu.memory_space<vmem>>, vector<1x16x144xbf16>
    %8 = vector.shape_cast %7 : vector<1x16x144xbf16> to vector<16x144xbf16>
    %c17_i32 = arith.constant 17 : i32
    %9 = tpu.dynamic_rotate %0 by %c17_i32 dim 1 : vector<16x512xf32>, i32 -> vector<16x512xf32>
    %10 = vector.extract_strided_slice %1 {offsets = [0, 0], sizes = [1, 512], strides = [1, 1]} : vector<16x512xf32> to vector<1x512xf32>
    %11 = vector.broadcast %10 : vector<1x512xf32> to vector<16x512xf32>
    %12 = arith.mulf %9, %11 : vector<16x512xf32>
    %13 = arith.truncf %12 : vector<16x512xf32> to vector<16x512xbf16>
    %c0_14 = arith.constant 0 : index
    %c0_15 = arith.constant 0 : index
    %14 = vector.load %arg23[%c0_14, %c0_15] : memref<144x512xbf16, #tpu.memory_space<vmem>>, vector<16x512xbf16>
    tpu.vector_store %arg23[%c0_14, %c0_15], %13 {strides = array<i32>} : memref<144x512xbf16, #tpu.memory_space<vmem>>, vector<16x512xbf16>,
    %c16_i32 = arith.constant 16 : i32
    %15 = tpu.dynamic_rotate %0 by %c16_i32 dim 1 : vector<16x512xf32>, i32 -> vector<16x512xf32>
    %16 = vector.extract_strided_slice %1 {offsets = [1, 0], sizes = [1, 512], strides = [1, 1]} : vector<16x512xf32> to vector<1x512xf32>
    %17 = vector.broadcast %16 : vector<1x512xf32> to vector<16x512xf32>
    %18 = arith.mulf %15, %17 : vector<16x512xf32>
    %19 = arith.truncf %18 : vector<16x512xf32> to vector<16x512xbf16>
    %c16 = arith.constant 16 : index
    %c0_16 = arith.constant 0 : index
    %20 = vector.load %arg23[%c16, %c0_16] : memref<144x512xbf16, #tpu.memory_space<vmem>>, vector<16x512xbf16>
    tpu.vector_store %arg23[%c16, %c0_16], %19 {strides = array<i32>} : memref<144x512xbf16, #tpu.memory_space<vmem>>, vector<16x512xbf16>,
    %c15_i32 = arith.constant 15 : i32
    %21 = tpu.dynamic_rotate %0 by %c15_i32 dim 1 : vector<16x512xf32>, i32 -> vector<16x512xf32>
    %22 = vector.extract_strided_slice %1 {offsets = [2, 0], sizes = [1, 512], strides = [1, 1]} : vector<16x512xf32> to vector<1x512xf32>
    %23 = vector.broadcast %22 : vector<1x512xf32> to vector<16x512xf32>
    %24 = arith.mulf %21, %23 : vector<16x512xf32>
    %25 = arith.truncf %24 : vector<16x512xf32> to vector<16x512xbf16>
    %c32 = arith.constant 32 : index
    %c0_17 = arith.constant 0 : index
    %26 = vector.load %arg23[%c32, %c0_17] : memref<144x512xbf16, #tpu.memory_space<vmem>>, vector<16x512xbf16>
    tpu.vector_store %arg23[%c32, %c0_17], %25 {strides = array<i32>} : memref<144x512xbf16, #tpu.memory_space<vmem>>, vector<16x512xbf16>,
    %c1_i32 = arith.constant 1 : i32
    %27 = tpu.dynamic_rotate %0 by %c1_i32 dim 1 : vector<16x512xf32>, i32 -> vector<16x512xf32>
    %28 = vector.extract_strided_slice %1 {offsets = [3, 0], sizes = [1, 512], strides = [1, 1]} : vector<16x512xf32> to vector<1x512xf32>
    %29 = vector.broadcast %28 : vector<1x512xf32> to vector<16x512xf32>
    %30 = arith.mulf %27, %29 : vector<16x512xf32>
    %31 = arith.truncf %30 : vector<16x512xf32> to vector<16x512xbf16>
    %c48 = arith.constant 48 : index
    %c0_18 = arith.constant 0 : index
    %32 = vector.load %arg23[%c48, %c0_18] : memref<144x512xbf16, #tpu.memory_space<vmem>>, vector<16x512xbf16>
    tpu.vector_store %arg23[%c48, %c0_18], %31 {strides = array<i32>} : memref<144x512xbf16, #tpu.memory_space<vmem>>, vector<16x512xbf16>,
    %33 = arith.truncf %0 : vector<16x512xf32> to vector<16x512xbf16>
    %c64 = arith.constant 64 : index
    %c0_19 = arith.constant 0 : index
    %34 = vector.load %arg23[%c64, %c0_19] : memref<144x512xbf16, #tpu.memory_space<vmem>>, vector<16x512xbf16>
    tpu.vector_store %arg23[%c64, %c0_19], %33 {strides = array<i32>} : memref<144x512xbf16, #tpu.memory_space<vmem>>, vector<16x512xbf16>,
    %c511_i32 = arith.constant 511 : i32
    %35 = tpu.dynamic_rotate %0 by %c511_i32 dim 1 : vector<16x512xf32>, i32 -> vector<16x512xf32>
    %36 = vector.extract_strided_slice %1 {offsets = [5, 0], sizes = [1, 512], strides = [1, 1]} : vector<16x512xf32> to vector<1x512xf32>
    %37 = vector.broadcast %36 : vector<1x512xf32> to vector<16x512xf32>
    %38 = arith.mulf %35, %37 : vector<16x512xf32>
    %39 = arith.truncf %38 : vector<16x512xf32> to vector<16x512xbf16>
    %c80 = arith.constant 80 : index
    %c0_20 = arith.constant 0 : index
    %40 = vector.load %arg23[%c80, %c0_20] : memref<144x512xbf16, #tpu.memory_space<vmem>>, vector<16x512xbf16>
    tpu.vector_store %arg23[%c80, %c0_20], %39 {strides = array<i32>} : memref<144x512xbf16, #tpu.memory_space<vmem>>, vector<16x512xbf16>,
    %c497_i32 = arith.constant 497 : i32
    %41 = tpu.dynamic_rotate %0 by %c497_i32 dim 1 : vector<16x512xf32>, i32 -> vector<16x512xf32>
    %42 = vector.extract_strided_slice %1 {offsets = [6, 0], sizes = [1, 512], strides = [1, 1]} : vector<16x512xf32> to vector<1x512xf32>
    %43 = vector.broadcast %42 : vector<1x512xf32> to vector<16x512xf32>
    %44 = arith.mulf %41, %43 : vector<16x512xf32>
    %45 = arith.truncf %44 : vector<16x512xf32> to vector<16x512xbf16>
    %c96 = arith.constant 96 : index
    %c0_21 = arith.constant 0 : index
    %46 = vector.load %arg23[%c96, %c0_21] : memref<144x512xbf16, #tpu.memory_space<vmem>>, vector<16x512xbf16>
    tpu.vector_store %arg23[%c96, %c0_21], %45 {strides = array<i32>} : memref<144x512xbf16, #tpu.memory_space<vmem>>, vector<16x512xbf16>,
    %c496_i32 = arith.constant 496 : i32
    %47 = tpu.dynamic_rotate %0 by %c496_i32 dim 1 : vector<16x512xf32>, i32 -> vector<16x512xf32>
    %48 = vector.extract_strided_slice %1 {offsets = [7, 0], sizes = [1, 512], strides = [1, 1]} : vector<16x512xf32> to vector<1x512xf32>
    %49 = vector.broadcast %48 : vector<1x512xf32> to vector<16x512xf32>
    %50 = arith.mulf %47, %49 : vector<16x512xf32>
    %51 = arith.truncf %50 : vector<16x512xf32> to vector<16x512xbf16>
    %c112 = arith.constant 112 : index
    %c0_22 = arith.constant 0 : index
    %52 = vector.load %arg23[%c112, %c0_22] : memref<144x512xbf16, #tpu.memory_space<vmem>>, vector<16x512xbf16>
    tpu.vector_store %arg23[%c112, %c0_22], %51 {strides = array<i32>} : memref<144x512xbf16, #tpu.memory_space<vmem>>, vector<16x512xbf16>,
    %c495_i32 = arith.constant 495 : i32
    %53 = tpu.dynamic_rotate %0 by %c495_i32 dim 1 : vector<16x512xf32>, i32 -> vector<16x512xf32>
    %54 = vector.extract_strided_slice %1 {offsets = [8, 0], sizes = [1, 512], strides = [1, 1]} : vector<16x512xf32> to vector<1x512xf32>
    %55 = vector.broadcast %54 : vector<1x512xf32> to vector<16x512xf32>
    %56 = arith.mulf %53, %55 : vector<16x512xf32>
    %57 = arith.truncf %56 : vector<16x512xf32> to vector<16x512xbf16>
    %c128 = arith.constant 128 : index
    %c0_23 = arith.constant 0 : index
    %58 = vector.load %arg23[%c128, %c0_23] : memref<144x512xbf16, #tpu.memory_space<vmem>>, vector<16x512xbf16>
    tpu.vector_store %arg23[%c128, %c0_23], %57 {strides = array<i32>} : memref<144x512xbf16, #tpu.memory_space<vmem>>, vector<16x512xbf16>,
    %c0_24 = arith.constant 0 : index
    %c0_25 = arith.constant 0 : index
    %59 = vector.load %arg23[%c0_24, %c0_25] : memref<144x512xbf16, #tpu.memory_space<vmem>>, vector<144x512xbf16>
    %cst = arith.constant dense<0.000000e+00> : vector<16x512xf32>
    %60 = tpu.matmul %8, %59, %cst {dimension_numbers = #tpu.dot_dimension_numbers<[1], [0], [0], [1], [0, 0, 1, 1], [], []>} : vector<16x144xbf16>, vector<144x512xbf16>, vector<16x512xf32> -> vector<16x512xf32>
    %cst_26 = arith.constant 0.000000e+00 : f32
    %61 = vector.broadcast %cst_26 : f32 to vector<16x512xf32>
    %62 = arith.maximumf %60, %61 : vector<16x512xf32>
    %c1 = arith.constant 1 : index
    %c0_27 = arith.constant 0 : index
    %c0_28 = arith.constant 0 : index
    %63 = vector.load %arg1[%c1, %c0_27, %c0_28] : memref<4x16x144xbf16, #tpu.memory_space<vmem>>, vector<1x16x144xbf16>
    %64 = vector.shape_cast %63 : vector<1x16x144xbf16> to vector<16x144xbf16>
    %c17_i32_29 = arith.constant 17 : i32
    %65 = tpu.dynamic_rotate %62 by %c17_i32_29 dim 1 : vector<16x512xf32>, i32 -> vector<16x512xf32>
    %66 = vector.extract_strided_slice %1 {offsets = [0, 0], sizes = [1, 512], strides = [1, 1]} : vector<16x512xf32> to vector<1x512xf32>
    %67 = vector.broadcast %66 : vector<1x512xf32> to vector<16x512xf32>
    %68 = arith.mulf %65, %67 : vector<16x512xf32>
    %69 = arith.truncf %68 : vector<16x512xf32> to vector<16x512xbf16>
    %c0_30 = arith.constant 0 : index
    %c0_31 = arith.constant 0 : index
    %70 = vector.load %arg23[%c0_30, %c0_31] : memref<144x512xbf16, #tpu.memory_space<vmem>>, vector<16x512xbf16>
    tpu.vector_store %arg23[%c0_30, %c0_31], %69 {strides = array<i32>} : memref<144x512xbf16, #tpu.memory_space<vmem>>, vector<16x512xbf16>,
    %c16_i32_32 = arith.constant 16 : i32
    %71 = tpu.dynamic_rotate %62 by %c16_i32_32 dim 1 : vector<16x512xf32>, i32 -> vector<16x512xf32>
    %72 = vector.extract_strided_slice %1 {offsets = [1, 0], sizes = [1, 512], strides = [1, 1]} : vector<16x512xf32> to vector<1x512xf32>
    %73 = vector.broadcast %72 : vector<1x512xf32> to vector<16x512xf32>
    %74 = arith.mulf %71, %73 : vector<16x512xf32>
    %75 = arith.truncf %74 : vector<16x512xf32> to vector<16x512xbf16>
    %c16_33 = arith.constant 16 : index
    %c0_34 = arith.constant 0 : index
    %76 = vector.load %arg23[%c16_33, %c0_34] : memref<144x512xbf16, #tpu.memory_space<vmem>>, vector<16x512xbf16>
    tpu.vector_store %arg23[%c16_33, %c0_34], %75 {strides = array<i32>} : memref<144x512xbf16, #tpu.memory_space<vmem>>, vector<16x512xbf16>,
    %c15_i32_35 = arith.constant 15 : i32
    %77 = tpu.dynamic_rotate %62 by %c15_i32_35 dim 1 : vector<16x512xf32>, i32 -> vector<16x512xf32>
    %78 = vector.extract_strided_slice %1 {offsets = [2, 0], sizes = [1, 512], strides = [1, 1]} : vector<16x512xf32> to vector<1x512xf32>
    %79 = vector.broadcast %78 : vector<1x512xf32> to vector<16x512xf32>
    %80 = arith.mulf %77, %79 : vector<16x512xf32>
    %81 = arith.truncf %80 : vector<16x512xf32> to vector<16x512xbf16>
    %c32_36 = arith.constant 32 : index
    %c0_37 = arith.constant 0 : index
    %82 = vector.load %arg23[%c32_36, %c0_37] : memref<144x512xbf16, #tpu.memory_space<vmem>>, vector<16x512xbf16>
    tpu.vector_store %arg23[%c32_36, %c0_37], %81 {strides = array<i32>} : memref<144x512xbf16, #tpu.memory_space<vmem>>, vector<16x512xbf16>,
    %c1_i32_38 = arith.constant 1 : i32
    %83 = tpu.dynamic_rotate %62 by %c1_i32_38 dim 1 : vector<16x512xf32>, i32 -> vector<16x512xf32>
    %84 = vector.extract_strided_slice %1 {offsets = [3, 0], sizes = [1, 512], strides = [1, 1]} : vector<16x512xf32> to vector<1x512xf32>
    %85 = vector.broadcast %84 : vector<1x512xf32> to vector<16x512xf32>
    %86 = arith.mulf %83, %85 : vector<16x512xf32>
    %87 = arith.truncf %86 : vector<16x512xf32> to vector<16x512xbf16>
    %c48_39 = arith.constant 48 : index
    %c0_40 = arith.constant 0 : index
    %88 = vector.load %arg23[%c48_39, %c0_40] : memref<144x512xbf16, #tpu.memory_space<vmem>>, vector<16x512xbf16>
    tpu.vector_store %arg23[%c48_39, %c0_40], %87 {strides = array<i32>} : memref<144x512xbf16, #tpu.memory_space<vmem>>, vector<16x512xbf16>,
    %89 = arith.truncf %62 : vector<16x512xf32> to vector<16x512xbf16>
    %c64_41 = arith.constant 64 : index
    %c0_42 = arith.constant 0 : index
    %90 = vector.load %arg23[%c64_41, %c0_42] : memref<144x512xbf16, #tpu.memory_space<vmem>>, vector<16x512xbf16>
    tpu.vector_store %arg23[%c64_41, %c0_42], %89 {strides = array<i32>} : memref<144x512xbf16, #tpu.memory_space<vmem>>, vector<16x512xbf16>,
    %c511_i32_43 = arith.constant 511 : i32
    %91 = tpu.dynamic_rotate %62 by %c511_i32_43 dim 1 : vector<16x512xf32>, i32 -> vector<16x512xf32>
    %92 = vector.extract_strided_slice %1 {offsets = [5, 0], sizes = [1, 512], strides = [1, 1]} : vector<16x512xf32> to vector<1x512xf32>
    %93 = vector.broadcast %92 : vector<1x512xf32> to vector<16x512xf32>
    %94 = arith.mulf %91, %93 : vector<16x512xf32>
    %95 = arith.truncf %94 : vector<16x512xf32> to vector<16x512xbf16>
    %c80_44 = arith.constant 80 : index
    %c0_45 = arith.constant 0 : index
    %96 = vector.load %arg23[%c80_44, %c0_45] : memref<144x512xbf16, #tpu.memory_space<vmem>>, vector<16x512xbf16>
    tpu.vector_store %arg23[%c80_44, %c0_45], %95 {strides = array<i32>} : memref<144x512xbf16, #tpu.memory_space<vmem>>, vector<16x512xbf16>,
    %c497_i32_46 = arith.constant 497 : i32
    %97 = tpu.dynamic_rotate %62 by %c497_i32_46 dim 1 : vector<16x512xf32>, i32 -> vector<16x512xf32>
    %98 = vector.extract_strided_slice %1 {offsets = [6, 0], sizes = [1, 512], strides = [1, 1]} : vector<16x512xf32> to vector<1x512xf32>
    %99 = vector.broadcast %98 : vector<1x512xf32> to vector<16x512xf32>
    %100 = arith.mulf %97, %99 : vector<16x512xf32>
    %101 = arith.truncf %100 : vector<16x512xf32> to vector<16x512xbf16>
    %c96_47 = arith.constant 96 : index
    %c0_48 = arith.constant 0 : index
    %102 = vector.load %arg23[%c96_47, %c0_48] : memref<144x512xbf16, #tpu.memory_space<vmem>>, vector<16x512xbf16>
    tpu.vector_store %arg23[%c96_47, %c0_48], %101 {strides = array<i32>} : memref<144x512xbf16, #tpu.memory_space<vmem>>, vector<16x512xbf16>,
    %c496_i32_49 = arith.constant 496 : i32
    %103 = tpu.dynamic_rotate %62 by %c496_i32_49 dim 1 : vector<16x512xf32>, i32 -> vector<16x512xf32>
    %104 = vector.extract_strided_slice %1 {offsets = [7, 0], sizes = [1, 512], strides = [1, 1]} : vector<16x512xf32> to vector<1x512xf32>
    %105 = vector.broadcast %104 : vector<1x512xf32> to vector<16x512xf32>
    %106 = arith.mulf %103, %105 : vector<16x512xf32>
    %107 = arith.truncf %106 : vector<16x512xf32> to vector<16x512xbf16>
    %c112_50 = arith.constant 112 : index
    %c0_51 = arith.constant 0 : index
    %108 = vector.load %arg23[%c112_50, %c0_51] : memref<144x512xbf16, #tpu.memory_space<vmem>>, vector<16x512xbf16>
    tpu.vector_store %arg23[%c112_50, %c0_51], %107 {strides = array<i32>} : memref<144x512xbf16, #tpu.memory_space<vmem>>, vector<16x512xbf16>,
    %c495_i32_52 = arith.constant 495 : i32
    %109 = tpu.dynamic_rotate %62 by %c495_i32_52 dim 1 : vector<16x512xf32>, i32 -> vector<16x512xf32>
    %110 = vector.extract_strided_slice %1 {offsets = [8, 0], sizes = [1, 512], strides = [1, 1]} : vector<16x512xf32> to vector<1x512xf32>
    %111 = vector.broadcast %110 : vector<1x512xf32> to vector<16x512xf32>
    %112 = arith.mulf %109, %111 : vector<16x512xf32>
    %113 = arith.truncf %112 : vector<16x512xf32> to vector<16x512xbf16>
    %c128_53 = arith.constant 128 : index
    %c0_54 = arith.constant 0 : index
    %114 = vector.load %arg23[%c128_53, %c0_54] : memref<144x512xbf16, #tpu.memory_space<vmem>>, vector<16x512xbf16>
    tpu.vector_store %arg23[%c128_53, %c0_54], %113 {strides = array<i32>} : memref<144x512xbf16, #tpu.memory_space<vmem>>, vector<16x512xbf16>,
    %c0_55 = arith.constant 0 : index
    %c0_56 = arith.constant 0 : index
    %115 = vector.load %arg23[%c0_55, %c0_56] : memref<144x512xbf16, #tpu.memory_space<vmem>>, vector<144x512xbf16>
    %cst_57 = arith.constant dense<0.000000e+00> : vector<16x512xf32>
    %116 = tpu.matmul %64, %115, %cst_57 {dimension_numbers = #tpu.dot_dimension_numbers<[1], [0], [0], [1], [0, 0, 1, 1], [], []>} : vector<16x144xbf16>, vector<144x512xbf16>, vector<16x512xf32> -> vector<16x512xf32>
    %117 = arith.truncf %116 : vector<16x512xf32> to vector<16x512xbf16>
    %cst_58 = arith.constant dense<0.000000e+00> : vector<16x2xf32>
    %118 = tpu.matmul %117, %2, %cst_58 {dimension_numbers = #tpu.dot_dimension_numbers<[1], [1], [0], [0], [0, 0, 1, 0], [], []>} : vector<16x512xbf16>, vector<2x512xbf16>, vector<16x2xf32> -> vector<16x2xf32>
    %cst_59 = arith.constant 3.906250e-03 : f32
    %119 = vector.broadcast %cst_59 : f32 to vector<16x2xf32>
    %120 = arith.mulf %118, %119 : vector<16x2xf32>
    %121 = arith.truncf %120 : vector<16x2xf32> to vector<16x2xbf16>
    %cst_60 = arith.constant dense<0.000000e+00> : vector<4x2xf32>
    %122 = tpu.matmul %4, %121, %cst_60 {dimension_numbers = #tpu.dot_dimension_numbers<[1], [0], [0], [1], [0, 0, 1, 1], [], []>} : vector<4x16xbf16>, vector<16x2xbf16>, vector<4x2xf32> -> vector<4x2xf32>
    %cst_61 = arith.constant 0.000000e+00 : f32
    %123 = vector.broadcast %cst_61 : f32 to vector<4x2xf32>
    %124 = arith.maximumf %122, %123 : vector<4x2xf32>
    %125 = arith.truncf %124 : vector<4x2xf32> to vector<4x2xbf16>
    %cst_62 = arith.constant dense<0.000000e+00> : vector<16x2xf32>
    %126 = tpu.matmul %6, %125, %cst_62 {dimension_numbers = #tpu.dot_dimension_numbers<[1], [0], [0], [1], [0, 0, 1, 1], [], []>} : vector<16x4xbf16>, vector<4x2xbf16>, vector<16x2xf32> -> vector<16x2xf32>
    %cst_63 = arith.constant 5.000000e-01 : f32
    %127 = vector.broadcast %cst_63 : f32 to vector<16x2xf32>
    %128 = arith.mulf %127, %126 : vector<16x2xf32>
    %129 = math.tanh %128 : vector<16x2xf32>
    %cst_64 = arith.constant 1.000000e+00 : f32
    %130 = vector.broadcast %cst_64 : f32 to vector<16x2xf32>
    %131 = arith.addf %129, %130 : vector<16x2xf32>
    %cst_65 = arith.constant 5.000000e-01 : f32
    %132 = vector.broadcast %cst_65 : f32 to vector<16x2xf32>
    %133 = arith.mulf %132, %131 : vector<16x2xf32>
    %134 = arith.truncf %133 : vector<16x2xf32> to vector<16x2xbf16>
    %cst_66 = arith.constant dense<0.000000e+00> : vector<16x512xf32>
    %135 = tpu.matmul %134, %2, %cst_66 {dimension_numbers = #tpu.dot_dimension_numbers<[1], [0], [0], [1], [0, 0, 1, 1], [], []>} : vector<16x2xbf16>, vector<2x512xbf16>, vector<16x512xf32> -> vector<16x512xf32>
    %136 = arith.mulf %116, %135 : vector<16x512xf32>
    %137 = arith.addf %136, %0 : vector<16x512xf32>
    %c1_67 = arith.constant 1 : index
    %c0_68 = arith.constant 0 : index
    %c0_69 = arith.constant 0 : index
    %138 = vector.load %arg2[%c1_67, %c0_68, %c0_69] : memref<2x4x16xbf16, #tpu.memory_space<vmem>>, vector<1x4x16xbf16>
    %139 = vector.shape_cast %138 : vector<1x4x16xbf16> to vector<4x16xbf16>
    %c1_70 = arith.constant 1 : index
    %c0_71 = arith.constant 0 : index
    %c0_72 = arith.constant 0 : index
    %140 = vector.load %arg3[%c1_70, %c0_71, %c0_72] : memref<2x16x4xbf16, #tpu.memory_space<vmem>>, vector<1x16x4xbf16>
    %141 = vector.shape_cast %140 : vector<1x16x4xbf16> to vector<16x4xbf16>
    %c2 = arith.constant 2 : index
    %c0_73 = arith.constant 0 : index
    %c0_74 = arith.constant 0 : index
    %142 = vector.load %arg1[%c2, %c0_73, %c0_74] : memref<4x16x144xbf16, #tpu.memory_space<vmem>>, vector<1x16x144xbf16>
    %143 = vector.shape_cast %142 : vector<1x16x144xbf16> to vector<16x144xbf16>
    %c17_i32_75 = arith.constant 17 : i32
    %144 = tpu.dynamic_rotate %137 by %c17_i32_75 dim 1 : vector<16x512xf32>, i32 -> vector<16x512xf32>
    %145 = vector.extract_strided_slice %1 {offsets = [0, 0], sizes = [1, 512], strides = [1, 1]} : vector<16x512xf32> to vector<1x512xf32>
    %146 = vector.broadcast %145 : vector<1x512xf32> to vector<16x512xf32>
    %147 = arith.mulf %144, %146 : vector<16x512xf32>
    %148 = arith.truncf %147 : vector<16x512xf32> to vector<16x512xbf16>
    %c0_76 = arith.constant 0 : index
    %c0_77 = arith.constant 0 : index
    %149 = vector.load %arg23[%c0_76, %c0_77] : memref<144x512xbf16, #tpu.memory_space<vmem>>, vector<16x512xbf16>
    tpu.vector_store %arg23[%c0_76, %c0_77], %148 {strides = array<i32>} : memref<144x512xbf16, #tpu.memory_space<vmem>>, vector<16x512xbf16>,
    %c16_i32_78 = arith.constant 16 : i32
    %150 = tpu.dynamic_rotate %137 by %c16_i32_78 dim 1 : vector<16x512xf32>, i32 -> vector<16x512xf32>
    %151 = vector.extract_strided_slice %1 {offsets = [1, 0], sizes = [1, 512], strides = [1, 1]} : vector<16x512xf32> to vector<1x512xf32>
    %152 = vector.broadcast %151 : vector<1x512xf32> to vector<16x512xf32>
    %153 = arith.mulf %150, %152 : vector<16x512xf32>
    %154 = arith.truncf %153 : vector<16x512xf32> to vector<16x512xbf16>
    %c16_79 = arith.constant 16 : index
    %c0_80 = arith.constant 0 : index
    %155 = vector.load %arg23[%c16_79, %c0_80] : memref<144x512xbf16, #tpu.memory_space<vmem>>, vector<16x512xbf16>
    tpu.vector_store %arg23[%c16_79, %c0_80], %154 {strides = array<i32>} : memref<144x512xbf16, #tpu.memory_space<vmem>>, vector<16x512xbf16>,
    %c15_i32_81 = arith.constant 15 : i32
    %156 = tpu.dynamic_rotate %137 by %c15_i32_81 dim 1 : vector<16x512xf32>, i32 -> vector<16x512xf32>
    %157 = vector.extract_strided_slice %1 {offsets = [2, 0], sizes = [1, 512], strides = [1, 1]} : vector<16x512xf32> to vector<1x512xf32>
    %158 = vector.broadcast %157 : vector<1x512xf32> to vector<16x512xf32>
    %159 = arith.mulf %156, %158 : vector<16x512xf32>
    %160 = arith.truncf %159 : vector<16x512xf32> to vector<16x512xbf16>
    %c32_82 = arith.constant 32 : index
    %c0_83 = arith.constant 0 : index
    %161 = vector.load %arg23[%c32_82, %c0_83] : memref<144x512xbf16, #tpu.memory_space<vmem>>, vector<16x512xbf16>
    tpu.vector_store %arg23[%c32_82, %c0_83], %160 {strides = array<i32>} : memref<144x512xbf16, #tpu.memory_space<vmem>>, vector<16x512xbf16>,
    %c1_i32_84 = arith.constant 1 : i32
    %162 = tpu.dynamic_rotate %137 by %c1_i32_84 dim 1 : vector<16x512xf32>, i32 -> vector<16x512xf32>
    %163 = vector.extract_strided_slice %1 {offsets = [3, 0], sizes = [1, 512], strides = [1, 1]} : vector<16x512xf32> to vector<1x512xf32>
    %164 = vector.broadcast %163 : vector<1x512xf32> to vector<16x512xf32>
    %165 = arith.mulf %162, %164 : vector<16x512xf32>
    %166 = arith.truncf %165 : vector<16x512xf32> to vector<16x512xbf16>
    %c48_85 = arith.constant 48 : index
    %c0_86 = arith.constant 0 : index
    %167 = vector.load %arg23[%c48_85, %c0_86] : memref<144x512xbf16, #tpu.memory_space<vmem>>, vector<16x512xbf16>
    tpu.vector_store %arg23[%c48_85, %c0_86], %166 {strides = array<i32>} : memref<144x512xbf16, #tpu.memory_space<vmem>>, vector<16x512xbf16>,
    %168 = arith.truncf %137 : vector<16x512xf32> to vector<16x512xbf16>
    %c64_87 = arith.constant 64 : index
    %c0_88 = arith.constant 0 : index
    %169 = vector.load %arg23[%c64_87, %c0_88] : memref<144x512xbf16, #tpu.memory_space<vmem>>, vector<16x512xbf16>
    tpu.vector_store %arg23[%c64_87, %c0_88], %168 {strides = array<i32>} : memref<144x512xbf16, #tpu.memory_space<vmem>>, vector<16x512xbf16>,
    %c511_i32_89 = arith.constant 511 : i32
    %170 = tpu.dynamic_rotate %137 by %c511_i32_89 dim 1 : vector<16x512xf32>, i32 -> vector<16x512xf32>
    %171 = vector.extract_strided_slice %1 {offsets = [5, 0], sizes = [1, 512], strides = [1, 1]} : vector<16x512xf32> to vector<1x512xf32>
    %172 = vector.broadcast %171 : vector<1x512xf32> to vector<16x512xf32>
    %173 = arith.mulf %170, %172 : vector<16x512xf32>
    %174 = arith.truncf %173 : vector<16x512xf32> to vector<16x512xbf16>
    %c80_90 = arith.constant 80 : index
    %c0_91 = arith.constant 0 : index
    %175 = vector.load %arg23[%c80_90, %c0_91] : memref<144x512xbf16, #tpu.memory_space<vmem>>, vector<16x512xbf16>
    tpu.vector_store %arg23[%c80_90, %c0_91], %174 {strides = array<i32>} : memref<144x512xbf16, #tpu.memory_space<vmem>>, vector<16x512xbf16>,
    %c497_i32_92 = arith.constant 497 : i32
    %176 = tpu.dynamic_rotate %137 by %c497_i32_92 dim 1 : vector<16x512xf32>, i32 -> vector<16x512xf32>
    %177 = vector.extract_strided_slice %1 {offsets = [6, 0], sizes = [1, 512], strides = [1, 1]} : vector<16x512xf32> to vector<1x512xf32>
    %178 = vector.broadcast %177 : vector<1x512xf32> to vector<16x512xf32>
    %179 = arith.mulf %176, %178 : vector<16x512xf32>
    %180 = arith.truncf %179 : vector<16x512xf32> to vector<16x512xbf16>
    %c96_93 = arith.constant 96 : index
    %c0_94 = arith.constant 0 : index
    %181 = vector.load %arg23[%c96_93, %c0_94] : memref<144x512xbf16, #tpu.memory_space<vmem>>, vector<16x512xbf16>
    tpu.vector_store %arg23[%c96_93, %c0_94], %180 {strides = array<i32>} : memref<144x512xbf16, #tpu.memory_space<vmem>>, vector<16x512xbf16>,
    %c496_i32_95 = arith.constant 496 : i32
    %182 = tpu.dynamic_rotate %137 by %c496_i32_95 dim 1 : vector<16x512xf32>, i32 -> vector<16x512xf32>
    %183 = vector.extract_strided_slice %1 {offsets = [7, 0], sizes = [1, 512], strides = [1, 1]} : vector<16x512xf32> to vector<1x512xf32>
    %184 = vector.broadcast %183 : vector<1x512xf32> to vector<16x512xf32>
    %185 = arith.mulf %182, %184 : vector<16x512xf32>
    %186 = arith.truncf %185 : vector<16x512xf32> to vector<16x512xbf16>
    %c112_96 = arith.constant 112 : index
    %c0_97 = arith.constant 0 : index
    %187 = vector.load %arg23[%c112_96, %c0_97] : memref<144x512xbf16, #tpu.memory_space<vmem>>, vector<16x512xbf16>
    tpu.vector_store %arg23[%c112_96, %c0_97], %186 {strides = array<i32>} : memref<144x512xbf16, #tpu.memory_space<vmem>>, vector<16x512xbf16>,
    %c495_i32_98 = arith.constant 495 : i32
    %188 = tpu.dynamic_rotate %137 by %c495_i32_98 dim 1 : vector<16x512xf32>, i32 -> vector<16x512xf32>
    %189 = vector.extract_strided_slice %1 {offsets = [8, 0], sizes = [1, 512], strides = [1, 1]} : vector<16x512xf32> to vector<1x512xf32>
    %190 = vector.broadcast %189 : vector<1x512xf32> to vector<16x512xf32>
    %191 = arith.mulf %188, %190 : vector<16x512xf32>
    %192 = arith.truncf %191 : vector<16x512xf32> to vector<16x512xbf16>
    %c128_99 = arith.constant 128 : index
    %c0_100 = arith.constant 0 : index
    %193 = vector.load %arg23[%c128_99, %c0_100] : memref<144x512xbf16, #tpu.memory_space<vmem>>, vector<16x512xbf16>
    tpu.vector_store %arg23[%c128_99, %c0_100], %192 {strides = array<i32>} : memref<144x512xbf16, #tpu.memory_space<vmem>>, vector<16x512xbf16>,
    %c0_101 = arith.constant 0 : index
    %c0_102 = arith.constant 0 : index
    %194 = vector.load %arg23[%c0_101, %c0_102] : memref<144x512xbf16, #tpu.memory_space<vmem>>, vector<144x512xbf16>
    %cst_103 = arith.constant dense<0.000000e+00> : vector<16x512xf32>
    %195 = tpu.matmul %143, %194, %cst_103 {dimension_numbers = #tpu.dot_dimension_numbers<[1], [0], [0], [1], [0, 0, 1, 1], [], []>} : vector<16x144xbf16>, vector<144x512xbf16>, vector<16x512xf32> -> vector<16x512xf32>
    %cst_104 = arith.constant 0.000000e+00 : f32
    %196 = vector.broadcast %cst_104 : f32 to vector<16x512xf32>
    %197 = arith.maximumf %195, %196 : vector<16x512xf32>
    %c3 = arith.constant 3 : index
    %c0_105 = arith.constant 0 : index
    %c0_106 = arith.constant 0 : index
    %198 = vector.load %arg1[%c3, %c0_105, %c0_106] : memref<4x16x144xbf16, #tpu.memory_space<vmem>>, vector<1x16x144xbf16>
    %199 = vector.shape_cast %198 : vector<1x16x144xbf16> to vector<16x144xbf16>
    %c17_i32_107 = arith.constant 17 : i32
    %200 = tpu.dynamic_rotate %197 by %c17_i32_107 dim 1 : vector<16x512xf32>, i32 -> vector<16x512xf32>
    %201 = vector.extract_strided_slice %1 {offsets = [0, 0], sizes = [1, 512], strides = [1, 1]} : vector<16x512xf32> to vector<1x512xf32>
    %202 = vector.broadcast %201 : vector<1x512xf32> to vector<16x512xf32>
    %203 = arith.mulf %200, %202 : vector<16x512xf32>
    %204 = arith.truncf %203 : vector<16x512xf32> to vector<16x512xbf16>
    %c0_108 = arith.constant 0 : index
    %c0_109 = arith.constant 0 : index
    %205 = vector.load %arg23[%c0_108, %c0_109] : memref<144x512xbf16, #tpu.memory_space<vmem>>, vector<16x512xbf16>
    tpu.vector_store %arg23[%c0_108, %c0_109], %204 {strides = array<i32>} : memref<144x512xbf16, #tpu.memory_space<vmem>>, vector<16x512xbf16>,
    %c16_i32_110 = arith.constant 16 : i32
    %206 = tpu.dynamic_rotate %197 by %c16_i32_110 dim 1 : vector<16x512xf32>, i32 -> vector<16x512xf32>
    %207 = vector.extract_strided_slice %1 {offsets = [1, 0], sizes = [1, 512], strides = [1, 1]} : vector<16x512xf32> to vector<1x512xf32>
    %208 = vector.broadcast %207 : vector<1x512xf32> to vector<16x512xf32>
    %209 = arith.mulf %206, %208 : vector<16x512xf32>
    %210 = arith.truncf %209 : vector<16x512xf32> to vector<16x512xbf16>
    %c16_111 = arith.constant 16 : index
    %c0_112 = arith.constant 0 : index
    %211 = vector.load %arg23[%c16_111, %c0_112] : memref<144x512xbf16, #tpu.memory_space<vmem>>, vector<16x512xbf16>
    tpu.vector_store %arg23[%c16_111, %c0_112], %210 {strides = array<i32>} : memref<144x512xbf16, #tpu.memory_space<vmem>>, vector<16x512xbf16>,
    %c15_i32_113 = arith.constant 15 : i32
    %212 = tpu.dynamic_rotate %197 by %c15_i32_113 dim 1 : vector<16x512xf32>, i32 -> vector<16x512xf32>
    %213 = vector.extract_strided_slice %1 {offsets = [2, 0], sizes = [1, 512], strides = [1, 1]} : vector<16x512xf32> to vector<1x512xf32>
    %214 = vector.broadcast %213 : vector<1x512xf32> to vector<16x512xf32>
    %215 = arith.mulf %212, %214 : vector<16x512xf32>
    %216 = arith.truncf %215 : vector<16x512xf32> to vector<16x512xbf16>
    %c32_114 = arith.constant 32 : index
    %c0_115 = arith.constant 0 : index
    %217 = vector.load %arg23[%c32_114, %c0_115] : memref<144x512xbf16, #tpu.memory_space<vmem>>, vector<16x512xbf16>
    tpu.vector_store %arg23[%c32_114, %c0_115], %216 {strides = array<i32>} : memref<144x512xbf16, #tpu.memory_space<vmem>>, vector<16x512xbf16>,
    %c1_i32_116 = arith.constant 1 : i32
    %218 = tpu.dynamic_rotate %197 by %c1_i32_116 dim 1 : vector<16x512xf32>, i32 -> vector<16x512xf32>
    %219 = vector.extract_strided_slice %1 {offsets = [3, 0], sizes = [1, 512], strides = [1, 1]} : vector<16x512xf32> to vector<1x512xf32>
    %220 = vector.broadcast %219 : vector<1x512xf32> to vector<16x512xf32>
    %221 = arith.mulf %218, %220 : vector<16x512xf32>
    %222 = arith.truncf %221 : vector<16x512xf32> to vector<16x512xbf16>
    %c48_117 = arith.constant 48 : index
    %c0_118 = arith.constant 0 : index
    %223 = vector.load %arg23[%c48_117, %c0_118] : memref<144x512xbf16, #tpu.memory_space<vmem>>, vector<16x512xbf16>
    tpu.vector_store %arg23[%c48_117, %c0_118], %222 {strides = array<i32>} : memref<144x512xbf16, #tpu.memory_space<vmem>>, vector<16x512xbf16>,
    %224 = arith.truncf %197 : vector<16x512xf32> to vector<16x512xbf16>
    %c64_119 = arith.constant 64 : index
    %c0_120 = arith.constant 0 : index
    %225 = vector.load %arg23[%c64_119, %c0_120] : memref<144x512xbf16, #tpu.memory_space<vmem>>, vector<16x512xbf16>
    tpu.vector_store %arg23[%c64_119, %c0_120], %224 {strides = array<i32>} : memref<144x512xbf16, #tpu.memory_space<vmem>>, vector<16x512xbf16>,
    %c511_i32_121 = arith.constant 511 : i32
    %226 = tpu.dynamic_rotate %197 by %c511_i32_121 dim 1 : vector<16x512xf32>, i32 -> vector<16x512xf32>
    %227 = vector.extract_strided_slice %1 {offsets = [5, 0], sizes = [1, 512], strides = [1, 1]} : vector<16x512xf32> to vector<1x512xf32>
    %228 = vector.broadcast %227 : vector<1x512xf32> to vector<16x512xf32>
    %229 = arith.mulf %226, %228 : vector<16x512xf32>
    %230 = arith.truncf %229 : vector<16x512xf32> to vector<16x512xbf16>
    %c80_122 = arith.constant 80 : index
    %c0_123 = arith.constant 0 : index
    %231 = vector.load %arg23[%c80_122, %c0_123] : memref<144x512xbf16, #tpu.memory_space<vmem>>, vector<16x512xbf16>
    tpu.vector_store %arg23[%c80_122, %c0_123], %230 {strides = array<i32>} : memref<144x512xbf16, #tpu.memory_space<vmem>>, vector<16x512xbf16>,
    %c497_i32_124 = arith.constant 497 : i32
    %232 = tpu.dynamic_rotate %197 by %c497_i32_124 dim 1 : vector<16x512xf32>, i32 -> vector<16x512xf32>
    %233 = vector.extract_strided_slice %1 {offsets = [6, 0], sizes = [1, 512], strides = [1, 1]} : vector<16x512xf32> to vector<1x512xf32>
    %234 = vector.broadcast %233 : vector<1x512xf32> to vector<16x512xf32>
    %235 = arith.mulf %232, %234 : vector<16x512xf32>
    %236 = arith.truncf %235 : vector<16x512xf32> to vector<16x512xbf16>
    %c96_125 = arith.constant 96 : index
    %c0_126 = arith.constant 0 : index
    %237 = vector.load %arg23[%c96_125, %c0_126] : memref<144x512xbf16, #tpu.memory_space<vmem>>, vector<16x512xbf16>
    tpu.vector_store %arg23[%c96_125, %c0_126], %236 {strides = array<i32>} : memref<144x512xbf16, #tpu.memory_space<vmem>>, vector<16x512xbf16>,
    %c496_i32_127 = arith.constant 496 : i32
    %238 = tpu.dynamic_rotate %197 by %c496_i32_127 dim 1 : vector<16x512xf32>, i32 -> vector<16x512xf32>
    %239 = vector.extract_strided_slice %1 {offsets = [7, 0], sizes = [1, 512], strides = [1, 1]} : vector<16x512xf32> to vector<1x512xf32>
    %240 = vector.broadcast %239 : vector<1x512xf32> to vector<16x512xf32>
    %241 = arith.mulf %238, %240 : vector<16x512xf32>
    %242 = arith.truncf %241 : vector<16x512xf32> to vector<16x512xbf16>
    %c112_128 = arith.constant 112 : index
    %c0_129 = arith.constant 0 : index
    %243 = vector.load %arg23[%c112_128, %c0_129] : memref<144x512xbf16, #tpu.memory_space<vmem>>, vector<16x512xbf16>
    tpu.vector_store %arg23[%c112_128, %c0_129], %242 {strides = array<i32>} : memref<144x512xbf16, #tpu.memory_space<vmem>>, vector<16x512xbf16>,
    %c495_i32_130 = arith.constant 495 : i32
    %244 = tpu.dynamic_rotate %197 by %c495_i32_130 dim 1 : vector<16x512xf32>, i32 -> vector<16x512xf32>
    %245 = vector.extract_strided_slice %1 {offsets = [8, 0], sizes = [1, 512], strides = [1, 1]} : vector<16x512xf32> to vector<1x512xf32>
    %246 = vector.broadcast %245 : vector<1x512xf32> to vector<16x512xf32>
    %247 = arith.mulf %244, %246 : vector<16x512xf32>
    %248 = arith.truncf %247 : vector<16x512xf32> to vector<16x512xbf16>
    %c128_131 = arith.constant 128 : index
    %c0_132 = arith.constant 0 : index
    %249 = vector.load %arg23[%c128_131, %c0_132] : memref<144x512xbf16, #tpu.memory_space<vmem>>, vector<16x512xbf16>
    tpu.vector_store %arg23[%c128_131, %c0_132], %248 {strides = array<i32>} : memref<144x512xbf16, #tpu.memory_space<vmem>>, vector<16x512xbf16>,
    %c0_133 = arith.constant 0 : index
    %c0_134 = arith.constant 0 : index
    %250 = vector.load %arg23[%c0_133, %c0_134] : memref<144x512xbf16, #tpu.memory_space<vmem>>, vector<144x512xbf16>
    %cst_135 = arith.constant dense<0.000000e+00> : vector<16x512xf32>
    %251 = tpu.matmul %199, %250, %cst_135 {dimension_numbers = #tpu.dot_dimension_numbers<[1], [0], [0], [1], [0, 0, 1, 1], [], []>} : vector<16x144xbf16>, vector<144x512xbf16>, vector<16x512xf32> -> vector<16x512xf32>
    %252 = arith.truncf %251 : vector<16x512xf32> to vector<16x512xbf16>
    %cst_136 = arith.constant dense<0.000000e+00> : vector<16x2xf32>
    %253 = tpu.matmul %252, %2, %cst_136 {dimension_numbers = #tpu.dot_dimension_numbers<[1], [1], [0], [0], [0, 0, 1, 0], [], []>} : vector<16x512xbf16>, vector<2x512xbf16>, vector<16x2xf32> -> vector<16x2xf32>
    %cst_137 = arith.constant 3.906250e-03 : f32
    %254 = vector.broadcast %cst_137 : f32 to vector<16x2xf32>
    %255 = arith.mulf %253, %254 : vector<16x2xf32>
    %256 = arith.truncf %255 : vector<16x2xf32> to vector<16x2xbf16>
    %cst_138 = arith.constant dense<0.000000e+00> : vector<4x2xf32>
    %257 = tpu.matmul %139, %256, %cst_138 {dimension_numbers = #tpu.dot_dimension_numbers<[1], [0], [0], [1], [0, 0, 1, 1], [], []>} : vector<4x16xbf16>, vector<16x2xbf16>, vector<4x2xf32> -> vector<4x2xf32>
    %cst_139 = arith.constant 0.000000e+00 : f32
    %258 = vector.broadcast %cst_139 : f32 to vector<4x2xf32>
    %259 = arith.maximumf %257, %258 : vector<4x2xf32>
    %260 = arith.truncf %259 : vector<4x2xf32> to vector<4x2xbf16>
    %cst_140 = arith.constant dense<0.000000e+00> : vector<16x2xf32>
    %261 = tpu.matmul %141, %260, %cst_140 {dimension_numbers = #tpu.dot_dimension_numbers<[1], [0], [0], [1], [0, 0, 1, 1], [], []>} : vector<16x4xbf16>, vector<4x2xbf16>, vector<16x2xf32> -> vector<16x2xf32>
    %cst_141 = arith.constant 5.000000e-01 : f32
    %262 = vector.broadcast %cst_141 : f32 to vector<16x2xf32>
    %263 = arith.mulf %262, %261 : vector<16x2xf32>
    %264 = math.tanh %263 : vector<16x2xf32>
    %cst_142 = arith.constant 1.000000e+00 : f32
    %265 = vector.broadcast %cst_142 : f32 to vector<16x2xf32>
    %266 = arith.addf %264, %265 : vector<16x2xf32>
    %cst_143 = arith.constant 5.000000e-01 : f32
    %267 = vector.broadcast %cst_143 : f32 to vector<16x2xf32>
    %268 = arith.mulf %267, %266 : vector<16x2xf32>
    %269 = arith.truncf %268 : vector<16x2xf32> to vector<16x2xbf16>
    %cst_144 = arith.constant dense<0.000000e+00> : vector<16x512xf32>
    %270 = tpu.matmul %269, %2, %cst_144 {dimension_numbers = #tpu.dot_dimension_numbers<[1], [0], [0], [1], [0, 0, 1, 1], [], []>} : vector<16x2xbf16>, vector<2x512xbf16>, vector<16x512xf32> -> vector<16x512xf32>
    %271 = arith.mulf %251, %270 : vector<16x512xf32>
    %272 = arith.addf %271, %137 : vector<16x512xf32>
    %c0_145 = arith.constant 0 : index
    %c0_146 = arith.constant 0 : index
    %273 = vector.load %arg20[%c0_145, %c0_146] : memref<16x512xf32, #tpu.memory_space<vmem>>, vector<16x512xf32>
    tpu.vector_store %arg20[%c0_145, %c0_146], %272 {strides = array<i32>} : memref<16x512xf32, #tpu.memory_space<vmem>>, vector<16x512xf32>,
    %274 = arith.truncf %272 : vector<16x512xf32> to vector<16x512xbf16>
    %c0_147 = arith.constant 0 : index
    %c0_148 = arith.constant 0 : index
    %275 = vector.load %arg6[%c0_147, %c0_148] : memref<512x128xbf16, #tpu.memory_space<vmem>>, vector<512x128xbf16>
    %cst_149 = arith.constant dense<0.000000e+00> : vector<16x128xf32>
    %276 = tpu.matmul %274, %275, %cst_149 {dimension_numbers = #tpu.dot_dimension_numbers<[1], [0], [0], [1], [0, 0, 1, 1], [], []>} : vector<16x512xbf16>, vector<512x128xbf16>, vector<16x128xf32> -> vector<16x128xf32>
    %c0_150 = arith.constant 0 : index
    %c0_151 = arith.constant 0 : index
    %277 = vector.load %arg7[%c0_150, %c0_151] : memref<32x16xbf16, #tpu.memory_space<vmem>>, vector<32x16xbf16>
    %278 = arith.truncf %276 : vector<16x128xf32> to vector<16x128xbf16>
    %cst_152 = arith.constant dense<0.000000e+00> : vector<32x128xf32>
    %279 = tpu.matmul %277, %278, %cst_152 {dimension_numbers = #tpu.dot_dimension_numbers<[1], [0], [0], [1], [0, 0, 1, 1], [], []>} : vector<32x16xbf16>, vector<16x128xbf16>, vector<32x128xf32> -> vector<32x128xf32>
    %c0_153 = arith.constant 0 : index
    %c0_154 = arith.constant 0 : index
    %280 = vector.load %arg11[%c0_153, %c0_154] : memref<16x128xf32, #tpu.memory_space<vmem>>, vector<16x128xf32>
    %c0_155 = arith.constant 0 : index
    %c0_156 = arith.constant 0 : index
    %281 = vector.load %arg12[%c0_155, %c0_156] : memref<2x128xbf16, #tpu.memory_space<vmem>>, vector<2x128xbf16>
    %c0_157 = arith.constant 0 : index
    %c0_158 = arith.constant 0 : index
    %c0_159 = arith.constant 0 : index
    %282 = vector.load %arg9[%c0_157, %c0_158, %c0_159] : memref<2x8x32xbf16, #tpu.memory_space<vmem>>, vector<1x8x32xbf16>
    %283 = vector.shape_cast %282 : vector<1x8x32xbf16> to vector<8x32xbf16>
    %c0_160 = arith.constant 0 : index
    %c0_161 = arith.constant 0 : index
    %c0_162 = arith.constant 0 : index
    %284 = vector.load %arg10[%c0_160, %c0_161, %c0_162] : memref<2x32x8xbf16, #tpu.memory_space<vmem>>, vector<1x32x8xbf16>
    %285 = vector.shape_cast %284 : vector<1x32x8xbf16> to vector<32x8xbf16>
    %c0_163 = arith.constant 0 : index
    %c0_164 = arith.constant 0 : index
    %c0_165 = arith.constant 0 : index
    %286 = vector.load %arg8[%c0_163, %c0_164, %c0_165] : memref<4x32x288xbf16, #tpu.memory_space<vmem>>, vector<1x32x288xbf16>
    %287 = vector.shape_cast %286 : vector<1x32x288xbf16> to vector<32x288xbf16>
    %c9_i32 = arith.constant 9 : i32
    %288 = tpu.dynamic_rotate %279 by %c9_i32 dim 1 : vector<32x128xf32>, i32 -> vector<32x128xf32>
    %289 = vector.extract_strided_slice %280 {offsets = [0, 0], sizes = [1, 128], strides = [1, 1]} : vector<16x128xf32> to vector<1x128xf32>
    %290 = vector.broadcast %289 : vector<1x128xf32> to vector<32x128xf32>
    %291 = arith.mulf %288, %290 : vector<32x128xf32>
    %292 = arith.truncf %291 : vector<32x128xf32> to vector<32x128xbf16>
    %c0_166 = arith.constant 0 : index
    %c0_167 = arith.constant 0 : index
    %293 = vector.load %arg24[%c0_166, %c0_167] : memref<288x128xbf16, #tpu.memory_space<vmem>>, vector<32x128xbf16>
    tpu.vector_store %arg24[%c0_166, %c0_167], %292 {strides = array<i32>} : memref<288x128xbf16, #tpu.memory_space<vmem>>, vector<32x128xbf16>,
    %c8_i32 = arith.constant 8 : i32
    %294 = tpu.dynamic_rotate %279 by %c8_i32 dim 1 : vector<32x128xf32>, i32 -> vector<32x128xf32>
    %295 = vector.extract_strided_slice %280 {offsets = [1, 0], sizes = [1, 128], strides = [1, 1]} : vector<16x128xf32> to vector<1x128xf32>
    %296 = vector.broadcast %295 : vector<1x128xf32> to vector<32x128xf32>
    %297 = arith.mulf %294, %296 : vector<32x128xf32>
    %298 = arith.truncf %297 : vector<32x128xf32> to vector<32x128xbf16>
    %c32_168 = arith.constant 32 : index
    %c0_169 = arith.constant 0 : index
    %299 = vector.load %arg24[%c32_168, %c0_169] : memref<288x128xbf16, #tpu.memory_space<vmem>>, vector<32x128xbf16>
    tpu.vector_store %arg24[%c32_168, %c0_169], %298 {strides = array<i32>} : memref<288x128xbf16, #tpu.memory_space<vmem>>, vector<32x128xbf16>,
    %c7_i32 = arith.constant 7 : i32
    %300 = tpu.dynamic_rotate %279 by %c7_i32 dim 1 : vector<32x128xf32>, i32 -> vector<32x128xf32>
    %301 = vector.extract_strided_slice %280 {offsets = [2, 0], sizes = [1, 128], strides = [1, 1]} : vector<16x128xf32> to vector<1x128xf32>
    %302 = vector.broadcast %301 : vector<1x128xf32> to vector<32x128xf32>
    %303 = arith.mulf %300, %302 : vector<32x128xf32>
    %304 = arith.truncf %303 : vector<32x128xf32> to vector<32x128xbf16>
    %c64_170 = arith.constant 64 : index
    %c0_171 = arith.constant 0 : index
    %305 = vector.load %arg24[%c64_170, %c0_171] : memref<288x128xbf16, #tpu.memory_space<vmem>>, vector<32x128xbf16>
    tpu.vector_store %arg24[%c64_170, %c0_171], %304 {strides = array<i32>} : memref<288x128xbf16, #tpu.memory_space<vmem>>, vector<32x128xbf16>,
    %c1_i32_172 = arith.constant 1 : i32
    %306 = tpu.dynamic_rotate %279 by %c1_i32_172 dim 1 : vector<32x128xf32>, i32 -> vector<32x128xf32>
    %307 = vector.extract_strided_slice %280 {offsets = [3, 0], sizes = [1, 128], strides = [1, 1]} : vector<16x128xf32> to vector<1x128xf32>
    %308 = vector.broadcast %307 : vector<1x128xf32> to vector<32x128xf32>
    %309 = arith.mulf %306, %308 : vector<32x128xf32>
    %310 = arith.truncf %309 : vector<32x128xf32> to vector<32x128xbf16>
    %c96_173 = arith.constant 96 : index
    %c0_174 = arith.constant 0 : index
    %311 = vector.load %arg24[%c96_173, %c0_174] : memref<288x128xbf16, #tpu.memory_space<vmem>>, vector<32x128xbf16>
    tpu.vector_store %arg24[%c96_173, %c0_174], %310 {strides = array<i32>} : memref<288x128xbf16, #tpu.memory_space<vmem>>, vector<32x128xbf16>,
    %312 = arith.truncf %279 : vector<32x128xf32> to vector<32x128xbf16>
    %c128_175 = arith.constant 128 : index
    %c0_176 = arith.constant 0 : index
    %313 = vector.load %arg24[%c128_175, %c0_176] : memref<288x128xbf16, #tpu.memory_space<vmem>>, vector<32x128xbf16>
    tpu.vector_store %arg24[%c128_175, %c0_176], %312 {strides = array<i32>} : memref<288x128xbf16, #tpu.memory_space<vmem>>, vector<32x128xbf16>,
    %c127_i32 = arith.constant 127 : i32
    %314 = tpu.dynamic_rotate %279 by %c127_i32 dim 1 : vector<32x128xf32>, i32 -> vector<32x128xf32>
    %315 = vector.extract_strided_slice %280 {offsets = [5, 0], sizes = [1, 128], strides = [1, 1]} : vector<16x128xf32> to vector<1x128xf32>
    %316 = vector.broadcast %315 : vector<1x128xf32> to vector<32x128xf32>
    %317 = arith.mulf %314, %316 : vector<32x128xf32>
    %318 = arith.truncf %317 : vector<32x128xf32> to vector<32x128xbf16>
    %c160 = arith.constant 160 : index
    %c0_177 = arith.constant 0 : index
    %319 = vector.load %arg24[%c160, %c0_177] : memref<288x128xbf16, #tpu.memory_space<vmem>>, vector<32x128xbf16>
    tpu.vector_store %arg24[%c160, %c0_177], %318 {strides = array<i32>} : memref<288x128xbf16, #tpu.memory_space<vmem>>, vector<32x128xbf16>,
    %c121_i32 = arith.constant 121 : i32
    %320 = tpu.dynamic_rotate %279 by %c121_i32 dim 1 : vector<32x128xf32>, i32 -> vector<32x128xf32>
    %321 = vector.extract_strided_slice %280 {offsets = [6, 0], sizes = [1, 128], strides = [1, 1]} : vector<16x128xf32> to vector<1x128xf32>
    %322 = vector.broadcast %321 : vector<1x128xf32> to vector<32x128xf32>
    %323 = arith.mulf %320, %322 : vector<32x128xf32>
    %324 = arith.truncf %323 : vector<32x128xf32> to vector<32x128xbf16>
    %c192 = arith.constant 192 : index
    %c0_178 = arith.constant 0 : index
    %325 = vector.load %arg24[%c192, %c0_178] : memref<288x128xbf16, #tpu.memory_space<vmem>>, vector<32x128xbf16>
    tpu.vector_store %arg24[%c192, %c0_178], %324 {strides = array<i32>} : memref<288x128xbf16, #tpu.memory_space<vmem>>, vector<32x128xbf16>,
    %c120_i32 = arith.constant 120 : i32
    %326 = tpu.dynamic_rotate %279 by %c120_i32 dim 1 : vector<32x128xf32>, i32 -> vector<32x128xf32>
    %327 = vector.extract_strided_slice %280 {offsets = [7, 0], sizes = [1, 128], strides = [1, 1]} : vector<16x128xf32> to vector<1x128xf32>
    %328 = vector.broadcast %327 : vector<1x128xf32> to vector<32x128xf32>
    %329 = arith.mulf %326, %328 : vector<32x128xf32>
    %330 = arith.truncf %329 : vector<32x128xf32> to vector<32x128xbf16>
    %c224 = arith.constant 224 : index
    %c0_179 = arith.constant 0 : index
    %331 = vector.load %arg24[%c224, %c0_179] : memref<288x128xbf16, #tpu.memory_space<vmem>>, vector<32x128xbf16>
    tpu.vector_store %arg24[%c224, %c0_179], %330 {strides = array<i32>} : memref<288x128xbf16, #tpu.memory_space<vmem>>, vector<32x128xbf16>,
    %c119_i32 = arith.constant 119 : i32
    %332 = tpu.dynamic_rotate %279 by %c119_i32 dim 1 : vector<32x128xf32>, i32 -> vector<32x128xf32>
    %333 = vector.extract_strided_slice %280 {offsets = [8, 0], sizes = [1, 128], strides = [1, 1]} : vector<16x128xf32> to vector<1x128xf32>
    %334 = vector.broadcast %333 : vector<1x128xf32> to vector<32x128xf32>
    %335 = arith.mulf %332, %334 : vector<32x128xf32>
    %336 = arith.truncf %335 : vector<32x128xf32> to vector<32x128xbf16>
    %c256 = arith.constant 256 : index
    %c0_180 = arith.constant 0 : index
    %337 = vector.load %arg24[%c256, %c0_180] : memref<288x128xbf16, #tpu.memory_space<vmem>>, vector<32x128xbf16>
    tpu.vector_store %arg24[%c256, %c0_180], %336 {strides = array<i32>} : memref<288x128xbf16, #tpu.memory_space<vmem>>, vector<32x128xbf16>,
    %c0_181 = arith.constant 0 : index
    %c0_182 = arith.constant 0 : index
    %338 = vector.load %arg24[%c0_181, %c0_182] : memref<288x128xbf16, #tpu.memory_space<vmem>>, vector<288x128xbf16>
    %cst_183 = arith.constant dense<0.000000e+00> : vector<32x128xf32>
    %339 = tpu.matmul %287, %338, %cst_183 {dimension_numbers = #tpu.dot_dimension_numbers<[1], [0], [0], [1], [0, 0, 1, 1], [], []>} : vector<32x288xbf16>, vector<288x128xbf16>, vector<32x128xf32> -> vector<32x128xf32>
    %cst_184 = arith.constant 0.000000e+00 : f32
    %340 = vector.broadcast %cst_184 : f32 to vector<32x128xf32>
    %341 = arith.maximumf %339, %340 : vector<32x128xf32>
    %c1_185 = arith.constant 1 : index
    %c0_186 = arith.constant 0 : index
    %c0_187 = arith.constant 0 : index
    %342 = vector.load %arg8[%c1_185, %c0_186, %c0_187] : memref<4x32x288xbf16, #tpu.memory_space<vmem>>, vector<1x32x288xbf16>
    %343 = vector.shape_cast %342 : vector<1x32x288xbf16> to vector<32x288xbf16>
    %c9_i32_188 = arith.constant 9 : i32
    %344 = tpu.dynamic_rotate %341 by %c9_i32_188 dim 1 : vector<32x128xf32>, i32 -> vector<32x128xf32>
    %345 = vector.extract_strided_slice %280 {offsets = [0, 0], sizes = [1, 128], strides = [1, 1]} : vector<16x128xf32> to vector<1x128xf32>
    %346 = vector.broadcast %345 : vector<1x128xf32> to vector<32x128xf32>
    %347 = arith.mulf %344, %346 : vector<32x128xf32>
    %348 = arith.truncf %347 : vector<32x128xf32> to vector<32x128xbf16>
    %c0_189 = arith.constant 0 : index
    %c0_190 = arith.constant 0 : index
    %349 = vector.load %arg24[%c0_189, %c0_190] : memref<288x128xbf16, #tpu.memory_space<vmem>>, vector<32x128xbf16>
    tpu.vector_store %arg24[%c0_189, %c0_190], %348 {strides = array<i32>} : memref<288x128xbf16, #tpu.memory_space<vmem>>, vector<32x128xbf16>,
    %c8_i32_191 = arith.constant 8 : i32
    %350 = tpu.dynamic_rotate %341 by %c8_i32_191 dim 1 : vector<32x128xf32>, i32 -> vector<32x128xf32>
    %351 = vector.extract_strided_slice %280 {offsets = [1, 0], sizes = [1, 128], strides = [1, 1]} : vector<16x128xf32> to vector<1x128xf32>
    %352 = vector.broadcast %351 : vector<1x128xf32> to vector<32x128xf32>
    %353 = arith.mulf %350, %352 : vector<32x128xf32>
    %354 = arith.truncf %353 : vector<32x128xf32> to vector<32x128xbf16>
    %c32_192 = arith.constant 32 : index
    %c0_193 = arith.constant 0 : index
    %355 = vector.load %arg24[%c32_192, %c0_193] : memref<288x128xbf16, #tpu.memory_space<vmem>>, vector<32x128xbf16>
    tpu.vector_store %arg24[%c32_192, %c0_193], %354 {strides = array<i32>} : memref<288x128xbf16, #tpu.memory_space<vmem>>, vector<32x128xbf16>,
    %c7_i32_194 = arith.constant 7 : i32
    %356 = tpu.dynamic_rotate %341 by %c7_i32_194 dim 1 : vector<32x128xf32>, i32 -> vector<32x128xf32>
    %357 = vector.extract_strided_slice %280 {offsets = [2, 0], sizes = [1, 128], strides = [1, 1]} : vector<16x128xf32> to vector<1x128xf32>
    %358 = vector.broadcast %357 : vector<1x128xf32> to vector<32x128xf32>
    %359 = arith.mulf %356, %358 : vector<32x128xf32>
    %360 = arith.truncf %359 : vector<32x128xf32> to vector<32x128xbf16>
    %c64_195 = arith.constant 64 : index
    %c0_196 = arith.constant 0 : index
    %361 = vector.load %arg24[%c64_195, %c0_196] : memref<288x128xbf16, #tpu.memory_space<vmem>>, vector<32x128xbf16>
    tpu.vector_store %arg24[%c64_195, %c0_196], %360 {strides = array<i32>} : memref<288x128xbf16, #tpu.memory_space<vmem>>, vector<32x128xbf16>,
    %c1_i32_197 = arith.constant 1 : i32
    %362 = tpu.dynamic_rotate %341 by %c1_i32_197 dim 1 : vector<32x128xf32>, i32 -> vector<32x128xf32>
    %363 = vector.extract_strided_slice %280 {offsets = [3, 0], sizes = [1, 128], strides = [1, 1]} : vector<16x128xf32> to vector<1x128xf32>
    %364 = vector.broadcast %363 : vector<1x128xf32> to vector<32x128xf32>
    %365 = arith.mulf %362, %364 : vector<32x128xf32>
    %366 = arith.truncf %365 : vector<32x128xf32> to vector<32x128xbf16>
    %c96_198 = arith.constant 96 : index
    %c0_199 = arith.constant 0 : index
    %367 = vector.load %arg24[%c96_198, %c0_199] : memref<288x128xbf16, #tpu.memory_space<vmem>>, vector<32x128xbf16>
    tpu.vector_store %arg24[%c96_198, %c0_199], %366 {strides = array<i32>} : memref<288x128xbf16, #tpu.memory_space<vmem>>, vector<32x128xbf16>,
    %368 = arith.truncf %341 : vector<32x128xf32> to vector<32x128xbf16>
    %c128_200 = arith.constant 128 : index
    %c0_201 = arith.constant 0 : index
    %369 = vector.load %arg24[%c128_200, %c0_201] : memref<288x128xbf16, #tpu.memory_space<vmem>>, vector<32x128xbf16>
    tpu.vector_store %arg24[%c128_200, %c0_201], %368 {strides = array<i32>} : memref<288x128xbf16, #tpu.memory_space<vmem>>, vector<32x128xbf16>,
    %c127_i32_202 = arith.constant 127 : i32
    %370 = tpu.dynamic_rotate %341 by %c127_i32_202 dim 1 : vector<32x128xf32>, i32 -> vector<32x128xf32>
    %371 = vector.extract_strided_slice %280 {offsets = [5, 0], sizes = [1, 128], strides = [1, 1]} : vector<16x128xf32> to vector<1x128xf32>
    %372 = vector.broadcast %371 : vector<1x128xf32> to vector<32x128xf32>
    %373 = arith.mulf %370, %372 : vector<32x128xf32>
    %374 = arith.truncf %373 : vector<32x128xf32> to vector<32x128xbf16>
    %c160_203 = arith.constant 160 : index
    %c0_204 = arith.constant 0 : index
    %375 = vector.load %arg24[%c160_203, %c0_204] : memref<288x128xbf16, #tpu.memory_space<vmem>>, vector<32x128xbf16>
    tpu.vector_store %arg24[%c160_203, %c0_204], %374 {strides = array<i32>} : memref<288x128xbf16, #tpu.memory_space<vmem>>, vector<32x128xbf16>,
    %c121_i32_205 = arith.constant 121 : i32
    %376 = tpu.dynamic_rotate %341 by %c121_i32_205 dim 1 : vector<32x128xf32>, i32 -> vector<32x128xf32>
    %377 = vector.extract_strided_slice %280 {offsets = [6, 0], sizes = [1, 128], strides = [1, 1]} : vector<16x128xf32> to vector<1x128xf32>
    %378 = vector.broadcast %377 : vector<1x128xf32> to vector<32x128xf32>
    %379 = arith.mulf %376, %378 : vector<32x128xf32>
    %380 = arith.truncf %379 : vector<32x128xf32> to vector<32x128xbf16>
    %c192_206 = arith.constant 192 : index
    %c0_207 = arith.constant 0 : index
    %381 = vector.load %arg24[%c192_206, %c0_207] : memref<288x128xbf16, #tpu.memory_space<vmem>>, vector<32x128xbf16>
    tpu.vector_store %arg24[%c192_206, %c0_207], %380 {strides = array<i32>} : memref<288x128xbf16, #tpu.memory_space<vmem>>, vector<32x128xbf16>,
    %c120_i32_208 = arith.constant 120 : i32
    %382 = tpu.dynamic_rotate %341 by %c120_i32_208 dim 1 : vector<32x128xf32>, i32 -> vector<32x128xf32>
    %383 = vector.extract_strided_slice %280 {offsets = [7, 0], sizes = [1, 128], strides = [1, 1]} : vector<16x128xf32> to vector<1x128xf32>
    %384 = vector.broadcast %383 : vector<1x128xf32> to vector<32x128xf32>
    %385 = arith.mulf %382, %384 : vector<32x128xf32>
    %386 = arith.truncf %385 : vector<32x128xf32> to vector<32x128xbf16>
    %c224_209 = arith.constant 224 : index
    %c0_210 = arith.constant 0 : index
    %387 = vector.load %arg24[%c224_209, %c0_210] : memref<288x128xbf16, #tpu.memory_space<vmem>>, vector<32x128xbf16>
    tpu.vector_store %arg24[%c224_209, %c0_210], %386 {strides = array<i32>} : memref<288x128xbf16, #tpu.memory_space<vmem>>, vector<32x128xbf16>,
    %c119_i32_211 = arith.constant 119 : i32
    %388 = tpu.dynamic_rotate %341 by %c119_i32_211 dim 1 : vector<32x128xf32>, i32 -> vector<32x128xf32>
    %389 = vector.extract_strided_slice %280 {offsets = [8, 0], sizes = [1, 128], strides = [1, 1]} : vector<16x128xf32> to vector<1x128xf32>
    %390 = vector.broadcast %389 : vector<1x128xf32> to vector<32x128xf32>
    %391 = arith.mulf %388, %390 : vector<32x128xf32>
    %392 = arith.truncf %391 : vector<32x128xf32> to vector<32x128xbf16>
    %c256_212 = arith.constant 256 : index
    %c0_213 = arith.constant 0 : index
    %393 = vector.load %arg24[%c256_212, %c0_213] : memref<288x128xbf16, #tpu.memory_space<vmem>>, vector<32x128xbf16>
    tpu.vector_store %arg24[%c256_212, %c0_213], %392 {strides = array<i32>} : memref<288x128xbf16, #tpu.memory_space<vmem>>, vector<32x128xbf16>,
    %c0_214 = arith.constant 0 : index
    %c0_215 = arith.constant 0 : index
    %394 = vector.load %arg24[%c0_214, %c0_215] : memref<288x128xbf16, #tpu.memory_space<vmem>>, vector<288x128xbf16>
    %cst_216 = arith.constant dense<0.000000e+00> : vector<32x128xf32>
    %395 = tpu.matmul %343, %394, %cst_216 {dimension_numbers = #tpu.dot_dimension_numbers<[1], [0], [0], [1], [0, 0, 1, 1], [], []>} : vector<32x288xbf16>, vector<288x128xbf16>, vector<32x128xf32> -> vector<32x128xf32>
    %396 = arith.truncf %395 : vector<32x128xf32> to vector<32x128xbf16>
    %cst_217 = arith.constant dense<0.000000e+00> : vector<32x2xf32>
    %397 = tpu.matmul %396, %281, %cst_217 {dimension_numbers = #tpu.dot_dimension_numbers<[1], [1], [0], [0], [0, 0, 1, 0], [], []>} : vector<32x128xbf16>, vector<2x128xbf16>, vector<32x2xf32> -> vector<32x2xf32>
    %cst_218 = arith.constant 1.562500e-02 : f32
    %398 = vector.broadcast %cst_218 : f32 to vector<32x2xf32>
    %399 = arith.mulf %397, %398 : vector<32x2xf32>
    %400 = arith.truncf %399 : vector<32x2xf32> to vector<32x2xbf16>
    %cst_219 = arith.constant dense<0.000000e+00> : vector<8x2xf32>
    %401 = tpu.matmul %283, %400, %cst_219 {dimension_numbers = #tpu.dot_dimension_numbers<[1], [0], [0], [1], [0, 0, 1, 1], [], []>} : vector<8x32xbf16>, vector<32x2xbf16>, vector<8x2xf32> -> vector<8x2xf32>
    %cst_220 = arith.constant 0.000000e+00 : f32
    %402 = vector.broadcast %cst_220 : f32 to vector<8x2xf32>
    %403 = arith.maximumf %401, %402 : vector<8x2xf32>
    %404 = arith.truncf %403 : vector<8x2xf32> to vector<8x2xbf16>
    %cst_221 = arith.constant dense<0.000000e+00> : vector<32x2xf32>
    %405 = tpu.matmul %285, %404, %cst_221 {dimension_numbers = #tpu.dot_dimension_numbers<[1], [0], [0], [1], [0, 0, 1, 1], [], []>} : vector<32x8xbf16>, vector<8x2xbf16>, vector<32x2xf32> -> vector<32x2xf32>
    %cst_222 = arith.constant 5.000000e-01 : f32
    %406 = vector.broadcast %cst_222 : f32 to vector<32x2xf32>
    %407 = arith.mulf %406, %405 : vector<32x2xf32>
    %408 = math.tanh %407 : vector<32x2xf32>
    %cst_223 = arith.constant 1.000000e+00 : f32
    %409 = vector.broadcast %cst_223 : f32 to vector<32x2xf32>
    %410 = arith.addf %408, %409 : vector<32x2xf32>
    %cst_224 = arith.constant 5.000000e-01 : f32
    %411 = vector.broadcast %cst_224 : f32 to vector<32x2xf32>
    %412 = arith.mulf %411, %410 : vector<32x2xf32>
    %413 = arith.truncf %412 : vector<32x2xf32> to vector<32x2xbf16>
    %cst_225 = arith.constant dense<0.000000e+00> : vector<32x128xf32>
    %414 = tpu.matmul %413, %281, %cst_225 {dimension_numbers = #tpu.dot_dimension_numbers<[1], [0], [0], [1], [0, 0, 1, 1], [], []>} : vector<32x2xbf16>, vector<2x128xbf16>, vector<32x128xf32> -> vector<32x128xf32>
    %415 = arith.mulf %395, %414 : vector<32x128xf32>
    %416 = arith.addf %415, %279 : vector<32x128xf32>
    %c1_226 = arith.constant 1 : index
    %c0_227 = arith.constant 0 : index
    %c0_228 = arith.constant 0 : index
    %417 = vector.load %arg9[%c1_226, %c0_227, %c0_228] : memref<2x8x32xbf16, #tpu.memory_space<vmem>>, vector<1x8x32xbf16>
    %418 = vector.shape_cast %417 : vector<1x8x32xbf16> to vector<8x32xbf16>
    %c1_229 = arith.constant 1 : index
    %c0_230 = arith.constant 0 : index
    %c0_231 = arith.constant 0 : index
    %419 = vector.load %arg10[%c1_229, %c0_230, %c0_231] : memref<2x32x8xbf16, #tpu.memory_space<vmem>>, vector<1x32x8xbf16>
    %420 = vector.shape_cast %419 : vector<1x32x8xbf16> to vector<32x8xbf16>
    %c2_232 = arith.constant 2 : index
    %c0_233 = arith.constant 0 : index
    %c0_234 = arith.constant 0 : index
    %421 = vector.load %arg8[%c2_232, %c0_233, %c0_234] : memref<4x32x288xbf16, #tpu.memory_space<vmem>>, vector<1x32x288xbf16>
    %422 = vector.shape_cast %421 : vector<1x32x288xbf16> to vector<32x288xbf16>
    %c9_i32_235 = arith.constant 9 : i32
    %423 = tpu.dynamic_rotate %416 by %c9_i32_235 dim 1 : vector<32x128xf32>, i32 -> vector<32x128xf32>
    %424 = vector.extract_strided_slice %280 {offsets = [0, 0], sizes = [1, 128], strides = [1, 1]} : vector<16x128xf32> to vector<1x128xf32>
    %425 = vector.broadcast %424 : vector<1x128xf32> to vector<32x128xf32>
    %426 = arith.mulf %423, %425 : vector<32x128xf32>
    %427 = arith.truncf %426 : vector<32x128xf32> to vector<32x128xbf16>
    %c0_236 = arith.constant 0 : index
    %c0_237 = arith.constant 0 : index
    %428 = vector.load %arg24[%c0_236, %c0_237] : memref<288x128xbf16, #tpu.memory_space<vmem>>, vector<32x128xbf16>
    tpu.vector_store %arg24[%c0_236, %c0_237], %427 {strides = array<i32>} : memref<288x128xbf16, #tpu.memory_space<vmem>>, vector<32x128xbf16>,
    %c8_i32_238 = arith.constant 8 : i32
    %429 = tpu.dynamic_rotate %416 by %c8_i32_238 dim 1 : vector<32x128xf32>, i32 -> vector<32x128xf32>
    %430 = vector.extract_strided_slice %280 {offsets = [1, 0], sizes = [1, 128], strides = [1, 1]} : vector<16x128xf32> to vector<1x128xf32>
    %431 = vector.broadcast %430 : vector<1x128xf32> to vector<32x128xf32>
    %432 = arith.mulf %429, %431 : vector<32x128xf32>
    %433 = arith.truncf %432 : vector<32x128xf32> to vector<32x128xbf16>
    %c32_239 = arith.constant 32 : index
    %c0_240 = arith.constant 0 : index
    %434 = vector.load %arg24[%c32_239, %c0_240] : memref<288x128xbf16, #tpu.memory_space<vmem>>, vector<32x128xbf16>
    tpu.vector_store %arg24[%c32_239, %c0_240], %433 {strides = array<i32>} : memref<288x128xbf16, #tpu.memory_space<vmem>>, vector<32x128xbf16>,
    %c7_i32_241 = arith.constant 7 : i32
    %435 = tpu.dynamic_rotate %416 by %c7_i32_241 dim 1 : vector<32x128xf32>, i32 -> vector<32x128xf32>
    %436 = vector.extract_strided_slice %280 {offsets = [2, 0], sizes = [1, 128], strides = [1, 1]} : vector<16x128xf32> to vector<1x128xf32>
    %437 = vector.broadcast %436 : vector<1x128xf32> to vector<32x128xf32>
    %438 = arith.mulf %435, %437 : vector<32x128xf32>
    %439 = arith.truncf %438 : vector<32x128xf32> to vector<32x128xbf16>
    %c64_242 = arith.constant 64 : index
    %c0_243 = arith.constant 0 : index
    %440 = vector.load %arg24[%c64_242, %c0_243] : memref<288x128xbf16, #tpu.memory_space<vmem>>, vector<32x128xbf16>
    tpu.vector_store %arg24[%c64_242, %c0_243], %439 {strides = array<i32>} : memref<288x128xbf16, #tpu.memory_space<vmem>>, vector<32x128xbf16>,
    %c1_i32_244 = arith.constant 1 : i32
    %441 = tpu.dynamic_rotate %416 by %c1_i32_244 dim 1 : vector<32x128xf32>, i32 -> vector<32x128xf32>
    %442 = vector.extract_strided_slice %280 {offsets = [3, 0], sizes = [1, 128], strides = [1, 1]} : vector<16x128xf32> to vector<1x128xf32>
    %443 = vector.broadcast %442 : vector<1x128xf32> to vector<32x128xf32>
    %444 = arith.mulf %441, %443 : vector<32x128xf32>
    %445 = arith.truncf %444 : vector<32x128xf32> to vector<32x128xbf16>
    %c96_245 = arith.constant 96 : index
    %c0_246 = arith.constant 0 : index
    %446 = vector.load %arg24[%c96_245, %c0_246] : memref<288x128xbf16, #tpu.memory_space<vmem>>, vector<32x128xbf16>
    tpu.vector_store %arg24[%c96_245, %c0_246], %445 {strides = array<i32>} : memref<288x128xbf16, #tpu.memory_space<vmem>>, vector<32x128xbf16>,
    %447 = arith.truncf %416 : vector<32x128xf32> to vector<32x128xbf16>
    %c128_247 = arith.constant 128 : index
    %c0_248 = arith.constant 0 : index
    %448 = vector.load %arg24[%c128_247, %c0_248] : memref<288x128xbf16, #tpu.memory_space<vmem>>, vector<32x128xbf16>
    tpu.vector_store %arg24[%c128_247, %c0_248], %447 {strides = array<i32>} : memref<288x128xbf16, #tpu.memory_space<vmem>>, vector<32x128xbf16>,
    %c127_i32_249 = arith.constant 127 : i32
    %449 = tpu.dynamic_rotate %416 by %c127_i32_249 dim 1 : vector<32x128xf32>, i32 -> vector<32x128xf32>
    %450 = vector.extract_strided_slice %280 {offsets = [5, 0], sizes = [1, 128], strides = [1, 1]} : vector<16x128xf32> to vector<1x128xf32>
    %451 = vector.broadcast %450 : vector<1x128xf32> to vector<32x128xf32>
    %452 = arith.mulf %449, %451 : vector<32x128xf32>
    %453 = arith.truncf %452 : vector<32x128xf32> to vector<32x128xbf16>
    %c160_250 = arith.constant 160 : index
    %c0_251 = arith.constant 0 : index
    %454 = vector.load %arg24[%c160_250, %c0_251] : memref<288x128xbf16, #tpu.memory_space<vmem>>, vector<32x128xbf16>
    tpu.vector_store %arg24[%c160_250, %c0_251], %453 {strides = array<i32>} : memref<288x128xbf16, #tpu.memory_space<vmem>>, vector<32x128xbf16>,
    %c121_i32_252 = arith.constant 121 : i32
    %455 = tpu.dynamic_rotate %416 by %c121_i32_252 dim 1 : vector<32x128xf32>, i32 -> vector<32x128xf32>
    %456 = vector.extract_strided_slice %280 {offsets = [6, 0], sizes = [1, 128], strides = [1, 1]} : vector<16x128xf32> to vector<1x128xf32>
    %457 = vector.broadcast %456 : vector<1x128xf32> to vector<32x128xf32>
    %458 = arith.mulf %455, %457 : vector<32x128xf32>
    %459 = arith.truncf %458 : vector<32x128xf32> to vector<32x128xbf16>
    %c192_253 = arith.constant 192 : index
    %c0_254 = arith.constant 0 : index
    %460 = vector.load %arg24[%c192_253, %c0_254] : memref<288x128xbf16, #tpu.memory_space<vmem>>, vector<32x128xbf16>
    tpu.vector_store %arg24[%c192_253, %c0_254], %459 {strides = array<i32>} : memref<288x128xbf16, #tpu.memory_space<vmem>>, vector<32x128xbf16>,
    %c120_i32_255 = arith.constant 120 : i32
    %461 = tpu.dynamic_rotate %416 by %c120_i32_255 dim 1 : vector<32x128xf32>, i32 -> vector<32x128xf32>
    %462 = vector.extract_strided_slice %280 {offsets = [7, 0], sizes = [1, 128], strides = [1, 1]} : vector<16x128xf32> to vector<1x128xf32>
    %463 = vector.broadcast %462 : vector<1x128xf32> to vector<32x128xf32>
    %464 = arith.mulf %461, %463 : vector<32x128xf32>
    %465 = arith.truncf %464 : vector<32x128xf32> to vector<32x128xbf16>
    %c224_256 = arith.constant 224 : index
    %c0_257 = arith.constant 0 : index
    %466 = vector.load %arg24[%c224_256, %c0_257] : memref<288x128xbf16, #tpu.memory_space<vmem>>, vector<32x128xbf16>
    tpu.vector_store %arg24[%c224_256, %c0_257], %465 {strides = array<i32>} : memref<288x128xbf16, #tpu.memory_space<vmem>>, vector<32x128xbf16>,
    %c119_i32_258 = arith.constant 119 : i32
    %467 = tpu.dynamic_rotate %416 by %c119_i32_258 dim 1 : vector<32x128xf32>, i32 -> vector<32x128xf32>
    %468 = vector.extract_strided_slice %280 {offsets = [8, 0], sizes = [1, 128], strides = [1, 1]} : vector<16x128xf32> to vector<1x128xf32>
    %469 = vector.broadcast %468 : vector<1x128xf32> to vector<32x128xf32>
    %470 = arith.mulf %467, %469 : vector<32x128xf32>
    %471 = arith.truncf %470 : vector<32x128xf32> to vector<32x128xbf16>
    %c256_259 = arith.constant 256 : index
    %c0_260 = arith.constant 0 : index
    %472 = vector.load %arg24[%c256_259, %c0_260] : memref<288x128xbf16, #tpu.memory_space<vmem>>, vector<32x128xbf16>
    tpu.vector_store %arg24[%c256_259, %c0_260], %471 {strides = array<i32>} : memref<288x128xbf16, #tpu.memory_space<vmem>>, vector<32x128xbf16>,
    %c0_261 = arith.constant 0 : index
    %c0_262 = arith.constant 0 : index
    %473 = vector.load %arg24[%c0_261, %c0_262] : memref<288x128xbf16, #tpu.memory_space<vmem>>, vector<288x128xbf16>
    %cst_263 = arith.constant dense<0.000000e+00> : vector<32x128xf32>
    %474 = tpu.matmul %422, %473, %cst_263 {dimension_numbers = #tpu.dot_dimension_numbers<[1], [0], [0], [1], [0, 0, 1, 1], [], []>} : vector<32x288xbf16>, vector<288x128xbf16>, vector<32x128xf32> -> vector<32x128xf32>
    %cst_264 = arith.constant 0.000000e+00 : f32
    %475 = vector.broadcast %cst_264 : f32 to vector<32x128xf32>
    %476 = arith.maximumf %474, %475 : vector<32x128xf32>
    %c3_265 = arith.constant 3 : index
    %c0_266 = arith.constant 0 : index
    %c0_267 = arith.constant 0 : index
    %477 = vector.load %arg8[%c3_265, %c0_266, %c0_267] : memref<4x32x288xbf16, #tpu.memory_space<vmem>>, vector<1x32x288xbf16>
    %478 = vector.shape_cast %477 : vector<1x32x288xbf16> to vector<32x288xbf16>
    %c9_i32_268 = arith.constant 9 : i32
    %479 = tpu.dynamic_rotate %476 by %c9_i32_268 dim 1 : vector<32x128xf32>, i32 -> vector<32x128xf32>
    %480 = vector.extract_strided_slice %280 {offsets = [0, 0], sizes = [1, 128], strides = [1, 1]} : vector<16x128xf32> to vector<1x128xf32>
    %481 = vector.broadcast %480 : vector<1x128xf32> to vector<32x128xf32>
    %482 = arith.mulf %479, %481 : vector<32x128xf32>
    %483 = arith.truncf %482 : vector<32x128xf32> to vector<32x128xbf16>
    %c0_269 = arith.constant 0 : index
    %c0_270 = arith.constant 0 : index
    %484 = vector.load %arg24[%c0_269, %c0_270] : memref<288x128xbf16, #tpu.memory_space<vmem>>, vector<32x128xbf16>
    tpu.vector_store %arg24[%c0_269, %c0_270], %483 {strides = array<i32>} : memref<288x128xbf16, #tpu.memory_space<vmem>>, vector<32x128xbf16>,
    %c8_i32_271 = arith.constant 8 : i32
    %485 = tpu.dynamic_rotate %476 by %c8_i32_271 dim 1 : vector<32x128xf32>, i32 -> vector<32x128xf32>
    %486 = vector.extract_strided_slice %280 {offsets = [1, 0], sizes = [1, 128], strides = [1, 1]} : vector<16x128xf32> to vector<1x128xf32>
    %487 = vector.broadcast %486 : vector<1x128xf32> to vector<32x128xf32>
    %488 = arith.mulf %485, %487 : vector<32x128xf32>
    %489 = arith.truncf %488 : vector<32x128xf32> to vector<32x128xbf16>
    %c32_272 = arith.constant 32 : index
    %c0_273 = arith.constant 0 : index
    %490 = vector.load %arg24[%c32_272, %c0_273] : memref<288x128xbf16, #tpu.memory_space<vmem>>, vector<32x128xbf16>
    tpu.vector_store %arg24[%c32_272, %c0_273], %489 {strides = array<i32>} : memref<288x128xbf16, #tpu.memory_space<vmem>>, vector<32x128xbf16>,
    %c7_i32_274 = arith.constant 7 : i32
    %491 = tpu.dynamic_rotate %476 by %c7_i32_274 dim 1 : vector<32x128xf32>, i32 -> vector<32x128xf32>
    %492 = vector.extract_strided_slice %280 {offsets = [2, 0], sizes = [1, 128], strides = [1, 1]} : vector<16x128xf32> to vector<1x128xf32>
    %493 = vector.broadcast %492 : vector<1x128xf32> to vector<32x128xf32>
    %494 = arith.mulf %491, %493 : vector<32x128xf32>
    %495 = arith.truncf %494 : vector<32x128xf32> to vector<32x128xbf16>
    %c64_275 = arith.constant 64 : index
    %c0_276 = arith.constant 0 : index
    %496 = vector.load %arg24[%c64_275, %c0_276] : memref<288x128xbf16, #tpu.memory_space<vmem>>, vector<32x128xbf16>
    tpu.vector_store %arg24[%c64_275, %c0_276], %495 {strides = array<i32>} : memref<288x128xbf16, #tpu.memory_space<vmem>>, vector<32x128xbf16>,
    %c1_i32_277 = arith.constant 1 : i32
    %497 = tpu.dynamic_rotate %476 by %c1_i32_277 dim 1 : vector<32x128xf32>, i32 -> vector<32x128xf32>
    %498 = vector.extract_strided_slice %280 {offsets = [3, 0], sizes = [1, 128], strides = [1, 1]} : vector<16x128xf32> to vector<1x128xf32>
    %499 = vector.broadcast %498 : vector<1x128xf32> to vector<32x128xf32>
    %500 = arith.mulf %497, %499 : vector<32x128xf32>
    %501 = arith.truncf %500 : vector<32x128xf32> to vector<32x128xbf16>
    %c96_278 = arith.constant 96 : index
    %c0_279 = arith.constant 0 : index
    %502 = vector.load %arg24[%c96_278, %c0_279] : memref<288x128xbf16, #tpu.memory_space<vmem>>, vector<32x128xbf16>
    tpu.vector_store %arg24[%c96_278, %c0_279], %501 {strides = array<i32>} : memref<288x128xbf16, #tpu.memory_space<vmem>>, vector<32x128xbf16>,
    %503 = arith.truncf %476 : vector<32x128xf32> to vector<32x128xbf16>
    %c128_280 = arith.constant 128 : index
    %c0_281 = arith.constant 0 : index
    %504 = vector.load %arg24[%c128_280, %c0_281] : memref<288x128xbf16, #tpu.memory_space<vmem>>, vector<32x128xbf16>
    tpu.vector_store %arg24[%c128_280, %c0_281], %503 {strides = array<i32>} : memref<288x128xbf16, #tpu.memory_space<vmem>>, vector<32x128xbf16>,
    %c127_i32_282 = arith.constant 127 : i32
    %505 = tpu.dynamic_rotate %476 by %c127_i32_282 dim 1 : vector<32x128xf32>, i32 -> vector<32x128xf32>
    %506 = vector.extract_strided_slice %280 {offsets = [5, 0], sizes = [1, 128], strides = [1, 1]} : vector<16x128xf32> to vector<1x128xf32>
    %507 = vector.broadcast %506 : vector<1x128xf32> to vector<32x128xf32>
    %508 = arith.mulf %505, %507 : vector<32x128xf32>
    %509 = arith.truncf %508 : vector<32x128xf32> to vector<32x128xbf16>
    %c160_283 = arith.constant 160 : index
    %c0_284 = arith.constant 0 : index
    %510 = vector.load %arg24[%c160_283, %c0_284] : memref<288x128xbf16, #tpu.memory_space<vmem>>, vector<32x128xbf16>
    tpu.vector_store %arg24[%c160_283, %c0_284], %509 {strides = array<i32>} : memref<288x128xbf16, #tpu.memory_space<vmem>>, vector<32x128xbf16>,
    %c121_i32_285 = arith.constant 121 : i32
    %511 = tpu.dynamic_rotate %476 by %c121_i32_285 dim 1 : vector<32x128xf32>, i32 -> vector<32x128xf32>
    %512 = vector.extract_strided_slice %280 {offsets = [6, 0], sizes = [1, 128], strides = [1, 1]} : vector<16x128xf32> to vector<1x128xf32>
    %513 = vector.broadcast %512 : vector<1x128xf32> to vector<32x128xf32>
    %514 = arith.mulf %511, %513 : vector<32x128xf32>
    %515 = arith.truncf %514 : vector<32x128xf32> to vector<32x128xbf16>
    %c192_286 = arith.constant 192 : index
    %c0_287 = arith.constant 0 : index
    %516 = vector.load %arg24[%c192_286, %c0_287] : memref<288x128xbf16, #tpu.memory_space<vmem>>, vector<32x128xbf16>
    tpu.vector_store %arg24[%c192_286, %c0_287], %515 {strides = array<i32>} : memref<288x128xbf16, #tpu.memory_space<vmem>>, vector<32x128xbf16>,
    %c120_i32_288 = arith.constant 120 : i32
    %517 = tpu.dynamic_rotate %476 by %c120_i32_288 dim 1 : vector<32x128xf32>, i32 -> vector<32x128xf32>
    %518 = vector.extract_strided_slice %280 {offsets = [7, 0], sizes = [1, 128], strides = [1, 1]} : vector<16x128xf32> to vector<1x128xf32>
    %519 = vector.broadcast %518 : vector<1x128xf32> to vector<32x128xf32>
    %520 = arith.mulf %517, %519 : vector<32x128xf32>
    %521 = arith.truncf %520 : vector<32x128xf32> to vector<32x128xbf16>
    %c224_289 = arith.constant 224 : index
    %c0_290 = arith.constant 0 : index
    %522 = vector.load %arg24[%c224_289, %c0_290] : memref<288x128xbf16, #tpu.memory_space<vmem>>, vector<32x128xbf16>
    tpu.vector_store %arg24[%c224_289, %c0_290], %521 {strides = array<i32>} : memref<288x128xbf16, #tpu.memory_space<vmem>>, vector<32x128xbf16>,
    %c119_i32_291 = arith.constant 119 : i32
    %523 = tpu.dynamic_rotate %476 by %c119_i32_291 dim 1 : vector<32x128xf32>, i32 -> vector<32x128xf32>
    %524 = vector.extract_strided_slice %280 {offsets = [8, 0], sizes = [1, 128], strides = [1, 1]} : vector<16x128xf32> to vector<1x128xf32>
    %525 = vector.broadcast %524 : vector<1x128xf32> to vector<32x128xf32>
    %526 = arith.mulf %523, %525 : vector<32x128xf32>
    %527 = arith.truncf %526 : vector<32x128xf32> to vector<32x128xbf16>
    %c256_292 = arith.constant 256 : index
    %c0_293 = arith.constant 0 : index
    %528 = vector.load %arg24[%c256_292, %c0_293] : memref<288x128xbf16, #tpu.memory_space<vmem>>, vector<32x128xbf16>
    tpu.vector_store %arg24[%c256_292, %c0_293], %527 {strides = array<i32>} : memref<288x128xbf16, #tpu.memory_space<vmem>>, vector<32x128xbf16>,
    %c0_294 = arith.constant 0 : index
    %c0_295 = arith.constant 0 : index
    %529 = vector.load %arg24[%c0_294, %c0_295] : memref<288x128xbf16, #tpu.memory_space<vmem>>, vector<288x128xbf16>
    %cst_296 = arith.constant dense<0.000000e+00> : vector<32x128xf32>
    %530 = tpu.matmul %478, %529, %cst_296 {dimension_numbers = #tpu.dot_dimension_numbers<[1], [0], [0], [1], [0, 0, 1, 1], [], []>} : vector<32x288xbf16>, vector<288x128xbf16>, vector<32x128xf32> -> vector<32x128xf32>
    %531 = arith.truncf %530 : vector<32x128xf32> to vector<32x128xbf16>
    %cst_297 = arith.constant dense<0.000000e+00> : vector<32x2xf32>
    %532 = tpu.matmul %531, %281, %cst_297 {dimension_numbers = #tpu.dot_dimension_numbers<[1], [1], [0], [0], [0, 0, 1, 0], [], []>} : vector<32x128xbf16>, vector<2x128xbf16>, vector<32x2xf32> -> vector<32x2xf32>
    %cst_298 = arith.constant 1.562500e-02 : f32
    %533 = vector.broadcast %cst_298 : f32 to vector<32x2xf32>
    %534 = arith.mulf %532, %533 : vector<32x2xf32>
    %535 = arith.truncf %534 : vector<32x2xf32> to vector<32x2xbf16>
    %cst_299 = arith.constant dense<0.000000e+00> : vector<8x2xf32>
    %536 = tpu.matmul %418, %535, %cst_299 {dimension_numbers = #tpu.dot_dimension_numbers<[1], [0], [0], [1], [0, 0, 1, 1], [], []>} : vector<8x32xbf16>, vector<32x2xbf16>, vector<8x2xf32> -> vector<8x2xf32>
    %cst_300 = arith.constant 0.000000e+00 : f32
    %537 = vector.broadcast %cst_300 : f32 to vector<8x2xf32>
    %538 = arith.maximumf %536, %537 : vector<8x2xf32>
    %539 = arith.truncf %538 : vector<8x2xf32> to vector<8x2xbf16>
    %cst_301 = arith.constant dense<0.000000e+00> : vector<32x2xf32>
    %540 = tpu.matmul %420, %539, %cst_301 {dimension_numbers = #tpu.dot_dimension_numbers<[1], [0], [0], [1], [0, 0, 1, 1], [], []>} : vector<32x8xbf16>, vector<8x2xbf16>, vector<32x2xf32> -> vector<32x2xf32>
    %cst_302 = arith.constant 5.000000e-01 : f32
    %541 = vector.broadcast %cst_302 : f32 to vector<32x2xf32>
    %542 = arith.mulf %541, %540 : vector<32x2xf32>
    %543 = math.tanh %542 : vector<32x2xf32>
    %cst_303 = arith.constant 1.000000e+00 : f32
    %544 = vector.broadcast %cst_303 : f32 to vector<32x2xf32>
    %545 = arith.addf %543, %544 : vector<32x2xf32>
    %cst_304 = arith.constant 5.000000e-01 : f32
    %546 = vector.broadcast %cst_304 : f32 to vector<32x2xf32>
    %547 = arith.mulf %546, %545 : vector<32x2xf32>
    %548 = arith.truncf %547 : vector<32x2xf32> to vector<32x2xbf16>
    %cst_305 = arith.constant dense<0.000000e+00> : vector<32x128xf32>
    %549 = tpu.matmul %548, %281, %cst_305 {dimension_numbers = #tpu.dot_dimension_numbers<[1], [0], [0], [1], [0, 0, 1, 1], [], []>} : vector<32x2xbf16>, vector<2x128xbf16>, vector<32x128xf32> -> vector<32x128xf32>
    %550 = arith.mulf %530, %549 : vector<32x128xf32>
    %551 = arith.addf %550, %416 : vector<32x128xf32>
    %c0_306 = arith.constant 0 : index
    %c0_307 = arith.constant 0 : index
    %552 = vector.load %arg21[%c0_306, %c0_307] : memref<32x128xf32, #tpu.memory_space<vmem>>, vector<32x128xf32>
    tpu.vector_store %arg21[%c0_306, %c0_307], %551 {strides = array<i32>} : memref<32x128xf32, #tpu.memory_space<vmem>>, vector<32x128xf32>,
    %553 = arith.truncf %551 : vector<32x128xf32> to vector<32x128xbf16>
    %c0_308 = arith.constant 0 : index
    %c0_309 = arith.constant 0 : index
    %554 = vector.load %arg13[%c0_308, %c0_309] : memref<128x32xbf16, #tpu.memory_space<vmem>>, vector<128x32xbf16>
    %cst_310 = arith.constant dense<0.000000e+00> : vector<32x32xf32>
    %555 = tpu.matmul %553, %554, %cst_310 {dimension_numbers = #tpu.dot_dimension_numbers<[1], [0], [0], [1], [0, 0, 1, 1], [], []>} : vector<32x128xbf16>, vector<128x32xbf16>, vector<32x32xf32> -> vector<32x32xf32>
    %c0_311 = arith.constant 0 : index
    %c0_312 = arith.constant 0 : index
    %556 = vector.load %arg14[%c0_311, %c0_312] : memref<48x32xbf16, #tpu.memory_space<vmem>>, vector<48x32xbf16>
    %557 = arith.truncf %555 : vector<32x32xf32> to vector<32x32xbf16>
    %cst_313 = arith.constant dense<0.000000e+00> : vector<48x32xf32>
    %558 = tpu.matmul %556, %557, %cst_313 {dimension_numbers = #tpu.dot_dimension_numbers<[1], [0], [0], [1], [0, 0, 1, 1], [], []>} : vector<48x32xbf16>, vector<32x32xbf16>, vector<48x32xf32> -> vector<48x32xf32>
    %c0_314 = arith.constant 0 : index
    %c0_315 = arith.constant 0 : index
    %559 = vector.load %arg18[%c0_314, %c0_315] : memref<16x32xf32, #tpu.memory_space<vmem>>, vector<16x32xf32>
    %c0_316 = arith.constant 0 : index
    %c0_317 = arith.constant 0 : index
    %560 = vector.load %arg19[%c0_316, %c0_317] : memref<2x32xbf16, #tpu.memory_space<vmem>>, vector<2x32xbf16>
    %c0_318 = arith.constant 0 : index
    %c0_319 = arith.constant 0 : index
    %c0_320 = arith.constant 0 : index
    %561 = vector.load %arg16[%c0_318, %c0_319, %c0_320] : memref<2x12x48xbf16, #tpu.memory_space<vmem>>, vector<1x12x48xbf16>
    %562 = vector.shape_cast %561 : vector<1x12x48xbf16> to vector<12x48xbf16>
    %c0_321 = arith.constant 0 : index
    %c0_322 = arith.constant 0 : index
    %c0_323 = arith.constant 0 : index
    %563 = vector.load %arg17[%c0_321, %c0_322, %c0_323] : memref<2x48x12xbf16, #tpu.memory_space<vmem>>, vector<1x48x12xbf16>
    %564 = vector.shape_cast %563 : vector<1x48x12xbf16> to vector<48x12xbf16>
    %c0_324 = arith.constant 0 : index
    %c0_325 = arith.constant 0 : index
    %c0_326 = arith.constant 0 : index
    %565 = vector.load %arg15[%c0_324, %c0_325, %c0_326] : memref<4x48x432xbf16, #tpu.memory_space<vmem>>, vector<1x48x432xbf16>
    %566 = vector.shape_cast %565 : vector<1x48x432xbf16> to vector<48x432xbf16>
    %c5_i32 = arith.constant 5 : i32
    %567 = tpu.dynamic_rotate %558 by %c5_i32 dim 1 : vector<48x32xf32>, i32 -> vector<48x32xf32>
    %568 = vector.extract_strided_slice %559 {offsets = [0, 0], sizes = [1, 32], strides = [1, 1]} : vector<16x32xf32> to vector<1x32xf32>
    %569 = vector.broadcast %568 : vector<1x32xf32> to vector<48x32xf32>
    %570 = arith.mulf %567, %569 : vector<48x32xf32>
    %571 = arith.truncf %570 : vector<48x32xf32> to vector<48x32xbf16>
    %c0_327 = arith.constant 0 : index
    %c0_328 = arith.constant 0 : index
    %572 = vector.load %arg25[%c0_327, %c0_328] : memref<432x32xbf16, #tpu.memory_space<vmem>>, vector<48x32xbf16>
    tpu.vector_store %arg25[%c0_327, %c0_328], %571 {strides = array<i32>} : memref<432x32xbf16, #tpu.memory_space<vmem>>, vector<48x32xbf16>,
    %c4_i32 = arith.constant 4 : i32
    %573 = tpu.dynamic_rotate %558 by %c4_i32 dim 1 : vector<48x32xf32>, i32 -> vector<48x32xf32>
    %574 = vector.extract_strided_slice %559 {offsets = [1, 0], sizes = [1, 32], strides = [1, 1]} : vector<16x32xf32> to vector<1x32xf32>
    %575 = vector.broadcast %574 : vector<1x32xf32> to vector<48x32xf32>
    %576 = arith.mulf %573, %575 : vector<48x32xf32>
    %577 = arith.truncf %576 : vector<48x32xf32> to vector<48x32xbf16>
    %c48_329 = arith.constant 48 : index
    %c0_330 = arith.constant 0 : index
    %578 = vector.load %arg25[%c48_329, %c0_330] : memref<432x32xbf16, #tpu.memory_space<vmem>>, vector<48x32xbf16>
    tpu.vector_store %arg25[%c48_329, %c0_330], %577 {strides = array<i32>} : memref<432x32xbf16, #tpu.memory_space<vmem>>, vector<48x32xbf16>,
    %c3_i32 = arith.constant 3 : i32
    %579 = tpu.dynamic_rotate %558 by %c3_i32 dim 1 : vector<48x32xf32>, i32 -> vector<48x32xf32>
    %580 = vector.extract_strided_slice %559 {offsets = [2, 0], sizes = [1, 32], strides = [1, 1]} : vector<16x32xf32> to vector<1x32xf32>
    %581 = vector.broadcast %580 : vector<1x32xf32> to vector<48x32xf32>
    %582 = arith.mulf %579, %581 : vector<48x32xf32>
    %583 = arith.truncf %582 : vector<48x32xf32> to vector<48x32xbf16>
    %c96_331 = arith.constant 96 : index
    %c0_332 = arith.constant 0 : index
    %584 = vector.load %arg25[%c96_331, %c0_332] : memref<432x32xbf16, #tpu.memory_space<vmem>>, vector<48x32xbf16>
    tpu.vector_store %arg25[%c96_331, %c0_332], %583 {strides = array<i32>} : memref<432x32xbf16, #tpu.memory_space<vmem>>, vector<48x32xbf16>,
    %c1_i32_333 = arith.constant 1 : i32
    %585 = tpu.dynamic_rotate %558 by %c1_i32_333 dim 1 : vector<48x32xf32>, i32 -> vector<48x32xf32>
    %586 = vector.extract_strided_slice %559 {offsets = [3, 0], sizes = [1, 32], strides = [1, 1]} : vector<16x32xf32> to vector<1x32xf32>
    %587 = vector.broadcast %586 : vector<1x32xf32> to vector<48x32xf32>
    %588 = arith.mulf %585, %587 : vector<48x32xf32>
    %589 = arith.truncf %588 : vector<48x32xf32> to vector<48x32xbf16>
    %c144 = arith.constant 144 : index
    %c0_334 = arith.constant 0 : index
    %590 = vector.load %arg25[%c144, %c0_334] : memref<432x32xbf16, #tpu.memory_space<vmem>>, vector<48x32xbf16>
    tpu.vector_store %arg25[%c144, %c0_334], %589 {strides = array<i32>} : memref<432x32xbf16, #tpu.memory_space<vmem>>, vector<48x32xbf16>,
    %591 = arith.truncf %558 : vector<48x32xf32> to vector<48x32xbf16>
    %c192_335 = arith.constant 192 : index
    %c0_336 = arith.constant 0 : index
    %592 = vector.load %arg25[%c192_335, %c0_336] : memref<432x32xbf16, #tpu.memory_space<vmem>>, vector<48x32xbf16>
    tpu.vector_store %arg25[%c192_335, %c0_336], %591 {strides = array<i32>} : memref<432x32xbf16, #tpu.memory_space<vmem>>, vector<48x32xbf16>,
    %c31_i32 = arith.constant 31 : i32
    %593 = tpu.dynamic_rotate %558 by %c31_i32 dim 1 : vector<48x32xf32>, i32 -> vector<48x32xf32>
    %594 = vector.extract_strided_slice %559 {offsets = [5, 0], sizes = [1, 32], strides = [1, 1]} : vector<16x32xf32> to vector<1x32xf32>
    %595 = vector.broadcast %594 : vector<1x32xf32> to vector<48x32xf32>
    %596 = arith.mulf %593, %595 : vector<48x32xf32>
    %597 = arith.truncf %596 : vector<48x32xf32> to vector<48x32xbf16>
    %c240 = arith.constant 240 : index
    %c0_337 = arith.constant 0 : index
    %598 = vector.load %arg25[%c240, %c0_337] : memref<432x32xbf16, #tpu.memory_space<vmem>>, vector<48x32xbf16>
    tpu.vector_store %arg25[%c240, %c0_337], %597 {strides = array<i32>} : memref<432x32xbf16, #tpu.memory_space<vmem>>, vector<48x32xbf16>,
    %c29_i32 = arith.constant 29 : i32
    %599 = tpu.dynamic_rotate %558 by %c29_i32 dim 1 : vector<48x32xf32>, i32 -> vector<48x32xf32>
    %600 = vector.extract_strided_slice %559 {offsets = [6, 0], sizes = [1, 32], strides = [1, 1]} : vector<16x32xf32> to vector<1x32xf32>
    %601 = vector.broadcast %600 : vector<1x32xf32> to vector<48x32xf32>
    %602 = arith.mulf %599, %601 : vector<48x32xf32>
    %603 = arith.truncf %602 : vector<48x32xf32> to vector<48x32xbf16>
    %c288 = arith.constant 288 : index
    %c0_338 = arith.constant 0 : index
    %604 = vector.load %arg25[%c288, %c0_338] : memref<432x32xbf16, #tpu.memory_space<vmem>>, vector<48x32xbf16>
    tpu.vector_store %arg25[%c288, %c0_338], %603 {strides = array<i32>} : memref<432x32xbf16, #tpu.memory_space<vmem>>, vector<48x32xbf16>,
    %c28_i32 = arith.constant 28 : i32
    %605 = tpu.dynamic_rotate %558 by %c28_i32 dim 1 : vector<48x32xf32>, i32 -> vector<48x32xf32>
    %606 = vector.extract_strided_slice %559 {offsets = [7, 0], sizes = [1, 32], strides = [1, 1]} : vector<16x32xf32> to vector<1x32xf32>
    %607 = vector.broadcast %606 : vector<1x32xf32> to vector<48x32xf32>
    %608 = arith.mulf %605, %607 : vector<48x32xf32>
    %609 = arith.truncf %608 : vector<48x32xf32> to vector<48x32xbf16>
    %c336 = arith.constant 336 : index
    %c0_339 = arith.constant 0 : index
    %610 = vector.load %arg25[%c336, %c0_339] : memref<432x32xbf16, #tpu.memory_space<vmem>>, vector<48x32xbf16>
    tpu.vector_store %arg25[%c336, %c0_339], %609 {strides = array<i32>} : memref<432x32xbf16, #tpu.memory_space<vmem>>, vector<48x32xbf16>,
    %c27_i32 = arith.constant 27 : i32
    %611 = tpu.dynamic_rotate %558 by %c27_i32 dim 1 : vector<48x32xf32>, i32 -> vector<48x32xf32>
    %612 = vector.extract_strided_slice %559 {offsets = [8, 0], sizes = [1, 32], strides = [1, 1]} : vector<16x32xf32> to vector<1x32xf32>
    %613 = vector.broadcast %612 : vector<1x32xf32> to vector<48x32xf32>
    %614 = arith.mulf %611, %613 : vector<48x32xf32>
    %615 = arith.truncf %614 : vector<48x32xf32> to vector<48x32xbf16>
    %c384 = arith.constant 384 : index
    %c0_340 = arith.constant 0 : index
    %616 = vector.load %arg25[%c384, %c0_340] : memref<432x32xbf16, #tpu.memory_space<vmem>>, vector<48x32xbf16>
    tpu.vector_store %arg25[%c384, %c0_340], %615 {strides = array<i32>} : memref<432x32xbf16, #tpu.memory_space<vmem>>, vector<48x32xbf16>,
    %c0_341 = arith.constant 0 : index
    %c0_342 = arith.constant 0 : index
    %617 = vector.load %arg25[%c0_341, %c0_342] : memref<432x32xbf16, #tpu.memory_space<vmem>>, vector<432x32xbf16>
    %cst_343 = arith.constant dense<0.000000e+00> : vector<48x32xf32>
    %618 = tpu.matmul %566, %617, %cst_343 {dimension_numbers = #tpu.dot_dimension_numbers<[1], [0], [0], [1], [0, 0, 1, 1], [], []>} : vector<48x432xbf16>, vector<432x32xbf16>, vector<48x32xf32> -> vector<48x32xf32>
    %cst_344 = arith.constant 0.000000e+00 : f32
    %619 = vector.broadcast %cst_344 : f32 to vector<48x32xf32>
    %620 = arith.maximumf %618, %619 : vector<48x32xf32>
    %c1_345 = arith.constant 1 : index
    %c0_346 = arith.constant 0 : index
    %c0_347 = arith.constant 0 : index
    %621 = vector.load %arg15[%c1_345, %c0_346, %c0_347] : memref<4x48x432xbf16, #tpu.memory_space<vmem>>, vector<1x48x432xbf16>
    %622 = vector.shape_cast %621 : vector<1x48x432xbf16> to vector<48x432xbf16>
    %c5_i32_348 = arith.constant 5 : i32
    %623 = tpu.dynamic_rotate %620 by %c5_i32_348 dim 1 : vector<48x32xf32>, i32 -> vector<48x32xf32>
    %624 = vector.extract_strided_slice %559 {offsets = [0, 0], sizes = [1, 32], strides = [1, 1]} : vector<16x32xf32> to vector<1x32xf32>
    %625 = vector.broadcast %624 : vector<1x32xf32> to vector<48x32xf32>
    %626 = arith.mulf %623, %625 : vector<48x32xf32>
    %627 = arith.truncf %626 : vector<48x32xf32> to vector<48x32xbf16>
    %c0_349 = arith.constant 0 : index
    %c0_350 = arith.constant 0 : index
    %628 = vector.load %arg25[%c0_349, %c0_350] : memref<432x32xbf16, #tpu.memory_space<vmem>>, vector<48x32xbf16>
    tpu.vector_store %arg25[%c0_349, %c0_350], %627 {strides = array<i32>} : memref<432x32xbf16, #tpu.memory_space<vmem>>, vector<48x32xbf16>,
    %c4_i32_351 = arith.constant 4 : i32
    %629 = tpu.dynamic_rotate %620 by %c4_i32_351 dim 1 : vector<48x32xf32>, i32 -> vector<48x32xf32>
    %630 = vector.extract_strided_slice %559 {offsets = [1, 0], sizes = [1, 32], strides = [1, 1]} : vector<16x32xf32> to vector<1x32xf32>
    %631 = vector.broadcast %630 : vector<1x32xf32> to vector<48x32xf32>
    %632 = arith.mulf %629, %631 : vector<48x32xf32>
    %633 = arith.truncf %632 : vector<48x32xf32> to vector<48x32xbf16>
    %c48_352 = arith.constant 48 : index
    %c0_353 = arith.constant 0 : index
    %634 = vector.load %arg25[%c48_352, %c0_353] : memref<432x32xbf16, #tpu.memory_space<vmem>>, vector<48x32xbf16>
    tpu.vector_store %arg25[%c48_352, %c0_353], %633 {strides = array<i32>} : memref<432x32xbf16, #tpu.memory_space<vmem>>, vector<48x32xbf16>,
    %c3_i32_354 = arith.constant 3 : i32
    %635 = tpu.dynamic_rotate %620 by %c3_i32_354 dim 1 : vector<48x32xf32>, i32 -> vector<48x32xf32>
    %636 = vector.extract_strided_slice %559 {offsets = [2, 0], sizes = [1, 32], strides = [1, 1]} : vector<16x32xf32> to vector<1x32xf32>
    %637 = vector.broadcast %636 : vector<1x32xf32> to vector<48x32xf32>
    %638 = arith.mulf %635, %637 : vector<48x32xf32>
    %639 = arith.truncf %638 : vector<48x32xf32> to vector<48x32xbf16>
    %c96_355 = arith.constant 96 : index
    %c0_356 = arith.constant 0 : index
    %640 = vector.load %arg25[%c96_355, %c0_356] : memref<432x32xbf16, #tpu.memory_space<vmem>>, vector<48x32xbf16>
    tpu.vector_store %arg25[%c96_355, %c0_356], %639 {strides = array<i32>} : memref<432x32xbf16, #tpu.memory_space<vmem>>, vector<48x32xbf16>,
    %c1_i32_357 = arith.constant 1 : i32
    %641 = tpu.dynamic_rotate %620 by %c1_i32_357 dim 1 : vector<48x32xf32>, i32 -> vector<48x32xf32>
    %642 = vector.extract_strided_slice %559 {offsets = [3, 0], sizes = [1, 32], strides = [1, 1]} : vector<16x32xf32> to vector<1x32xf32>
    %643 = vector.broadcast %642 : vector<1x32xf32> to vector<48x32xf32>
    %644 = arith.mulf %641, %643 : vector<48x32xf32>
    %645 = arith.truncf %644 : vector<48x32xf32> to vector<48x32xbf16>
    %c144_358 = arith.constant 144 : index
    %c0_359 = arith.constant 0 : index
    %646 = vector.load %arg25[%c144_358, %c0_359] : memref<432x32xbf16, #tpu.memory_space<vmem>>, vector<48x32xbf16>
    tpu.vector_store %arg25[%c144_358, %c0_359], %645 {strides = array<i32>} : memref<432x32xbf16, #tpu.memory_space<vmem>>, vector<48x32xbf16>,
    %647 = arith.truncf %620 : vector<48x32xf32> to vector<48x32xbf16>
    %c192_360 = arith.constant 192 : index
    %c0_361 = arith.constant 0 : index
    %648 = vector.load %arg25[%c192_360, %c0_361] : memref<432x32xbf16, #tpu.memory_space<vmem>>, vector<48x32xbf16>
    tpu.vector_store %arg25[%c192_360, %c0_361], %647 {strides = array<i32>} : memref<432x32xbf16, #tpu.memory_space<vmem>>, vector<48x32xbf16>,
    %c31_i32_362 = arith.constant 31 : i32
    %649 = tpu.dynamic_rotate %620 by %c31_i32_362 dim 1 : vector<48x32xf32>, i32 -> vector<48x32xf32>
    %650 = vector.extract_strided_slice %559 {offsets = [5, 0], sizes = [1, 32], strides = [1, 1]} : vector<16x32xf32> to vector<1x32xf32>
    %651 = vector.broadcast %650 : vector<1x32xf32> to vector<48x32xf32>
    %652 = arith.mulf %649, %651 : vector<48x32xf32>
    %653 = arith.truncf %652 : vector<48x32xf32> to vector<48x32xbf16>
    %c240_363 = arith.constant 240 : index
    %c0_364 = arith.constant 0 : index
    %654 = vector.load %arg25[%c240_363, %c0_364] : memref<432x32xbf16, #tpu.memory_space<vmem>>, vector<48x32xbf16>
    tpu.vector_store %arg25[%c240_363, %c0_364], %653 {strides = array<i32>} : memref<432x32xbf16, #tpu.memory_space<vmem>>, vector<48x32xbf16>,
    %c29_i32_365 = arith.constant 29 : i32
    %655 = tpu.dynamic_rotate %620 by %c29_i32_365 dim 1 : vector<48x32xf32>, i32 -> vector<48x32xf32>
    %656 = vector.extract_strided_slice %559 {offsets = [6, 0], sizes = [1, 32], strides = [1, 1]} : vector<16x32xf32> to vector<1x32xf32>
    %657 = vector.broadcast %656 : vector<1x32xf32> to vector<48x32xf32>
    %658 = arith.mulf %655, %657 : vector<48x32xf32>
    %659 = arith.truncf %658 : vector<48x32xf32> to vector<48x32xbf16>
    %c288_366 = arith.constant 288 : index
    %c0_367 = arith.constant 0 : index
    %660 = vector.load %arg25[%c288_366, %c0_367] : memref<432x32xbf16, #tpu.memory_space<vmem>>, vector<48x32xbf16>
    tpu.vector_store %arg25[%c288_366, %c0_367], %659 {strides = array<i32>} : memref<432x32xbf16, #tpu.memory_space<vmem>>, vector<48x32xbf16>,
    %c28_i32_368 = arith.constant 28 : i32
    %661 = tpu.dynamic_rotate %620 by %c28_i32_368 dim 1 : vector<48x32xf32>, i32 -> vector<48x32xf32>
    %662 = vector.extract_strided_slice %559 {offsets = [7, 0], sizes = [1, 32], strides = [1, 1]} : vector<16x32xf32> to vector<1x32xf32>
    %663 = vector.broadcast %662 : vector<1x32xf32> to vector<48x32xf32>
    %664 = arith.mulf %661, %663 : vector<48x32xf32>
    %665 = arith.truncf %664 : vector<48x32xf32> to vector<48x32xbf16>
    %c336_369 = arith.constant 336 : index
    %c0_370 = arith.constant 0 : index
    %666 = vector.load %arg25[%c336_369, %c0_370] : memref<432x32xbf16, #tpu.memory_space<vmem>>, vector<48x32xbf16>
    tpu.vector_store %arg25[%c336_369, %c0_370], %665 {strides = array<i32>} : memref<432x32xbf16, #tpu.memory_space<vmem>>, vector<48x32xbf16>,
    %c27_i32_371 = arith.constant 27 : i32
    %667 = tpu.dynamic_rotate %620 by %c27_i32_371 dim 1 : vector<48x32xf32>, i32 -> vector<48x32xf32>
    %668 = vector.extract_strided_slice %559 {offsets = [8, 0], sizes = [1, 32], strides = [1, 1]} : vector<16x32xf32> to vector<1x32xf32>
    %669 = vector.broadcast %668 : vector<1x32xf32> to vector<48x32xf32>
    %670 = arith.mulf %667, %669 : vector<48x32xf32>
    %671 = arith.truncf %670 : vector<48x32xf32> to vector<48x32xbf16>
    %c384_372 = arith.constant 384 : index
    %c0_373 = arith.constant 0 : index
    %672 = vector.load %arg25[%c384_372, %c0_373] : memref<432x32xbf16, #tpu.memory_space<vmem>>, vector<48x32xbf16>
    tpu.vector_store %arg25[%c384_372, %c0_373], %671 {strides = array<i32>} : memref<432x32xbf16, #tpu.memory_space<vmem>>, vector<48x32xbf16>,
    %c0_374 = arith.constant 0 : index
    %c0_375 = arith.constant 0 : index
    %673 = vector.load %arg25[%c0_374, %c0_375] : memref<432x32xbf16, #tpu.memory_space<vmem>>, vector<432x32xbf16>
    %cst_376 = arith.constant dense<0.000000e+00> : vector<48x32xf32>
    %674 = tpu.matmul %622, %673, %cst_376 {dimension_numbers = #tpu.dot_dimension_numbers<[1], [0], [0], [1], [0, 0, 1, 1], [], []>} : vector<48x432xbf16>, vector<432x32xbf16>, vector<48x32xf32> -> vector<48x32xf32>
    %675 = arith.truncf %674 : vector<48x32xf32> to vector<48x32xbf16>
    %cst_377 = arith.constant dense<0.000000e+00> : vector<48x2xf32>
    %676 = tpu.matmul %675, %560, %cst_377 {dimension_numbers = #tpu.dot_dimension_numbers<[1], [1], [0], [0], [0, 0, 1, 0], [], []>} : vector<48x32xbf16>, vector<2x32xbf16>, vector<48x2xf32> -> vector<48x2xf32>
    %cst_378 = arith.constant 6.250000e-02 : f32
    %677 = vector.broadcast %cst_378 : f32 to vector<48x2xf32>
    %678 = arith.mulf %676, %677 : vector<48x2xf32>
    %679 = arith.truncf %678 : vector<48x2xf32> to vector<48x2xbf16>
    %cst_379 = arith.constant dense<0.000000e+00> : vector<12x2xf32>
    %680 = tpu.matmul %562, %679, %cst_379 {dimension_numbers = #tpu.dot_dimension_numbers<[1], [0], [0], [1], [0, 0, 1, 1], [], []>} : vector<12x48xbf16>, vector<48x2xbf16>, vector<12x2xf32> -> vector<12x2xf32>
    %cst_380 = arith.constant 0.000000e+00 : f32
    %681 = vector.broadcast %cst_380 : f32 to vector<12x2xf32>
    %682 = arith.maximumf %680, %681 : vector<12x2xf32>
    %683 = arith.truncf %682 : vector<12x2xf32> to vector<12x2xbf16>
    %cst_381 = arith.constant dense<0.000000e+00> : vector<48x2xf32>
    %684 = tpu.matmul %564, %683, %cst_381 {dimension_numbers = #tpu.dot_dimension_numbers<[1], [0], [0], [1], [0, 0, 1, 1], [], []>} : vector<48x12xbf16>, vector<12x2xbf16>, vector<48x2xf32> -> vector<48x2xf32>
    %cst_382 = arith.constant 5.000000e-01 : f32
    %685 = vector.broadcast %cst_382 : f32 to vector<48x2xf32>
    %686 = arith.mulf %685, %684 : vector<48x2xf32>
    %687 = math.tanh %686 : vector<48x2xf32>
    %cst_383 = arith.constant 1.000000e+00 : f32
    %688 = vector.broadcast %cst_383 : f32 to vector<48x2xf32>
    %689 = arith.addf %687, %688 : vector<48x2xf32>
    %cst_384 = arith.constant 5.000000e-01 : f32
    %690 = vector.broadcast %cst_384 : f32 to vector<48x2xf32>
    %691 = arith.mulf %690, %689 : vector<48x2xf32>
    %692 = arith.truncf %691 : vector<48x2xf32> to vector<48x2xbf16>
    %cst_385 = arith.constant dense<0.000000e+00> : vector<48x32xf32>
    %693 = tpu.matmul %692, %560, %cst_385 {dimension_numbers = #tpu.dot_dimension_numbers<[1], [0], [0], [1], [0, 0, 1, 1], [], []>} : vector<48x2xbf16>, vector<2x32xbf16>, vector<48x32xf32> -> vector<48x32xf32>
    %694 = arith.mulf %674, %693 : vector<48x32xf32>
    %695 = arith.addf %694, %558 : vector<48x32xf32>
    %c1_386 = arith.constant 1 : index
    %c0_387 = arith.constant 0 : index
    %c0_388 = arith.constant 0 : index
    %696 = vector.load %arg16[%c1_386, %c0_387, %c0_388] : memref<2x12x48xbf16, #tpu.memory_space<vmem>>, vector<1x12x48xbf16>
    %697 = vector.shape_cast %696 : vector<1x12x48xbf16> to vector<12x48xbf16>
    %c1_389 = arith.constant 1 : index
    %c0_390 = arith.constant 0 : index
    %c0_391 = arith.constant 0 : index
    %698 = vector.load %arg17[%c1_389, %c0_390, %c0_391] : memref<2x48x12xbf16, #tpu.memory_space<vmem>>, vector<1x48x12xbf16>
    %699 = vector.shape_cast %698 : vector<1x48x12xbf16> to vector<48x12xbf16>
    %c2_392 = arith.constant 2 : index
    %c0_393 = arith.constant 0 : index
    %c0_394 = arith.constant 0 : index
    %700 = vector.load %arg15[%c2_392, %c0_393, %c0_394] : memref<4x48x432xbf16, #tpu.memory_space<vmem>>, vector<1x48x432xbf16>
    %701 = vector.shape_cast %700 : vector<1x48x432xbf16> to vector<48x432xbf16>
    %c5_i32_395 = arith.constant 5 : i32
    %702 = tpu.dynamic_rotate %695 by %c5_i32_395 dim 1 : vector<48x32xf32>, i32 -> vector<48x32xf32>
    %703 = vector.extract_strided_slice %559 {offsets = [0, 0], sizes = [1, 32], strides = [1, 1]} : vector<16x32xf32> to vector<1x32xf32>
    %704 = vector.broadcast %703 : vector<1x32xf32> to vector<48x32xf32>
    %705 = arith.mulf %702, %704 : vector<48x32xf32>
    %706 = arith.truncf %705 : vector<48x32xf32> to vector<48x32xbf16>
    %c0_396 = arith.constant 0 : index
    %c0_397 = arith.constant 0 : index
    %707 = vector.load %arg25[%c0_396, %c0_397] : memref<432x32xbf16, #tpu.memory_space<vmem>>, vector<48x32xbf16>
    tpu.vector_store %arg25[%c0_396, %c0_397], %706 {strides = array<i32>} : memref<432x32xbf16, #tpu.memory_space<vmem>>, vector<48x32xbf16>,
    %c4_i32_398 = arith.constant 4 : i32
    %708 = tpu.dynamic_rotate %695 by %c4_i32_398 dim 1 : vector<48x32xf32>, i32 -> vector<48x32xf32>
    %709 = vector.extract_strided_slice %559 {offsets = [1, 0], sizes = [1, 32], strides = [1, 1]} : vector<16x32xf32> to vector<1x32xf32>
    %710 = vector.broadcast %709 : vector<1x32xf32> to vector<48x32xf32>
    %711 = arith.mulf %708, %710 : vector<48x32xf32>
    %712 = arith.truncf %711 : vector<48x32xf32> to vector<48x32xbf16>
    %c48_399 = arith.constant 48 : index
    %c0_400 = arith.constant 0 : index
    %713 = vector.load %arg25[%c48_399, %c0_400] : memref<432x32xbf16, #tpu.memory_space<vmem>>, vector<48x32xbf16>
    tpu.vector_store %arg25[%c48_399, %c0_400], %712 {strides = array<i32>} : memref<432x32xbf16, #tpu.memory_space<vmem>>, vector<48x32xbf16>,
    %c3_i32_401 = arith.constant 3 : i32
    %714 = tpu.dynamic_rotate %695 by %c3_i32_401 dim 1 : vector<48x32xf32>, i32 -> vector<48x32xf32>
    %715 = vector.extract_strided_slice %559 {offsets = [2, 0], sizes = [1, 32], strides = [1, 1]} : vector<16x32xf32> to vector<1x32xf32>
    %716 = vector.broadcast %715 : vector<1x32xf32> to vector<48x32xf32>
    %717 = arith.mulf %714, %716 : vector<48x32xf32>
    %718 = arith.truncf %717 : vector<48x32xf32> to vector<48x32xbf16>
    %c96_402 = arith.constant 96 : index
    %c0_403 = arith.constant 0 : index
    %719 = vector.load %arg25[%c96_402, %c0_403] : memref<432x32xbf16, #tpu.memory_space<vmem>>, vector<48x32xbf16>
    tpu.vector_store %arg25[%c96_402, %c0_403], %718 {strides = array<i32>} : memref<432x32xbf16, #tpu.memory_space<vmem>>, vector<48x32xbf16>,
    %c1_i32_404 = arith.constant 1 : i32
    %720 = tpu.dynamic_rotate %695 by %c1_i32_404 dim 1 : vector<48x32xf32>, i32 -> vector<48x32xf32>
    %721 = vector.extract_strided_slice %559 {offsets = [3, 0], sizes = [1, 32], strides = [1, 1]} : vector<16x32xf32> to vector<1x32xf32>
    %722 = vector.broadcast %721 : vector<1x32xf32> to vector<48x32xf32>
    %723 = arith.mulf %720, %722 : vector<48x32xf32>
    %724 = arith.truncf %723 : vector<48x32xf32> to vector<48x32xbf16>
    %c144_405 = arith.constant 144 : index
    %c0_406 = arith.constant 0 : index
    %725 = vector.load %arg25[%c144_405, %c0_406] : memref<432x32xbf16, #tpu.memory_space<vmem>>, vector<48x32xbf16>
    tpu.vector_store %arg25[%c144_405, %c0_406], %724 {strides = array<i32>} : memref<432x32xbf16, #tpu.memory_space<vmem>>, vector<48x32xbf16>,
    %726 = arith.truncf %695 : vector<48x32xf32> to vector<48x32xbf16>
    %c192_407 = arith.constant 192 : index
    %c0_408 = arith.constant 0 : index
    %727 = vector.load %arg25[%c192_407, %c0_408] : memref<432x32xbf16, #tpu.memory_space<vmem>>, vector<48x32xbf16>
    tpu.vector_store %arg25[%c192_407, %c0_408], %726 {strides = array<i32>} : memref<432x32xbf16, #tpu.memory_space<vmem>>, vector<48x32xbf16>,
    %c31_i32_409 = arith.constant 31 : i32
    %728 = tpu.dynamic_rotate %695 by %c31_i32_409 dim 1 : vector<48x32xf32>, i32 -> vector<48x32xf32>
    %729 = vector.extract_strided_slice %559 {offsets = [5, 0], sizes = [1, 32], strides = [1, 1]} : vector<16x32xf32> to vector<1x32xf32>
    %730 = vector.broadcast %729 : vector<1x32xf32> to vector<48x32xf32>
    %731 = arith.mulf %728, %730 : vector<48x32xf32>
    %732 = arith.truncf %731 : vector<48x32xf32> to vector<48x32xbf16>
    %c240_410 = arith.constant 240 : index
    %c0_411 = arith.constant 0 : index
    %733 = vector.load %arg25[%c240_410, %c0_411] : memref<432x32xbf16, #tpu.memory_space<vmem>>, vector<48x32xbf16>
    tpu.vector_store %arg25[%c240_410, %c0_411], %732 {strides = array<i32>} : memref<432x32xbf16, #tpu.memory_space<vmem>>, vector<48x32xbf16>,
    %c29_i32_412 = arith.constant 29 : i32
    %734 = tpu.dynamic_rotate %695 by %c29_i32_412 dim 1 : vector<48x32xf32>, i32 -> vector<48x32xf32>
    %735 = vector.extract_strided_slice %559 {offsets = [6, 0], sizes = [1, 32], strides = [1, 1]} : vector<16x32xf32> to vector<1x32xf32>
    %736 = vector.broadcast %735 : vector<1x32xf32> to vector<48x32xf32>
    %737 = arith.mulf %734, %736 : vector<48x32xf32>
    %738 = arith.truncf %737 : vector<48x32xf32> to vector<48x32xbf16>
    %c288_413 = arith.constant 288 : index
    %c0_414 = arith.constant 0 : index
    %739 = vector.load %arg25[%c288_413, %c0_414] : memref<432x32xbf16, #tpu.memory_space<vmem>>, vector<48x32xbf16>
    tpu.vector_store %arg25[%c288_413, %c0_414], %738 {strides = array<i32>} : memref<432x32xbf16, #tpu.memory_space<vmem>>, vector<48x32xbf16>,
    %c28_i32_415 = arith.constant 28 : i32
    %740 = tpu.dynamic_rotate %695 by %c28_i32_415 dim 1 : vector<48x32xf32>, i32 -> vector<48x32xf32>
    %741 = vector.extract_strided_slice %559 {offsets = [7, 0], sizes = [1, 32], strides = [1, 1]} : vector<16x32xf32> to vector<1x32xf32>
    %742 = vector.broadcast %741 : vector<1x32xf32> to vector<48x32xf32>
    %743 = arith.mulf %740, %742 : vector<48x32xf32>
    %744 = arith.truncf %743 : vector<48x32xf32> to vector<48x32xbf16>
    %c336_416 = arith.constant 336 : index
    %c0_417 = arith.constant 0 : index
    %745 = vector.load %arg25[%c336_416, %c0_417] : memref<432x32xbf16, #tpu.memory_space<vmem>>, vector<48x32xbf16>
    tpu.vector_store %arg25[%c336_416, %c0_417], %744 {strides = array<i32>} : memref<432x32xbf16, #tpu.memory_space<vmem>>, vector<48x32xbf16>,
    %c27_i32_418 = arith.constant 27 : i32
    %746 = tpu.dynamic_rotate %695 by %c27_i32_418 dim 1 : vector<48x32xf32>, i32 -> vector<48x32xf32>
    %747 = vector.extract_strided_slice %559 {offsets = [8, 0], sizes = [1, 32], strides = [1, 1]} : vector<16x32xf32> to vector<1x32xf32>
    %748 = vector.broadcast %747 : vector<1x32xf32> to vector<48x32xf32>
    %749 = arith.mulf %746, %748 : vector<48x32xf32>
    %750 = arith.truncf %749 : vector<48x32xf32> to vector<48x32xbf16>
    %c384_419 = arith.constant 384 : index
    %c0_420 = arith.constant 0 : index
    %751 = vector.load %arg25[%c384_419, %c0_420] : memref<432x32xbf16, #tpu.memory_space<vmem>>, vector<48x32xbf16>
    tpu.vector_store %arg25[%c384_419, %c0_420], %750 {strides = array<i32>} : memref<432x32xbf16, #tpu.memory_space<vmem>>, vector<48x32xbf16>,
    %c0_421 = arith.constant 0 : index
    %c0_422 = arith.constant 0 : index
    %752 = vector.load %arg25[%c0_421, %c0_422] : memref<432x32xbf16, #tpu.memory_space<vmem>>, vector<432x32xbf16>
    %cst_423 = arith.constant dense<0.000000e+00> : vector<48x32xf32>
    %753 = tpu.matmul %701, %752, %cst_423 {dimension_numbers = #tpu.dot_dimension_numbers<[1], [0], [0], [1], [0, 0, 1, 1], [], []>} : vector<48x432xbf16>, vector<432x32xbf16>, vector<48x32xf32> -> vector<48x32xf32>
    %cst_424 = arith.constant 0.000000e+00 : f32
    %754 = vector.broadcast %cst_424 : f32 to vector<48x32xf32>
    %755 = arith.maximumf %753, %754 : vector<48x32xf32>
    %c3_425 = arith.constant 3 : index
    %c0_426 = arith.constant 0 : index
    %c0_427 = arith.constant 0 : index
    %756 = vector.load %arg15[%c3_425, %c0_426, %c0_427] : memref<4x48x432xbf16, #tpu.memory_space<vmem>>, vector<1x48x432xbf16>
    %757 = vector.shape_cast %756 : vector<1x48x432xbf16> to vector<48x432xbf16>
    %c5_i32_428 = arith.constant 5 : i32
    %758 = tpu.dynamic_rotate %755 by %c5_i32_428 dim 1 : vector<48x32xf32>, i32 -> vector<48x32xf32>
    %759 = vector.extract_strided_slice %559 {offsets = [0, 0], sizes = [1, 32], strides = [1, 1]} : vector<16x32xf32> to vector<1x32xf32>
    %760 = vector.broadcast %759 : vector<1x32xf32> to vector<48x32xf32>
    %761 = arith.mulf %758, %760 : vector<48x32xf32>
    %762 = arith.truncf %761 : vector<48x32xf32> to vector<48x32xbf16>
    %c0_429 = arith.constant 0 : index
    %c0_430 = arith.constant 0 : index
    %763 = vector.load %arg25[%c0_429, %c0_430] : memref<432x32xbf16, #tpu.memory_space<vmem>>, vector<48x32xbf16>
    tpu.vector_store %arg25[%c0_429, %c0_430], %762 {strides = array<i32>} : memref<432x32xbf16, #tpu.memory_space<vmem>>, vector<48x32xbf16>,
    %c4_i32_431 = arith.constant 4 : i32
    %764 = tpu.dynamic_rotate %755 by %c4_i32_431 dim 1 : vector<48x32xf32>, i32 -> vector<48x32xf32>
    %765 = vector.extract_strided_slice %559 {offsets = [1, 0], sizes = [1, 32], strides = [1, 1]} : vector<16x32xf32> to vector<1x32xf32>
    %766 = vector.broadcast %765 : vector<1x32xf32> to vector<48x32xf32>
    %767 = arith.mulf %764, %766 : vector<48x32xf32>
    %768 = arith.truncf %767 : vector<48x32xf32> to vector<48x32xbf16>
    %c48_432 = arith.constant 48 : index
    %c0_433 = arith.constant 0 : index
    %769 = vector.load %arg25[%c48_432, %c0_433] : memref<432x32xbf16, #tpu.memory_space<vmem>>, vector<48x32xbf16>
    tpu.vector_store %arg25[%c48_432, %c0_433], %768 {strides = array<i32>} : memref<432x32xbf16, #tpu.memory_space<vmem>>, vector<48x32xbf16>,
    %c3_i32_434 = arith.constant 3 : i32
    %770 = tpu.dynamic_rotate %755 by %c3_i32_434 dim 1 : vector<48x32xf32>, i32 -> vector<48x32xf32>
    %771 = vector.extract_strided_slice %559 {offsets = [2, 0], sizes = [1, 32], strides = [1, 1]} : vector<16x32xf32> to vector<1x32xf32>
    %772 = vector.broadcast %771 : vector<1x32xf32> to vector<48x32xf32>
    %773 = arith.mulf %770, %772 : vector<48x32xf32>
    %774 = arith.truncf %773 : vector<48x32xf32> to vector<48x32xbf16>
    %c96_435 = arith.constant 96 : index
    %c0_436 = arith.constant 0 : index
    %775 = vector.load %arg25[%c96_435, %c0_436] : memref<432x32xbf16, #tpu.memory_space<vmem>>, vector<48x32xbf16>
    tpu.vector_store %arg25[%c96_435, %c0_436], %774 {strides = array<i32>} : memref<432x32xbf16, #tpu.memory_space<vmem>>, vector<48x32xbf16>,
    %c1_i32_437 = arith.constant 1 : i32
    %776 = tpu.dynamic_rotate %755 by %c1_i32_437 dim 1 : vector<48x32xf32>, i32 -> vector<48x32xf32>
    %777 = vector.extract_strided_slice %559 {offsets = [3, 0], sizes = [1, 32], strides = [1, 1]} : vector<16x32xf32> to vector<1x32xf32>
    %778 = vector.broadcast %777 : vector<1x32xf32> to vector<48x32xf32>
    %779 = arith.mulf %776, %778 : vector<48x32xf32>
    %780 = arith.truncf %779 : vector<48x32xf32> to vector<48x32xbf16>
    %c144_438 = arith.constant 144 : index
    %c0_439 = arith.constant 0 : index
    %781 = vector.load %arg25[%c144_438, %c0_439] : memref<432x32xbf16, #tpu.memory_space<vmem>>, vector<48x32xbf16>
    tpu.vector_store %arg25[%c144_438, %c0_439], %780 {strides = array<i32>} : memref<432x32xbf16, #tpu.memory_space<vmem>>, vector<48x32xbf16>,
    %782 = arith.truncf %755 : vector<48x32xf32> to vector<48x32xbf16>
    %c192_440 = arith.constant 192 : index
    %c0_441 = arith.constant 0 : index
    %783 = vector.load %arg25[%c192_440, %c0_441] : memref<432x32xbf16, #tpu.memory_space<vmem>>, vector<48x32xbf16>
    tpu.vector_store %arg25[%c192_440, %c0_441], %782 {strides = array<i32>} : memref<432x32xbf16, #tpu.memory_space<vmem>>, vector<48x32xbf16>,
    %c31_i32_442 = arith.constant 31 : i32
    %784 = tpu.dynamic_rotate %755 by %c31_i32_442 dim 1 : vector<48x32xf32>, i32 -> vector<48x32xf32>
    %785 = vector.extract_strided_slice %559 {offsets = [5, 0], sizes = [1, 32], strides = [1, 1]} : vector<16x32xf32> to vector<1x32xf32>
    %786 = vector.broadcast %785 : vector<1x32xf32> to vector<48x32xf32>
    %787 = arith.mulf %784, %786 : vector<48x32xf32>
    %788 = arith.truncf %787 : vector<48x32xf32> to vector<48x32xbf16>
    %c240_443 = arith.constant 240 : index
    %c0_444 = arith.constant 0 : index
    %789 = vector.load %arg25[%c240_443, %c0_444] : memref<432x32xbf16, #tpu.memory_space<vmem>>, vector<48x32xbf16>
    tpu.vector_store %arg25[%c240_443, %c0_444], %788 {strides = array<i32>} : memref<432x32xbf16, #tpu.memory_space<vmem>>, vector<48x32xbf16>,
    %c29_i32_445 = arith.constant 29 : i32
    %790 = tpu.dynamic_rotate %755 by %c29_i32_445 dim 1 : vector<48x32xf32>, i32 -> vector<48x32xf32>
    %791 = vector.extract_strided_slice %559 {offsets = [6, 0], sizes = [1, 32], strides = [1, 1]} : vector<16x32xf32> to vector<1x32xf32>
    %792 = vector.broadcast %791 : vector<1x32xf32> to vector<48x32xf32>
    %793 = arith.mulf %790, %792 : vector<48x32xf32>
    %794 = arith.truncf %793 : vector<48x32xf32> to vector<48x32xbf16>
    %c288_446 = arith.constant 288 : index
    %c0_447 = arith.constant 0 : index
    %795 = vector.load %arg25[%c288_446, %c0_447] : memref<432x32xbf16, #tpu.memory_space<vmem>>, vector<48x32xbf16>
    tpu.vector_store %arg25[%c288_446, %c0_447], %794 {strides = array<i32>} : memref<432x32xbf16, #tpu.memory_space<vmem>>, vector<48x32xbf16>,
    %c28_i32_448 = arith.constant 28 : i32
    %796 = tpu.dynamic_rotate %755 by %c28_i32_448 dim 1 : vector<48x32xf32>, i32 -> vector<48x32xf32>
    %797 = vector.extract_strided_slice %559 {offsets = [7, 0], sizes = [1, 32], strides = [1, 1]} : vector<16x32xf32> to vector<1x32xf32>
    %798 = vector.broadcast %797 : vector<1x32xf32> to vector<48x32xf32>
    %799 = arith.mulf %796, %798 : vector<48x32xf32>
    %800 = arith.truncf %799 : vector<48x32xf32> to vector<48x32xbf16>
    %c336_449 = arith.constant 336 : index
    %c0_450 = arith.constant 0 : index
    %801 = vector.load %arg25[%c336_449, %c0_450] : memref<432x32xbf16, #tpu.memory_space<vmem>>, vector<48x32xbf16>
    tpu.vector_store %arg25[%c336_449, %c0_450], %800 {strides = array<i32>} : memref<432x32xbf16, #tpu.memory_space<vmem>>, vector<48x32xbf16>,
    %c27_i32_451 = arith.constant 27 : i32
    %802 = tpu.dynamic_rotate %755 by %c27_i32_451 dim 1 : vector<48x32xf32>, i32 -> vector<48x32xf32>
    %803 = vector.extract_strided_slice %559 {offsets = [8, 0], sizes = [1, 32], strides = [1, 1]} : vector<16x32xf32> to vector<1x32xf32>
    %804 = vector.broadcast %803 : vector<1x32xf32> to vector<48x32xf32>
    %805 = arith.mulf %802, %804 : vector<48x32xf32>
    %806 = arith.truncf %805 : vector<48x32xf32> to vector<48x32xbf16>
    %c384_452 = arith.constant 384 : index
    %c0_453 = arith.constant 0 : index
    %807 = vector.load %arg25[%c384_452, %c0_453] : memref<432x32xbf16, #tpu.memory_space<vmem>>, vector<48x32xbf16>
    tpu.vector_store %arg25[%c384_452, %c0_453], %806 {strides = array<i32>} : memref<432x32xbf16, #tpu.memory_space<vmem>>, vector<48x32xbf16>,
    %c0_454 = arith.constant 0 : index
    %c0_455 = arith.constant 0 : index
    %808 = vector.load %arg25[%c0_454, %c0_455] : memref<432x32xbf16, #tpu.memory_space<vmem>>, vector<432x32xbf16>
    %cst_456 = arith.constant dense<0.000000e+00> : vector<48x32xf32>
    %809 = tpu.matmul %757, %808, %cst_456 {dimension_numbers = #tpu.dot_dimension_numbers<[1], [0], [0], [1], [0, 0, 1, 1], [], []>} : vector<48x432xbf16>, vector<432x32xbf16>, vector<48x32xf32> -> vector<48x32xf32>
    %810 = arith.truncf %809 : vector<48x32xf32> to vector<48x32xbf16>
    %cst_457 = arith.constant dense<0.000000e+00> : vector<48x2xf32>
    %811 = tpu.matmul %810, %560, %cst_457 {dimension_numbers = #tpu.dot_dimension_numbers<[1], [1], [0], [0], [0, 0, 1, 0], [], []>} : vector<48x32xbf16>, vector<2x32xbf16>, vector<48x2xf32> -> vector<48x2xf32>
    %cst_458 = arith.constant 6.250000e-02 : f32
    %812 = vector.broadcast %cst_458 : f32 to vector<48x2xf32>
    %813 = arith.mulf %811, %812 : vector<48x2xf32>
    %814 = arith.truncf %813 : vector<48x2xf32> to vector<48x2xbf16>
    %cst_459 = arith.constant dense<0.000000e+00> : vector<12x2xf32>
    %815 = tpu.matmul %697, %814, %cst_459 {dimension_numbers = #tpu.dot_dimension_numbers<[1], [0], [0], [1], [0, 0, 1, 1], [], []>} : vector<12x48xbf16>, vector<48x2xbf16>, vector<12x2xf32> -> vector<12x2xf32>
    %cst_460 = arith.constant 0.000000e+00 : f32
    %816 = vector.broadcast %cst_460 : f32 to vector<12x2xf32>
    %817 = arith.maximumf %815, %816 : vector<12x2xf32>
    %818 = arith.truncf %817 : vector<12x2xf32> to vector<12x2xbf16>
    %cst_461 = arith.constant dense<0.000000e+00> : vector<48x2xf32>
    %819 = tpu.matmul %699, %818, %cst_461 {dimension_numbers = #tpu.dot_dimension_numbers<[1], [0], [0], [1], [0, 0, 1, 1], [], []>} : vector<48x12xbf16>, vector<12x2xbf16>, vector<48x2xf32> -> vector<48x2xf32>
    %cst_462 = arith.constant 5.000000e-01 : f32
    %820 = vector.broadcast %cst_462 : f32 to vector<48x2xf32>
    %821 = arith.mulf %820, %819 : vector<48x2xf32>
    %822 = math.tanh %821 : vector<48x2xf32>
    %cst_463 = arith.constant 1.000000e+00 : f32
    %823 = vector.broadcast %cst_463 : f32 to vector<48x2xf32>
    %824 = arith.addf %822, %823 : vector<48x2xf32>
    %cst_464 = arith.constant 5.000000e-01 : f32
    %825 = vector.broadcast %cst_464 : f32 to vector<48x2xf32>
    %826 = arith.mulf %825, %824 : vector<48x2xf32>
    %827 = arith.truncf %826 : vector<48x2xf32> to vector<48x2xbf16>
    %cst_465 = arith.constant dense<0.000000e+00> : vector<48x32xf32>
    %828 = tpu.matmul %827, %560, %cst_465 {dimension_numbers = #tpu.dot_dimension_numbers<[1], [0], [0], [1], [0, 0, 1, 1], [], []>} : vector<48x2xbf16>, vector<2x32xbf16>, vector<48x32xf32> -> vector<48x32xf32>
    %829 = arith.mulf %809, %828 : vector<48x32xf32>
    %830 = arith.addf %829, %695 : vector<48x32xf32>
    %c0_466 = arith.constant 0 : index
    %c0_467 = arith.constant 0 : index
    %831 = vector.load %arg22[%c0_466, %c0_467] : memref<48x32xf32, #tpu.memory_space<vmem>>, vector<48x32xf32>
    tpu.vector_store %arg22[%c0_466, %c0_467], %830 {strides = array<i32>} : memref<48x32xf32, #tpu.memory_space<vmem>>, vector<48x32xf32>,
    return
  }
}

</mosaic_0001>

<llo_original>
// kernel: encoder_forward.1
$region0: #{encoder_forward.1}
  #allocation0 [shape = 'u32[]', space=smem, size = 0x4, offset = 0x4, fixed_abs, tag = 'smem constant byte address 0x4 - core index']
  #allocation1 [shape = 'u32[144,128]{1,0:T(1,128)}', space=vmem, size = 0x12000, scoped, tag = 'internal scratch']
  #allocation2 [shape = 'bf16[144,512]{1,0:T(16,128)(2,1)}', space=vmem, size = 0x24000, scoped, tag = 'scratch operand']
  #allocation3 [shape = 'bf16[288,128]{1,0:T(16,128)(2,1)}', space=vmem, size = 0x12000, scoped, tag = 'scratch operand']
  #allocation4 [shape = 'bf16[432,32]{1,0:T(16,128)(2,1)}', space=vmem, size = 0x1b000, scoped, tag = 'scratch operand']
  %s0 = inlined_call_operand.vmem [shape: f32[16,512], index: 0, kind: input, shape index: {}]
  %s1 = inlined_call_operand.vmem [shape: bf16[4,16,144], index: 1, kind: input, shape index: {}]
  %s2 = inlined_call_operand.vmem [shape: bf16[2,4,16], index: 2, kind: input, shape index: {}]
  %s3 = inlined_call_operand.vmem [shape: bf16[2,16,4], index: 3, kind: input, shape index: {}]
  %s4 = inlined_call_operand.vmem [shape: f32[16,512], index: 4, kind: input, shape index: {}]
  %s5 = inlined_call_operand.vmem [shape: bf16[2,512], index: 5, kind: input, shape index: {}]
  %s6 = inlined_call_operand.vmem [shape: bf16[512,128], index: 6, kind: input, shape index: {}]
  %s7 = inlined_call_operand.vmem [shape: bf16[32,16], index: 7, kind: input, shape index: {}]
  %s8 = inlined_call_operand.vmem [shape: bf16[4,32,288], index: 8, kind: input, shape index: {}]
  %s9 = inlined_call_operand.vmem [shape: bf16[2,8,32], index: 9, kind: input, shape index: {}]
  %s10 = inlined_call_operand.vmem [shape: bf16[2,32,8], index: 10, kind: input, shape index: {}]
  %s11 = inlined_call_operand.vmem [shape: f32[16,128], index: 11, kind: input, shape index: {}]
  %s12 = inlined_call_operand.vmem [shape: bf16[2,128], index: 12, kind: input, shape index: {}]
  %s13 = inlined_call_operand.vmem [shape: bf16[128,32], index: 13, kind: input, shape index: {}]
  %s14 = inlined_call_operand.vmem [shape: bf16[48,32], index: 14, kind: input, shape index: {}]
  %s15 = inlined_call_operand.vmem [shape: bf16[4,48,432], index: 15, kind: input, shape index: {}]
  %s16 = inlined_call_operand.vmem [shape: bf16[2,12,48], index: 16, kind: input, shape index: {}]
  %s17 = inlined_call_operand.vmem [shape: bf16[2,48,12], index: 17, kind: input, shape index: {}]
  %s18 = inlined_call_operand.vmem [shape: f32[16,32], index: 18, kind: input, shape index: {}]
  %s19 = inlined_call_operand.vmem [shape: bf16[2,32], index: 19, kind: input, shape index: {}]
  %s20 = inlined_call_operand.vmem [shape: f32[16,512], index: 20, kind: output, shape index: {0}]
  %s21 = inlined_call_operand.vmem [shape: f32[32,128], index: 21, kind: output, shape index: {1}]
  %s22 = inlined_call_operand.vmem [shape: f32[48,32], index: 22, kind: output, shape index: {2}]
  %23 = xla_tuple %s20, %s21, %s22
  %s24 = sld [smem:[#allocation0]]
  $region106: #{encoder_forward.1} parent=0
    _
  %s26 = ssub.s32 1, %s24
  %s27 = scalar_select 0, %s26, %s24
  // Predicated region
  $region2: #{encoder_forward.1} parent=0 // pred_check
    _
  $region3: #{encoder_forward.1} parent=0 // pred_check_branch
    %29 = sbr.rel (0) target = $region5
  $region4: #{encoder_forward.1} parent=0 // pred_region
    _
  $region5: #{encoder_forward.1} parent=0 // pred_fallthru
    _
  // Predicated region
  $region6: #{encoder_forward.1} parent=0 // pred_check
    _
  $region7: #{encoder_forward.1} parent=0 // pred_check_branch
    %31 = sbr.rel (0) target = $region9
  $region8: #{encoder_forward.1} parent=0 // pred_region
    _
  $region9: #{encoder_forward.1} parent=0 // pred_fallthru
    _
  // Predicated region
  $region10: #{encoder_forward.1} parent=0 // pred_check
    _
  $region11: #{encoder_forward.1} parent=0 // pred_check_branch
    %33 = sbr.rel (0) target = $region13
  $region12: #{encoder_forward.1} parent=0 // pred_region
    _
  $region13: #{encoder_forward.1} parent=0 // pred_fallthru
    _
  // Predicated region
  $region14: #{encoder_forward.1} parent=0 // pred_check
    _
  $region15: #{encoder_forward.1} parent=0 // pred_check_branch
    %35 = sbr.rel (0) target = $region17
  $region16: #{encoder_forward.1} parent=0 // pred_region
    _
  $region17: #{encoder_forward.1} parent=0 // pred_fallthru
    _
  // Predicated region
  $region18: #{encoder_forward.1} parent=0 // pred_check
    _
  $region19: #{encoder_forward.1} parent=0 // pred_check_branch
    %37 = sbr.rel (0) target = $region21
  $region20: #{encoder_forward.1} parent=0 // pred_region
    _
  $region21: #{encoder_forward.1} parent=0 // pred_fallthru
    _
  // Predicated region
  $region22: #{encoder_forward.1} parent=0 // pred_check
    _
  $region23: #{encoder_forward.1} parent=0 // pred_check_branch
    %39 = sbr.rel (0) target = $region25
  $region24: #{encoder_forward.1} parent=0 // pred_region
    _
  $region25: #{encoder_forward.1} parent=0 // pred_fallthru
    _
  // Predicated region
  $region26: #{encoder_forward.1} parent=0 // pred_check
    _
  $region27: #{encoder_forward.1} parent=0 // pred_check_branch
    %41 = sbr.rel (0) target = $region29
  $region28: #{encoder_forward.1} parent=0 // pred_region
    _
  $region29: #{encoder_forward.1} parent=0 // pred_fallthru
    _
  // Predicated region
  $region30: #{encoder_forward.1} parent=0 // pred_check
    _
  $region31: #{encoder_forward.1} parent=0 // pred_check_branch
    %43 = sbr.rel (0) target = $region33
  $region32: #{encoder_forward.1} parent=0 // pred_region
    _
  $region33: #{encoder_forward.1} parent=0 // pred_fallthru
    _
  // Predicated region
  $region34: #{encoder_forward.1} parent=0 // pred_check
    _
  $region35: #{encoder_forward.1} parent=0 // pred_check_branch
    %45 = sbr.rel (0) target = $region37
  $region36: #{encoder_forward.1} parent=0 // pred_region
    _
  $region37: #{encoder_forward.1} parent=0 // pred_fallthru
    _
  // Predicated region
  $region38: #{encoder_forward.1} parent=0 // pred_check
    _
  $region39: #{encoder_forward.1} parent=0 // pred_check_branch
    %47 = sbr.rel (0) target = $region41
  $region40: #{encoder_forward.1} parent=0 // pred_region
    _
  $region41: #{encoder_forward.1} parent=0 // pred_fallthru
    _
  // Predicated region
  $region42: #{encoder_forward.1} parent=0 // pred_check
    _
  $region43: #{encoder_forward.1} parent=0 // pred_check_branch
    %49 = sbr.rel (0) target = $region45
  $region44: #{encoder_forward.1} parent=0 // pred_region
    _
  $region45: #{encoder_forward.1} parent=0 // pred_fallthru
    _
  // Predicated region
  $region46: #{encoder_forward.1} parent=0 // pred_check
    _
  $region47: #{encoder_forward.1} parent=0 // pred_check_branch
    %51 = sbr.rel (0) target = $region49
  $region48: #{encoder_forward.1} parent=0 // pred_region
    _
  $region49: #{encoder_forward.1} parent=0 // pred_fallthru
    _
  // Predicated region
  $region50: #{encoder_forward.1} parent=0 // pred_check
    _
  $region51: #{encoder_forward.1} parent=0 // pred_check_branch
    %53 = sbr.rel (0) target = $region53
  $region52: #{encoder_forward.1} parent=0 // pred_region
    _
  $region53: #{encoder_forward.1} parent=0 // pred_fallthru
    _
  // Predicated region
  $region54: #{encoder_forward.1} parent=0 // pred_check
    _
  $region55: #{encoder_forward.1} parent=0 // pred_check_branch
    %55 = sbr.rel (0) target = $region57
  $region56: #{encoder_forward.1} parent=0 // pred_region
    _
  $region57: #{encoder_forward.1} parent=0 // pred_fallthru
    _
  // Predicated region
  $region58: #{encoder_forward.1} parent=0 // pred_check
    _
  $region59: #{encoder_forward.1} parent=0 // pred_check_branch
    %57 = sbr.rel (0) target = $region61
  $region60: #{encoder_forward.1} parent=0 // pred_region
    _
  $region61: #{encoder_forward.1} parent=0 // pred_fallthru
    _
  // Predicated region
  $region62: #{encoder_forward.1} parent=0 // pred_check
    _
  $region63: #{encoder_forward.1} parent=0 // pred_check_branch
    %59 = sbr.rel (0) target = $region65
  $region64: #{encoder_forward.1} parent=0 // pred_region
    _
  $region65: #{encoder_forward.1} parent=0 // pred_fallthru
    _
  // Predicated region
  $region66: #{encoder_forward.1} parent=0 // pred_check
    _
  $region67: #{encoder_forward.1} parent=0 // pred_check_branch
    %61 = sbr.rel (0) target = $region69
  $region68: #{encoder_forward.1} parent=0 // pred_region
    _
  $region69: #{encoder_forward.1} parent=0 // pred_fallthru
    _
  // Predicated region
  $region70: #{encoder_forward.1} parent=0 // pred_check
    _
  $region71: #{encoder_forward.1} parent=0 // pred_check_branch
    %63 = sbr.rel (0) target = $region73
  $region72: #{encoder_forward.1} parent=0 // pred_region
    _
  $region73: #{encoder_forward.1} parent=0 // pred_fallthru
    _
  // Predicated region
  $region74: #{encoder_forward.1} parent=0 // pred_check
    _
  $region75: #{encoder_forward.1} parent=0 // pred_check_branch
    %65 = sbr.rel (0) target = $region77
  $region76: #{encoder_forward.1} parent=0 // pred_region
    _
  $region77: #{encoder_forward.1} parent=0 // pred_fallthru
    _
  // Predicated region
  $region78: #{encoder_forward.1} parent=0 // pred_check
    _
  $region79: #{encoder_forward.1} parent=0 // pred_check_branch
    %67 = sbr.rel (0) target = $region81
  $region80: #{encoder_forward.1} parent=0 // pred_region
    _
  $region81: #{encoder_forward.1} parent=0 // pred_fallthru
    _
  %v69 = vld [vmem:[%s0] sm:$0xff]
  %v70 = vld [vmem:[%s0 + $0x8] sm:$0xff]
  %v71 = vld [vmem:[%s0 + $0x10] sm:$0xff]
  %v72 = vld [vmem:[%s0 + $0x18] sm:$0xff]
  %v73 = vld [vmem:[%s0 + $0x20] sm:$0xff]
  %v74 = vld [vmem:[%s0 + $0x28] sm:$0xff]
  %v75 = vld [vmem:[%s0 + $0x30] sm:$0xff]
  %v76 = vld [vmem:[%s0 + $0x38] sm:$0xff]
  %v77 = vld [vmem:[%s4] sm:$0xff]
  %v78 = vld [vmem:[%s4 + $0x8] sm:$0xff]
  %v79 = vld [vmem:[%s4 + $0x10] sm:$0xff]
  %v80 = vld [vmem:[%s4 + $0x18] sm:$0xff]
  %v81 = vld [vmem:[%s4 + $0x20] sm:$0xff]
  %v82 = vld [vmem:[%s4 + $0x28] sm:$0xff]
  %v83 = vld [vmem:[%s4 + $0x30] sm:$0xff]
  %v84 = vld [vmem:[%s4 + $0x38] sm:$0xff]
  %v85 = vld [vmem:[%s5] sm:$0xf]
  %v86 = vld [vmem:[%s2] sm:$0x3]
  %v87 = vld [vmem:[%s3] sm:$0xf]
  %v88 = vld [vmem:[%s3 + $0x4] sm:$0xf]
  %v89 = vld [vmem:[%s1] sm:$0xff]
  %v90 = vld [vmem:[%s1 + $0x8] sm:$0xff]
  %91 = vrot.lane.b32.xlu0 %v69, 17
  %v92 = vpop.permute.xlu0 %91
  %93 = vrot.lane.b32.xlu0 %v73, 17
  %v94 = vpop.permute.xlu0 %93
  %95 = vrot.lane.b32.xlu0 %v70, 17
  %v96 = vpop.permute.xlu0 %95
  %97 = vrot.lane.b32.xlu0 %v74, 17
  %v98 = vpop.permute.xlu0 %97
  %99 = vrot.lane.b32.xlu0 %v71, 17
  %v100 = vpop.permute.xlu0 %99
  %101 = vrot.lane.b32.xlu0 %v75, 17
  %v102 = vpop.permute.xlu0 %101
  %103 = vrot.lane.b32.xlu0 %v72, 17
  %v104 = vpop.permute.xlu0 %103
  %105 = vrot.lane.b32.xlu0 %v76, 17
  %v106 = vpop.permute.xlu0 %105
  %v107 = vlaneseq
  %v108 = vand.u32 %v107, 127
  %vm109 = vcmp.lt.s32.totalorder %v108, 17
  %v110 = vsel %vm109, %v100, %v104
  %v111 = vsel %vm109, %v102, %v106
  %v112 = vsel %vm109, %v96, %v100
  %v113 = vsel %vm109, %v98, %v102
  %v114 = vsel %vm109, %v92, %v96
  %v115 = vsel %vm109, %v94, %v98
  %v116 = vsel %vm109, %v104, %v92
  %v117 = vsel %vm109, %v106, %v94
  %v118 = vlaneseq
  %v119 = vshrl.u32 %v118, 7
  %v120 = vsub.s32 0, %v119
  %v121 = vrot.slane %v77, %v120
  %v122 = vlaneseq
  %v123 = vshrl.u32 %v122, 7
  %v124 = vsub.s32 0, %v123
  %v125 = vrot.slane %v78, %v124
  %v126 = vlaneseq
  %v127 = vshrl.u32 %v126, 7
  %v128 = vsub.s32 0, %v127
  %v129 = vrot.slane %v79, %v128
  %v130 = vlaneseq
  %v131 = vshrl.u32 %v130, 7
  %v132 = vsub.s32 0, %v131
  %v133 = vrot.slane %v80, %v132
  %v134 = vmul.f32 %v116, %v121
  %v135 = vmul.f32 %v114, %v125
  %v136 = vmul.f32 %v112, %v129
  %v137 = vmul.f32 %v110, %v133
  %v138 = vmul.f32 %v117, %v121
  %v139 = vmul.f32 %v115, %v125
  %v140 = vmul.f32 %v113, %v129
  %v141 = vmul.f32 %v111, %v133
  %v142 = vpack.c.bf16 %v138, %v134
  %v143 = vpack.c.bf16 %v139, %v135
  %v144 = vpack.c.bf16 %v140, %v136
  %v145 = vpack.c.bf16 %v141, %v137
  %146 = vst [vmem:[#allocation2] sm:$0xff] %v142
  %147 = vst [vmem:[#allocation2 + $0x8] sm:$0xff] %v143
  %148 = vst [vmem:[#allocation2 + $0x10] sm:$0xff] %v144
  %149 = vst [vmem:[#allocation2 + $0x18] sm:$0xff] %v145
  %150 = vrot.lane.b32.xlu0 %v69, 16
  %v151 = vpop.permute.xlu0 %150
  %152 = vrot.lane.b32.xlu0 %v73, 16
  %v153 = vpop.permute.xlu0 %152
  %154 = vrot.lane.b32.xlu0 %v70, 16
  %v155 = vpop.permute.xlu0 %154
  %156 = vrot.lane.b32.xlu0 %v74, 16
  %v157 = vpop.permute.xlu0 %156
  %158 = vrot.lane.b32.xlu0 %v71, 16
  %v159 = vpop.permute.xlu0 %158
  %160 = vrot.lane.b32.xlu0 %v75, 16
  %v161 = vpop.permute.xlu0 %160
  %162 = vrot.lane.b32.xlu0 %v72, 16
  %v163 = vpop.permute.xlu0 %162
  %164 = vrot.lane.b32.xlu0 %v76, 16
  %v165 = vpop.permute.xlu0 %164
  %vm166 = vcmp.lt.s32.totalorder %v108, 16
  %v167 = vsel %vm166, %v159, %v163
  %v168 = vsel %vm166, %v161, %v165
  %v169 = vsel %vm166, %v155, %v159
  %v170 = vsel %vm166, %v157, %v161
  %v171 = vsel %vm166, %v151, %v155
  %v172 = vsel %vm166, %v153, %v157
  %v173 = vsel %vm166, %v163, %v151
  %v174 = vsel %vm166, %v165, %v153
  %v175 = vlaneseq
  %v176 = vshrl.u32 %v175, 7
  %v177 = vsub.s32 1, %v176
  %v178 = vrot.slane %v77, %v177
  %v179 = vlaneseq
  %v180 = vshrl.u32 %v179, 7
  %v181 = vsub.s32 1, %v180
  %v182 = vrot.slane %v78, %v181
  %v183 = vlaneseq
  %v184 = vshrl.u32 %v183, 7
  %v185 = vsub.s32 1, %v184
  %v186 = vrot.slane %v79, %v185
  %v187 = vlaneseq
  %v188 = vshrl.u32 %v187, 7
  %v189 = vsub.s32 1, %v188
  %v190 = vrot.slane %v80, %v189
  %v191 = vmul.f32 %v173, %v178
  %v192 = vmul.f32 %v171, %v182
  %v193 = vmul.f32 %v169, %v186
  %v194 = vmul.f32 %v167, %v190
  %v195 = vmul.f32 %v174, %v178
  %v196 = vmul.f32 %v172, %v182
  %v197 = vmul.f32 %v170, %v186
  %v198 = vmul.f32 %v168, %v190
  %v199 = vpack.c.bf16 %v195, %v191
  %v200 = vpack.c.bf16 %v196, %v192
  %v201 = vpack.c.bf16 %v197, %v193
  %v202 = vpack.c.bf16 %v198, %v194
  %203 = vst [vmem:[#allocation2 + $0x20] sm:$0xff] %v199
  %204 = vst [vmem:[#allocation2 + $0x28] sm:$0xff] %v200
  %205 = vst [vmem:[#allocation2 + $0x30] sm:$0xff] %v201
  %206 = vst [vmem:[#allocation2 + $0x38] sm:$0xff] %v202
  %207 = vrot.lane.b32.xlu0 %v69, 15
  %v208 = vpop.permute.xlu0 %207
  %209 = vrot.lane.b32.xlu0 %v73, 15
  %v210 = vpop.permute.xlu0 %209
  %211 = vrot.lane.b32.xlu0 %v70, 15
  %v212 = vpop.permute.xlu0 %211
  %213 = vrot.lane.b32.xlu0 %v74, 15
  %v214 = vpop.permute.xlu0 %213
  %215 = vrot.lane.b32.xlu0 %v71, 15
  %v216 = vpop.permute.xlu0 %215
  %217 = vrot.lane.b32.xlu0 %v75, 15
  %v218 = vpop.permute.xlu0 %217
  %219 = vrot.lane.b32.xlu0 %v72, 15
  %v220 = vpop.permute.xlu0 %219
  %221 = vrot.lane.b32.xlu0 %v76, 15
  %v222 = vpop.permute.xlu0 %221
  %vm223 = vcmp.lt.s32.totalorder %v108, 15
  %v224 = vsel %vm223, %v216, %v220
  %v225 = vsel %vm223, %v218, %v222
  %v226 = vsel %vm223, %v212, %v216
  %v227 = vsel %vm223, %v214, %v218
  %v228 = vsel %vm223, %v208, %v212
  %v229 = vsel %vm223, %v210, %v214
  %v230 = vsel %vm223, %v220, %v208
  %v231 = vsel %vm223, %v222, %v210
  %v232 = vlaneseq
  %v233 = vshrl.u32 %v232, 7
  %v234 = vsub.s32 2, %v233
  %v235 = vrot.slane %v77, %v234
  %v236 = vlaneseq
  %v237 = vshrl.u32 %v236, 7
  %v238 = vsub.s32 2, %v237
  %v239 = vrot.slane %v78, %v238
  %v240 = vlaneseq
  %v241 = vshrl.u32 %v240, 7
  %v242 = vsub.s32 2, %v241
  %v243 = vrot.slane %v79, %v242
  %v244 = vlaneseq
  %v245 = vshrl.u32 %v244, 7
  %v246 = vsub.s32 2, %v245
  %v247 = vrot.slane %v80, %v246
  %v248 = vmul.f32 %v230, %v235
  %v249 = vmul.f32 %v228, %v239
  %v250 = vmul.f32 %v226, %v243
  %v251 = vmul.f32 %v224, %v247
  %v252 = vmul.f32 %v231, %v235
  %v253 = vmul.f32 %v229, %v239
  %v254 = vmul.f32 %v227, %v243
  %v255 = vmul.f32 %v225, %v247
  %v256 = vpack.c.bf16 %v252, %v248
  %v257 = vpack.c.bf16 %v253, %v249
  %v258 = vpack.c.bf16 %v254, %v250
  %v259 = vpack.c.bf16 %v255, %v251
  %260 = vst [vmem:[#allocation2 + $0x40] sm:$0xff] %v256
  %261 = vst [vmem:[#allocation2 + $0x48] sm:$0xff] %v257
  %262 = vst [vmem:[#allocation2 + $0x50] sm:$0xff] %v258
  %263 = vst [vmem:[#allocation2 + $0x58] sm:$0xff] %v259
  %264 = vrot.lane.b32.xlu0 %v69, 1
  %v265 = vpop.permute.xlu0 %264
  %266 = vrot.lane.b32.xlu0 %v73, 1
  %v267 = vpop.permute.xlu0 %266
  %268 = vrot.lane.b32.xlu0 %v70, 1
  %v269 = vpop.permute.xlu0 %268
  %270 = vrot.lane.b32.xlu0 %v74, 1
  %v271 = vpop.permute.xlu0 %270
  %272 = vrot.lane.b32.xlu0 %v71, 1
  %v273 = vpop.permute.xlu0 %272
  %274 = vrot.lane.b32.xlu0 %v75, 1
  %v275 = vpop.permute.xlu0 %274
  %276 = vrot.lane.b32.xlu0 %v72, 1
  %v277 = vpop.permute.xlu0 %276
  %278 = vrot.lane.b32.xlu0 %v76, 1
  %v279 = vpop.permute.xlu0 %278
  %vm280 = vcmp.lt.s32.totalorder %v108, 1
  %v281 = vsel %vm280, %v273, %v277
  %v282 = vsel %vm280, %v275, %v279
  %v283 = vsel %vm280, %v269, %v273
  %v284 = vsel %vm280, %v271, %v275
  %v285 = vsel %vm280, %v265, %v269
  %v286 = vsel %vm280, %v267, %v271
  %v287 = vsel %vm280, %v277, %v265
  %v288 = vsel %vm280, %v279, %v267
  %v289 = vlaneseq
  %v290 = vshrl.u32 %v289, 7
  %v291 = vsub.s32 3, %v290
  %v292 = vrot.slane %v77, %v291
  %v293 = vlaneseq
  %v294 = vshrl.u32 %v293, 7
  %v295 = vsub.s32 3, %v294
  %v296 = vrot.slane %v78, %v295
  %v297 = vlaneseq
  %v298 = vshrl.u32 %v297, 7
  %v299 = vsub.s32 3, %v298
  %v300 = vrot.slane %v79, %v299
  %v301 = vlaneseq
  %v302 = vshrl.u32 %v301, 7
  %v303 = vsub.s32 3, %v302
  %v304 = vrot.slane %v80, %v303
  %v305 = vmul.f32 %v287, %v292
  %v306 = vmul.f32 %v285, %v296
  %v307 = vmul.f32 %v283, %v300
  %v308 = vmul.f32 %v281, %v304
  %v309 = vmul.f32 %v288, %v292
  %v310 = vmul.f32 %v286, %v296
  %v311 = vmul.f32 %v284, %v300
  %v312 = vmul.f32 %v282, %v304
  %v313 = vpack.c.bf16 %v309, %v305
  %v314 = vpack.c.bf16 %v310, %v306
  %v315 = vpack.c.bf16 %v311, %v307
  %v316 = vpack.c.bf16 %v312, %v308
  %317 = vst [vmem:[#allocation2 + $0x60] sm:$0xff] %v313
  %318 = vst [vmem:[#allocation2 + $0x68] sm:$0xff] %v314
  %319 = vst [vmem:[#allocation2 + $0x70] sm:$0xff] %v315
  %320 = vst [vmem:[#allocation2 + $0x78] sm:$0xff] %v316
  %v321 = vpack.c.bf16 %v73, %v69
  %v322 = vpack.c.bf16 %v74, %v70
  %v323 = vpack.c.bf16 %v75, %v71
  %v324 = vpack.c.bf16 %v76, %v72
  %325 = vst [vmem:[#allocation2 + $0x80] sm:$0xff] %v321
  %326 = vst [vmem:[#allocation2 + $0x88] sm:$0xff] %v322
  %327 = vst [vmem:[#allocation2 + $0x90] sm:$0xff] %v323
  %328 = vst [vmem:[#allocation2 + $0x98] sm:$0xff] %v324
  %329 = vrot.lane.b32.xlu0 %v69, 127
  %v330 = vpop.permute.xlu0 %329
  %331 = vrot.lane.b32.xlu0 %v73, 127
  %v332 = vpop.permute.xlu0 %331
  %333 = vrot.lane.b32.xlu0 %v70, 127
  %v334 = vpop.permute.xlu0 %333
  %335 = vrot.lane.b32.xlu0 %v74, 127
  %v336 = vpop.permute.xlu0 %335
  %337 = vrot.lane.b32.xlu0 %v71, 127
  %v338 = vpop.permute.xlu0 %337
  %339 = vrot.lane.b32.xlu0 %v75, 127
  %v340 = vpop.permute.xlu0 %339
  %341 = vrot.lane.b32.xlu0 %v72, 127
  %v342 = vpop.permute.xlu0 %341
  %343 = vrot.lane.b32.xlu0 %v76, 127
  %v344 = vpop.permute.xlu0 %343
  %vm345 = vcmp.lt.s32.totalorder %v108, 127
  %v346 = vsel %vm345, %v338, %v342
  %v347 = vsel %vm345, %v340, %v344
  %v348 = vsel %vm345, %v334, %v338
  %v349 = vsel %vm345, %v336, %v340
  %v350 = vsel %vm345, %v330, %v334
  %v351 = vsel %vm345, %v332, %v336
  %v352 = vsel %vm345, %v342, %v330
  %v353 = vsel %vm345, %v344, %v332
  %v354 = vlaneseq
  %v355 = vshrl.u32 %v354, 7
  %v356 = vsub.s32 5, %v355
  %v357 = vrot.slane %v77, %v356
  %v358 = vlaneseq
  %v359 = vshrl.u32 %v358, 7
  %v360 = vsub.s32 5, %v359
  %v361 = vrot.slane %v78, %v360
  %v362 = vlaneseq
  %v363 = vshrl.u32 %v362, 7
  %v364 = vsub.s32 5, %v363
  %v365 = vrot.slane %v79, %v364
  %v366 = vlaneseq
  %v367 = vshrl.u32 %v366, 7
  %v368 = vsub.s32 5, %v367
  %v369 = vrot.slane %v80, %v368
  %v370 = vmul.f32 %v350, %v357
  %v371 = vmul.f32 %v348, %v361
  %v372 = vmul.f32 %v346, %v365
  %v373 = vmul.f32 %v352, %v369
  %v374 = vmul.f32 %v351, %v357
  %v375 = vmul.f32 %v349, %v361
  %v376 = vmul.f32 %v347, %v365
  %v377 = vmul.f32 %v353, %v369
  %v378 = vpack.c.bf16 %v374, %v370
  %v379 = vpack.c.bf16 %v375, %v371
  %v380 = vpack.c.bf16 %v376, %v372
  %v381 = vpack.c.bf16 %v377, %v373
  %382 = vst [vmem:[#allocation2 + $0xa0] sm:$0xff] %v378
  %383 = vst [vmem:[#allocation2 + $0xa8] sm:$0xff] %v379
  %384 = vst [vmem:[#allocation2 + $0xb0] sm:$0xff] %v380
  %385 = vst [vmem:[#allocation2 + $0xb8] sm:$0xff] %v381
  %386 = vrot.lane.b32.xlu0 %v69, 113
  %v387 = vpop.permute.xlu0 %386
  %388 = vrot.lane.b32.xlu0 %v73, 113
  %v389 = vpop.permute.xlu0 %388
  %390 = vrot.lane.b32.xlu0 %v70, 113
  %v391 = vpop.permute.xlu0 %390
  %392 = vrot.lane.b32.xlu0 %v74, 113
  %v393 = vpop.permute.xlu0 %392
  %394 = vrot.lane.b32.xlu0 %v71, 113
  %v395 = vpop.permute.xlu0 %394
  %396 = vrot.lane.b32.xlu0 %v75, 113
  %v397 = vpop.permute.xlu0 %396
  %398 = vrot.lane.b32.xlu0 %v72, 113
  %v399 = vpop.permute.xlu0 %398
  %400 = vrot.lane.b32.xlu0 %v76, 113
  %v401 = vpop.permute.xlu0 %400
  %vm402 = vcmp.lt.s32.totalorder %v108, 113
  %v403 = vsel %vm402, %v395, %v399
  %v404 = vsel %vm402, %v397, %v401
  %v405 = vsel %vm402, %v391, %v395
  %v406 = vsel %vm402, %v393, %v397
  %v407 = vsel %vm402, %v387, %v391
  %v408 = vsel %vm402, %v389, %v393
  %v409 = vsel %vm402, %v399, %v387
  %v410 = vsel %vm402, %v401, %v389
  %v411 = vlaneseq
  %v412 = vshrl.u32 %v411, 7
  %v413 = vsub.s32 6, %v412
  %v414 = vrot.slane %v77, %v413
  %v415 = vlaneseq
  %v416 = vshrl.u32 %v415, 7
  %v417 = vsub.s32 6, %v416
  %v418 = vrot.slane %v78, %v417
  %v419 = vlaneseq
  %v420 = vshrl.u32 %v419, 7
  %v421 = vsub.s32 6, %v420
  %v422 = vrot.slane %v79, %v421
  %v423 = vlaneseq
  %v424 = vshrl.u32 %v423, 7
  %v425 = vsub.s32 6, %v424
  %v426 = vrot.slane %v80, %v425
  %v427 = vmul.f32 %v407, %v414
  %v428 = vmul.f32 %v405, %v418
  %v429 = vmul.f32 %v403, %v422
  %v430 = vmul.f32 %v409, %v426
  %v431 = vmul.f32 %v408, %v414
  %v432 = vmul.f32 %v406, %v418
  %v433 = vmul.f32 %v404, %v422
  %v434 = vmul.f32 %v410, %v426
  %v435 = vpack.c.bf16 %v431, %v427
  %v436 = vpack.c.bf16 %v432, %v428
  %v437 = vpack.c.bf16 %v433, %v429
  %v438 = vpack.c.bf16 %v434, %v430
  %439 = vst [vmem:[#allocation2 + $0xc0] sm:$0xff] %v435
  %440 = vst [vmem:[#allocation2 + $0xc8] sm:$0xff] %v436
  %441 = vst [vmem:[#allocation2 + $0xd0] sm:$0xff] %v437
  %442 = vst [vmem:[#allocation2 + $0xd8] sm:$0xff] %v438
  %443 = vrot.lane.b32.xlu0 %v69, 112
  %v444 = vpop.permute.xlu0 %443
  %445 = vrot.lane.b32.xlu0 %v73, 112
  %v446 = vpop.permute.xlu0 %445
  %447 = vrot.lane.b32.xlu0 %v70, 112
  %v448 = vpop.permute.xlu0 %447
  %449 = vrot.lane.b32.xlu0 %v74, 112
  %v450 = vpop.permute.xlu0 %449
  %451 = vrot.lane.b32.xlu0 %v71, 112
  %v452 = vpop.permute.xlu0 %451
  %453 = vrot.lane.b32.xlu0 %v75, 112
  %v454 = vpop.permute.xlu0 %453
  %455 = vrot.lane.b32.xlu0 %v72, 112
  %v456 = vpop.permute.xlu0 %455
  %457 = vrot.lane.b32.xlu0 %v76, 112
  %v458 = vpop.permute.xlu0 %457
  %vm459 = vcmp.lt.s32.totalorder %v108, 112
  %v460 = vsel %vm459, %v452, %v456
  %v461 = vsel %vm459, %v454, %v458
  %v462 = vsel %vm459, %v448, %v452
  %v463 = vsel %vm459, %v450, %v454
  %v464 = vsel %vm459, %v444, %v448
  %v465 = vsel %vm459, %v446, %v450
  %v466 = vsel %vm459, %v456, %v444
  %v467 = vsel %vm459, %v458, %v446
  %v468 = vlaneseq
  %v469 = vshrl.u32 %v468, 7
  %v470 = vsub.s32 7, %v469
  %v471 = vrot.slane %v77, %v470
  %v472 = vlaneseq
  %v473 = vshrl.u32 %v472, 7
  %v474 = vsub.s32 7, %v473
  %v475 = vrot.slane %v78, %v474
  %v476 = vlaneseq
  %v477 = vshrl.u32 %v476, 7
  %v478 = vsub.s32 7, %v477
  %v479 = vrot.slane %v79, %v478
  %v480 = vlaneseq
  %v481 = vshrl.u32 %v480, 7
  %v482 = vsub.s32 7, %v481
  %v483 = vrot.slane %v80, %v482
  %v484 = vmul.f32 %v464, %v471
  %v485 = vmul.f32 %v462, %v475
  %v486 = vmul.f32 %v460, %v479
  %v487 = vmul.f32 %v466, %v483
  %v488 = vmul.f32 %v465, %v471
  %v489 = vmul.f32 %v463, %v475
  %v490 = vmul.f32 %v461, %v479
  %v491 = vmul.f32 %v467, %v483
  %v492 = vpack.c.bf16 %v488, %v484
  %v493 = vpack.c.bf16 %v489, %v485
  %v494 = vpack.c.bf16 %v490, %v486
  %v495 = vpack.c.bf16 %v491, %v487
  %496 = vst [vmem:[#allocation2 + $0xe0] sm:$0xff] %v492
  %497 = vst [vmem:[#allocation2 + $0xe8] sm:$0xff] %v493
  %498 = vst [vmem:[#allocation2 + $0xf0] sm:$0xff] %v494
  %499 = vst [vmem:[#allocation2 + $0xf8] sm:$0xff] %v495
  %500 = vrot.lane.b32.xlu0 %v69, 111
  %v501 = vpop.permute.xlu0 %500
  %502 = vrot.lane.b32.xlu0 %v73, 111
  %v503 = vpop.permute.xlu0 %502
  %504 = vrot.lane.b32.xlu0 %v70, 111
  %v505 = vpop.permute.xlu0 %504
  %506 = vrot.lane.b32.xlu0 %v74, 111
  %v507 = vpop.permute.xlu0 %506
  %508 = vrot.lane.b32.xlu0 %v71, 111
  %v509 = vpop.permute.xlu0 %508
  %510 = vrot.lane.b32.xlu0 %v75, 111
  %v511 = vpop.permute.xlu0 %510
  %512 = vrot.lane.b32.xlu0 %v72, 111
  %v513 = vpop.permute.xlu0 %512
  %514 = vrot.lane.b32.xlu0 %v76, 111
  %v515 = vpop.permute.xlu0 %514
  %vm516 = vcmp.lt.s32.totalorder %v108, 111
  %v517 = vsel %vm516, %v509, %v513
  %v518 = vsel %vm516, %v511, %v515
  %v519 = vsel %vm516, %v505, %v509
  %v520 = vsel %vm516, %v507, %v511
  %v521 = vsel %vm516, %v501, %v505
  %v522 = vsel %vm516, %v503, %v507
  %v523 = vsel %vm516, %v513, %v501
  %v524 = vsel %vm516, %v515, %v503
  %v525 = vlaneseq
  %v526 = vshrl.u32 %v525, 7
  %v527 = vsub.s32 0, %v526
  %v528 = vrot.slane %v81, %v527
  %v529 = vlaneseq
  %v530 = vshrl.u32 %v529, 7
  %v531 = vsub.s32 0, %v530
  %v532 = vrot.slane %v82, %v531
  %v533 = vlaneseq
  %v534 = vshrl.u32 %v533, 7
  %v535 = vsub.s32 0, %v534
  %v536 = vrot.slane %v83, %v535
  %v537 = vlaneseq
  %v538 = vshrl.u32 %v537, 7
  %v539 = vsub.s32 0, %v538
  %v540 = vrot.slane %v84, %v539
  %v541 = vmul.f32 %v521, %v528
  %v542 = vmul.f32 %v519, %v532
  %v543 = vmul.f32 %v517, %v536
  %v544 = vmul.f32 %v523, %v540
  %v545 = vmul.f32 %v522, %v528
  %v546 = vmul.f32 %v520, %v532
  %v547 = vmul.f32 %v518, %v536
  %v548 = vmul.f32 %v524, %v540
  %v549 = vpack.c.bf16 %v545, %v541
  %v550 = vpack.c.bf16 %v546, %v542
  %v551 = vpack.c.bf16 %v547, %v543
  %v552 = vpack.c.bf16 %v548, %v544
  %553 = vst [vmem:[#allocation2 + $0x100] sm:$0xff] %v549
  %554 = vst [vmem:[#allocation2 + $0x108] sm:$0xff] %v550
  %555 = vst [vmem:[#allocation2 + $0x110] sm:$0xff] %v551
  %556 = vst [vmem:[#allocation2 + $0x118] sm:$0xff] %v552
  %v557 = vld [vmem:[#allocation2] sm:$0xff]
  %v558 = vld [vmem:[#allocation2 + $0x8] sm:$0xff]
  %v559 = vld [vmem:[#allocation2 + $0x10] sm:$0xff]
  %v560 = vld [vmem:[#allocation2 + $0x18] sm:$0xff]
  %v561 = vld [vmem:[#allocation2 + $0x20] sm:$0xff]
  %v562 = vld [vmem:[#allocation2 + $0x28] sm:$0xff]
  %v563 = vld [vmem:[#allocation2 + $0x30] sm:$0xff]
  %v564 = vld [vmem:[#allocation2 + $0x38] sm:$0xff]
  %v565 = vld [vmem:[#allocation2 + $0x40] sm:$0xff]
  %v566 = vld [vmem:[#allocation2 + $0x48] sm:$0xff]
  %v567 = vld [vmem:[#allocation2 + $0x50] sm:$0xff]
  %v568 = vld [vmem:[#allocation2 + $0x58] sm:$0xff]
  %v569 = vld [vmem:[#allocation2 + $0x60] sm:$0xff]
  %v570 = vld [vmem:[#allocation2 + $0x68] sm:$0xff]
  %v571 = vld [vmem:[#allocation2 + $0x70] sm:$0xff]
  %v572 = vld [vmem:[#allocation2 + $0x78] sm:$0xff]
  %v573 = vld [vmem:[#allocation2 + $0x80] sm:$0xff]
  %v574 = vld [vmem:[#allocation2 + $0x88] sm:$0xff]
  %v575 = vld [vmem:[#allocation2 + $0x90] sm:$0xff]
  %v576 = vld [vmem:[#allocation2 + $0x98] sm:$0xff]
  %v577 = vld [vmem:[#allocation2 + $0xa0] sm:$0xff]
  %v578 = vld [vmem:[#allocation2 + $0xa8] sm:$0xff]
  %v579 = vld [vmem:[#allocation2 + $0xb0] sm:$0xff]
  %v580 = vld [vmem:[#allocation2 + $0xb8] sm:$0xff]
  %v581 = vld [vmem:[#allocation2 + $0xc0] sm:$0xff]
  %v582 = vld [vmem:[#allocation2 + $0xc8] sm:$0xff]
  %v583 = vld [vmem:[#allocation2 + $0xd0] sm:$0xff]
  %v584 = vld [vmem:[#allocation2 + $0xd8] sm:$0xff]
  %v585 = vld [vmem:[#allocation2 + $0xe0] sm:$0xff]
  %v586 = vld [vmem:[#allocation2 + $0xe8] sm:$0xff]
  %v587 = vld [vmem:[#allocation2 + $0xf0] sm:$0xff]
  %v588 = vld [vmem:[#allocation2 + $0xf8] sm:$0xff]
  %v589 = vld [vmem:[#allocation2 + $0x100] sm:$0xff]
  %v590 = vld [vmem:[#allocation2 + $0x108] sm:$0xff]
  %v591 = vld [vmem:[#allocation2 + $0x110] sm:$0xff]
  %v592 = vld [vmem:[#allocation2 + $0x118] sm:$0xff]
  %v595 = vunpack.c.l.b16 %v89
  %v596 = vunpack.c.h.b16 %v89
  %v597 = vunpack.c.l.b16 %v90
  %v598 = vunpack.c.h.b16 %v90
  %v599 = vpack.c.b16 %v597, %v595
  %v600 = vpack.c.b16 %v598, %v596
  %vm602 = vcmask 130048
  %v604 = vsel %vm602, %v600, 0
  %606 = vmatprep.subr.bf16.mxu0 %v558
  %607 = vmatpush1.bf16.msra.mxu0 %v557
  %608 = vmatprep.subr.bf16.mxu0 %v562
  %609 = vmatpush1.bf16.msra.mxu0 %v561
  %610 = vmatprep.subr.bf16.mxu0 %v566
  %611 = vmatpush1.bf16.msra.mxu0 %v565
  %612 = vmatprep.subr.bf16.mxu0 %v570
  %613 = vmatpush1.bf16.msra.mxu0 %v569
  %614 = vmatprep.subr.bf16.mxu0 %v574
  %615 = vmatpush1.bf16.msra.mxu0 %v573
  %616 = vmatprep.subr.bf16.mxu0 %v578
  %617 = vmatpush1.bf16.msra.mxu0 %v577
  %618 = vmatprep.subr.bf16.mxu0 %v582
  %619 = vmatpush1.bf16.msra.mxu0 %v581
  %620 = vmatprep.subr.bf16.mxu0 %v586
  %621 = vmatpush1.bf16.msra.mxu0 %v585
  %622 = vmatprep.subr.bf16.mxu0 %v590
  %623 = vmatpush1.bf16.msra.mxu0 %v589
  %624 = vmatprep.subr.bf16.mxu0 0
  %625 = vmatpush1.bf16.msra.mxu0 0
  %626 = vmatprep.subr.bf16.mxu0 0
  %627 = vmatpush1.bf16.msra.mxu0 0
  %628 = vmatprep.subr.bf16.mxu0 0
  %629 = vmatpush1.bf16.msra.mxu0 0
  %630 = vmatprep.subr.bf16.mxu0 0
  %631 = vmatpush1.bf16.msra.mxu0 0
  %632 = vmatprep.subr.bf16.mxu0 0
  %633 = vmatpush1.bf16.msra.mxu0 0
  %634 = vmatprep.subr.bf16.mxu0 0
  %635 = vmatpush1.bf16.msra.mxu0 0
  %636 = vmatprep.subr.bf16.mxu0 0
  %637 = vmatpush1.bf16.msra.mxu0 0
  %638 = vmatprep.mubr.bf16.mxu0 %v604
  %639 = vmatmul.mubr.bf16.gmra.mrb[0].mxu0 %v599
  %v640 = vpop.f32.mrb[0].mxu0
  %v641 = vadd.f32 0.0, %v640
  %v642 = vpop.f32.mrb[0].mxu0
  %v643 = vadd.f32 0.0, %v642
  %v644 = vpop.f32.mrb[0].mxu0
  %v645 = vadd.f32 0.0, %v644
  %v646 = vpop.f32.mrb[0].mxu0
  %v647 = vadd.f32 0.0, %v646
  %648 = vdwg.mxu0
  %649 = vmatprep.subr.bf16.mxu0 %v560
  %650 = vmatpush1.bf16.msra.mxu0 %v559
  %651 = vmatprep.subr.bf16.mxu0 %v564
  %652 = vmatpush1.bf16.msra.mxu0 %v563
  %653 = vmatprep.subr.bf16.mxu0 %v568
  %654 = vmatpush1.bf16.msra.mxu0 %v567
  %655 = vmatprep.subr.bf16.mxu0 %v572
  %656 = vmatpush1.bf16.msra.mxu0 %v571
  %657 = vmatprep.subr.bf16.mxu0 %v576
  %658 = vmatpush1.bf16.msra.mxu0 %v575
  %659 = vmatprep.subr.bf16.mxu0 %v580
  %660 = vmatpush1.bf16.msra.mxu0 %v579
  %661 = vmatprep.subr.bf16.mxu0 %v584
  %662 = vmatpush1.bf16.msra.mxu0 %v583
  %663 = vmatprep.subr.bf16.mxu0 %v588
  %664 = vmatpush1.bf16.msra.mxu0 %v587
  %665 = vmatprep.subr.bf16.mxu0 %v592
  %666 = vmatpush1.bf16.msra.mxu0 %v591
  %667 = vmatprep.subr.bf16.mxu0 0
  %668 = vmatpush1.bf16.msra.mxu0 0
  %669 = vmatprep.subr.bf16.mxu0 0
  %670 = vmatpush1.bf16.msra.mxu0 0
  %671 = vmatprep.subr.bf16.mxu0 0
  %672 = vmatpush1.bf16.msra.mxu0 0
  %673 = vmatprep.subr.bf16.mxu0 0
  %674 = vmatpush1.bf16.msra.mxu0 0
  %675 = vmatprep.subr.bf16.mxu0 0
  %676 = vmatpush1.bf16.msra.mxu0 0
  %677 = vmatprep.subr.bf16.mxu0 0
  %678 = vmatpush1.bf16.msra.mxu0 0
  %679 = vmatprep.subr.bf16.mxu0 0
  %680 = vmatpush1.bf16.msra.mxu0 0
  %681 = vmatprep.mubr.bf16.mxu0 %v604
  %682 = vmatmul.mubr.bf16.gmra.mrb[0].mxu0 %v599
  %v683 = vpop.f32.mrb[0].mxu0
  %v684 = vadd.f32 0.0, %v683
  %v685 = vpop.f32.mrb[0].mxu0
  %v686 = vadd.f32 0.0, %v685
  %v687 = vpop.f32.mrb[0].mxu0
  %v688 = vadd.f32 0.0, %v687
  %v689 = vpop.f32.mrb[0].mxu0
  %v690 = vadd.f32 0.0, %v689
  %691 = vdwg.mxu0
  %v692 = vmax.f32 %v641, 0.0
  %v693 = vmax.f32 %v643, 0.0
  %v694 = vmax.f32 %v684, 0.0
  %v695 = vmax.f32 %v686, 0.0
  %v696 = vmax.f32 %v645, 0.0
  %v697 = vmax.f32 %v647, 0.0
  %v698 = vmax.f32 %v688, 0.0
  %v699 = vmax.f32 %v690, 0.0
  %s700 = scalar_lea.vmem %s1, 16
  %v701 = vld [vmem:[%s700] sm:$0xff]
  %v702 = vld [vmem:[%s700 + $0x8] sm:$0xff]
  %703 = vrot.lane.b32.xlu0 %v692, 17
  %v704 = vpop.permute.xlu0 %703
  %705 = vrot.lane.b32.xlu0 %v696, 17
  %v706 = vpop.permute.xlu0 %705
  %707 = vrot.lane.b32.xlu0 %v693, 17
  %v708 = vpop.permute.xlu0 %707
  %709 = vrot.lane.b32.xlu0 %v697, 17
  %v710 = vpop.permute.xlu0 %709
  %711 = vrot.lane.b32.xlu0 %v694, 17
  %v712 = vpop.permute.xlu0 %711
  %713 = vrot.lane.b32.xlu0 %v698, 17
  %v714 = vpop.permute.xlu0 %713
  %715 = vrot.lane.b32.xlu0 %v695, 17
  %v716 = vpop.permute.xlu0 %715
  %717 = vrot.lane.b32.xlu0 %v699, 17
  %v718 = vpop.permute.xlu0 %717
  %v719 = vsel %vm109, %v712, %v716
  %v720 = vsel %vm109, %v714, %v718
  %v721 = vsel %vm109, %v708, %v712
  %v722 = vsel %vm109, %v710, %v714
  %v723 = vsel %vm109, %v704, %v708
  %v724 = vsel %vm109, %v706, %v710
  %v725 = vsel %vm109, %v716, %v704
  %v726 = vsel %vm109, %v718, %v706
  %v727 = vmul.f32 %v725, %v121
  %v728 = vmul.f32 %v723, %v125
  %v729 = vmul.f32 %v721, %v129
  %v730 = vmul.f32 %v719, %v133
  %v731 = vmul.f32 %v726, %v121
  %v732 = vmul.f32 %v724, %v125
  %v733 = vmul.f32 %v722, %v129
  %v734 = vmul.f32 %v720, %v133
  %v735 = vpack.c.bf16 %v731, %v727
  %v736 = vpack.c.bf16 %v732, %v728
  %v737 = vpack.c.bf16 %v733, %v729
  %v738 = vpack.c.bf16 %v734, %v730
  %739 = vst [vmem:[#allocation2] sm:$0xff] %v735
  %740 = vst [vmem:[#allocation2 + $0x8] sm:$0xff] %v736
  %741 = vst [vmem:[#allocation2 + $0x10] sm:$0xff] %v737
  %742 = vst [vmem:[#allocation2 + $0x18] sm:$0xff] %v738
  %743 = vrot.lane.b32.xlu0 %v692, 16
  %v744 = vpop.permute.xlu0 %743
  %745 = vrot.lane.b32.xlu0 %v696, 16
  %v746 = vpop.permute.xlu0 %745
  %747 = vrot.lane.b32.xlu0 %v693, 16
  %v748 = vpop.permute.xlu0 %747
  %749 = vrot.lane.b32.xlu0 %v697, 16
  %v750 = vpop.permute.xlu0 %749
  %751 = vrot.lane.b32.xlu0 %v694, 16
  %v752 = vpop.permute.xlu0 %751
  %753 = vrot.lane.b32.xlu0 %v698, 16
  %v754 = vpop.permute.xlu0 %753
  %755 = vrot.lane.b32.xlu0 %v695, 16
  %v756 = vpop.permute.xlu0 %755
  %757 = vrot.lane.b32.xlu0 %v699, 16
  %v758 = vpop.permute.xlu0 %757
  %v759 = vsel %vm166, %v752, %v756
  %v760 = vsel %vm166, %v754, %v758
  %v761 = vsel %vm166, %v748, %v752
  %v762 = vsel %vm166, %v750, %v754
  %v763 = vsel %vm166, %v744, %v748
  %v764 = vsel %vm166, %v746, %v750
  %v765 = vsel %vm166, %v756, %v744
  %v766 = vsel %vm166, %v758, %v746
  %v767 = vmul.f32 %v765, %v178
  %v768 = vmul.f32 %v763, %v182
  %v769 = vmul.f32 %v761, %v186
  %v770 = vmul.f32 %v759, %v190
  %v771 = vmul.f32 %v766, %v178
  %v772 = vmul.f32 %v764, %v182
  %v773 = vmul.f32 %v762, %v186
  %v774 = vmul.f32 %v760, %v190
  %v775 = vpack.c.bf16 %v771, %v767
  %v776 = vpack.c.bf16 %v772, %v768
  %v777 = vpack.c.bf16 %v773, %v769
  %v778 = vpack.c.bf16 %v774, %v770
  %779 = vst [vmem:[#allocation2 + $0x20] sm:$0xff] %v775
  %780 = vst [vmem:[#allocation2 + $0x28] sm:$0xff] %v776
  %781 = vst [vmem:[#allocation2 + $0x30] sm:$0xff] %v777
  %782 = vst [vmem:[#allocation2 + $0x38] sm:$0xff] %v778
  %783 = vrot.lane.b32.xlu0 %v692, 15
  %v784 = vpop.permute.xlu0 %783
  %785 = vrot.lane.b32.xlu0 %v696, 15
  %v786 = vpop.permute.xlu0 %785
  %787 = vrot.lane.b32.xlu0 %v693, 15
  %v788 = vpop.permute.xlu0 %787
  %789 = vrot.lane.b32.xlu0 %v697, 15
  %v790 = vpop.permute.xlu0 %789
  %791 = vrot.lane.b32.xlu0 %v694, 15
  %v792 = vpop.permute.xlu0 %791
  %793 = vrot.lane.b32.xlu0 %v698, 15
  %v794 = vpop.permute.xlu0 %793
  %795 = vrot.lane.b32.xlu0 %v695, 15
  %v796 = vpop.permute.xlu0 %795
  %797 = vrot.lane.b32.xlu0 %v699, 15
  %v798 = vpop.permute.xlu0 %797
  %v799 = vsel %vm223, %v792, %v796
  %v800 = vsel %vm223, %v794, %v798
  %v801 = vsel %vm223, %v788, %v792
  %v802 = vsel %vm223, %v790, %v794
  %v803 = vsel %vm223, %v784, %v788
  %v804 = vsel %vm223, %v786, %v790
  %v805 = vsel %vm223, %v796, %v784
  %v806 = vsel %vm223, %v798, %v786
  %v807 = vmul.f32 %v805, %v235
  %v808 = vmul.f32 %v803, %v239
  %v809 = vmul.f32 %v801, %v243
  %v810 = vmul.f32 %v799, %v247
  %v811 = vmul.f32 %v806, %v235
  %v812 = vmul.f32 %v804, %v239
  %v813 = vmul.f32 %v802, %v243
  %v814 = vmul.f32 %v800, %v247
  %v815 = vpack.c.bf16 %v811, %v807
  %v816 = vpack.c.bf16 %v812, %v808
  %v817 = vpack.c.bf16 %v813, %v809
  %v818 = vpack.c.bf16 %v814, %v810
  %819 = vst [vmem:[#allocation2 + $0x40] sm:$0xff] %v815
  %820 = vst [vmem:[#allocation2 + $0x48] sm:$0xff] %v816
  %821 = vst [vmem:[#allocation2 + $0x50] sm:$0xff] %v817
  %822 = vst [vmem:[#allocation2 + $0x58] sm:$0xff] %v818
  %823 = vrot.lane.b32.xlu0 %v692, 1
  %v824 = vpop.permute.xlu0 %823
  %825 = vrot.lane.b32.xlu0 %v696, 1
  %v826 = vpop.permute.xlu0 %825
  %827 = vrot.lane.b32.xlu0 %v693, 1
  %v828 = vpop.permute.xlu0 %827
  %829 = vrot.lane.b32.xlu0 %v697, 1
  %v830 = vpop.permute.xlu0 %829
  %831 = vrot.lane.b32.xlu0 %v694, 1
  %v832 = vpop.permute.xlu0 %831
  %833 = vrot.lane.b32.xlu0 %v698, 1
  %v834 = vpop.permute.xlu0 %833
  %835 = vrot.lane.b32.xlu0 %v695, 1
  %v836 = vpop.permute.xlu0 %835
  %837 = vrot.lane.b32.xlu0 %v699, 1
  %v838 = vpop.permute.xlu0 %837
  %v839 = vsel %vm280, %v832, %v836
  %v840 = vsel %vm280, %v834, %v838
  %v841 = vsel %vm280, %v828, %v832
  %v842 = vsel %vm280, %v830, %v834
  %v843 = vsel %vm280, %v824, %v828
  %v844 = vsel %vm280, %v826, %v830
  %v845 = vsel %vm280, %v836, %v824
  %v846 = vsel %vm280, %v838, %v826
  %v847 = vmul.f32 %v845, %v292
  %v848 = vmul.f32 %v843, %v296
  %v849 = vmul.f32 %v841, %v300
  %v850 = vmul.f32 %v839, %v304
  %v851 = vmul.f32 %v846, %v292
  %v852 = vmul.f32 %v844, %v296
  %v853 = vmul.f32 %v842, %v300
  %v854 = vmul.f32 %v840, %v304
  %v855 = vpack.c.bf16 %v851, %v847
  %v856 = vpack.c.bf16 %v852, %v848
  %v857 = vpack.c.bf16 %v853, %v849
  %v858 = vpack.c.bf16 %v854, %v850
  %859 = vst [vmem:[#allocation2 + $0x60] sm:$0xff] %v855
  %860 = vst [vmem:[#allocation2 + $0x68] sm:$0xff] %v856
  %861 = vst [vmem:[#allocation2 + $0x70] sm:$0xff] %v857
  %862 = vst [vmem:[#allocation2 + $0x78] sm:$0xff] %v858
  %v863 = vpack.c.bf16 %v696, %v692
  %v864 = vpack.c.bf16 %v697, %v693
  %v865 = vpack.c.bf16 %v698, %v694
  %v866 = vpack.c.bf16 %v699, %v695
  %867 = vst [vmem:[#allocation2 + $0x80] sm:$0xff] %v863
  %868 = vst [vmem:[#allocation2 + $0x88] sm:$0xff] %v864
  %869 = vst [vmem:[#allocation2 + $0x90] sm:$0xff] %v865
  %870 = vst [vmem:[#allocation2 + $0x98] sm:$0xff] %v866
  %871 = vrot.lane.b32.xlu0 %v692, 127
  %v872 = vpop.permute.xlu0 %871
  %873 = vrot.lane.b32.xlu0 %v696, 127
  %v874 = vpop.permute.xlu0 %873
  %875 = vrot.lane.b32.xlu0 %v693, 127
  %v876 = vpop.permute.xlu0 %875
  %877 = vrot.lane.b32.xlu0 %v697, 127
  %v878 = vpop.permute.xlu0 %877
  %879 = vrot.lane.b32.xlu0 %v694, 127
  %v880 = vpop.permute.xlu0 %879
  %881 = vrot.lane.b32.xlu0 %v698, 127
  %v882 = vpop.permute.xlu0 %881
  %883 = vrot.lane.b32.xlu0 %v695, 127
  %v884 = vpop.permute.xlu0 %883
  %885 = vrot.lane.b32.xlu0 %v699, 127
  %v886 = vpop.permute.xlu0 %885
  %v887 = vsel %vm345, %v880, %v884
  %v888 = vsel %vm345, %v882, %v886
  %v889 = vsel %vm345, %v876, %v880
  %v890 = vsel %vm345, %v878, %v882
  %v891 = vsel %vm345, %v872, %v876
  %v892 = vsel %vm345, %v874, %v878
  %v893 = vsel %vm345, %v884, %v872
  %v894 = vsel %vm345, %v886, %v874
  %v895 = vmul.f32 %v891, %v357
  %v896 = vmul.f32 %v889, %v361
  %v897 = vmul.f32 %v887, %v365
  %v898 = vmul.f32 %v893, %v369
  %v899 = vmul.f32 %v892, %v357
  %v900 = vmul.f32 %v890, %v361
  %v901 = vmul.f32 %v888, %v365
  %v902 = vmul.f32 %v894, %v369
  %v903 = vpack.c.bf16 %v899, %v895
  %v904 = vpack.c.bf16 %v900, %v896
  %v905 = vpack.c.bf16 %v901, %v897
  %v906 = vpack.c.bf16 %v902, %v898
  %907 = vst [vmem:[#allocation2 + $0xa0] sm:$0xff] %v903
  %908 = vst [vmem:[#allocation2 + $0xa8] sm:$0xff] %v904
  %909 = vst [vmem:[#allocation2 + $0xb0] sm:$0xff] %v905
  %910 = vst [vmem:[#allocation2 + $0xb8] sm:$0xff] %v906
  %911 = vrot.lane.b32.xlu0 %v692, 113
  %v912 = vpop.permute.xlu0 %911
  %913 = vrot.lane.b32.xlu0 %v696, 113
  %v914 = vpop.permute.xlu0 %913
  %915 = vrot.lane.b32.xlu0 %v693, 113
  %v916 = vpop.permute.xlu0 %915
  %917 = vrot.lane.b32.xlu0 %v697, 113
  %v918 = vpop.permute.xlu0 %917
  %919 = vrot.lane.b32.xlu0 %v694, 113
  %v920 = vpop.permute.xlu0 %919
  %921 = vrot.lane.b32.xlu0 %v698, 113
  %v922 = vpop.permute.xlu0 %921
  %923 = vrot.lane.b32.xlu0 %v695, 113
  %v924 = vpop.permute.xlu0 %923
  %925 = vrot.lane.b32.xlu0 %v699, 113
  %v926 = vpop.permute.xlu0 %925
  %v927 = vsel %vm402, %v920, %v924
  %v928 = vsel %vm402, %v922, %v926
  %v929 = vsel %vm402, %v916, %v920
  %v930 = vsel %vm402, %v918, %v922
  %v931 = vsel %vm402, %v912, %v916
  %v932 = vsel %vm402, %v914, %v918
  %v933 = vsel %vm402, %v924, %v912
  %v934 = vsel %vm402, %v926, %v914
  %v935 = vmul.f32 %v931, %v414
  %v936 = vmul.f32 %v929, %v418
  %v937 = vmul.f32 %v927, %v422
  %v938 = vmul.f32 %v933, %v426
  %v939 = vmul.f32 %v932, %v414
  %v940 = vmul.f32 %v930, %v418
  %v941 = vmul.f32 %v928, %v422
  %v942 = vmul.f32 %v934, %v426
  %v943 = vpack.c.bf16 %v939, %v935
  %v944 = vpack.c.bf16 %v940, %v936
  %v945 = vpack.c.bf16 %v941, %v937
  %v946 = vpack.c.bf16 %v942, %v938
  %947 = vst [vmem:[#allocation2 + $0xc0] sm:$0xff] %v943
  %948 = vst [vmem:[#allocation2 + $0xc8] sm:$0xff] %v944
  %949 = vst [vmem:[#allocation2 + $0xd0] sm:$0xff] %v945
  %950 = vst [vmem:[#allocation2 + $0xd8] sm:$0xff] %v946
  %951 = vrot.lane.b32.xlu0 %v692, 112
  %v952 = vpop.permute.xlu0 %951
  %953 = vrot.lane.b32.xlu0 %v696, 112
  %v954 = vpop.permute.xlu0 %953
  %955 = vrot.lane.b32.xlu0 %v693, 112
  %v956 = vpop.permute.xlu0 %955
  %957 = vrot.lane.b32.xlu0 %v697, 112
  %v958 = vpop.permute.xlu0 %957
  %959 = vrot.lane.b32.xlu0 %v694, 112
  %v960 = vpop.permute.xlu0 %959
  %961 = vrot.lane.b32.xlu0 %v698, 112
  %v962 = vpop.permute.xlu0 %961
  %963 = vrot.lane.b32.xlu0 %v695, 112
  %v964 = vpop.permute.xlu0 %963
  %965 = vrot.lane.b32.xlu0 %v699, 112
  %v966 = vpop.permute.xlu0 %965
  %v967 = vsel %vm459, %v960, %v964
  %v968 = vsel %vm459, %v962, %v966
  %v969 = vsel %vm459, %v956, %v960
  %v970 = vsel %vm459, %v958, %v962
  %v971 = vsel %vm459, %v952, %v956
  %v972 = vsel %vm459, %v954, %v958
  %v973 = vsel %vm459, %v964, %v952
  %v974 = vsel %vm459, %v966, %v954
  %v975 = vmul.f32 %v971, %v471
  %v976 = vmul.f32 %v969, %v475
  %v977 = vmul.f32 %v967, %v479
  %v978 = vmul.f32 %v973, %v483
  %v979 = vmul.f32 %v972, %v471
  %v980 = vmul.f32 %v970, %v475
  %v981 = vmul.f32 %v968, %v479
  %v982 = vmul.f32 %v974, %v483
  %v983 = vpack.c.bf16 %v979, %v975
  %v984 = vpack.c.bf16 %v980, %v976
  %v985 = vpack.c.bf16 %v981, %v977
  %v986 = vpack.c.bf16 %v982, %v978
  %987 = vst [vmem:[#allocation2 + $0xe0] sm:$0xff] %v983
  %988 = vst [vmem:[#allocation2 + $0xe8] sm:$0xff] %v984
  %989 = vst [vmem:[#allocation2 + $0xf0] sm:$0xff] %v985
  %990 = vst [vmem:[#allocation2 + $0xf8] sm:$0xff] %v986
  %991 = vrot.lane.b32.xlu0 %v692, 111
  %v992 = vpop.permute.xlu0 %991
  %993 = vrot.lane.b32.xlu0 %v696, 111
  %v994 = vpop.permute.xlu0 %993
  %995 = vrot.lane.b32.xlu0 %v693, 111
  %v996 = vpop.permute.xlu0 %995
  %997 = vrot.lane.b32.xlu0 %v697, 111
  %v998 = vpop.permute.xlu0 %997
  %999 = vrot.lane.b32.xlu0 %v694, 111
  %v1000 = vpop.permute.xlu0 %999
  %1001 = vrot.lane.b32.xlu0 %v698, 111
  %v1002 = vpop.permute.xlu0 %1001
  %1003 = vrot.lane.b32.xlu0 %v695, 111
  %v1004 = vpop.permute.xlu0 %1003
  %1005 = vrot.lane.b32.xlu0 %v699, 111
  %v1006 = vpop.permute.xlu0 %1005
  %v1007 = vsel %vm516, %v1000, %v1004
  %v1008 = vsel %vm516, %v1002, %v1006
  %v1009 = vsel %vm516, %v996, %v1000
  %v1010 = vsel %vm516, %v998, %v1002
  %v1011 = vsel %vm516, %v992, %v996
  %v1012 = vsel %vm516, %v994, %v998
  %v1013 = vsel %vm516, %v1004, %v992
  %v1014 = vsel %vm516, %v1006, %v994
  %v1015 = vmul.f32 %v1011, %v528
  %v1016 = vmul.f32 %v1009, %v532
  %v1017 = vmul.f32 %v1007, %v536
  %v1018 = vmul.f32 %v1013, %v540
  %v1019 = vmul.f32 %v1012, %v528
  %v1020 = vmul.f32 %v1010, %v532
  %v1021 = vmul.f32 %v1008, %v536
  %v1022 = vmul.f32 %v1014, %v540
  %v1023 = vpack.c.bf16 %v1019, %v1015
  %v1024 = vpack.c.bf16 %v1020, %v1016
  %v1025 = vpack.c.bf16 %v1021, %v1017
  %v1026 = vpack.c.bf16 %v1022, %v1018
  %1027 = vst [vmem:[#allocation2 + $0x100] sm:$0xff] %v1023
  %1028 = vst [vmem:[#allocation2 + $0x108] sm:$0xff] %v1024
  %1029 = vst [vmem:[#allocation2 + $0x110] sm:$0xff] %v1025
  %1030 = vst [vmem:[#allocation2 + $0x118] sm:$0xff] %v1026
  %v1031 = vld [vmem:[#allocation2] sm:$0xff]
  %v1032 = vld [vmem:[#allocation2 + $0x8] sm:$0xff]
  %v1033 = vld [vmem:[#allocation2 + $0x10] sm:$0xff]
  %v1034 = vld [vmem:[#allocation2 + $0x18] sm:$0xff]
  %v1035 = vld [vmem:[#allocation2 + $0x20] sm:$0xff]
  %v1036 = vld [vmem:[#allocation2 + $0x28] sm:$0xff]
  %v1037 = vld [vmem:[#allocation2 + $0x30] sm:$0xff]
  %v1038 = vld [vmem:[#allocation2 + $0x38] sm:$0xff]
  %v1039 = vld [vmem:[#allocation2 + $0x40] sm:$0xff]
  %v1040 = vld [vmem:[#allocation2 + $0x48] sm:$0xff]
  %v1041 = vld [vmem:[#allocation2 + $0x50] sm:$0xff]
  %v1042 = vld [vmem:[#allocation2 + $0x58] sm:$0xff]
  %v1043 = vld [vmem:[#allocation2 + $0x60] sm:$0xff]
  %v1044 = vld [vmem:[#allocation2 + $0x68] sm:$0xff]
  %v1045 = vld [vmem:[#allocation2 + $0x70] sm:$0xff]
  %v1046 = vld [vmem:[#allocation2 + $0x78] sm:$0xff]
  %v1047 = vld [vmem:[#allocation2 + $0x80] sm:$0xff]
  %v1048 = vld [vmem:[#allocation2 + $0x88] sm:$0xff]
  %v1049 = vld [vmem:[#allocation2 + $0x90] sm:$0xff]
  %v1050 = vld [vmem:[#allocation2 + $0x98] sm:$0xff]
  %v1051 = vld [vmem:[#allocation2 + $0xa0] sm:$0xff]
  %v1052 = vld [vmem:[#allocation2 + $0xa8] sm:$0xff]
  %v1053 = vld [vmem:[#allocation2 + $0xb0] sm:$0xff]
  %v1054 = vld [vmem:[#allocation2 + $0xb8] sm:$0xff]
  %v1055 = vld [vmem:[#allocation2 + $0xc0] sm:$0xff]
  %v1056 = vld [vmem:[#allocation2 + $0xc8] sm:$0xff]
  %v1057 = vld [vmem:[#allocation2 + $0xd0] sm:$0xff]
  %v1058 = vld [vmem:[#allocation2 + $0xd8] sm:$0xff]
  %v1059 = vld [vmem:[#allocation2 + $0xe0] sm:$0xff]
  %v1060 = vld [vmem:[#allocation2 + $0xe8] sm:$0xff]
  %v1061 = vld [vmem:[#allocation2 + $0xf0] sm:$0xff]
  %v1062 = vld [vmem:[#allocation2 + $0xf8] sm:$0xff]
  %v1063 = vld [vmem:[#allocation2 + $0x100] sm:$0xff]
  %v1064 = vld [vmem:[#allocation2 + $0x108] sm:$0xff]
  %v1065 = vld [vmem:[#allocation2 + $0x110] sm:$0xff]
  %v1066 = vld [vmem:[#allocation2 + $0x118] sm:$0xff]
  %v1069 = vunpack.c.l.b16 %v701
  %v1070 = vunpack.c.h.b16 %v701
  %v1071 = vunpack.c.l.b16 %v702
  %v1072 = vunpack.c.h.b16 %v702
  %v1073 = vpack.c.b16 %v1071, %v1069
  %v1074 = vpack.c.b16 %v1072, %v1070
  %v1077 = vsel %vm602, %v1074, 0
  %1079 = vmatprep.subr.bf16.mxu0 %v1032
  %1080 = vmatpush1.bf16.msra.mxu0 %v1031
  %1081 = vmatprep.subr.bf16.mxu0 %v1036
  %1082 = vmatpush1.bf16.msra.mxu0 %v1035
  %1083 = vmatprep.subr.bf16.mxu0 %v1040
  %1084 = vmatpush1.bf16.msra.mxu0 %v1039
  %1085 = vmatprep.subr.bf16.mxu0 %v1044
  %1086 = vmatpush1.bf16.msra.mxu0 %v1043
  %1087 = vmatprep.subr.bf16.mxu0 %v1048
  %1088 = vmatpush1.bf16.msra.mxu0 %v1047
  %1089 = vmatprep.subr.bf16.mxu0 %v1052
  %1090 = vmatpush1.bf16.msra.mxu0 %v1051
  %1091 = vmatprep.subr.bf16.mxu0 %v1056
  %1092 = vmatpush1.bf16.msra.mxu0 %v1055
  %1093 = vmatprep.subr.bf16.mxu0 %v1060
  %1094 = vmatpush1.bf16.msra.mxu0 %v1059
  %1095 = vmatprep.subr.bf16.mxu0 %v1064
  %1096 = vmatpush1.bf16.msra.mxu0 %v1063
  %1097 = vmatprep.subr.bf16.mxu0 0
  %1098 = vmatpush1.bf16.msra.mxu0 0
  %1099 = vmatprep.subr.bf16.mxu0 0
  %1100 = vmatpush1.bf16.msra.mxu0 0
  %1101 = vmatprep.subr.bf16.mxu0 0
  %1102 = vmatpush1.bf16.msra.mxu0 0
  %1103 = vmatprep.subr.bf16.mxu0 0
  %1104 = vmatpush1.bf16.msra.mxu0 0
  %1105 = vmatprep.subr.bf16.mxu0 0
  %1106 = vmatpush1.bf16.msra.mxu0 0
  %1107 = vmatprep.subr.bf16.mxu0 0
  %1108 = vmatpush1.bf16.msra.mxu0 0
  %1109 = vmatprep.subr.bf16.mxu0 0
  %1110 = vmatpush1.bf16.msra.mxu0 0
  %1111 = vmatprep.mubr.bf16.mxu0 %v1077
  %1112 = vmatmul.mubr.bf16.gmra.mrb[0].mxu0 %v1073
  %v1113 = vpop.f32.mrb[0].mxu0
  %v1114 = vadd.f32 0.0, %v1113
  %v1115 = vpop.f32.mrb[0].mxu0
  %v1116 = vadd.f32 0.0, %v1115
  %v1117 = vpop.f32.mrb[0].mxu0
  %v1118 = vadd.f32 0.0, %v1117
  %v1119 = vpop.f32.mrb[0].mxu0
  %v1120 = vadd.f32 0.0, %v1119
  %1121 = vdwg.mxu0
  %1122 = vmatprep.subr.bf16.mxu0 %v1034
  %1123 = vmatpush1.bf16.msra.mxu0 %v1033
  %1124 = vmatprep.subr.bf16.mxu0 %v1038
  %1125 = vmatpush1.bf16.msra.mxu0 %v1037
  %1126 = vmatprep.subr.bf16.mxu0 %v1042
  %1127 = vmatpush1.bf16.msra.mxu0 %v1041
  %1128 = vmatprep.subr.bf16.mxu0 %v1046
  %1129 = vmatpush1.bf16.msra.mxu0 %v1045
  %1130 = vmatprep.subr.bf16.mxu0 %v1050
  %1131 = vmatpush1.bf16.msra.mxu0 %v1049
  %1132 = vmatprep.subr.bf16.mxu0 %v1054
  %1133 = vmatpush1.bf16.msra.mxu0 %v1053
  %1134 = vmatprep.subr.bf16.mxu0 %v1058
  %1135 = vmatpush1.bf16.msra.mxu0 %v1057
  %1136 = vmatprep.subr.bf16.mxu0 %v1062
  %1137 = vmatpush1.bf16.msra.mxu0 %v1061
  %1138 = vmatprep.subr.bf16.mxu0 %v1066
  %1139 = vmatpush1.bf16.msra.mxu0 %v1065
  %1140 = vmatprep.subr.bf16.mxu0 0
  %1141 = vmatpush1.bf16.msra.mxu0 0
  %1142 = vmatprep.subr.bf16.mxu0 0
  %1143 = vmatpush1.bf16.msra.mxu0 0
  %1144 = vmatprep.subr.bf16.mxu0 0
  %1145 = vmatpush1.bf16.msra.mxu0 0
  %1146 = vmatprep.subr.bf16.mxu0 0
  %1147 = vmatpush1.bf16.msra.mxu0 0
  %1148 = vmatprep.subr.bf16.mxu0 0
  %1149 = vmatpush1.bf16.msra.mxu0 0
  %1150 = vmatprep.subr.bf16.mxu0 0
  %1151 = vmatpush1.bf16.msra.mxu0 0
  %1152 = vmatprep.subr.bf16.mxu0 0
  %1153 = vmatpush1.bf16.msra.mxu0 0
  %1154 = vmatprep.mubr.bf16.mxu0 %v1077
  %1155 = vmatmul.mubr.bf16.gmra.mrb[0].mxu0 %v1073
  %v1156 = vpop.f32.mrb[0].mxu0
  %v1157 = vadd.f32 0.0, %v1156
  %v1158 = vpop.f32.mrb[0].mxu0
  %v1159 = vadd.f32 0.0, %v1158
  %v1160 = vpop.f32.mrb[0].mxu0
  %v1161 = vadd.f32 0.0, %v1160
  %v1162 = vpop.f32.mrb[0].mxu0
  %v1163 = vadd.f32 0.0, %v1162
  %1164 = vdwg.mxu0
  %v1165 = vpack.c.bf16 %v1118, %v1114
  %v1166 = vpack.c.bf16 %v1120, %v1116
  %v1167 = vpack.c.bf16 %v1161, %v1157
  %v1168 = vpack.c.bf16 %v1163, %v1159
  %v1171 = vunpack.c.l.s4 1966171168
  %v1172 = vunpack.c.0.s8 %v1171
  %v1173 = vlaneseq
  %v1174 = vshrl.u32 %v1173, 7
  %v1175 = vsub.s32 %v1172, %v1174
  %v1176 = vrot.slane %v85, %v1175
  %v1177 = vcombine.high %v1176, %v1176
  %v1179 = vunpack.c.l.s4 1966171168
  %v1180 = vunpack.c.0.s8 %v1179
  %v1181 = vlaneseq
  %v1182 = vshrl.u32 %v1181, 7
  %v1183 = vsub.s32 %v1180, %v1182
  %v1184 = vrot.slane %v1176, %v1183
  %v1186 = vunpack.c.l.s4 1966171168
  %v1187 = vunpack.c.0.s8 %v1186
  %v1188 = vlaneseq
  %v1189 = vshrl.u32 %v1188, 7
  %v1190 = vsub.s32 %v1187, %v1189
  %v1191 = vrot.slane %v1177, %v1190
  %v1192 = vcombine.high %v1184, %v1184
  %v1193 = vcombine.high %v1191, %v1191
  %1198 = vmatprep.subr.bf16.mxu0 %v1191
  %1199 = vmatpush1.bf16.xpose.msra.mxu0 %v1184
  %1200 = vmatprep.subr.bf16.mxu0 0
  %1201 = vmatpush1.bf16.xpose.msra.mxu0 0
  %1202 = vmatprep.subr.bf16.mxu0 0
  %1203 = vmatpush1.bf16.xpose.msra.mxu0 0
  %1204 = vmatprep.subr.bf16.mxu0 0
  %1205 = vmatpush1.bf16.xpose.msra.mxu0 0
  %1206 = vmatprep.subr.bf16.mxu0 0
  %1207 = vmatpush1.bf16.xpose.msra.mxu0 0
  %1208 = vmatprep.subr.bf16.mxu0 0
  %1209 = vmatpush1.bf16.xpose.msra.mxu0 0
  %1210 = vmatprep.subr.bf16.mxu0 0
  %1211 = vmatpush1.bf16.xpose.msra.mxu0 0
  %1212 = vmatprep.subr.bf16.mxu0 0
  %1213 = vmatpush1.bf16.xpose.msra.mxu0 0
  %1214 = vmatprep.subr.bf16.mxu0 0
  %1215 = vmatpush1.bf16.xpose.msra.mxu0 0
  %1216 = vmatprep.subr.bf16.mxu0 0
  %1217 = vmatpush1.bf16.xpose.msra.mxu0 0
  %1218 = vmatprep.subr.bf16.mxu0 0
  %1219 = vmatpush1.bf16.xpose.msra.mxu0 0
  %1220 = vmatprep.subr.bf16.mxu0 0
  %1221 = vmatpush1.bf16.xpose.msra.mxu0 0
  %1222 = vmatprep.subr.bf16.mxu0 0
  %1223 = vmatpush1.bf16.xpose.msra.mxu0 0
  %1224 = vmatprep.subr.bf16.mxu0 0
  %1225 = vmatpush1.bf16.xpose.msra.mxu0 0
  %1226 = vmatprep.subr.bf16.mxu0 0
  %1227 = vmatpush1.bf16.xpose.msra.mxu0 0
  %1228 = vmatprep.subr.bf16.mxu0 0
  %1229 = vmatpush1.bf16.xpose.msra.mxu0 0
  %1230 = vmatprep.mubr.bf16.mxu0 %v1166
  %1231 = vmatmul.mubr.bf16.gmra.mrb[0].mxu0 %v1165
  %v1232 = vpop.f32.mrb[0].mxu0
  %v1233 = vadd.f32 0.0, %v1232
  %v1234 = vpop.f32.mrb[0].mxu0
  %v1235 = vpop.f32.mrb[0].mxu0
  %v1236 = vadd.f32 0.0, %v1235
  %v1237 = vpop.f32.mrb[0].mxu0
  %1238 = vdwg.mxu0
  %1239 = vmatprep.subr.bf16.mxu0 %v1193
  %1240 = vmatpush1.bf16.xpose.msra.mxu0 %v1192
  %1241 = vmatprep.subr.bf16.mxu0 0
  %1242 = vmatpush1.bf16.xpose.msra.mxu0 0
  %1243 = vmatprep.subr.bf16.mxu0 0
  %1244 = vmatpush1.bf16.xpose.msra.mxu0 0
  %1245 = vmatprep.subr.bf16.mxu0 0
  %1246 = vmatpush1.bf16.xpose.msra.mxu0 0
  %1247 = vmatprep.subr.bf16.mxu0 0
  %1248 = vmatpush1.bf16.xpose.msra.mxu0 0
  %1249 = vmatprep.subr.bf16.mxu0 0
  %1250 = vmatpush1.bf16.xpose.msra.mxu0 0
  %1251 = vmatprep.subr.bf16.mxu0 0
  %1252 = vmatpush1.bf16.xpose.msra.mxu0 0
  %1253 = vmatprep.subr.bf16.mxu0 0
  %1254 = vmatpush1.bf16.xpose.msra.mxu0 0
  %1255 = vmatprep.subr.bf16.mxu0 0
  %1256 = vmatpush1.bf16.xpose.msra.mxu0 0
  %1257 = vmatprep.subr.bf16.mxu0 0
  %1258 = vmatpush1.bf16.xpose.msra.mxu0 0
  %1259 = vmatprep.subr.bf16.mxu0 0
  %1260 = vmatpush1.bf16.xpose.msra.mxu0 0
  %1261 = vmatprep.subr.bf16.mxu0 0
  %1262 = vmatpush1.bf16.xpose.msra.mxu0 0
  %1263 = vmatprep.subr.bf16.mxu0 0
  %1264 = vmatpush1.bf16.xpose.msra.mxu0 0
  %1265 = vmatprep.subr.bf16.mxu0 0
  %1266 = vmatpush1.bf16.xpose.msra.mxu0 0
  %1267 = vmatprep.subr.bf16.mxu0 0
  %1268 = vmatpush1.bf16.xpose.msra.mxu0 0
  %1269 = vmatprep.subr.bf16.mxu0 0
  %1270 = vmatpush1.bf16.xpose.msra.mxu0 0
  %1271 = vmatprep.mubr.bf16.mxu0 %v1168
  %1272 = vmatmul.mubr.bf16.gmra.mrb[0].mxu0 %v1167
  %v1273 = vpop.f32.mrb[0].mxu0
  %v1274 = vadd.f32 %v1233, %v1273
  %v1275 = vpop.f32.mrb[0].mxu0
  %v1276 = vpop.f32.mrb[0].mxu0
  %v1277 = vadd.f32 %v1236, %v1276
  %v1278 = vpop.f32.mrb[0].mxu0
  %1279 = vdwg.mxu0
  %v1280 = vmul.f32 %v1274, 0.00390625
  %v1281 = vmul.f32 %v1277, 0.00390625
  %v1282 = vpack.c.bf16 %v1281, %v1280
  %v1284 = vsel %vm602, %v86, 0
  %1286 = vmatprep.subr.bf16.mxu0 0
  %1287 = vmatpush1.bf16.msra.mxu0 %v1282
  %1288 = vmatprep.subr.bf16.mxu0 0
  %1289 = vmatpush1.bf16.msra.mxu0 0
  %1290 = vmatprep.subr.bf16.mxu0 0
  %1291 = vmatpush1.bf16.msra.mxu0 0
  %1292 = vmatprep.subr.bf16.mxu0 0
  %1293 = vmatpush1.bf16.msra.mxu0 0
  %1294 = vmatprep.subr.bf16.mxu0 0
  %1295 = vmatpush1.bf16.msra.mxu0 0
  %1296 = vmatprep.subr.bf16.mxu0 0
  %1297 = vmatpush1.bf16.msra.mxu0 0
  %1298 = vmatprep.subr.bf16.mxu0 0
  %1299 = vmatpush1.bf16.msra.mxu0 0
  %1300 = vmatprep.subr.bf16.mxu0 0
  %1301 = vmatpush1.bf16.msra.mxu0 0
  %1302 = vmatprep.subr.bf16.mxu0 0
  %1303 = vmatpush1.bf16.msra.mxu0 0
  %1304 = vmatprep.subr.bf16.mxu0 0
  %1305 = vmatpush1.bf16.msra.mxu0 0
  %1306 = vmatprep.subr.bf16.mxu0 0
  %1307 = vmatpush1.bf16.msra.mxu0 0
  %1308 = vmatprep.subr.bf16.mxu0 0
  %1309 = vmatpush1.bf16.msra.mxu0 0
  %1310 = vmatprep.subr.bf16.mxu0 0
  %1311 = vmatpush1.bf16.msra.mxu0 0
  %1312 = vmatprep.subr.bf16.mxu0 0
  %1313 = vmatpush1.bf16.msra.mxu0 0
  %1314 = vmatprep.subr.bf16.mxu0 0
  %1315 = vmatpush1.bf16.msra.mxu0 0
  %1316 = vmatprep.subr.bf16.mxu0 0
  %1317 = vmatpush1.bf16.msra.mxu0 0
  %1318 = vmatprep.mubr.bf16.mxu0 0
  %1319 = vmatmul.mubr.bf16.gmra.mrb[0].mxu0 %v1284
  %v1320 = vpop.f32.mrb[0].mxu0
  %v1321 = vadd.f32 0.0, %v1320
  %v1322 = vpop.f32.mrb[0].mxu0
  %v1323 = vpop.f32.mrb[0].mxu0
  %v1324 = vpop.f32.mrb[0].mxu0
  %1325 = vdwg.mxu0
  %v1326 = vmax.f32 %v1321, 0.0
  %v1327 = vpack.c.bf16 %v1326, %v1326
  %v1330 = vunpack.c.l.b16 %v87
  %v1331 = vunpack.c.l.b16 %v88
  %v1332 = vpack.c.b16 %v1331, %v1330
  %vm1333 = vcmask 31744
  %v1335 = vsel %vm1333, %v1332, 0
  %vm1337 = vcmask 1041408
  %v1339 = vsel %vm1337, %v1327, 0
  %1341 = vmatprep.subr.bf16.mxu0 0
  %1342 = vmatpush1.bf16.msra.mxu0 %v1339
  %1343 = vmatprep.subr.bf16.mxu0 0
  %1344 = vmatpush1.bf16.msra.mxu0 0
  %1345 = vmatprep.subr.bf16.mxu0 0
  %1346 = vmatpush1.bf16.msra.mxu0 0
  %1347 = vmatprep.subr.bf16.mxu0 0
  %1348 = vmatpush1.bf16.msra.mxu0 0
  %1349 = vmatprep.subr.bf16.mxu0 0
  %1350 = vmatpush1.bf16.msra.mxu0 0
  %1351 = vmatprep.subr.bf16.mxu0 0
  %1352 = vmatpush1.bf16.msra.mxu0 0
  %1353 = vmatprep.subr.bf16.mxu0 0
  %1354 = vmatpush1.bf16.msra.mxu0 0
  %1355 = vmatprep.subr.bf16.mxu0 0
  %1356 = vmatpush1.bf16.msra.mxu0 0
  %1357 = vmatprep.subr.bf16.mxu0 0
  %1358 = vmatpush1.bf16.msra.mxu0 0
  %1359 = vmatprep.subr.bf16.mxu0 0
  %1360 = vmatpush1.bf16.msra.mxu0 0
  %1361 = vmatprep.subr.bf16.mxu0 0
  %1362 = vmatpush1.bf16.msra.mxu0 0
  %1363 = vmatprep.subr.bf16.mxu0 0
  %1364 = vmatpush1.bf16.msra.mxu0 0
  %1365 = vmatprep.subr.bf16.mxu0 0
  %1366 = vmatpush1.bf16.msra.mxu0 0
  %1367 = vmatprep.subr.bf16.mxu0 0
  %1368 = vmatpush1.bf16.msra.mxu0 0
  %1369 = vmatprep.subr.bf16.mxu0 0
  %1370 = vmatpush1.bf16.msra.mxu0 0
  %1371 = vmatprep.subr.bf16.mxu0 0
  %1372 = vmatpush1.bf16.msra.mxu0 0
  %1373 = vmatprep.mubr.bf16.mxu0 0
  %1374 = vmatmul.mubr.bf16.gmra.mrb[0].mxu0 %v1335
  %v1375 = vpop.f32.mrb[0].mxu0
  %v1376 = vadd.f32 0.0, %v1375
  %v1377 = vpop.f32.mrb[0].mxu0
  %v1378 = vpop.f32.mrb[0].mxu0
  %v1379 = vadd.f32 0.0, %v1378
  %v1380 = vpop.f32.mrb[0].mxu0
  %1381 = vdwg.mxu0
  %v1382 = vmul.f32 %v1376, 0.5
  %v1383 = vmul.f32 %v1379, 0.5
  %v1384 = vtanh.pop %v1382
  %v1385 = vtanh.pop %v1383
  %v1386 = vadd.f32 %v1384, 1.0
  %v1387 = vadd.f32 %v1385, 1.0
  %v1388 = vmul.f32 %v1386, 0.5
  %v1389 = vmul.f32 %v1387, 0.5
  %v1390 = vpack.c.bf16 %v1389, %v1388
  %vm1391 = vcmask 15360
  %v1393 = vsel %vm1391, %v1390, 0
  %vm1395 = vcmask 1040384
  %v1397 = vsel %vm1395, %v1184, 0
  %v1400 = vsel %vm1395, %v1191, 0
  %v1403 = vsel %vm1395, %v1192, 0
  %v1406 = vsel %vm1395, %v1193, 0
  %1408 = vmatprep.subr.bf16.mxu0 %v1400
  %1409 = vmatpush1.bf16.msra.mxu0 %v1397
  %1410 = vmatprep.subr.bf16.mxu0 0
  %1411 = vmatpush1.bf16.msra.mxu0 0
  %1412 = vmatprep.subr.bf16.mxu0 0
  %1413 = vmatpush1.bf16.msra.mxu0 0
  %1414 = vmatprep.subr.bf16.mxu0 0
  %1415 = vmatpush1.bf16.msra.mxu0 0
  %1416 = vmatprep.subr.bf16.mxu0 0
  %1417 = vmatpush1.bf16.msra.mxu0 0
  %1418 = vmatprep.subr.bf16.mxu0 0
  %1419 = vmatpush1.bf16.msra.mxu0 0
  %1420 = vmatprep.subr.bf16.mxu0 0
  %1421 = vmatpush1.bf16.msra.mxu0 0
  %1422 = vmatprep.subr.bf16.mxu0 0
  %1423 = vmatpush1.bf16.msra.mxu0 0
  %1424 = vmatprep.subr.bf16.mxu0 0
  %1425 = vmatpush1.bf16.msra.mxu0 0
  %1426 = vmatprep.subr.bf16.mxu0 0
  %1427 = vmatpush1.bf16.msra.mxu0 0
  %1428 = vmatprep.subr.bf16.mxu0 0
  %1429 = vmatpush1.bf16.msra.mxu0 0
  %1430 = vmatprep.subr.bf16.mxu0 0
  %1431 = vmatpush1.bf16.msra.mxu0 0
  %1432 = vmatprep.subr.bf16.mxu0 0
  %1433 = vmatpush1.bf16.msra.mxu0 0
  %1434 = vmatprep.subr.bf16.mxu0 0
  %1435 = vmatpush1.bf16.msra.mxu0 0
  %1436 = vmatprep.subr.bf16.mxu0 0
  %1437 = vmatpush1.bf16.msra.mxu0 0
  %1438 = vmatprep.subr.bf16.mxu0 0
  %1439 = vmatpush1.bf16.msra.mxu0 0
  %1440 = vmatprep.mubr.bf16.mxu0 0
  %1441 = vmatmul.mubr.bf16.gmra.mrb[0].mxu0 %v1393
  %v1442 = vpop.f32.mrb[0].mxu0
  %v1443 = vadd.f32 0.0, %v1442
  %v1444 = vpop.f32.mrb[0].mxu0
  %v1445 = vadd.f32 0.0, %v1444
  %v1446 = vpop.f32.mrb[0].mxu0
  %v1447 = vadd.f32 0.0, %v1446
  %v1448 = vpop.f32.mrb[0].mxu0
  %v1449 = vadd.f32 0.0, %v1448
  %1450 = vdwg.mxu0
  %1451 = vmatprep.subr.bf16.mxu0 %v1406
  %1452 = vmatpush1.bf16.msra.mxu0 %v1403
  %1453 = vmatprep.subr.bf16.mxu0 0
  %1454 = vmatpush1.bf16.msra.mxu0 0
  %1455 = vmatprep.subr.bf16.mxu0 0
  %1456 = vmatpush1.bf16.msra.mxu0 0
  %1457 = vmatprep.subr.bf16.mxu0 0
  %1458 = vmatpush1.bf16.msra.mxu0 0
  %1459 = vmatprep.subr.bf16.mxu0 0
  %1460 = vmatpush1.bf16.msra.mxu0 0
  %1461 = vmatprep.subr.bf16.mxu0 0
  %1462 = vmatpush1.bf16.msra.mxu0 0
  %1463 = vmatprep.subr.bf16.mxu0 0
  %1464 = vmatpush1.bf16.msra.mxu0 0
  %1465 = vmatprep.subr.bf16.mxu0 0
  %1466 = vmatpush1.bf16.msra.mxu0 0
  %1467 = vmatprep.subr.bf16.mxu0 0
  %1468 = vmatpush1.bf16.msra.mxu0 0
  %1469 = vmatprep.subr.bf16.mxu0 0
  %1470 = vmatpush1.bf16.msra.mxu0 0
  %1471 = vmatprep.subr.bf16.mxu0 0
  %1472 = vmatpush1.bf16.msra.mxu0 0
  %1473 = vmatprep.subr.bf16.mxu0 0
  %1474 = vmatpush1.bf16.msra.mxu0 0
  %1475 = vmatprep.subr.bf16.mxu0 0
  %1476 = vmatpush1.bf16.msra.mxu0 0
  %1477 = vmatprep.subr.bf16.mxu0 0
  %1478 = vmatpush1.bf16.msra.mxu0 0
  %1479 = vmatprep.subr.bf16.mxu0 0
  %1480 = vmatpush1.bf16.msra.mxu0 0
  %1481 = vmatprep.subr.bf16.mxu0 0
  %1482 = vmatpush1.bf16.msra.mxu0 0
  %1483 = vmatprep.mubr.bf16.mxu0 0
  %1484 = vmatmul.mubr.bf16.gmra.mrb[0].mxu0 %v1393
  %v1485 = vpop.f32.mrb[0].mxu0
  %v1486 = vadd.f32 0.0, %v1485
  %v1487 = vpop.f32.mrb[0].mxu0
  %v1488 = vadd.f32 0.0, %v1487
  %v1489 = vpop.f32.mrb[0].mxu0
  %v1490 = vadd.f32 0.0, %v1489
  %v1491 = vpop.f32.mrb[0].mxu0
  %v1492 = vadd.f32 0.0, %v1491
  %1493 = vdwg.mxu0
  %v1494 = vmul.f32 %v1114, %v1443
  %v1495 = vmul.f32 %v1116, %v1445
  %v1496 = vmul.f32 %v1157, %v1486
  %v1497 = vmul.f32 %v1159, %v1488
  %v1498 = vmul.f32 %v1118, %v1447
  %v1499 = vmul.f32 %v1120, %v1449
  %v1500 = vmul.f32 %v1161, %v1490
  %v1501 = vmul.f32 %v1163, %v1492
  %v1502 = vadd.f32 %v1494, %v69
  %v1503 = vadd.f32 %v1495, %v70
  %v1504 = vadd.f32 %v1496, %v71
  %v1505 = vadd.f32 %v1497, %v72
  %v1506 = vadd.f32 %v1498, %v73
  %v1507 = vadd.f32 %v1499, %v74
  %v1508 = vadd.f32 %v1500, %v75
  %v1509 = vadd.f32 %v1501, %v76
  %s1510 = scalar_lea.vmem %s2, 2
  %v1511 = vld [vmem:[%s1510] sm:$0x3]
  %s1512 = scalar_lea.vmem %s3, 8
  %v1513 = vld [vmem:[%s1512] sm:$0xf]
  %v1514 = vld [vmem:[%s1512 + $0x4] sm:$0xf]
  %s1515 = scalar_lea.vmem %s1, 32
  %v1516 = vld [vmem:[%s1515] sm:$0xff]
  %v1517 = vld [vmem:[%s1515 + $0x8] sm:$0xff]
  %1518 = vrot.lane.b32.xlu0 %v1502, 17
  %v1519 = vpop.permute.xlu0 %1518
  %1520 = vrot.lane.b32.xlu0 %v1506, 17
  %v1521 = vpop.permute.xlu0 %1520
  %1522 = vrot.lane.b32.xlu0 %v1503, 17
  %v1523 = vpop.permute.xlu0 %1522
  %1524 = vrot.lane.b32.xlu0 %v1507, 17
  %v1525 = vpop.permute.xlu0 %1524
  %1526 = vrot.lane.b32.xlu0 %v1504, 17
  %v1527 = vpop.permute.xlu0 %1526
  %1528 = vrot.lane.b32.xlu0 %v1508, 17
  %v1529 = vpop.permute.xlu0 %1528
  %1530 = vrot.lane.b32.xlu0 %v1505, 17
  %v1531 = vpop.permute.xlu0 %1530
  %1532 = vrot.lane.b32.xlu0 %v1509, 17
  %v1533 = vpop.permute.xlu0 %1532
  %v1534 = vsel %vm109, %v1527, %v1531
  %v1535 = vsel %vm109, %v1529, %v1533
  %v1536 = vsel %vm109, %v1523, %v1527
  %v1537 = vsel %vm109, %v1525, %v1529
  %v1538 = vsel %vm109, %v1519, %v1523
  %v1539 = vsel %vm109, %v1521, %v1525
  %v1540 = vsel %vm109, %v1531, %v1519
  %v1541 = vsel %vm109, %v1533, %v1521
  %v1542 = vmul.f32 %v1540, %v121
  %v1543 = vmul.f32 %v1538, %v125
  %v1544 = vmul.f32 %v1536, %v129
  %v1545 = vmul.f32 %v1534, %v133
  %v1546 = vmul.f32 %v1541, %v121
  %v1547 = vmul.f32 %v1539, %v125
  %v1548 = vmul.f32 %v1537, %v129
  %v1549 = vmul.f32 %v1535, %v133
  %v1550 = vpack.c.bf16 %v1546, %v1542
  %v1551 = vpack.c.bf16 %v1547, %v1543
  %v1552 = vpack.c.bf16 %v1548, %v1544
  %v1553 = vpack.c.bf16 %v1549, %v1545
  %1554 = vst [vmem:[#allocation2] sm:$0xff] %v1550
  %1555 = vst [vmem:[#allocation2 + $0x8] sm:$0xff] %v1551
  %1556 = vst [vmem:[#allocation2 + $0x10] sm:$0xff] %v1552
  %1557 = vst [vmem:[#allocation2 + $0x18] sm:$0xff] %v1553
  %1558 = vrot.lane.b32.xlu0 %v1502, 16
  %v1559 = vpop.permute.xlu0 %1558
  %1560 = vrot.lane.b32.xlu0 %v1506, 16
  %v1561 = vpop.permute.xlu0 %1560
  %1562 = vrot.lane.b32.xlu0 %v1503, 16
  %v1563 = vpop.permute.xlu0 %1562
  %1564 = vrot.lane.b32.xlu0 %v1507, 16
  %v1565 = vpop.permute.xlu0 %1564
  %1566 = vrot.lane.b32.xlu0 %v1504, 16
  %v1567 = vpop.permute.xlu0 %1566
  %1568 = vrot.lane.b32.xlu0 %v1508, 16
  %v1569 = vpop.permute.xlu0 %1568
  %1570 = vrot.lane.b32.xlu0 %v1505, 16
  %v1571 = vpop.permute.xlu0 %1570
  %1572 = vrot.lane.b32.xlu0 %v1509, 16
  %v1573 = vpop.permute.xlu0 %1572
  %v1574 = vsel %vm166, %v1567, %v1571
  %v1575 = vsel %vm166, %v1569, %v1573
  %v1576 = vsel %vm166, %v1563, %v1567
  %v1577 = vsel %vm166, %v1565, %v1569
  %v1578 = vsel %vm166, %v1559, %v1563
  %v1579 = vsel %vm166, %v1561, %v1565
  %v1580 = vsel %vm166, %v1571, %v1559
  %v1581 = vsel %vm166, %v1573, %v1561
  %v1582 = vmul.f32 %v1580, %v178
  %v1583 = vmul.f32 %v1578, %v182
  %v1584 = vmul.f32 %v1576, %v186
  %v1585 = vmul.f32 %v1574, %v190
  %v1586 = vmul.f32 %v1581, %v178
  %v1587 = vmul.f32 %v1579, %v182
  %v1588 = vmul.f32 %v1577, %v186
  %v1589 = vmul.f32 %v1575, %v190
  %v1590 = vpack.c.bf16 %v1586, %v1582
  %v1591 = vpack.c.bf16 %v1587, %v1583
  %v1592 = vpack.c.bf16 %v1588, %v1584
  %v1593 = vpack.c.bf16 %v1589, %v1585
  %1594 = vst [vmem:[#allocation2 + $0x20] sm:$0xff] %v1590
  %1595 = vst [vmem:[#allocation2 + $0x28] sm:$0xff] %v1591
  %1596 = vst [vmem:[#allocation2 + $0x30] sm:$0xff] %v1592
  %1597 = vst [vmem:[#allocation2 + $0x38] sm:$0xff] %v1593
  %1598 = vrot.lane.b32.xlu0 %v1502, 15
  %v1599 = vpop.permute.xlu0 %1598
  %1600 = vrot.lane.b32.xlu0 %v1506, 15
  %v1601 = vpop.permute.xlu0 %1600
  %1602 = vrot.lane.b32.xlu0 %v1503, 15
  %v1603 = vpop.permute.xlu0 %1602
  %1604 = vrot.lane.b32.xlu0 %v1507, 15
  %v1605 = vpop.permute.xlu0 %1604
  %1606 = vrot.lane.b32.xlu0 %v1504, 15
  %v1607 = vpop.permute.xlu0 %1606
  %1608 = vrot.lane.b32.xlu0 %v1508, 15
  %v1609 = vpop.permute.xlu0 %1608
  %1610 = vrot.lane.b32.xlu0 %v1505, 15
  %v1611 = vpop.permute.xlu0 %1610
  %1612 = vrot.lane.b32.xlu0 %v1509, 15
  %v1613 = vpop.permute.xlu0 %1612
  %v1614 = vsel %vm223, %v1607, %v1611
  %v1615 = vsel %vm223, %v1609, %v1613
  %v1616 = vsel %vm223, %v1603, %v1607
  %v1617 = vsel %vm223, %v1605, %v1609
  %v1618 = vsel %vm223, %v1599, %v1603
  %v1619 = vsel %vm223, %v1601, %v1605
  %v1620 = vsel %vm223, %v1611, %v1599
  %v1621 = vsel %vm223, %v1613, %v1601
  %v1622 = vmul.f32 %v1620, %v235
  %v1623 = vmul.f32 %v1618, %v239
  %v1624 = vmul.f32 %v1616, %v243
  %v1625 = vmul.f32 %v1614, %v247
  %v1626 = vmul.f32 %v1621, %v235
  %v1627 = vmul.f32 %v1619, %v239
  %v1628 = vmul.f32 %v1617, %v243
  %v1629 = vmul.f32 %v1615, %v247
  %v1630 = vpack.c.bf16 %v1626, %v1622
  %v1631 = vpack.c.bf16 %v1627, %v1623
  %v1632 = vpack.c.bf16 %v1628, %v1624
  %v1633 = vpack.c.bf16 %v1629, %v1625
  %1634 = vst [vmem:[#allocation2 + $0x40] sm:$0xff] %v1630
  %1635 = vst [vmem:[#allocation2 + $0x48] sm:$0xff] %v1631
  %1636 = vst [vmem:[#allocation2 + $0x50] sm:$0xff] %v1632
  %1637 = vst [vmem:[#allocation2 + $0x58] sm:$0xff] %v1633
  %1638 = vrot.lane.b32.xlu0 %v1502, 1
  %v1639 = vpop.permute.xlu0 %1638
  %1640 = vrot.lane.b32.xlu0 %v1506, 1
  %v1641 = vpop.permute.xlu0 %1640
  %1642 = vrot.lane.b32.xlu0 %v1503, 1
  %v1643 = vpop.permute.xlu0 %1642
  %1644 = vrot.lane.b32.xlu0 %v1507, 1
  %v1645 = vpop.permute.xlu0 %1644
  %1646 = vrot.lane.b32.xlu0 %v1504, 1
  %v1647 = vpop.permute.xlu0 %1646
  %1648 = vrot.lane.b32.xlu0 %v1508, 1
  %v1649 = vpop.permute.xlu0 %1648
  %1650 = vrot.lane.b32.xlu0 %v1505, 1
  %v1651 = vpop.permute.xlu0 %1650
  %1652 = vrot.lane.b32.xlu0 %v1509, 1
  %v1653 = vpop.permute.xlu0 %1652
  %v1654 = vsel %vm280, %v1647, %v1651
  %v1655 = vsel %vm280, %v1649, %v1653
  %v1656 = vsel %vm280, %v1643, %v1647
  %v1657 = vsel %vm280, %v1645, %v1649
  %v1658 = vsel %vm280, %v1639, %v1643
  %v1659 = vsel %vm280, %v1641, %v1645
  %v1660 = vsel %vm280, %v1651, %v1639
  %v1661 = vsel %vm280, %v1653, %v1641
  %v1662 = vmul.f32 %v1660, %v292
  %v1663 = vmul.f32 %v1658, %v296
  %v1664 = vmul.f32 %v1656, %v300
  %v1665 = vmul.f32 %v1654, %v304
  %v1666 = vmul.f32 %v1661, %v292
  %v1667 = vmul.f32 %v1659, %v296
  %v1668 = vmul.f32 %v1657, %v300
  %v1669 = vmul.f32 %v1655, %v304
  %v1670 = vpack.c.bf16 %v1666, %v1662
  %v1671 = vpack.c.bf16 %v1667, %v1663
  %v1672 = vpack.c.bf16 %v1668, %v1664
  %v1673 = vpack.c.bf16 %v1669, %v1665
  %1674 = vst [vmem:[#allocation2 + $0x60] sm:$0xff] %v1670
  %1675 = vst [vmem:[#allocation2 + $0x68] sm:$0xff] %v1671
  %1676 = vst [vmem:[#allocation2 + $0x70] sm:$0xff] %v1672
  %1677 = vst [vmem:[#allocation2 + $0x78] sm:$0xff] %v1673
  %v1678 = vpack.c.bf16 %v1506, %v1502
  %v1679 = vpack.c.bf16 %v1507, %v1503
  %v1680 = vpack.c.bf16 %v1508, %v1504
  %v1681 = vpack.c.bf16 %v1509, %v1505
  %1682 = vst [vmem:[#allocation2 + $0x80] sm:$0xff] %v1678
  %1683 = vst [vmem:[#allocation2 + $0x88] sm:$0xff] %v1679
  %1684 = vst [vmem:[#allocation2 + $0x90] sm:$0xff] %v1680
  %1685 = vst [vmem:[#allocation2 + $0x98] sm:$0xff] %v1681
  %1686 = vrot.lane.b32.xlu0 %v1502, 127
  %v1687 = vpop.permute.xlu0 %1686
  %1688 = vrot.lane.b32.xlu0 %v1506, 127
  %v1689 = vpop.permute.xlu0 %1688
  %1690 = vrot.lane.b32.xlu0 %v1503, 127
  %v1691 = vpop.permute.xlu0 %1690
  %1692 = vrot.lane.b32.xlu0 %v1507, 127
  %v1693 = vpop.permute.xlu0 %1692
  %1694 = vrot.lane.b32.xlu0 %v1504, 127
  %v1695 = vpop.permute.xlu0 %1694
  %1696 = vrot.lane.b32.xlu0 %v1508, 127
  %v1697 = vpop.permute.xlu0 %1696
  %1698 = vrot.lane.b32.xlu0 %v1505, 127
  %v1699 = vpop.permute.xlu0 %1698
  %1700 = vrot.lane.b32.xlu0 %v1509, 127
  %v1701 = vpop.permute.xlu0 %1700
  %v1702 = vsel %vm345, %v1695, %v1699
  %v1703 = vsel %vm345, %v1697, %v1701
  %v1704 = vsel %vm345, %v1691, %v1695
  %v1705 = vsel %vm345, %v1693, %v1697
  %v1706 = vsel %vm345, %v1687, %v1691
  %v1707 = vsel %vm345, %v1689, %v1693
  %v1708 = vsel %vm345, %v1699, %v1687
  %v1709 = vsel %vm345, %v1701, %v1689
  %v1710 = vmul.f32 %v1706, %v357
  %v1711 = vmul.f32 %v1704, %v361
  %v1712 = vmul.f32 %v1702, %v365
  %v1713 = vmul.f32 %v1708, %v369
  %v1714 = vmul.f32 %v1707, %v357
  %v1715 = vmul.f32 %v1705, %v361
  %v1716 = vmul.f32 %v1703, %v365
  %v1717 = vmul.f32 %v1709, %v369
  %v1718 = vpack.c.bf16 %v1714, %v1710
  %v1719 = vpack.c.bf16 %v1715, %v1711
  %v1720 = vpack.c.bf16 %v1716, %v1712
  %v1721 = vpack.c.bf16 %v1717, %v1713
  %1722 = vst [vmem:[#allocation2 + $0xa0] sm:$0xff] %v1718
  %1723 = vst [vmem:[#allocation2 + $0xa8] sm:$0xff] %v1719
  %1724 = vst [vmem:[#allocation2 + $0xb0] sm:$0xff] %v1720
  %1725 = vst [vmem:[#allocation2 + $0xb8] sm:$0xff] %v1721
  %1726 = vrot.lane.b32.xlu0 %v1502, 113
  %v1727 = vpop.permute.xlu0 %1726
  %1728 = vrot.lane.b32.xlu0 %v1506, 113
  %v1729 = vpop.permute.xlu0 %1728
  %1730 = vrot.lane.b32.xlu0 %v1503, 113
  %v1731 = vpop.permute.xlu0 %1730
  %1732 = vrot.lane.b32.xlu0 %v1507, 113
  %v1733 = vpop.permute.xlu0 %1732
  %1734 = vrot.lane.b32.xlu0 %v1504, 113
  %v1735 = vpop.permute.xlu0 %1734
  %1736 = vrot.lane.b32.xlu0 %v1508, 113
  %v1737 = vpop.permute.xlu0 %1736
  %1738 = vrot.lane.b32.xlu0 %v1505, 113
  %v1739 = vpop.permute.xlu0 %1738
  %1740 = vrot.lane.b32.xlu0 %v1509, 113
  %v1741 = vpop.permute.xlu0 %1740
  %v1742 = vsel %vm402, %v1735, %v1739
  %v1743 = vsel %vm402, %v1737, %v1741
  %v1744 = vsel %vm402, %v1731, %v1735
  %v1745 = vsel %vm402, %v1733, %v1737
  %v1746 = vsel %vm402, %v1727, %v1731
  %v1747 = vsel %vm402, %v1729, %v1733
  %v1748 = vsel %vm402, %v1739, %v1727
  %v1749 = vsel %vm402, %v1741, %v1729
  %v1750 = vmul.f32 %v1746, %v414
  %v1751 = vmul.f32 %v1744, %v418
  %v1752 = vmul.f32 %v1742, %v422
  %v1753 = vmul.f32 %v1748, %v426
  %v1754 = vmul.f32 %v1747, %v414
  %v1755 = vmul.f32 %v1745, %v418
  %v1756 = vmul.f32 %v1743, %v422
  %v1757 = vmul.f32 %v1749, %v426
  %v1758 = vpack.c.bf16 %v1754, %v1750
  %v1759 = vpack.c.bf16 %v1755, %v1751
  %v1760 = vpack.c.bf16 %v1756, %v1752
  %v1761 = vpack.c.bf16 %v1757, %v1753
  %1762 = vst [vmem:[#allocation2 + $0xc0] sm:$0xff] %v1758
  %1763 = vst [vmem:[#allocation2 + $0xc8] sm:$0xff] %v1759
  %1764 = vst [vmem:[#allocation2 + $0xd0] sm:$0xff] %v1760
  %1765 = vst [vmem:[#allocation2 + $0xd8] sm:$0xff] %v1761
  %1766 = vrot.lane.b32.xlu0 %v1502, 112
  %v1767 = vpop.permute.xlu0 %1766
  %1768 = vrot.lane.b32.xlu0 %v1506, 112
  %v1769 = vpop.permute.xlu0 %1768
  %1770 = vrot.lane.b32.xlu0 %v1503, 112
  %v1771 = vpop.permute.xlu0 %1770
  %1772 = vrot.lane.b32.xlu0 %v1507, 112
  %v1773 = vpop.permute.xlu0 %1772
  %1774 = vrot.lane.b32.xlu0 %v1504, 112
  %v1775 = vpop.permute.xlu0 %1774
  %1776 = vrot.lane.b32.xlu0 %v1508, 112
  %v1777 = vpop.permute.xlu0 %1776
  %1778 = vrot.lane.b32.xlu0 %v1505, 112
  %v1779 = vpop.permute.xlu0 %1778
  %1780 = vrot.lane.b32.xlu0 %v1509, 112
  %v1781 = vpop.permute.xlu0 %1780
  %v1782 = vsel %vm459, %v1775, %v1779
  %v1783 = vsel %vm459, %v1777, %v1781
  %v1784 = vsel %vm459, %v1771, %v1775
  %v1785 = vsel %vm459, %v1773, %v1777
  %v1786 = vsel %vm459, %v1767, %v1771
  %v1787 = vsel %vm459, %v1769, %v1773
  %v1788 = vsel %vm459, %v1779, %v1767
  %v1789 = vsel %vm459, %v1781, %v1769
  %v1790 = vmul.f32 %v1786, %v471
  %v1791 = vmul.f32 %v1784, %v475
  %v1792 = vmul.f32 %v1782, %v479
  %v1793 = vmul.f32 %v1788, %v483
  %v1794 = vmul.f32 %v1787, %v471
  %v1795 = vmul.f32 %v1785, %v475
  %v1796 = vmul.f32 %v1783, %v479
  %v1797 = vmul.f32 %v1789, %v483
  %v1798 = vpack.c.bf16 %v1794, %v1790
  %v1799 = vpack.c.bf16 %v1795, %v1791
  %v1800 = vpack.c.bf16 %v1796, %v1792
  %v1801 = vpack.c.bf16 %v1797, %v1793
  %1802 = vst [vmem:[#allocation2 + $0xe0] sm:$0xff] %v1798
  %1803 = vst [vmem:[#allocation2 + $0xe8] sm:$0xff] %v1799
  %1804 = vst [vmem:[#allocation2 + $0xf0] sm:$0xff] %v1800
  %1805 = vst [vmem:[#allocation2 + $0xf8] sm:$0xff] %v1801
  %1806 = vrot.lane.b32.xlu0 %v1502, 111
  %v1807 = vpop.permute.xlu0 %1806
  %1808 = vrot.lane.b32.xlu0 %v1506, 111
  %v1809 = vpop.permute.xlu0 %1808
  %1810 = vrot.lane.b32.xlu0 %v1503, 111
  %v1811 = vpop.permute.xlu0 %1810
  %1812 = vrot.lane.b32.xlu0 %v1507, 111
  %v1813 = vpop.permute.xlu0 %1812
  %1814 = vrot.lane.b32.xlu0 %v1504, 111
  %v1815 = vpop.permute.xlu0 %1814
  %1816 = vrot.lane.b32.xlu0 %v1508, 111
  %v1817 = vpop.permute.xlu0 %1816
  %1818 = vrot.lane.b32.xlu0 %v1505, 111
  %v1819 = vpop.permute.xlu0 %1818
  %1820 = vrot.lane.b32.xlu0 %v1509, 111
  %v1821 = vpop.permute.xlu0 %1820
  %v1822 = vsel %vm516, %v1815, %v1819
  %v1823 = vsel %vm516, %v1817, %v1821
  %v1824 = vsel %vm516, %v1811, %v1815
  %v1825 = vsel %vm516, %v1813, %v1817
  %v1826 = vsel %vm516, %v1807, %v1811
  %v1827 = vsel %vm516, %v1809, %v1813
  %v1828 = vsel %vm516, %v1819, %v1807
  %v1829 = vsel %vm516, %v1821, %v1809
  %v1830 = vmul.f32 %v1826, %v528
  %v1831 = vmul.f32 %v1824, %v532
  %v1832 = vmul.f32 %v1822, %v536
  %v1833 = vmul.f32 %v1828, %v540
  %v1834 = vmul.f32 %v1827, %v528
  %v1835 = vmul.f32 %v1825, %v532
  %v1836 = vmul.f32 %v1823, %v536
  %v1837 = vmul.f32 %v1829, %v540
  %v1838 = vpack.c.bf16 %v1834, %v1830
  %v1839 = vpack.c.bf16 %v1835, %v1831
  %v1840 = vpack.c.bf16 %v1836, %v1832
  %v1841 = vpack.c.bf16 %v1837, %v1833
  %1842 = vst [vmem:[#allocation2 + $0x100] sm:$0xff] %v1838
  %1843 = vst [vmem:[#allocation2 + $0x108] sm:$0xff] %v1839
  %1844 = vst [vmem:[#allocation2 + $0x110] sm:$0xff] %v1840
  %1845 = vst [vmem:[#allocation2 + $0x118] sm:$0xff] %v1841
  %v1846 = vld [vmem:[#allocation2] sm:$0xff]
  %v1847 = vld [vmem:[#allocation2 + $0x8] sm:$0xff]
  %v1848 = vld [vmem:[#allocation2 + $0x10] sm:$0xff]
  %v1849 = vld [vmem:[#allocation2 + $0x18] sm:$0xff]
  %v1850 = vld [vmem:[#allocation2 + $0x20] sm:$0xff]
  %v1851 = vld [vmem:[#allocation2 + $0x28] sm:$0xff]
  %v1852 = vld [vmem:[#allocation2 + $0x30] sm:$0xff]
  %v1853 = vld [vmem:[#allocation2 + $0x38] sm:$0xff]
  %v1854 = vld [vmem:[#allocation2 + $0x40] sm:$0xff]
  %v1855 = vld [vmem:[#allocation2 + $0x48] sm:$0xff]
  %v1856 = vld [vmem:[#allocation2 + $0x50] sm:$0xff]
  %v1857 = vld [vmem:[#allocation2 + $0x58] sm:$0xff]
  %v1858 = vld [vmem:[#allocation2 + $0x60] sm:$0xff]
  %v1859 = vld [vmem:[#allocation2 + $0x68] sm:$0xff]
  %v1860 = vld [vmem:[#allocation2 + $0x70] sm:$0xff]
  %v1861 = vld [vmem:[#allocation2 + $0x78] sm:$0xff]
  %v1862 = vld [vmem:[#allocation2 + $0x80] sm:$0xff]
  %v1863 = vld [vmem:[#allocation2 + $0x88] sm:$0xff]
  %v1864 = vld [vmem:[#allocation2 + $0x90] sm:$0xff]
  %v1865 = vld [vmem:[#allocation2 + $0x98] sm:$0xff]
  %v1866 = vld [vmem:[#allocation2 + $0xa0] sm:$0xff]
  %v1867 = vld [vmem:[#allocation2 + $0xa8] sm:$0xff]
  %v1868 = vld [vmem:[#allocation2 + $0xb0] sm:$0xff]
  %v1869 = vld [vmem:[#allocation2 + $0xb8] sm:$0xff]
  %v1870 = vld [vmem:[#allocation2 + $0xc0] sm:$0xff]
  %v1871 = vld [vmem:[#allocation2 + $0xc8] sm:$0xff]
  %v1872 = vld [vmem:[#allocation2 + $0xd0] sm:$0xff]
  %v1873 = vld [vmem:[#allocation2 + $0xd8] sm:$0xff]
  %v1874 = vld [vmem:[#allocation2 + $0xe0] sm:$0xff]
  %v1875 = vld [vmem:[#allocation2 + $0xe8] sm:$0xff]
  %v1876 = vld [vmem:[#allocation2 + $0xf0] sm:$0xff]
  %v1877 = vld [vmem:[#allocation2 + $0xf8] sm:$0xff]
  %v1878 = vld [vmem:[#allocation2 + $0x100] sm:$0xff]
  %v1879 = vld [vmem:[#allocation2 + $0x108] sm:$0xff]
  %v1880 = vld [vmem:[#allocation2 + $0x110] sm:$0xff]
  %v1881 = vld [vmem:[#allocation2 + $0x118] sm:$0xff]
  %v1884 = vunpack.c.l.b16 %v1516
  %v1885 = vunpack.c.h.b16 %v1516
  %v1886 = vunpack.c.l.b16 %v1517
  %v1887 = vunpack.c.h.b16 %v1517
  %v1888 = vpack.c.b16 %v1886, %v1884
  %v1889 = vpack.c.b16 %v1887, %v1885
  %v1892 = vsel %vm602, %v1889, 0
  %1894 = vmatprep.subr.bf16.mxu0 %v1847
  %1895 = vmatpush1.bf16.msra.mxu0 %v1846
  %1896 = vmatprep.subr.bf16.mxu0 %v1851
  %1897 = vmatpush1.bf16.msra.mxu0 %v1850
  %1898 = vmatprep.subr.bf16.mxu0 %v1855
  %1899 = vmatpush1.bf16.msra.mxu0 %v1854
  %1900 = vmatprep.subr.bf16.mxu0 %v1859
  %1901 = vmatpush1.bf16.msra.mxu0 %v1858
  %1902 = vmatprep.subr.bf16.mxu0 %v1863
  %1903 = vmatpush1.bf16.msra.mxu0 %v1862
  %1904 = vmatprep.subr.bf16.mxu0 %v1867
  %1905 = vmatpush1.bf16.msra.mxu0 %v1866
  %1906 = vmatprep.subr.bf16.mxu0 %v1871
  %1907 = vmatpush1.bf16.msra.mxu0 %v1870
  %1908 = vmatprep.subr.bf16.mxu0 %v1875
  %1909 = vmatpush1.bf16.msra.mxu0 %v1874
  %1910 = vmatprep.subr.bf16.mxu0 %v1879
  %1911 = vmatpush1.bf16.msra.mxu0 %v1878
  %1912 = vmatprep.subr.bf16.mxu0 0
  %1913 = vmatpush1.bf16.msra.mxu0 0
  %1914 = vmatprep.subr.bf16.mxu0 0
  %1915 = vmatpush1.bf16.msra.mxu0 0
  %1916 = vmatprep.subr.bf16.mxu0 0
  %1917 = vmatpush1.bf16.msra.mxu0 0
  %1918 = vmatprep.subr.bf16.mxu0 0
  %1919 = vmatpush1.bf16.msra.mxu0 0
  %1920 = vmatprep.subr.bf16.mxu0 0
  %1921 = vmatpush1.bf16.msra.mxu0 0
  %1922 = vmatprep.subr.bf16.mxu0 0
  %1923 = vmatpush1.bf16.msra.mxu0 0
  %1924 = vmatprep.subr.bf16.mxu0 0
  %1925 = vmatpush1.bf16.msra.mxu0 0
  %1926 = vmatprep.mubr.bf16.mxu0 %v1892
  %1927 = vmatmul.mubr.bf16.gmra.mrb[0].mxu0 %v1888
  %v1928 = vpop.f32.mrb[0].mxu0
  %v1929 = vadd.f32 0.0, %v1928
  %v1930 = vpop.f32.mrb[0].mxu0
  %v1931 = vadd.f32 0.0, %v1930
  %v1932 = vpop.f32.mrb[0].mxu0
  %v1933 = vadd.f32 0.0, %v1932
  %v1934 = vpop.f32.mrb[0].mxu0
  %v1935 = vadd.f32 0.0, %v1934
  %1936 = vdwg.mxu0
  %1937 = vmatprep.subr.bf16.mxu0 %v1849
  %1938 = vmatpush1.bf16.msra.mxu0 %v1848
  %1939 = vmatprep.subr.bf16.mxu0 %v1853
  %1940 = vmatpush1.bf16.msra.mxu0 %v1852
  %1941 = vmatprep.subr.bf16.mxu0 %v1857
  %1942 = vmatpush1.bf16.msra.mxu0 %v1856
  %1943 = vmatprep.subr.bf16.mxu0 %v1861
  %1944 = vmatpush1.bf16.msra.mxu0 %v1860
  %1945 = vmatprep.subr.bf16.mxu0 %v1865
  %1946 = vmatpush1.bf16.msra.mxu0 %v1864
  %1947 = vmatprep.subr.bf16.mxu0 %v1869
  %1948 = vmatpush1.bf16.msra.mxu0 %v1868
  %1949 = vmatprep.subr.bf16.mxu0 %v1873
  %1950 = vmatpush1.bf16.msra.mxu0 %v1872
  %1951 = vmatprep.subr.bf16.mxu0 %v1877
  %1952 = vmatpush1.bf16.msra.mxu0 %v1876
  %1953 = vmatprep.subr.bf16.mxu0 %v1881
  %1954 = vmatpush1.bf16.msra.mxu0 %v1880
  %1955 = vmatprep.subr.bf16.mxu0 0
  %1956 = vmatpush1.bf16.msra.mxu0 0
  %1957 = vmatprep.subr.bf16.mxu0 0
  %1958 = vmatpush1.bf16.msra.mxu0 0
  %1959 = vmatprep.subr.bf16.mxu0 0
  %1960 = vmatpush1.bf16.msra.mxu0 0
  %1961 = vmatprep.subr.bf16.mxu0 0
  %1962 = vmatpush1.bf16.msra.mxu0 0
  %1963 = vmatprep.subr.bf16.mxu0 0
  %1964 = vmatpush1.bf16.msra.mxu0 0
  %1965 = vmatprep.subr.bf16.mxu0 0
  %1966 = vmatpush1.bf16.msra.mxu0 0
  %1967 = vmatprep.subr.bf16.mxu0 0
  %1968 = vmatpush1.bf16.msra.mxu0 0
  %1969 = vmatprep.mubr.bf16.mxu0 %v1892
  %1970 = vmatmul.mubr.bf16.gmra.mrb[0].mxu0 %v1888
  %v1971 = vpop.f32.mrb[0].mxu0
  %v1972 = vadd.f32 0.0, %v1971
  %v1973 = vpop.f32.mrb[0].mxu0
  %v1974 = vadd.f32 0.0, %v1973
  %v1975 = vpop.f32.mrb[0].mxu0
  %v1976 = vadd.f32 0.0, %v1975
  %v1977 = vpop.f32.mrb[0].mxu0
  %v1978 = vadd.f32 0.0, %v1977
  %1979 = vdwg.mxu0
  %v1980 = vmax.f32 %v1929, 0.0
  %v1981 = vmax.f32 %v1931, 0.0
  %v1982 = vmax.f32 %v1972, 0.0
  %v1983 = vmax.f32 %v1974, 0.0
  %v1984 = vmax.f32 %v1933, 0.0
  %v1985 = vmax.f32 %v1935, 0.0
  %v1986 = vmax.f32 %v1976, 0.0
  %v1987 = vmax.f32 %v1978, 0.0
  %s1988 = scalar_lea.vmem %s1, 48
  %v1989 = vld [vmem:[%s1988] sm:$0xff]
  %v1990 = vld [vmem:[%s1988 + $0x8] sm:$0xff]
  %1991 = vrot.lane.b32.xlu0 %v1980, 17
  %v1992 = vpop.permute.xlu0 %1991
  %1993 = vrot.lane.b32.xlu0 %v1984, 17
  %v1994 = vpop.permute.xlu0 %1993
  %1995 = vrot.lane.b32.xlu0 %v1981, 17
  %v1996 = vpop.permute.xlu0 %1995
  %1997 = vrot.lane.b32.xlu0 %v1985, 17
  %v1998 = vpop.permute.xlu0 %1997
  %1999 = vrot.lane.b32.xlu0 %v1982, 17
  %v2000 = vpop.permute.xlu0 %1999
  %2001 = vrot.lane.b32.xlu0 %v1986, 17
  %v2002 = vpop.permute.xlu0 %2001
  %2003 = vrot.lane.b32.xlu0 %v1983, 17
  %v2004 = vpop.permute.xlu0 %2003
  %2005 = vrot.lane.b32.xlu0 %v1987, 17
  %v2006 = vpop.permute.xlu0 %2005
  %v2007 = vsel %vm109, %v2000, %v2004
  %v2008 = vsel %vm109, %v2002, %v2006
  %v2009 = vsel %vm109, %v1996, %v2000
  %v2010 = vsel %vm109, %v1998, %v2002
  %v2011 = vsel %vm109, %v1992, %v1996
  %v2012 = vsel %vm109, %v1994, %v1998
  %v2013 = vsel %vm109, %v2004, %v1992
  %v2014 = vsel %vm109, %v2006, %v1994
  %v2015 = vmul.f32 %v2013, %v121
  %v2016 = vmul.f32 %v2011, %v125
  %v2017 = vmul.f32 %v2009, %v129
  %v2018 = vmul.f32 %v2007, %v133
  %v2019 = vmul.f32 %v2014, %v121
  %v2020 = vmul.f32 %v2012, %v125
  %v2021 = vmul.f32 %v2010, %v129
  %v2022 = vmul.f32 %v2008, %v133
  %v2023 = vpack.c.bf16 %v2019, %v2015
  %v2024 = vpack.c.bf16 %v2020, %v2016
  %v2025 = vpack.c.bf16 %v2021, %v2017
  %v2026 = vpack.c.bf16 %v2022, %v2018
  %2027 = vst [vmem:[#allocation2] sm:$0xff] %v2023
  %2028 = vst [vmem:[#allocation2 + $0x8] sm:$0xff] %v2024
  %2029 = vst [vmem:[#allocation2 + $0x10] sm:$0xff] %v2025
  %2030 = vst [vmem:[#allocation2 + $0x18] sm:$0xff] %v2026
  %2031 = vrot.lane.b32.xlu0 %v1980, 16
  %v2032 = vpop.permute.xlu0 %2031
  %2033 = vrot.lane.b32.xlu0 %v1984, 16
  %v2034 = vpop.permute.xlu0 %2033
  %2035 = vrot.lane.b32.xlu0 %v1981, 16
  %v2036 = vpop.permute.xlu0 %2035
  %2037 = vrot.lane.b32.xlu0 %v1985, 16
  %v2038 = vpop.permute.xlu0 %2037
  %2039 = vrot.lane.b32.xlu0 %v1982, 16
  %v2040 = vpop.permute.xlu0 %2039
  %2041 = vrot.lane.b32.xlu0 %v1986, 16
  %v2042 = vpop.permute.xlu0 %2041
  %2043 = vrot.lane.b32.xlu0 %v1983, 16
  %v2044 = vpop.permute.xlu0 %2043
  %2045 = vrot.lane.b32.xlu0 %v1987, 16
  %v2046 = vpop.permute.xlu0 %2045
  %v2047 = vsel %vm166, %v2040, %v2044
  %v2048 = vsel %vm166, %v2042, %v2046
  %v2049 = vsel %vm166, %v2036, %v2040
  %v2050 = vsel %vm166, %v2038, %v2042
  %v2051 = vsel %vm166, %v2032, %v2036
  %v2052 = vsel %vm166, %v2034, %v2038
  %v2053 = vsel %vm166, %v2044, %v2032
  %v2054 = vsel %vm166, %v2046, %v2034
  %v2055 = vmul.f32 %v2053, %v178
  %v2056 = vmul.f32 %v2051, %v182
  %v2057 = vmul.f32 %v2049, %v186
  %v2058 = vmul.f32 %v2047, %v190
  %v2059 = vmul.f32 %v2054, %v178
  %v2060 = vmul.f32 %v2052, %v182
  %v2061 = vmul.f32 %v2050, %v186
  %v2062 = vmul.f32 %v2048, %v190
  %v2063 = vpack.c.bf16 %v2059, %v2055
  %v2064 = vpack.c.bf16 %v2060, %v2056
  %v2065 = vpack.c.bf16 %v2061, %v2057
  %v2066 = vpack.c.bf16 %v2062, %v2058
  %2067 = vst [vmem:[#allocation2 + $0x20] sm:$0xff] %v2063
  %2068 = vst [vmem:[#allocation2 + $0x28] sm:$0xff] %v2064
  %2069 = vst [vmem:[#allocation2 + $0x30] sm:$0xff] %v2065
  %2070 = vst [vmem:[#allocation2 + $0x38] sm:$0xff] %v2066
  %2071 = vrot.lane.b32.xlu0 %v1980, 15
  %v2072 = vpop.permute.xlu0 %2071
  %2073 = vrot.lane.b32.xlu0 %v1984, 15
  %v2074 = vpop.permute.xlu0 %2073
  %2075 = vrot.lane.b32.xlu0 %v1981, 15
  %v2076 = vpop.permute.xlu0 %2075
  %2077 = vrot.lane.b32.xlu0 %v1985, 15
  %v2078 = vpop.permute.xlu0 %2077
  %2079 = vrot.lane.b32.xlu0 %v1982, 15
  %v2080 = vpop.permute.xlu0 %2079
  %2081 = vrot.lane.b32.xlu0 %v1986, 15
  %v2082 = vpop.permute.xlu0 %2081
  %2083 = vrot.lane.b32.xlu0 %v1983, 15
  %v2084 = vpop.permute.xlu0 %2083
  %2085 = vrot.lane.b32.xlu0 %v1987, 15
  %v2086 = vpop.permute.xlu0 %2085
  %v2087 = vsel %vm223, %v2080, %v2084
  %v2088 = vsel %vm223, %v2082, %v2086
  %v2089 = vsel %vm223, %v2076, %v2080
  %v2090 = vsel %vm223, %v2078, %v2082
  %v2091 = vsel %vm223, %v2072, %v2076
  %v2092 = vsel %vm223, %v2074, %v2078
  %v2093 = vsel %vm223, %v2084, %v2072
  %v2094 = vsel %vm223, %v2086, %v2074
  %v2095 = vmul.f32 %v2093, %v235
  %v2096 = vmul.f32 %v2091, %v239
  %v2097 = vmul.f32 %v2089, %v243
  %v2098 = vmul.f32 %v2087, %v247
  %v2099 = vmul.f32 %v2094, %v235
  %v2100 = vmul.f32 %v2092, %v239
  %v2101 = vmul.f32 %v2090, %v243
  %v2102 = vmul.f32 %v2088, %v247
  %v2103 = vpack.c.bf16 %v2099, %v2095
  %v2104 = vpack.c.bf16 %v2100, %v2096
  %v2105 = vpack.c.bf16 %v2101, %v2097
  %v2106 = vpack.c.bf16 %v2102, %v2098
  %2107 = vst [vmem:[#allocation2 + $0x40] sm:$0xff] %v2103
  %2108 = vst [vmem:[#allocation2 + $0x48] sm:$0xff] %v2104
  %2109 = vst [vmem:[#allocation2 + $0x50] sm:$0xff] %v2105
  %2110 = vst [vmem:[#allocation2 + $0x58] sm:$0xff] %v2106
  %2111 = vrot.lane.b32.xlu0 %v1980, 1
  %v2112 = vpop.permute.xlu0 %2111
  %2113 = vrot.lane.b32.xlu0 %v1984, 1
  %v2114 = vpop.permute.xlu0 %2113
  %2115 = vrot.lane.b32.xlu0 %v1981, 1
  %v2116 = vpop.permute.xlu0 %2115
  %2117 = vrot.lane.b32.xlu0 %v1985, 1
  %v2118 = vpop.permute.xlu0 %2117
  %2119 = vrot.lane.b32.xlu0 %v1982, 1
  %v2120 = vpop.permute.xlu0 %2119
  %2121 = vrot.lane.b32.xlu0 %v1986, 1
  %v2122 = vpop.permute.xlu0 %2121
  %2123 = vrot.lane.b32.xlu0 %v1983, 1
  %v2124 = vpop.permute.xlu0 %2123
  %2125 = vrot.lane.b32.xlu0 %v1987, 1
  %v2126 = vpop.permute.xlu0 %2125
  %v2127 = vsel %vm280, %v2120, %v2124
  %v2128 = vsel %vm280, %v2122, %v2126
  %v2129 = vsel %vm280, %v2116, %v2120
  %v2130 = vsel %vm280, %v2118, %v2122
  %v2131 = vsel %vm280, %v2112, %v2116
  %v2132 = vsel %vm280, %v2114, %v2118
  %v2133 = vsel %vm280, %v2124, %v2112
  %v2134 = vsel %vm280, %v2126, %v2114
  %v2135 = vmul.f32 %v2133, %v292
  %v2136 = vmul.f32 %v2131, %v296
  %v2137 = vmul.f32 %v2129, %v300
  %v2138 = vmul.f32 %v2127, %v304
  %v2139 = vmul.f32 %v2134, %v292
  %v2140 = vmul.f32 %v2132, %v296
  %v2141 = vmul.f32 %v2130, %v300
  %v2142 = vmul.f32 %v2128, %v304
  %v2143 = vpack.c.bf16 %v2139, %v2135
  %v2144 = vpack.c.bf16 %v2140, %v2136
  %v2145 = vpack.c.bf16 %v2141, %v2137
  %v2146 = vpack.c.bf16 %v2142, %v2138
  %2147 = vst [vmem:[#allocation2 + $0x60] sm:$0xff] %v2143
  %2148 = vst [vmem:[#allocation2 + $0x68] sm:$0xff] %v2144
  %2149 = vst [vmem:[#allocation2 + $0x70] sm:$0xff] %v2145
  %2150 = vst [vmem:[#allocation2 + $0x78] sm:$0xff] %v2146
  %v2151 = vpack.c.bf16 %v1984, %v1980
  %v2152 = vpack.c.bf16 %v1985, %v1981
  %v2153 = vpack.c.bf16 %v1986, %v1982
  %v2154 = vpack.c.bf16 %v1987, %v1983
  %2155 = vst [vmem:[#allocation2 + $0x80] sm:$0xff] %v2151
  %2156 = vst [vmem:[#allocation2 + $0x88] sm:$0xff] %v2152
  %2157 = vst [vmem:[#allocation2 + $0x90] sm:$0xff] %v2153
  %2158 = vst [vmem:[#allocation2 + $0x98] sm:$0xff] %v2154
  %2159 = vrot.lane.b32.xlu0 %v1980, 127
  %v2160 = vpop.permute.xlu0 %2159
  %2161 = vrot.lane.b32.xlu0 %v1984, 127
  %v2162 = vpop.permute.xlu0 %2161
  %2163 = vrot.lane.b32.xlu0 %v1981, 127
  %v2164 = vpop.permute.xlu0 %2163
  %2165 = vrot.lane.b32.xlu0 %v1985, 127
  %v2166 = vpop.permute.xlu0 %2165
  %2167 = vrot.lane.b32.xlu0 %v1982, 127
  %v2168 = vpop.permute.xlu0 %2167
  %2169 = vrot.lane.b32.xlu0 %v1986, 127
  %v2170 = vpop.permute.xlu0 %2169
  %2171 = vrot.lane.b32.xlu0 %v1983, 127
  %v2172 = vpop.permute.xlu0 %2171
  %2173 = vrot.lane.b32.xlu0 %v1987, 127
  %v2174 = vpop.permute.xlu0 %2173
  %v2175 = vsel %vm345, %v2168, %v2172
  %v2176 = vsel %vm345, %v2170, %v2174
  %v2177 = vsel %vm345, %v2164, %v2168
  %v2178 = vsel %vm345, %v2166, %v2170
  %v2179 = vsel %vm345, %v2160, %v2164
  %v2180 = vsel %vm345, %v2162, %v2166
  %v2181 = vsel %vm345, %v2172, %v2160
  %v2182 = vsel %vm345, %v2174, %v2162
  %v2183 = vmul.f32 %v2179, %v357
  %v2184 = vmul.f32 %v2177, %v361
  %v2185 = vmul.f32 %v2175, %v365
  %v2186 = vmul.f32 %v2181, %v369
  %v2187 = vmul.f32 %v2180, %v357
  %v2188 = vmul.f32 %v2178, %v361
  %v2189 = vmul.f32 %v2176, %v365
  %v2190 = vmul.f32 %v2182, %v369
  %v2191 = vpack.c.bf16 %v2187, %v2183
  %v2192 = vpack.c.bf16 %v2188, %v2184
  %v2193 = vpack.c.bf16 %v2189, %v2185
  %v2194 = vpack.c.bf16 %v2190, %v2186
  %2195 = vst [vmem:[#allocation2 + $0xa0] sm:$0xff] %v2191
  %2196 = vst [vmem:[#allocation2 + $0xa8] sm:$0xff] %v2192
  %2197 = vst [vmem:[#allocation2 + $0xb0] sm:$0xff] %v2193
  %2198 = vst [vmem:[#allocation2 + $0xb8] sm:$0xff] %v2194
  %2199 = vrot.lane.b32.xlu0 %v1980, 113
  %v2200 = vpop.permute.xlu0 %2199
  %2201 = vrot.lane.b32.xlu0 %v1984, 113
  %v2202 = vpop.permute.xlu0 %2201
  %2203 = vrot.lane.b32.xlu0 %v1981, 113
  %v2204 = vpop.permute.xlu0 %2203
  %2205 = vrot.lane.b32.xlu0 %v1985, 113
  %v2206 = vpop.permute.xlu0 %2205
  %2207 = vrot.lane.b32.xlu0 %v1982, 113
  %v2208 = vpop.permute.xlu0 %2207
  %2209 = vrot.lane.b32.xlu0 %v1986, 113
  %v2210 = vpop.permute.xlu0 %2209
  %2211 = vrot.lane.b32.xlu0 %v1983, 113
  %v2212 = vpop.permute.xlu0 %2211
  %2213 = vrot.lane.b32.xlu0 %v1987, 113
  %v2214 = vpop.permute.xlu0 %2213
  %v2215 = vsel %vm402, %v2208, %v2212
  %v2216 = vsel %vm402, %v2210, %v2214
  %v2217 = vsel %vm402, %v2204, %v2208
  %v2218 = vsel %vm402, %v2206, %v2210
  %v2219 = vsel %vm402, %v2200, %v2204
  %v2220 = vsel %vm402, %v2202, %v2206
  %v2221 = vsel %vm402, %v2212, %v2200
  %v2222 = vsel %vm402, %v2214, %v2202
  %v2223 = vmul.f32 %v2219, %v414
  %v2224 = vmul.f32 %v2217, %v418
  %v2225 = vmul.f32 %v2215, %v422
  %v2226 = vmul.f32 %v2221, %v426
  %v2227 = vmul.f32 %v2220, %v414
  %v2228 = vmul.f32 %v2218, %v418
  %v2229 = vmul.f32 %v2216, %v422
  %v2230 = vmul.f32 %v2222, %v426
  %v2231 = vpack.c.bf16 %v2227, %v2223
  %v2232 = vpack.c.bf16 %v2228, %v2224
  %v2233 = vpack.c.bf16 %v2229, %v2225
  %v2234 = vpack.c.bf16 %v2230, %v2226
  %2235 = vst [vmem:[#allocation2 + $0xc0] sm:$0xff] %v2231
  %2236 = vst [vmem:[#allocation2 + $0xc8] sm:$0xff] %v2232
  %2237 = vst [vmem:[#allocation2 + $0xd0] sm:$0xff] %v2233
  %2238 = vst [vmem:[#allocation2 + $0xd8] sm:$0xff] %v2234
  %2239 = vrot.lane.b32.xlu0 %v1980, 112
  %v2240 = vpop.permute.xlu0 %2239
  %2241 = vrot.lane.b32.xlu0 %v1984, 112
  %v2242 = vpop.permute.xlu0 %2241
  %2243 = vrot.lane.b32.xlu0 %v1981, 112
  %v2244 = vpop.permute.xlu0 %2243
  %2245 = vrot.lane.b32.xlu0 %v1985, 112
  %v2246 = vpop.permute.xlu0 %2245
  %2247 = vrot.lane.b32.xlu0 %v1982, 112
  %v2248 = vpop.permute.xlu0 %2247
  %2249 = vrot.lane.b32.xlu0 %v1986, 112
  %v2250 = vpop.permute.xlu0 %2249
  %2251 = vrot.lane.b32.xlu0 %v1983, 112
  %v2252 = vpop.permute.xlu0 %2251
  %2253 = vrot.lane.b32.xlu0 %v1987, 112
  %v2254 = vpop.permute.xlu0 %2253
  %v2255 = vsel %vm459, %v2248, %v2252
  %v2256 = vsel %vm459, %v2250, %v2254
  %v2257 = vsel %vm459, %v2244, %v2248
  %v2258 = vsel %vm459, %v2246, %v2250
  %v2259 = vsel %vm459, %v2240, %v2244
  %v2260 = vsel %vm459, %v2242, %v2246
  %v2261 = vsel %vm459, %v2252, %v2240
  %v2262 = vsel %vm459, %v2254, %v2242
  %v2263 = vmul.f32 %v2259, %v471
  %v2264 = vmul.f32 %v2257, %v475
  %v2265 = vmul.f32 %v2255, %v479
  %v2266 = vmul.f32 %v2261, %v483
  %v2267 = vmul.f32 %v2260, %v471
  %v2268 = vmul.f32 %v2258, %v475
  %v2269 = vmul.f32 %v2256, %v479
  %v2270 = vmul.f32 %v2262, %v483
  %v2271 = vpack.c.bf16 %v2267, %v2263
  %v2272 = vpack.c.bf16 %v2268, %v2264
  %v2273 = vpack.c.bf16 %v2269, %v2265
  %v2274 = vpack.c.bf16 %v2270, %v2266
  %2275 = vst [vmem:[#allocation2 + $0xe0] sm:$0xff] %v2271
  %2276 = vst [vmem:[#allocation2 + $0xe8] sm:$0xff] %v2272
  %2277 = vst [vmem:[#allocation2 + $0xf0] sm:$0xff] %v2273
  %2278 = vst [vmem:[#allocation2 + $0xf8] sm:$0xff] %v2274
  %2279 = vrot.lane.b32.xlu0 %v1980, 111
  %v2280 = vpop.permute.xlu0 %2279
  %2281 = vrot.lane.b32.xlu0 %v1984, 111
  %v2282 = vpop.permute.xlu0 %2281
  %2283 = vrot.lane.b32.xlu0 %v1981, 111
  %v2284 = vpop.permute.xlu0 %2283
  %2285 = vrot.lane.b32.xlu0 %v1985, 111
  %v2286 = vpop.permute.xlu0 %2285
  %2287 = vrot.lane.b32.xlu0 %v1982, 111
  %v2288 = vpop.permute.xlu0 %2287
  %2289 = vrot.lane.b32.xlu0 %v1986, 111
  %v2290 = vpop.permute.xlu0 %2289
  %2291 = vrot.lane.b32.xlu0 %v1983, 111
  %v2292 = vpop.permute.xlu0 %2291
  %2293 = vrot.lane.b32.xlu0 %v1987, 111
  %v2294 = vpop.permute.xlu0 %2293
  %v2295 = vsel %vm516, %v2288, %v2292
  %v2296 = vsel %vm516, %v2290, %v2294
  %v2297 = vsel %vm516, %v2284, %v2288
  %v2298 = vsel %vm516, %v2286, %v2290
  %v2299 = vsel %vm516, %v2280, %v2284
  %v2300 = vsel %vm516, %v2282, %v2286
  %v2301 = vsel %vm516, %v2292, %v2280
  %v2302 = vsel %vm516, %v2294, %v2282
  %v2303 = vmul.f32 %v2299, %v528
  %v2304 = vmul.f32 %v2297, %v532
  %v2305 = vmul.f32 %v2295, %v536
  %v2306 = vmul.f32 %v2301, %v540
  %v2307 = vmul.f32 %v2300, %v528
  %v2308 = vmul.f32 %v2298, %v532
  %v2309 = vmul.f32 %v2296, %v536
  %v2310 = vmul.f32 %v2302, %v540
  %v2311 = vpack.c.bf16 %v2307, %v2303
  %v2312 = vpack.c.bf16 %v2308, %v2304
  %v2313 = vpack.c.bf16 %v2309, %v2305
  %v2314 = vpack.c.bf16 %v2310, %v2306
  %2315 = vst [vmem:[#allocation2 + $0x100] sm:$0xff] %v2311
  %2316 = vst [vmem:[#allocation2 + $0x108] sm:$0xff] %v2312
  %2317 = vst [vmem:[#allocation2 + $0x110] sm:$0xff] %v2313
  %2318 = vst [vmem:[#allocation2 + $0x118] sm:$0xff] %v2314
  %v2319 = vld [vmem:[#allocation2] sm:$0xff]
  %v2320 = vld [vmem:[#allocation2 + $0x8] sm:$0xff]
  %v2321 = vld [vmem:[#allocation2 + $0x10] sm:$0xff]
  %v2322 = vld [vmem:[#allocation2 + $0x18] sm:$0xff]
  %v2323 = vld [vmem:[#allocation2 + $0x20] sm:$0xff]
  %v2324 = vld [vmem:[#allocation2 + $0x28] sm:$0xff]
  %v2325 = vld [vmem:[#allocation2 + $0x30] sm:$0xff]
  %v2326 = vld [vmem:[#allocation2 + $0x38] sm:$0xff]
  %v2327 = vld [vmem:[#allocation2 + $0x40] sm:$0xff]
  %v2328 = vld [vmem:[#allocation2 + $0x48] sm:$0xff]
  %v2329 = vld [vmem:[#allocation2 + $0x50] sm:$0xff]
  %v2330 = vld [vmem:[#allocation2 + $0x58] sm:$0xff]
  %v2331 = vld [vmem:[#allocation2 + $0x60] sm:$0xff]
  %v2332 = vld [vmem:[#allocation2 + $0x68] sm:$0xff]
  %v2333 = vld [vmem:[#allocation2 + $0x70] sm:$0xff]
  %v2334 = vld [vmem:[#allocation2 + $0x78] sm:$0xff]
  %v2335 = vld [vmem:[#allocation2 + $0x80] sm:$0xff]
  %v2336 = vld [vmem:[#allocation2 + $0x88] sm:$0xff]
  %v2337 = vld [vmem:[#allocation2 + $0x90] sm:$0xff]
  %v2338 = vld [vmem:[#allocation2 + $0x98] sm:$0xff]
  %v2339 = vld [vmem:[#allocation2 + $0xa0] sm:$0xff]
  %v2340 = vld [vmem:[#allocation2 + $0xa8] sm:$0xff]
  %v2341 = vld [vmem:[#allocation2 + $0xb0] sm:$0xff]
  %v2342 = vld [vmem:[#allocation2 + $0xb8] sm:$0xff]
  %v2343 = vld [vmem:[#allocation2 + $0xc0] sm:$0xff]
  %v2344 = vld [vmem:[#allocation2 + $0xc8] sm:$0xff]
  %v2345 = vld [vmem:[#allocation2 + $0xd0] sm:$0xff]
  %v2346 = vld [vmem:[#allocation2 + $0xd8] sm:$0xff]
  %v2347 = vld [vmem:[#allocation2 + $0xe0] sm:$0xff]
  %v2348 = vld [vmem:[#allocation2 + $0xe8] sm:$0xff]
  %v2349 = vld [vmem:[#allocation2 + $0xf0] sm:$0xff]
  %v2350 = vld [vmem:[#allocation2 + $0xf8] sm:$0xff]
  %v2351 = vld [vmem:[#allocation2 + $0x100] sm:$0xff]
  %v2352 = vld [vmem:[#allocation2 + $0x108] sm:$0xff]
  %v2353 = vld [vmem:[#allocation2 + $0x110] sm:$0xff]
  %v2354 = vld [vmem:[#allocation2 + $0x118] sm:$0xff]
  %v2357 = vunpack.c.l.b16 %v1989
  %v2358 = vunpack.c.h.b16 %v1989
  %v2359 = vunpack.c.l.b16 %v1990
  %v2360 = vunpack.c.h.b16 %v1990
  %v2361 = vpack.c.b16 %v2359, %v2357
  %v2362 = vpack.c.b16 %v2360, %v2358
  %v2365 = vsel %vm602, %v2362, 0
  %2367 = vmatprep.subr.bf16.mxu0 %v2320
  %2368 = vmatpush1.bf16.msra.mxu0 %v2319
  %2369 = vmatprep.subr.bf16.mxu0 %v2324
  %2370 = vmatpush1.bf16.msra.mxu0 %v2323
  %2371 = vmatprep.subr.bf16.mxu0 %v2328
  %2372 = vmatpush1.bf16.msra.mxu0 %v2327
  %2373 = vmatprep.subr.bf16.mxu0 %v2332
  %2374 = vmatpush1.bf16.msra.mxu0 %v2331
  %2375 = vmatprep.subr.bf16.mxu0 %v2336
  %2376 = vmatpush1.bf16.msra.mxu0 %v2335
  %2377 = vmatprep.subr.bf16.mxu0 %v2340
  %2378 = vmatpush1.bf16.msra.mxu0 %v2339
  %2379 = vmatprep.subr.bf16.mxu0 %v2344
  %2380 = vmatpush1.bf16.msra.mxu0 %v2343
  %2381 = vmatprep.subr.bf16.mxu0 %v2348
  %2382 = vmatpush1.bf16.msra.mxu0 %v2347
  %2383 = vmatprep.subr.bf16.mxu0 %v2352
  %2384 = vmatpush1.bf16.msra.mxu0 %v2351
  %2385 = vmatprep.subr.bf16.mxu0 0
  %2386 = vmatpush1.bf16.msra.mxu0 0
  %2387 = vmatprep.subr.bf16.mxu0 0
  %2388 = vmatpush1.bf16.msra.mxu0 0
  %2389 = vmatprep.subr.bf16.mxu0 0
  %2390 = vmatpush1.bf16.msra.mxu0 0
  %2391 = vmatprep.subr.bf16.mxu0 0
  %2392 = vmatpush1.bf16.msra.mxu0 0
  %2393 = vmatprep.subr.bf16.mxu0 0
  %2394 = vmatpush1.bf16.msra.mxu0 0
  %2395 = vmatprep.subr.bf16.mxu0 0
  %2396 = vmatpush1.bf16.msra.mxu0 0
  %2397 = vmatprep.subr.bf16.mxu0 0
  %2398 = vmatpush1.bf16.msra.mxu0 0
  %2399 = vmatprep.mubr.bf16.mxu0 %v2365
  %2400 = vmatmul.mubr.bf16.gmra.mrb[0].mxu0 %v2361
  %v2401 = vpop.f32.mrb[0].mxu0
  %v2402 = vadd.f32 0.0, %v2401
  %v2403 = vpop.f32.mrb[0].mxu0
  %v2404 = vadd.f32 0.0, %v2403
  %v2405 = vpop.f32.mrb[0].mxu0
  %v2406 = vadd.f32 0.0, %v2405
  %v2407 = vpop.f32.mrb[0].mxu0
  %v2408 = vadd.f32 0.0, %v2407
  %2409 = vdwg.mxu0
  %2410 = vmatprep.subr.bf16.mxu0 %v2322
  %2411 = vmatpush1.bf16.msra.mxu0 %v2321
  %2412 = vmatprep.subr.bf16.mxu0 %v2326
  %2413 = vmatpush1.bf16.msra.mxu0 %v2325
  %2414 = vmatprep.subr.bf16.mxu0 %v2330
  %2415 = vmatpush1.bf16.msra.mxu0 %v2329
  %2416 = vmatprep.subr.bf16.mxu0 %v2334
  %2417 = vmatpush1.bf16.msra.mxu0 %v2333
  %2418 = vmatprep.subr.bf16.mxu0 %v2338
  %2419 = vmatpush1.bf16.msra.mxu0 %v2337
  %2420 = vmatprep.subr.bf16.mxu0 %v2342
  %2421 = vmatpush1.bf16.msra.mxu0 %v2341
  %2422 = vmatprep.subr.bf16.mxu0 %v2346
  %2423 = vmatpush1.bf16.msra.mxu0 %v2345
  %2424 = vmatprep.subr.bf16.mxu0 %v2350
  %2425 = vmatpush1.bf16.msra.mxu0 %v2349
  %2426 = vmatprep.subr.bf16.mxu0 %v2354
  %2427 = vmatpush1.bf16.msra.mxu0 %v2353
  %2428 = vmatprep.subr.bf16.mxu0 0
  %2429 = vmatpush1.bf16.msra.mxu0 0
  %2430 = vmatprep.subr.bf16.mxu0 0
  %2431 = vmatpush1.bf16.msra.mxu0 0
  %2432 = vmatprep.subr.bf16.mxu0 0
  %2433 = vmatpush1.bf16.msra.mxu0 0
  %2434 = vmatprep.subr.bf16.mxu0 0
  %2435 = vmatpush1.bf16.msra.mxu0 0
  %2436 = vmatprep.subr.bf16.mxu0 0
  %2437 = vmatpush1.bf16.msra.mxu0 0
  %2438 = vmatprep.subr.bf16.mxu0 0
  %2439 = vmatpush1.bf16.msra.mxu0 0
  %2440 = vmatprep.subr.bf16.mxu0 0
  %2441 = vmatpush1.bf16.msra.mxu0 0
  %2442 = vmatprep.mubr.bf16.mxu0 %v2365
  %2443 = vmatmul.mubr.bf16.gmra.mrb[0].mxu0 %v2361
  %v2444 = vpop.f32.mrb[0].mxu0
  %v2445 = vadd.f32 0.0, %v2444
  %v2446 = vpop.f32.mrb[0].mxu0
  %v2447 = vadd.f32 0.0, %v2446
  %v2448 = vpop.f32.mrb[0].mxu0
  %v2449 = vadd.f32 0.0, %v2448
  %v2450 = vpop.f32.mrb[0].mxu0
  %v2451 = vadd.f32 0.0, %v2450
  %2452 = vdwg.mxu0
  %v2453 = vpack.c.bf16 %v2406, %v2402
  %v2454 = vpack.c.bf16 %v2408, %v2404
  %v2455 = vpack.c.bf16 %v2449, %v2445
  %v2456 = vpack.c.bf16 %v2451, %v2447
  %2457 = vmatprep.subr.bf16.mxu0 %v1191
  %2458 = vmatpush1.bf16.xpose.msra.mxu0 %v1184
  %2459 = vmatprep.subr.bf16.mxu0 0
  %2460 = vmatpush1.bf16.xpose.msra.mxu0 0
  %2461 = vmatprep.subr.bf16.mxu0 0
  %2462 = vmatpush1.bf16.xpose.msra.mxu0 0
  %2463 = vmatprep.subr.bf16.mxu0 0
  %2464 = vmatpush1.bf16.xpose.msra.mxu0 0
  %2465 = vmatprep.subr.bf16.mxu0 0
  %2466 = vmatpush1.bf16.xpose.msra.mxu0 0
  %2467 = vmatprep.subr.bf16.mxu0 0
  %2468 = vmatpush1.bf16.xpose.msra.mxu0 0
  %2469 = vmatprep.subr.bf16.mxu0 0
  %2470 = vmatpush1.bf16.xpose.msra.mxu0 0
  %2471 = vmatprep.subr.bf16.mxu0 0
  %2472 = vmatpush1.bf16.xpose.msra.mxu0 0
  %2473 = vmatprep.subr.bf16.mxu0 0
  %2474 = vmatpush1.bf16.xpose.msra.mxu0 0
  %2475 = vmatprep.subr.bf16.mxu0 0
  %2476 = vmatpush1.bf16.xpose.msra.mxu0 0
  %2477 = vmatprep.subr.bf16.mxu0 0
  %2478 = vmatpush1.bf16.xpose.msra.mxu0 0
  %2479 = vmatprep.subr.bf16.mxu0 0
  %2480 = vmatpush1.bf16.xpose.msra.mxu0 0
  %2481 = vmatprep.subr.bf16.mxu0 0
  %2482 = vmatpush1.bf16.xpose.msra.mxu0 0
  %2483 = vmatprep.subr.bf16.mxu0 0
  %2484 = vmatpush1.bf16.xpose.msra.mxu0 0
  %2485 = vmatprep.subr.bf16.mxu0 0
  %2486 = vmatpush1.bf16.xpose.msra.mxu0 0
  %2487 = vmatprep.subr.bf16.mxu0 0
  %2488 = vmatpush1.bf16.xpose.msra.mxu0 0
  %2489 = vmatprep.mubr.bf16.mxu0 %v2454
  %2490 = vmatmul.mubr.bf16.gmra.mrb[0].mxu0 %v2453
  %v2491 = vpop.f32.mrb[0].mxu0
  %v2492 = vadd.f32 0.0, %v2491
  %v2493 = vpop.f32.mrb[0].mxu0
  %v2494 = vpop.f32.mrb[0].mxu0
  %v2495 = vadd.f32 0.0, %v2494
  %v2496 = vpop.f32.mrb[0].mxu0
  %2497 = vdwg.mxu0
  %2498 = vmatprep.subr.bf16.mxu0 %v1193
  %2499 = vmatpush1.bf16.xpose.msra.mxu0 %v1192
  %2500 = vmatprep.subr.bf16.mxu0 0
  %2501 = vmatpush1.bf16.xpose.msra.mxu0 0
  %2502 = vmatprep.subr.bf16.mxu0 0
  %2503 = vmatpush1.bf16.xpose.msra.mxu0 0
  %2504 = vmatprep.subr.bf16.mxu0 0
  %2505 = vmatpush1.bf16.xpose.msra.mxu0 0
  %2506 = vmatprep.subr.bf16.mxu0 0
  %2507 = vmatpush1.bf16.xpose.msra.mxu0 0
  %2508 = vmatprep.subr.bf16.mxu0 0
  %2509 = vmatpush1.bf16.xpose.msra.mxu0 0
  %2510 = vmatprep.subr.bf16.mxu0 0
  %2511 = vmatpush1.bf16.xpose.msra.mxu0 0
  %2512 = vmatprep.subr.bf16.mxu0 0
  %2513 = vmatpush1.bf16.xpose.msra.mxu0 0
  %2514 = vmatprep.subr.bf16.mxu0 0
  %2515 = vmatpush1.bf16.xpose.msra.mxu0 0
  %2516 = vmatprep.subr.bf16.mxu0 0
  %2517 = vmatpush1.bf16.xpose.msra.mxu0 0
  %2518 = vmatprep.subr.bf16.mxu0 0
  %2519 = vmatpush1.bf16.xpose.msra.mxu0 0
  %2520 = vmatprep.subr.bf16.mxu0 0
  %2521 = vmatpush1.bf16.xpose.msra.mxu0 0
  %2522 = vmatprep.subr.bf16.mxu0 0
  %2523 = vmatpush1.bf16.xpose.msra.mxu0 0
  %2524 = vmatprep.subr.bf16.mxu0 0
  %2525 = vmatpush1.bf16.xpose.msra.mxu0 0
  %2526 = vmatprep.subr.bf16.mxu0 0
  %2527 = vmatpush1.bf16.xpose.msra.mxu0 0
  %2528 = vmatprep.subr.bf16.mxu0 0
  %2529 = vmatpush1.bf16.xpose.msra.mxu0 0
  %2530 = vmatprep.mubr.bf16.mxu0 %v2456
  %2531 = vmatmul.mubr.bf16.gmra.mrb[0].mxu0 %v2455
  %v2532 = vpop.f32.mrb[0].mxu0
  %v2533 = vadd.f32 %v2492, %v2532
  %v2534 = vpop.f32.mrb[0].mxu0
  %v2535 = vpop.f32.mrb[0].mxu0
  %v2536 = vadd.f32 %v2495, %v2535
  %v2537 = vpop.f32.mrb[0].mxu0
  %2538 = vdwg.mxu0
  %v2539 = vmul.f32 %v2533, 0.00390625
  %v2540 = vmul.f32 %v2536, 0.00390625
  %v2541 = vpack.c.bf16 %v2540, %v2539
  %v2543 = vsel %vm602, %v1511, 0
  %2545 = vmatprep.subr.bf16.mxu0 0
  %2546 = vmatpush1.bf16.msra.mxu0 %v2541
  %2547 = vmatprep.subr.bf16.mxu0 0
  %2548 = vmatpush1.bf16.msra.mxu0 0
  %2549 = vmatprep.subr.bf16.mxu0 0
  %2550 = vmatpush1.bf16.msra.mxu0 0
  %2551 = vmatprep.subr.bf16.mxu0 0
  %2552 = vmatpush1.bf16.msra.mxu0 0
  %2553 = vmatprep.subr.bf16.mxu0 0
  %2554 = vmatpush1.bf16.msra.mxu0 0
  %2555 = vmatprep.subr.bf16.mxu0 0
  %2556 = vmatpush1.bf16.msra.mxu0 0
  %2557 = vmatprep.subr.bf16.mxu0 0
  %2558 = vmatpush1.bf16.msra.mxu0 0
  %2559 = vmatprep.subr.bf16.mxu0 0
  %2560 = vmatpush1.bf16.msra.mxu0 0
  %2561 = vmatprep.subr.bf16.mxu0 0
  %2562 = vmatpush1.bf16.msra.mxu0 0
  %2563 = vmatprep.subr.bf16.mxu0 0
  %2564 = vmatpush1.bf16.msra.mxu0 0
  %2565 = vmatprep.subr.bf16.mxu0 0
  %2566 = vmatpush1.bf16.msra.mxu0 0
  %2567 = vmatprep.subr.bf16.mxu0 0
  %2568 = vmatpush1.bf16.msra.mxu0 0
  %2569 = vmatprep.subr.bf16.mxu0 0
  %2570 = vmatpush1.bf16.msra.mxu0 0
  %2571 = vmatprep.subr.bf16.mxu0 0
  %2572 = vmatpush1.bf16.msra.mxu0 0
  %2573 = vmatprep.subr.bf16.mxu0 0
  %2574 = vmatpush1.bf16.msra.mxu0 0
  %2575 = vmatprep.subr.bf16.mxu0 0
  %2576 = vmatpush1.bf16.msra.mxu0 0
  %2577 = vmatprep.mubr.bf16.mxu0 0
  %2578 = vmatmul.mubr.bf16.gmra.mrb[0].mxu0 %v2543
  %v2579 = vpop.f32.mrb[0].mxu0
  %v2580 = vadd.f32 0.0, %v2579
  %v2581 = vpop.f32.mrb[0].mxu0
  %v2582 = vpop.f32.mrb[0].mxu0
  %v2583 = vpop.f32.mrb[0].mxu0
  %2584 = vdwg.mxu0
  %v2585 = vmax.f32 %v2580, 0.0
  %v2586 = vpack.c.bf16 %v2585, %v2585
  %v2589 = vunpack.c.l.b16 %v1513
  %v2590 = vunpack.c.l.b16 %v1514
  %v2591 = vpack.c.b16 %v2590, %v2589
  %v2593 = vsel %vm1333, %v2591, 0
  %v2596 = vsel %vm1337, %v2586, 0
  %2598 = vmatprep.subr.bf16.mxu0 0
  %2599 = vmatpush1.bf16.msra.mxu0 %v2596
  %2600 = vmatprep.subr.bf16.mxu0 0
  %2601 = vmatpush1.bf16.msra.mxu0 0
  %2602 = vmatprep.subr.bf16.mxu0 0
  %2603 = vmatpush1.bf16.msra.mxu0 0
  %2604 = vmatprep.subr.bf16.mxu0 0
  %2605 = vmatpush1.bf16.msra.mxu0 0
  %2606 = vmatprep.subr.bf16.mxu0 0
  %2607 = vmatpush1.bf16.msra.mxu0 0
  %2608 = vmatprep.subr.bf16.mxu0 0
  %2609 = vmatpush1.bf16.msra.mxu0 0
  %2610 = vmatprep.subr.bf16.mxu0 0
  %2611 = vmatpush1.bf16.msra.mxu0 0
  %2612 = vmatprep.subr.bf16.mxu0 0
  %2613 = vmatpush1.bf16.msra.mxu0 0
  %2614 = vmatprep.subr.bf16.mxu0 0
  %2615 = vmatpush1.bf16.msra.mxu0 0
  %2616 = vmatprep.subr.bf16.mxu0 0
  %2617 = vmatpush1.bf16.msra.mxu0 0
  %2618 = vmatprep.subr.bf16.mxu0 0
  %2619 = vmatpush1.bf16.msra.mxu0 0
  %2620 = vmatprep.subr.bf16.mxu0 0
  %2621 = vmatpush1.bf16.msra.mxu0 0
  %2622 = vmatprep.subr.bf16.mxu0 0
  %2623 = vmatpush1.bf16.msra.mxu0 0
  %2624 = vmatprep.subr.bf16.mxu0 0
  %2625 = vmatpush1.bf16.msra.mxu0 0
  %2626 = vmatprep.subr.bf16.mxu0 0
  %2627 = vmatpush1.bf16.msra.mxu0 0
  %2628 = vmatprep.subr.bf16.mxu0 0
  %2629 = vmatpush1.bf16.msra.mxu0 0
  %2630 = vmatprep.mubr.bf16.mxu0 0
  %2631 = vmatmul.mubr.bf16.gmra.mrb[0].mxu0 %v2593
  %v2632 = vpop.f32.mrb[0].mxu0
  %v2633 = vadd.f32 0.0, %v2632
  %v2634 = vpop.f32.mrb[0].mxu0
  %v2635 = vpop.f32.mrb[0].mxu0
  %v2636 = vadd.f32 0.0, %v2635
  %v2637 = vpop.f32.mrb[0].mxu0
  %2638 = vdwg.mxu0
  %v2639 = vmul.f32 %v2633, 0.5
  %v2640 = vmul.f32 %v2636, 0.5
  %v2641 = vtanh.pop %v2639
  %v2642 = vtanh.pop %v2640
  %v2643 = vadd.f32 %v2641, 1.0
  %v2644 = vadd.f32 %v2642, 1.0
  %v2645 = vmul.f32 %v2643, 0.5
  %v2646 = vmul.f32 %v2644, 0.5
  %v2647 = vpack.c.bf16 %v2646, %v2645
  %v2649 = vsel %vm1391, %v2647, 0
  %2651 = vmatprep.subr.bf16.mxu0 %v1400
  %2652 = vmatpush1.bf16.msra.mxu0 %v1397
  %2653 = vmatprep.subr.bf16.mxu0 0
  %2654 = vmatpush1.bf16.msra.mxu0 0
  %2655 = vmatprep.subr.bf16.mxu0 0
  %2656 = vmatpush1.bf16.msra.mxu0 0
  %2657 = vmatprep.subr.bf16.mxu0 0
  %2658 = vmatpush1.bf16.msra.mxu0 0
  %2659 = vmatprep.subr.bf16.mxu0 0
  %2660 = vmatpush1.bf16.msra.mxu0 0
  %2661 = vmatprep.subr.bf16.mxu0 0
  %2662 = vmatpush1.bf16.msra.mxu0 0
  %2663 = vmatprep.subr.bf16.mxu0 0
  %2664 = vmatpush1.bf16.msra.mxu0 0
  %2665 = vmatprep.subr.bf16.mxu0 0
  %2666 = vmatpush1.bf16.msra.mxu0 0
  %2667 = vmatprep.subr.bf16.mxu0 0
  %2668 = vmatpush1.bf16.msra.mxu0 0
  %2669 = vmatprep.subr.bf16.mxu0 0
  %2670 = vmatpush1.bf16.msra.mxu0 0
  %2671 = vmatprep.subr.bf16.mxu0 0
  %2672 = vmatpush1.bf16.msra.mxu0 0
  %2673 = vmatprep.subr.bf16.mxu0 0
  %2674 = vmatpush1.bf16.msra.mxu0 0
  %2675 = vmatprep.subr.bf16.mxu0 0
  %2676 = vmatpush1.bf16.msra.mxu0 0
  %2677 = vmatprep.subr.bf16.mxu0 0
  %2678 = vmatpush1.bf16.msra.mxu0 0
  %2679 = vmatprep.subr.bf16.mxu0 0
  %2680 = vmatpush1.bf16.msra.mxu0 0
  %2681 = vmatprep.subr.bf16.mxu0 0
  %2682 = vmatpush1.bf16.msra.mxu0 0
  %2683 = vmatprep.mubr.bf16.mxu0 0
  %2684 = vmatmul.mubr.bf16.gmra.mrb[0].mxu0 %v2649
  %v2685 = vpop.f32.mrb[0].mxu0
  %v2686 = vadd.f32 0.0, %v2685
  %v2687 = vpop.f32.mrb[0].mxu0
  %v2688 = vadd.f32 0.0, %v2687
  %v2689 = vpop.f32.mrb[0].mxu0
  %v2690 = vadd.f32 0.0, %v2689
  %v2691 = vpop.f32.mrb[0].mxu0
  %v2692 = vadd.f32 0.0, %v2691
  %2693 = vdwg.mxu0
  %2694 = vmatprep.subr.bf16.mxu0 %v1406
  %2695 = vmatpush1.bf16.msra.mxu0 %v1403
  %2696 = vmatprep.subr.bf16.mxu0 0
  %2697 = vmatpush1.bf16.msra.mxu0 0
  %2698 = vmatprep.subr.bf16.mxu0 0
  %2699 = vmatpush1.bf16.msra.mxu0 0
  %2700 = vmatprep.subr.bf16.mxu0 0
  %2701 = vmatpush1.bf16.msra.mxu0 0
  %2702 = vmatprep.subr.bf16.mxu0 0
  %2703 = vmatpush1.bf16.msra.mxu0 0
  %2704 = vmatprep.subr.bf16.mxu0 0
  %2705 = vmatpush1.bf16.msra.mxu0 0
  %2706 = vmatprep.subr.bf16.mxu0 0
  %2707 = vmatpush1.bf16.msra.mxu0 0
  %2708 = vmatprep.subr.bf16.mxu0 0
  %2709 = vmatpush1.bf16.msra.mxu0 0
  %2710 = vmatprep.subr.bf16.mxu0 0
  %2711 = vmatpush1.bf16.msra.mxu0 0
  %2712 = vmatprep.subr.bf16.mxu0 0
  %2713 = vmatpush1.bf16.msra.mxu0 0
  %2714 = vmatprep.subr.bf16.mxu0 0
  %2715 = vmatpush1.bf16.msra.mxu0 0
  %2716 = vmatprep.subr.bf16.mxu0 0
  %2717 = vmatpush1.bf16.msra.mxu0 0
  %2718 = vmatprep.subr.bf16.mxu0 0
  %2719 = vmatpush1.bf16.msra.mxu0 0
  %2720 = vmatprep.subr.bf16.mxu0 0
  %2721 = vmatpush1.bf16.msra.mxu0 0
  %2722 = vmatprep.subr.bf16.mxu0 0
  %2723 = vmatpush1.bf16.msra.mxu0 0
  %2724 = vmatprep.subr.bf16.mxu0 0
  %2725 = vmatpush1.bf16.msra.mxu0 0
  %2726 = vmatprep.mubr.bf16.mxu0 0
  %2727 = vmatmul.mubr.bf16.gmra.mrb[0].mxu0 %v2649
  %v2728 = vpop.f32.mrb[0].mxu0
  %v2729 = vadd.f32 0.0, %v2728
  %v2730 = vpop.f32.mrb[0].mxu0
  %v2731 = vadd.f32 0.0, %v2730
  %v2732 = vpop.f32.mrb[0].mxu0
  %v2733 = vadd.f32 0.0, %v2732
  %v2734 = vpop.f32.mrb[0].mxu0
  %v2735 = vadd.f32 0.0, %v2734
  %2736 = vdwg.mxu0
  %v2737 = vmul.f32 %v2402, %v2686
  %v2738 = vmul.f32 %v2404, %v2688
  %v2739 = vmul.f32 %v2445, %v2729
  %v2740 = vmul.f32 %v2447, %v2731
  %v2741 = vmul.f32 %v2406, %v2690
  %v2742 = vmul.f32 %v2408, %v2692
  %v2743 = vmul.f32 %v2449, %v2733
  %v2744 = vmul.f32 %v2451, %v2735
  %v2745 = vadd.f32 %v2737, %v1502
  %v2746 = vadd.f32 %v2738, %v1503
  %v2747 = vadd.f32 %v2739, %v1504
  %v2748 = vadd.f32 %v2740, %v1505
  %v2749 = vadd.f32 %v2741, %v1506
  %v2750 = vadd.f32 %v2742, %v1507
  %v2751 = vadd.f32 %v2743, %v1508
  %v2752 = vadd.f32 %v2744, %v1509
  %2753 = vst [vmem:[%s20] sm:$0xff] %v2745
  %2754 = vst [vmem:[%s20 + $0x8] sm:$0xff] %v2746
  %2755 = vst [vmem:[%s20 + $0x10] sm:$0xff] %v2747
  %2756 = vst [vmem:[%s20 + $0x18] sm:$0xff] %v2748
  %2757 = vst [vmem:[%s20 + $0x20] sm:$0xff] %v2749
  %2758 = vst [vmem:[%s20 + $0x28] sm:$0xff] %v2750
  %2759 = vst [vmem:[%s20 + $0x30] sm:$0xff] %v2751
  %2760 = vst [vmem:[%s20 + $0x38] sm:$0xff] %v2752
  %v2761 = vpack.c.bf16 %v2749, %v2745
  %v2762 = vpack.c.bf16 %v2750, %v2746
  %v2763 = vpack.c.bf16 %v2751, %v2747
  %v2764 = vpack.c.bf16 %v2752, %v2748
  %v2765 = vld [vmem:[%s6] sm:$0xf]
  %v2766 = vld [vmem:[%s6 + $0x4] sm:$0xf]
  %v2767 = vld [vmem:[%s6 + $0x8] sm:$0xf]
  %v2768 = vld [vmem:[%s6 + $0xc] sm:$0xf]
  %v2769 = vld [vmem:[%s6 + $0x10] sm:$0xf]
  %v2770 = vld [vmem:[%s6 + $0x14] sm:$0xf]
  %v2771 = vld [vmem:[%s6 + $0x18] sm:$0xf]
  %v2772 = vld [vmem:[%s6 + $0x1c] sm:$0xf]
  %v2773 = vld [vmem:[%s6 + $0x20] sm:$0xf]
  %v2774 = vld [vmem:[%s6 + $0x24] sm:$0xf]
  %v2775 = vld [vmem:[%s6 + $0x28] sm:$0xf]
  %v2776 = vld [vmem:[%s6 + $0x2c] sm:$0xf]
  %v2777 = vld [vmem:[%s6 + $0x30] sm:$0xf]
  %v2778 = vld [vmem:[%s6 + $0x34] sm:$0xf]
  %v2779 = vld [vmem:[%s6 + $0x38] sm:$0xf]
  %v2780 = vld [vmem:[%s6 + $0x3c] sm:$0xf]
  %v2781 = vld [vmem:[%s6 + $0x40] sm:$0xf]
  %v2782 = vld [vmem:[%s6 + $0x44] sm:$0xf]
  %v2783 = vld [vmem:[%s6 + $0x48] sm:$0xf]
  %v2784 = vld [vmem:[%s6 + $0x4c] sm:$0xf]
  %v2785 = vld [vmem:[%s6 + $0x50] sm:$0xf]
  %v2786 = vld [vmem:[%s6 + $0x54] sm:$0xf]
  %v2787 = vld [vmem:[%s6 + $0x58] sm:$0xf]
  %v2788 = vld [vmem:[%s6 + $0x5c] sm:$0xf]
  %v2789 = vld [vmem:[%s6 + $0x60] sm:$0xf]
  %v2790 = vld [vmem:[%s6 + $0x64] sm:$0xf]
  %v2791 = vld [vmem:[%s6 + $0x68] sm:$0xf]
  %v2792 = vld [vmem:[%s6 + $0x6c] sm:$0xf]
  %v2793 = vld [vmem:[%s6 + $0x70] sm:$0xf]
  %v2794 = vld [vmem:[%s6 + $0x74] sm:$0xf]
  %v2795 = vld [vmem:[%s6 + $0x78] sm:$0xf]
  %v2796 = vld [vmem:[%s6 + $0x7c] sm:$0xf]
  %v2797 = vld [vmem:[%s6 + $0x80] sm:$0xf]
  %v2798 = vld [vmem:[%s6 + $0x84] sm:$0xf]
  %v2799 = vld [vmem:[%s6 + $0x88] sm:$0xf]
  %v2800 = vld [vmem:[%s6 + $0x8c] sm:$0xf]
  %v2801 = vld [vmem:[%s6 + $0x90] sm:$0xf]
  %v2802 = vld [vmem:[%s6 + $0x94] sm:$0xf]
  %v2803 = vld [vmem:[%s6 + $0x98] sm:$0xf]
  %v2804 = vld [vmem:[%s6 + $0x9c] sm:$0xf]
  %v2805 = vld [vmem:[%s6 + $0xa0] sm:$0xf]
  %v2806 = vld [vmem:[%s6 + $0xa4] sm:$0xf]
  %v2807 = vld [vmem:[%s6 + $0xa8] sm:$0xf]
  %v2808 = vld [vmem:[%s6 + $0xac] sm:$0xf]
  %v2809 = vld [vmem:[%s6 + $0xb0] sm:$0xf]
  %v2810 = vld [vmem:[%s6 + $0xb4] sm:$0xf]
  %v2811 = vld [vmem:[%s6 + $0xb8] sm:$0xf]
  %v2812 = vld [vmem:[%s6 + $0xbc] sm:$0xf]
  %v2813 = vld [vmem:[%s6 + $0xc0] sm:$0xf]
  %v2814 = vld [vmem:[%s6 + $0xc4] sm:$0xf]
  %v2815 = vld [vmem:[%s6 + $0xc8] sm:$0xf]
  %v2816 = vld [vmem:[%s6 + $0xcc] sm:$0xf]
  %v2817 = vld [vmem:[%s6 + $0xd0] sm:$0xf]
  %v2818 = vld [vmem:[%s6 + $0xd4] sm:$0xf]
  %v2819 = vld [vmem:[%s6 + $0xd8] sm:$0xf]
  %v2820 = vld [vmem:[%s6 + $0xdc] sm:$0xf]
  %v2821 = vld [vmem:[%s6 + $0xe0] sm:$0xf]
  %v2822 = vld [vmem:[%s6 + $0xe4] sm:$0xf]
  %v2823 = vld [vmem:[%s6 + $0xe8] sm:$0xf]
  %v2824 = vld [vmem:[%s6 + $0xec] sm:$0xf]
  %v2825 = vld [vmem:[%s6 + $0xf0] sm:$0xf]
  %v2826 = vld [vmem:[%s6 + $0xf4] sm:$0xf]
  %v2827 = vld [vmem:[%s6 + $0xf8] sm:$0xf]
  %v2828 = vld [vmem:[%s6 + $0xfc] sm:$0xf]
  %v2893 = vunpack.c.l.b16 %v2765
  %v2894 = vunpack.c.l.b16 %v2766
  %v2895 = vunpack.c.l.b16 %v2767
  %v2896 = vunpack.c.l.b16 %v2768
  %v2897 = vunpack.c.l.b16 %v2769
  %v2898 = vunpack.c.l.b16 %v2770
  %v2899 = vunpack.c.l.b16 %v2771
  %v2900 = vunpack.c.l.b16 %v2772
  %v2901 = vunpack.c.l.b16 %v2773
  %v2902 = vunpack.c.l.b16 %v2774
  %v2903 = vunpack.c.l.b16 %v2775
  %v2904 = vunpack.c.l.b16 %v2776
  %v2905 = vunpack.c.l.b16 %v2777
  %v2906 = vunpack.c.l.b16 %v2778
  %v2907 = vunpack.c.l.b16 %v2779
  %v2908 = vunpack.c.l.b16 %v2780
  %v2909 = vunpack.c.l.b16 %v2781
  %v2910 = vunpack.c.l.b16 %v2782
  %v2911 = vunpack.c.l.b16 %v2783
  %v2912 = vunpack.c.l.b16 %v2784
  %v2913 = vunpack.c.l.b16 %v2785
  %v2914 = vunpack.c.l.b16 %v2786
  %v2915 = vunpack.c.l.b16 %v2787
  %v2916 = vunpack.c.l.b16 %v2788
  %v2917 = vunpack.c.l.b16 %v2789
  %v2918 = vunpack.c.l.b16 %v2790
  %v2919 = vunpack.c.l.b16 %v2791
  %v2920 = vunpack.c.l.b16 %v2792
  %v2921 = vunpack.c.l.b16 %v2793
  %v2922 = vunpack.c.l.b16 %v2794
  %v2923 = vunpack.c.l.b16 %v2795
  %v2924 = vunpack.c.l.b16 %v2796
  %v2925 = vunpack.c.l.b16 %v2797
  %v2926 = vunpack.c.l.b16 %v2798
  %v2927 = vunpack.c.l.b16 %v2799
  %v2928 = vunpack.c.l.b16 %v2800
  %v2929 = vunpack.c.l.b16 %v2801
  %v2930 = vunpack.c.l.b16 %v2802
  %v2931 = vunpack.c.l.b16 %v2803
  %v2932 = vunpack.c.l.b16 %v2804
  %v2933 = vunpack.c.l.b16 %v2805
  %v2934 = vunpack.c.l.b16 %v2806
  %v2935 = vunpack.c.l.b16 %v2807
  %v2936 = vunpack.c.l.b16 %v2808
  %v2937 = vunpack.c.l.b16 %v2809
  %v2938 = vunpack.c.l.b16 %v2810
  %v2939 = vunpack.c.l.b16 %v2811
  %v2940 = vunpack.c.l.b16 %v2812
  %v2941 = vunpack.c.l.b16 %v2813
  %v2942 = vunpack.c.l.b16 %v2814
  %v2943 = vunpack.c.l.b16 %v2815
  %v2944 = vunpack.c.l.b16 %v2816
  %v2945 = vunpack.c.l.b16 %v2817
  %v2946 = vunpack.c.l.b16 %v2818
  %v2947 = vunpack.c.l.b16 %v2819
  %v2948 = vunpack.c.l.b16 %v2820
  %v2949 = vunpack.c.l.b16 %v2821
  %v2950 = vunpack.c.l.b16 %v2822
  %v2951 = vunpack.c.l.b16 %v2823
  %v2952 = vunpack.c.l.b16 %v2824
  %v2953 = vunpack.c.l.b16 %v2825
  %v2954 = vunpack.c.l.b16 %v2826
  %v2955 = vunpack.c.l.b16 %v2827
  %v2956 = vunpack.c.l.b16 %v2828
  %v2957 = vpack.c.b16 %v2894, %v2893
  %v2958 = vpack.c.b16 %v2896, %v2895
  %v2959 = vpack.c.b16 %v2898, %v2897
  %v2960 = vpack.c.b16 %v2900, %v2899
  %v2961 = vpack.c.b16 %v2902, %v2901
  %v2962 = vpack.c.b16 %v2904, %v2903
  %v2963 = vpack.c.b16 %v2906, %v2905
  %v2964 = vpack.c.b16 %v2908, %v2907
  %v2965 = vpack.c.b16 %v2910, %v2909
  %v2966 = vpack.c.b16 %v2912, %v2911
  %v2967 = vpack.c.b16 %v2914, %v2913
  %v2968 = vpack.c.b16 %v2916, %v2915
  %v2969 = vpack.c.b16 %v2918, %v2917
  %v2970 = vpack.c.b16 %v2920, %v2919
  %v2971 = vpack.c.b16 %v2922, %v2921
  %v2972 = vpack.c.b16 %v2924, %v2923
  %v2973 = vpack.c.b16 %v2926, %v2925
  %v2974 = vpack.c.b16 %v2928, %v2927
  %v2975 = vpack.c.b16 %v2930, %v2929
  %v2976 = vpack.c.b16 %v2932, %v2931
  %v2977 = vpack.c.b16 %v2934, %v2933
  %v2978 = vpack.c.b16 %v2936, %v2935
  %v2979 = vpack.c.b16 %v2938, %v2937
  %v2980 = vpack.c.b16 %v2940, %v2939
  %v2981 = vpack.c.b16 %v2942, %v2941
  %v2982 = vpack.c.b16 %v2944, %v2943
  %v2983 = vpack.c.b16 %v2946, %v2945
  %v2984 = vpack.c.b16 %v2948, %v2947
  %v2985 = vpack.c.b16 %v2950, %v2949
  %v2986 = vpack.c.b16 %v2952, %v2951
  %v2987 = vpack.c.b16 %v2954, %v2953
  %v2988 = vpack.c.b16 %v2956, %v2955
  %3021 = vmatprep.subr.bf16.mxu0 0
  %3022 = vmatpush1.bf16.msra.mxu0 %v2957
  %3023 = vmatprep.subr.bf16.mxu0 0
  %3024 = vmatpush1.bf16.msra.mxu0 %v2958
  %3025 = vmatprep.subr.bf16.mxu0 0
  %3026 = vmatpush1.bf16.msra.mxu0 %v2959
  %3027 = vmatprep.subr.bf16.mxu0 0
  %3028 = vmatpush1.bf16.msra.mxu0 %v2960
  %3029 = vmatprep.subr.bf16.mxu0 0
  %3030 = vmatpush1.bf16.msra.mxu0 %v2961
  %3031 = vmatprep.subr.bf16.mxu0 0
  %3032 = vmatpush1.bf16.msra.mxu0 %v2962
  %3033 = vmatprep.subr.bf16.mxu0 0
  %3034 = vmatpush1.bf16.msra.mxu0 %v2963
  %3035 = vmatprep.subr.bf16.mxu0 0
  %3036 = vmatpush1.bf16.msra.mxu0 %v2964
  %3037 = vmatprep.subr.bf16.mxu0 0
  %3038 = vmatpush1.bf16.msra.mxu0 %v2965
  %3039 = vmatprep.subr.bf16.mxu0 0
  %3040 = vmatpush1.bf16.msra.mxu0 %v2966
  %3041 = vmatprep.subr.bf16.mxu0 0
  %3042 = vmatpush1.bf16.msra.mxu0 %v2967
  %3043 = vmatprep.subr.bf16.mxu0 0
  %3044 = vmatpush1.bf16.msra.mxu0 %v2968
  %3045 = vmatprep.subr.bf16.mxu0 0
  %3046 = vmatpush1.bf16.msra.mxu0 %v2969
  %3047 = vmatprep.subr.bf16.mxu0 0
  %3048 = vmatpush1.bf16.msra.mxu0 %v2970
  %3049 = vmatprep.subr.bf16.mxu0 0
  %3050 = vmatpush1.bf16.msra.mxu0 %v2971
  %3051 = vmatprep.subr.bf16.mxu0 0
  %3052 = vmatpush1.bf16.msra.mxu0 %v2972
  %3053 = vmatprep.mubr.bf16.mxu0 %v2762
  %3054 = vmatmul.mubr.bf16.gmra.mrb[0].mxu0 %v2761
  %v3055 = vpop.f32.mrb[0].mxu0
  %v3056 = vadd.f32 0.0, %v3055
  %v3057 = vpop.f32.mrb[0].mxu0
  %v3058 = vpop.f32.mrb[0].mxu0
  %v3059 = vadd.f32 0.0, %v3058
  %v3060 = vpop.f32.mrb[0].mxu0
  %3061 = vdwg.mxu0
  %3062 = vmatprep.subr.bf16.mxu0 0
  %3063 = vmatpush1.bf16.msra.mxu0 %v2973
  %3064 = vmatprep.subr.bf16.mxu0 0
  %3065 = vmatpush1.bf16.msra.mxu0 %v2974
  %3066 = vmatprep.subr.bf16.mxu0 0
  %3067 = vmatpush1.bf16.msra.mxu0 %v2975
  %3068 = vmatprep.subr.bf16.mxu0 0
  %3069 = vmatpush1.bf16.msra.mxu0 %v2976
  %3070 = vmatprep.subr.bf16.mxu0 0
  %3071 = vmatpush1.bf16.msra.mxu0 %v2977
  %3072 = vmatprep.subr.bf16.mxu0 0
  %3073 = vmatpush1.bf16.msra.mxu0 %v2978
  %3074 = vmatprep.subr.bf16.mxu0 0
  %3075 = vmatpush1.bf16.msra.mxu0 %v2979
  %3076 = vmatprep.subr.bf16.mxu0 0
  %3077 = vmatpush1.bf16.msra.mxu0 %v2980
  %3078 = vmatprep.subr.bf16.mxu0 0
  %3079 = vmatpush1.bf16.msra.mxu0 %v2981
  %3080 = vmatprep.subr.bf16.mxu0 0
  %3081 = vmatpush1.bf16.msra.mxu0 %v2982
  %3082 = vmatprep.subr.bf16.mxu0 0
  %3083 = vmatpush1.bf16.msra.mxu0 %v2983
  %3084 = vmatprep.subr.bf16.mxu0 0
  %3085 = vmatpush1.bf16.msra.mxu0 %v2984
  %3086 = vmatprep.subr.bf16.mxu0 0
  %3087 = vmatpush1.bf16.msra.mxu0 %v2985
  %3088 = vmatprep.subr.bf16.mxu0 0
  %3089 = vmatpush1.bf16.msra.mxu0 %v2986
  %3090 = vmatprep.subr.bf16.mxu0 0
  %3091 = vmatpush1.bf16.msra.mxu0 %v2987
  %3092 = vmatprep.subr.bf16.mxu0 0
  %3093 = vmatpush1.bf16.msra.mxu0 %v2988
  %3094 = vmatprep.mubr.bf16.mxu0 %v2764
  %3095 = vmatmul.mubr.bf16.gmra.mrb[0].mxu0 %v2763
  %v3096 = vpop.f32.mrb[0].mxu0
  %v3097 = vadd.f32 %v3056, %v3096
  %v3098 = vpop.f32.mrb[0].mxu0
  %v3099 = vpop.f32.mrb[0].mxu0
  %v3100 = vadd.f32 %v3059, %v3099
  %v3101 = vpop.f32.mrb[0].mxu0
  %3102 = vdwg.mxu0
  %v3103 = vld [vmem:[%s7] sm:$0xf]
  %v3104 = vld [vmem:[%s7 + $0x4] sm:$0xf]
  %v3105 = vld [vmem:[%s7 + $0x8] sm:$0xf]
  %v3106 = vld [vmem:[%s7 + $0xc] sm:$0xf]
  %v3107 = vpack.c.bf16 %v3100, %v3097
  %v3112 = vunpack.c.l.b16 %v3103
  %v3113 = vunpack.c.l.b16 %v3104
  %v3114 = vunpack.c.l.b16 %v3105
  %v3115 = vunpack.c.l.b16 %v3106
  %v3116 = vpack.c.b16 %v3113, %v3112
  %v3117 = vpack.c.b16 %v3115, %v3114
  %v3119 = vsel %vm602, %v3116, 0
  %v3122 = vsel %vm602, %v3117, 0
  %3124 = vmatprep.subr.bf16.mxu0 0
  %3125 = vmatpush1.bf16.msra.mxu0 %v3107
  %3126 = vmatprep.subr.bf16.mxu0 0
  %3127 = vmatpush1.bf16.msra.mxu0 0
  %3128 = vmatprep.subr.bf16.mxu0 0
  %3129 = vmatpush1.bf16.msra.mxu0 0
  %3130 = vmatprep.subr.bf16.mxu0 0
  %3131 = vmatpush1.bf16.msra.mxu0 0
  %3132 = vmatprep.subr.bf16.mxu0 0
  %3133 = vmatpush1.bf16.msra.mxu0 0
  %3134 = vmatprep.subr.bf16.mxu0 0
  %3135 = vmatpush1.bf16.msra.mxu0 0
  %3136 = vmatprep.subr.bf16.mxu0 0
  %3137 = vmatpush1.bf16.msra.mxu0 0
  %3138 = vmatprep.subr.bf16.mxu0 0
  %3139 = vmatpush1.bf16.msra.mxu0 0
  %3140 = vmatprep.subr.bf16.mxu0 0
  %3141 = vmatpush1.bf16.msra.mxu0 0
  %3142 = vmatprep.subr.bf16.mxu0 0
  %3143 = vmatpush1.bf16.msra.mxu0 0
  %3144 = vmatprep.subr.bf16.mxu0 0
  %3145 = vmatpush1.bf16.msra.mxu0 0
  %3146 = vmatprep.subr.bf16.mxu0 0
  %3147 = vmatpush1.bf16.msra.mxu0 0
  %3148 = vmatprep.subr.bf16.mxu0 0
  %3149 = vmatpush1.bf16.msra.mxu0 0
  %3150 = vmatprep.subr.bf16.mxu0 0
  %3151 = vmatpush1.bf16.msra.mxu0 0
  %3152 = vmatprep.subr.bf16.mxu0 0
  %3153 = vmatpush1.bf16.msra.mxu0 0
  %3154 = vmatprep.subr.bf16.mxu0 0
  %3155 = vmatpush1.bf16.msra.mxu0 0
  %3156 = vmatprep.mubr.bf16.mxu0 0
  %3157 = vmatmul.mubr.bf16.gmra.mrb[0].mxu0 %v3119
  %v3158 = vpop.f32.mrb[0].mxu0
  %v3159 = vadd.f32 0.0, %v3158
  %v3160 = vpop.f32.mrb[0].mxu0
  %v3161 = vpop.f32.mrb[0].mxu0
  %v3162 = vadd.f32 0.0, %v3161
  %v3163 = vpop.f32.mrb[0].mxu0
  %3164 = vmatprep.mubr.bf16.mxu0 0
  %3165 = vmatmul.mubr.bf16.gmra.mrb[0].mxu0 %v3122
  %v3166 = vpop.f32.mrb[0].mxu0
  %v3167 = vadd.f32 0.0, %v3166
  %v3168 = vpop.f32.mrb[0].mxu0
  %v3169 = vpop.f32.mrb[0].mxu0
  %v3170 = vadd.f32 0.0, %v3169
  %v3171 = vpop.f32.mrb[0].mxu0
  %3172 = vdwg.mxu0
  %v3173 = vld [vmem:[%s11] sm:$0xff]
  %v3174 = vld [vmem:[%s11 + $0x8] sm:$0xff]
  %v3175 = vld [vmem:[%s12] sm:$0x1]
  %v3176 = vld [vmem:[%s9] sm:$0xf]
  %v3177 = vld [vmem:[%s10] sm:$0xf]
  %v3178 = vld [vmem:[%s10 + $0x4] sm:$0xf]
  %v3179 = vld [vmem:[%s10 + $0x8] sm:$0xf]
  %v3180 = vld [vmem:[%s10 + $0xc] sm:$0xf]
  %v3181 = vld [vmem:[%s8] sm:$0xff]
  %v3182 = vld [vmem:[%s8 + $0x8] sm:$0xf]
  %v3183 = vld [vmem:[%s8 + $0xc] sm:$0xff]
  %v3184 = vld [vmem:[%s8 + $0x14] sm:$0xf]
  %v3185 = vld [vmem:[%s8 + $0x18] sm:$0xff]
  %v3186 = vld [vmem:[%s8 + $0x20] sm:$0xf]
  %v3187 = vld [vmem:[%s8 + $0x24] sm:$0xff]
  %v3188 = vld [vmem:[%s8 + $0x2c] sm:$0xf]
  %3189 = vrot.lane.b32.xlu0 %v3159, 9
  %v3190 = vpop.permute.xlu0 %3189
  %3191 = vrot.lane.b32.xlu0 %v3162, 9
  %v3192 = vpop.permute.xlu0 %3191
  %3193 = vrot.lane.b32.xlu0 %v3167, 9
  %v3194 = vpop.permute.xlu0 %3193
  %3195 = vrot.lane.b32.xlu0 %v3170, 9
  %v3196 = vpop.permute.xlu0 %3195
  %v3197 = vlaneseq
  %v3198 = vshrl.u32 %v3197, 7
  %v3199 = vsub.s32 0, %v3198
  %v3200 = vrot.slane %v3173, %v3199
  %v3201 = vmul.f32 %v3190, %v3200
  %v3202 = vmul.f32 %v3192, %v3200
  %v3203 = vmul.f32 %v3194, %v3200
  %v3204 = vmul.f32 %v3196, %v3200
  %v3205 = vpack.c.bf16 %v3202, %v3201
  %v3206 = vpack.c.bf16 %v3204, %v3203
  %3207 = vst [vmem:[#allocation3] sm:$0xff] %v3205
  %3208 = vst [vmem:[#allocation3 + $0x8] sm:$0xff] %v3206
  %3209 = vrot.lane.b32.xlu0 %v3159, 8
  %v3210 = vpop.permute.xlu0 %3209
  %3211 = vrot.lane.b32.xlu0 %v3162, 8
  %v3212 = vpop.permute.xlu0 %3211
  %3213 = vrot.lane.b32.xlu0 %v3167, 8
  %v3214 = vpop.permute.xlu0 %3213
  %3215 = vrot.lane.b32.xlu0 %v3170, 8
  %v3216 = vpop.permute.xlu0 %3215
  %v3217 = vlaneseq
  %v3218 = vshrl.u32 %v3217, 7
  %v3219 = vsub.s32 1, %v3218
  %v3220 = vrot.slane %v3173, %v3219
  %v3221 = vmul.f32 %v3210, %v3220
  %v3222 = vmul.f32 %v3212, %v3220
  %v3223 = vmul.f32 %v3214, %v3220
  %v3224 = vmul.f32 %v3216, %v3220
  %v3225 = vpack.c.bf16 %v3222, %v3221
  %v3226 = vpack.c.bf16 %v3224, %v3223
  %3227 = vst [vmem:[#allocation3 + $0x10] sm:$0xff] %v3225
  %3228 = vst [vmem:[#allocation3 + $0x18] sm:$0xff] %v3226
  %3229 = vrot.lane.b32.xlu0 %v3159, 7
  %v3230 = vpop.permute.xlu0 %3229
  %3231 = vrot.lane.b32.xlu0 %v3162, 7
  %v3232 = vpop.permute.xlu0 %3231
  %3233 = vrot.lane.b32.xlu0 %v3167, 7
  %v3234 = vpop.permute.xlu0 %3233
  %3235 = vrot.lane.b32.xlu0 %v3170, 7
  %v3236 = vpop.permute.xlu0 %3235
  %v3237 = vlaneseq
  %v3238 = vshrl.u32 %v3237, 7
  %v3239 = vsub.s32 2, %v3238
  %v3240 = vrot.slane %v3173, %v3239
  %v3241 = vmul.f32 %v3230, %v3240
  %v3242 = vmul.f32 %v3232, %v3240
  %v3243 = vmul.f32 %v3234, %v3240
  %v3244 = vmul.f32 %v3236, %v3240
  %v3245 = vpack.c.bf16 %v3242, %v3241
  %v3246 = vpack.c.bf16 %v3244, %v3243
  %3247 = vst [vmem:[#allocation3 + $0x20] sm:$0xff] %v3245
  %3248 = vst [vmem:[#allocation3 + $0x28] sm:$0xff] %v3246
  %3249 = vrot.lane.b32.xlu0 %v3159, 1
  %v3250 = vpop.permute.xlu0 %3249
  %3251 = vrot.lane.b32.xlu0 %v3162, 1
  %v3252 = vpop.permute.xlu0 %3251
  %3253 = vrot.lane.b32.xlu0 %v3167, 1
  %v3254 = vpop.permute.xlu0 %3253
  %3255 = vrot.lane.b32.xlu0 %v3170, 1
  %v3256 = vpop.permute.xlu0 %3255
  %v3257 = vlaneseq
  %v3258 = vshrl.u32 %v3257, 7
  %v3259 = vsub.s32 3, %v3258
  %v3260 = vrot.slane %v3173, %v3259
  %v3261 = vmul.f32 %v3250, %v3260
  %v3262 = vmul.f32 %v3252, %v3260
  %v3263 = vmul.f32 %v3254, %v3260
  %v3264 = vmul.f32 %v3256, %v3260
  %v3265 = vpack.c.bf16 %v3262, %v3261
  %v3266 = vpack.c.bf16 %v3264, %v3263
  %3267 = vst [vmem:[#allocation3 + $0x30] sm:$0xff] %v3265
  %3268 = vst [vmem:[#allocation3 + $0x38] sm:$0xff] %v3266
  %v3269 = vpack.c.bf16 %v3162, %v3159
  %v3270 = vpack.c.bf16 %v3170, %v3167
  %3271 = vst [vmem:[#allocation3 + $0x40] sm:$0xff] %v3269
  %3272 = vst [vmem:[#allocation3 + $0x48] sm:$0xff] %v3270
  %3273 = vrot.lane.b32.xlu0 %v3159, 127
  %v3274 = vpop.permute.xlu0 %3273
  %3275 = vrot.lane.b32.xlu0 %v3162, 127
  %v3276 = vpop.permute.xlu0 %3275
  %3277 = vrot.lane.b32.xlu0 %v3167, 127
  %v3278 = vpop.permute.xlu0 %3277
  %3279 = vrot.lane.b32.xlu0 %v3170, 127
  %v3280 = vpop.permute.xlu0 %3279
  %v3281 = vlaneseq
  %v3282 = vshrl.u32 %v3281, 7
  %v3283 = vsub.s32 5, %v3282
  %v3284 = vrot.slane %v3173, %v3283
  %v3285 = vmul.f32 %v3274, %v3284
  %v3286 = vmul.f32 %v3276, %v3284
  %v3287 = vmul.f32 %v3278, %v3284
  %v3288 = vmul.f32 %v3280, %v3284
  %v3289 = vpack.c.bf16 %v3286, %v3285
  %v3290 = vpack.c.bf16 %v3288, %v3287
  %3291 = vst [vmem:[#allocation3 + $0x50] sm:$0xff] %v3289
  %3292 = vst [vmem:[#allocation3 + $0x58] sm:$0xff] %v3290
  %3293 = vrot.lane.b32.xlu0 %v3159, 121
  %v3294 = vpop.permute.xlu0 %3293
  %3295 = vrot.lane.b32.xlu0 %v3162, 121
  %v3296 = vpop.permute.xlu0 %3295
  %3297 = vrot.lane.b32.xlu0 %v3167, 121
  %v3298 = vpop.permute.xlu0 %3297
  %3299 = vrot.lane.b32.xlu0 %v3170, 121
  %v3300 = vpop.permute.xlu0 %3299
  %v3301 = vlaneseq
  %v3302 = vshrl.u32 %v3301, 7
  %v3303 = vsub.s32 6, %v3302
  %v3304 = vrot.slane %v3173, %v3303
  %v3305 = vmul.f32 %v3294, %v3304
  %v3306 = vmul.f32 %v3296, %v3304
  %v3307 = vmul.f32 %v3298, %v3304
  %v3308 = vmul.f32 %v3300, %v3304
  %v3309 = vpack.c.bf16 %v3306, %v3305
  %v3310 = vpack.c.bf16 %v3308, %v3307
  %3311 = vst [vmem:[#allocation3 + $0x60] sm:$0xff] %v3309
  %3312 = vst [vmem:[#allocation3 + $0x68] sm:$0xff] %v3310
  %3313 = vrot.lane.b32.xlu0 %v3159, 120
  %v3314 = vpop.permute.xlu0 %3313
  %3315 = vrot.lane.b32.xlu0 %v3162, 120
  %v3316 = vpop.permute.xlu0 %3315
  %3317 = vrot.lane.b32.xlu0 %v3167, 120
  %v3318 = vpop.permute.xlu0 %3317
  %3319 = vrot.lane.b32.xlu0 %v3170, 120
  %v3320 = vpop.permute.xlu0 %3319
  %v3321 = vlaneseq
  %v3322 = vshrl.u32 %v3321, 7
  %v3323 = vsub.s32 7, %v3322
  %v3324 = vrot.slane %v3173, %v3323
  %v3325 = vmul.f32 %v3314, %v3324
  %v3326 = vmul.f32 %v3316, %v3324
  %v3327 = vmul.f32 %v3318, %v3324
  %v3328 = vmul.f32 %v3320, %v3324
  %v3329 = vpack.c.bf16 %v3326, %v3325
  %v3330 = vpack.c.bf16 %v3328, %v3327
  %3331 = vst [vmem:[#allocation3 + $0x70] sm:$0xff] %v3329
  %3332 = vst [vmem:[#allocation3 + $0x78] sm:$0xff] %v3330
  %3333 = vrot.lane.b32.xlu0 %v3159, 119
  %v3334 = vpop.permute.xlu0 %3333
  %3335 = vrot.lane.b32.xlu0 %v3162, 119
  %v3336 = vpop.permute.xlu0 %3335
  %3337 = vrot.lane.b32.xlu0 %v3167, 119
  %v3338 = vpop.permute.xlu0 %3337
  %3339 = vrot.lane.b32.xlu0 %v3170, 119
  %v3340 = vpop.permute.xlu0 %3339
  %v3341 = vlaneseq
  %v3342 = vshrl.u32 %v3341, 7
  %v3343 = vsub.s32 0, %v3342
  %v3344 = vrot.slane %v3174, %v3343
  %v3345 = vmul.f32 %v3334, %v3344
  %v3346 = vmul.f32 %v3336, %v3344
  %v3347 = vmul.f32 %v3338, %v3344
  %v3348 = vmul.f32 %v3340, %v3344
  %v3349 = vpack.c.bf16 %v3346, %v3345
  %v3350 = vpack.c.bf16 %v3348, %v3347
  %3351 = vst [vmem:[#allocation3 + $0x80] sm:$0xff] %v3349
  %3352 = vst [vmem:[#allocation3 + $0x88] sm:$0xff] %v3350
  %v3353 = vld [vmem:[#allocation3] sm:$0xff]
  %v3354 = vld [vmem:[#allocation3 + $0x8] sm:$0xff]
  %v3355 = vld [vmem:[#allocation3 + $0x10] sm:$0xff]
  %v3356 = vld [vmem:[#allocation3 + $0x18] sm:$0xff]
  %v3357 = vld [vmem:[#allocation3 + $0x20] sm:$0xff]
  %v3358 = vld [vmem:[#allocation3 + $0x28] sm:$0xff]
  %v3359 = vld [vmem:[#allocation3 + $0x30] sm:$0xff]
  %v3360 = vld [vmem:[#allocation3 + $0x38] sm:$0xff]
  %v3361 = vld [vmem:[#allocation3 + $0x40] sm:$0xff]
  %v3362 = vld [vmem:[#allocation3 + $0x48] sm:$0xff]
  %v3363 = vld [vmem:[#allocation3 + $0x50] sm:$0xff]
  %v3364 = vld [vmem:[#allocation3 + $0x58] sm:$0xff]
  %v3365 = vld [vmem:[#allocation3 + $0x60] sm:$0xff]
  %v3366 = vld [vmem:[#allocation3 + $0x68] sm:$0xff]
  %v3367 = vld [vmem:[#allocation3 + $0x70] sm:$0xff]
  %v3368 = vld [vmem:[#allocation3 + $0x78] sm:$0xff]
  %v3369 = vld [vmem:[#allocation3 + $0x80] sm:$0xff]
  %v3370 = vld [vmem:[#allocation3 + $0x88] sm:$0xff]
  %v3379 = vunpack.c.l.b16 %v3181
  %v3380 = vunpack.c.h.b16 %v3181
  %v3381 = vunpack.c.l.b16 %v3182
  %v3382 = vunpack.c.l.b16 %v3183
  %v3383 = vunpack.c.h.b16 %v3183
  %v3384 = vunpack.c.l.b16 %v3184
  %v3385 = vunpack.c.l.b16 %v3185
  %v3386 = vunpack.c.h.b16 %v3185
  %v3387 = vunpack.c.l.b16 %v3186
  %v3388 = vunpack.c.l.b16 %v3187
  %v3389 = vunpack.c.h.b16 %v3187
  %v3390 = vunpack.c.l.b16 %v3188
  %v3391 = vpack.c.b16 %v3382, %v3379
  %v3392 = vpack.c.b16 %v3383, %v3380
  %v3393 = vpack.c.b16 %v3384, %v3381
  %v3394 = vpack.c.b16 %v3388, %v3385
  %v3395 = vpack.c.b16 %v3389, %v3386
  %v3396 = vpack.c.b16 %v3390, %v3387
  %vm3401 = vcmask 261120
  %v3403 = vsel %vm3401, %v3393, 0
  %v3406 = vsel %vm3401, %v3396, 0
  %3408 = vmatprep.subr.bf16.mxu0 0
  %3409 = vmatpush1.bf16.msra.mxu0 %v3353
  %3410 = vmatprep.subr.bf16.mxu0 0
  %3411 = vmatpush1.bf16.msra.mxu0 %v3354
  %3412 = vmatprep.subr.bf16.mxu0 0
  %3413 = vmatpush1.bf16.msra.mxu0 %v3355
  %3414 = vmatprep.subr.bf16.mxu0 0
  %3415 = vmatpush1.bf16.msra.mxu0 %v3356
  %3416 = vmatprep.subr.bf16.mxu0 0
  %3417 = vmatpush1.bf16.msra.mxu0 %v3357
  %3418 = vmatprep.subr.bf16.mxu0 0
  %3419 = vmatpush1.bf16.msra.mxu0 %v3358
  %3420 = vmatprep.subr.bf16.mxu0 0
  %3421 = vmatpush1.bf16.msra.mxu0 %v3359
  %3422 = vmatprep.subr.bf16.mxu0 0
  %3423 = vmatpush1.bf16.msra.mxu0 %v3360
  %3424 = vmatprep.subr.bf16.mxu0 0
  %3425 = vmatpush1.bf16.msra.mxu0 %v3361
  %3426 = vmatprep.subr.bf16.mxu0 0
  %3427 = vmatpush1.bf16.msra.mxu0 %v3362
  %3428 = vmatprep.subr.bf16.mxu0 0
  %3429 = vmatpush1.bf16.msra.mxu0 %v3363
  %3430 = vmatprep.subr.bf16.mxu0 0
  %3431 = vmatpush1.bf16.msra.mxu0 %v3364
  %3432 = vmatprep.subr.bf16.mxu0 0
  %3433 = vmatpush1.bf16.msra.mxu0 %v3365
  %3434 = vmatprep.subr.bf16.mxu0 0
  %3435 = vmatpush1.bf16.msra.mxu0 %v3366
  %3436 = vmatprep.subr.bf16.mxu0 0
  %3437 = vmatpush1.bf16.msra.mxu0 %v3367
  %3438 = vmatprep.subr.bf16.mxu0 0
  %3439 = vmatpush1.bf16.msra.mxu0 %v3368
  %3440 = vmatprep.mubr.bf16.mxu0 %v3392
  %3441 = vmatmul.mubr.bf16.gmra.mrb[0].mxu0 %v3391
  %v3442 = vpop.f32.mrb[0].mxu0
  %v3443 = vadd.f32 0.0, %v3442
  %v3444 = vpop.f32.mrb[0].mxu0
  %v3445 = vpop.f32.mrb[0].mxu0
  %v3446 = vadd.f32 0.0, %v3445
  %v3447 = vpop.f32.mrb[0].mxu0
  %3448 = vmatprep.mubr.bf16.mxu0 %v3395
  %3449 = vmatmul.mubr.bf16.gmra.mrb[0].mxu0 %v3394
  %v3450 = vpop.f32.mrb[0].mxu0
  %v3451 = vadd.f32 0.0, %v3450
  %v3452 = vpop.f32.mrb[0].mxu0
  %v3453 = vpop.f32.mrb[0].mxu0
  %v3454 = vadd.f32 0.0, %v3453
  %v3455 = vpop.f32.mrb[0].mxu0
  %3456 = vdwg.mxu0
  %3457 = vmatprep.subr.bf16.mxu0 0
  %3458 = vmatpush1.bf16.msra.mxu0 %v3369
  %3459 = vmatprep.subr.bf16.mxu0 0
  %3460 = vmatpush1.bf16.msra.mxu0 %v3370
  %3461 = vmatprep.subr.bf16.mxu0 0
  %3462 = vmatpush1.bf16.msra.mxu0 0
  %3463 = vmatprep.subr.bf16.mxu0 0
  %3464 = vmatpush1.bf16.msra.mxu0 0
  %3465 = vmatprep.subr.bf16.mxu0 0
  %3466 = vmatpush1.bf16.msra.mxu0 0
  %3467 = vmatprep.subr.bf16.mxu0 0
  %3468 = vmatpush1.bf16.msra.mxu0 0
  %3469 = vmatprep.subr.bf16.mxu0 0
  %3470 = vmatpush1.bf16.msra.mxu0 0
  %3471 = vmatprep.subr.bf16.mxu0 0
  %3472 = vmatpush1.bf16.msra.mxu0 0
  %3473 = vmatprep.subr.bf16.mxu0 0
  %3474 = vmatpush1.bf16.msra.mxu0 0
  %3475 = vmatprep.subr.bf16.mxu0 0
  %3476 = vmatpush1.bf16.msra.mxu0 0
  %3477 = vmatprep.subr.bf16.mxu0 0
  %3478 = vmatpush1.bf16.msra.mxu0 0
  %3479 = vmatprep.subr.bf16.mxu0 0
  %3480 = vmatpush1.bf16.msra.mxu0 0
  %3481 = vmatprep.subr.bf16.mxu0 0
  %3482 = vmatpush1.bf16.msra.mxu0 0
  %3483 = vmatprep.subr.bf16.mxu0 0
  %3484 = vmatpush1.bf16.msra.mxu0 0
  %3485 = vmatprep.subr.bf16.mxu0 0
  %3486 = vmatpush1.bf16.msra.mxu0 0
  %3487 = vmatprep.subr.bf16.mxu0 0
  %3488 = vmatpush1.bf16.msra.mxu0 0
  %3489 = vmatprep.mubr.bf16.mxu0 0
  %3490 = vmatmul.mubr.bf16.gmra.mrb[0].mxu0 %v3403
  %v3491 = vpop.f32.mrb[0].mxu0
  %v3492 = vadd.f32 %v3443, %v3491
  %v3493 = vpop.f32.mrb[0].mxu0
  %v3494 = vpop.f32.mrb[0].mxu0
  %v3495 = vadd.f32 %v3446, %v3494
  %v3496 = vpop.f32.mrb[0].mxu0
  %3497 = vmatprep.mubr.bf16.mxu0 0
  %3498 = vmatmul.mubr.bf16.gmra.mrb[0].mxu0 %v3406
  %v3499 = vpop.f32.mrb[0].mxu0
  %v3500 = vadd.f32 %v3451, %v3499
  %v3501 = vpop.f32.mrb[0].mxu0
  %v3502 = vpop.f32.mrb[0].mxu0
  %v3503 = vadd.f32 %v3454, %v3502
  %v3504 = vpop.f32.mrb[0].mxu0
  %3505 = vdwg.mxu0
  %v3506 = vmax.f32 %v3492, 0.0
  %v3507 = vmax.f32 %v3495, 0.0
  %v3508 = vmax.f32 %v3500, 0.0
  %v3509 = vmax.f32 %v3503, 0.0
  %s3510 = scalar_lea.vmem %s8, 48
  %v3511 = vld [vmem:[%s3510] sm:$0xff]
  %v3512 = vld [vmem:[%s3510 + $0x8] sm:$0xf]
  %v3513 = vld [vmem:[%s3510 + $0xc] sm:$0xff]
  %v3514 = vld [vmem:[%s3510 + $0x14] sm:$0xf]
  %v3515 = vld [vmem:[%s3510 + $0x18] sm:$0xff]
  %v3516 = vld [vmem:[%s3510 + $0x20] sm:$0xf]
  %v3517 = vld [vmem:[%s3510 + $0x24] sm:$0xff]
  %v3518 = vld [vmem:[%s3510 + $0x2c] sm:$0xf]
  %3519 = vrot.lane.b32.xlu0 %v3506, 9
  %v3520 = vpop.permute.xlu0 %3519
  %3521 = vrot.lane.b32.xlu0 %v3507, 9
  %v3522 = vpop.permute.xlu0 %3521
  %3523 = vrot.lane.b32.xlu0 %v3508, 9
  %v3524 = vpop.permute.xlu0 %3523
  %3525 = vrot.lane.b32.xlu0 %v3509, 9
  %v3526 = vpop.permute.xlu0 %3525
  %v3527 = vmul.f32 %v3520, %v3200
  %v3528 = vmul.f32 %v3522, %v3200
  %v3529 = vmul.f32 %v3524, %v3200
  %v3530 = vmul.f32 %v3526, %v3200
  %v3531 = vpack.c.bf16 %v3528, %v3527
  %v3532 = vpack.c.bf16 %v3530, %v3529
  %3533 = vst [vmem:[#allocation3] sm:$0xff] %v3531
  %3534 = vst [vmem:[#allocation3 + $0x8] sm:$0xff] %v3532
  %3535 = vrot.lane.b32.xlu0 %v3506, 8
  %v3536 = vpop.permute.xlu0 %3535
  %3537 = vrot.lane.b32.xlu0 %v3507, 8
  %v3538 = vpop.permute.xlu0 %3537
  %3539 = vrot.lane.b32.xlu0 %v3508, 8
  %v3540 = vpop.permute.xlu0 %3539
  %3541 = vrot.lane.b32.xlu0 %v3509, 8
  %v3542 = vpop.permute.xlu0 %3541
  %v3543 = vmul.f32 %v3536, %v3220
  %v3544 = vmul.f32 %v3538, %v3220
  %v3545 = vmul.f32 %v3540, %v3220
  %v3546 = vmul.f32 %v3542, %v3220
  %v3547 = vpack.c.bf16 %v3544, %v3543
  %v3548 = vpack.c.bf16 %v3546, %v3545
  %3549 = vst [vmem:[#allocation3 + $0x10] sm:$0xff] %v3547
  %3550 = vst [vmem:[#allocation3 + $0x18] sm:$0xff] %v3548
  %3551 = vrot.lane.b32.xlu0 %v3506, 7
  %v3552 = vpop.permute.xlu0 %3551
  %3553 = vrot.lane.b32.xlu0 %v3507, 7
  %v3554 = vpop.permute.xlu0 %3553
  %3555 = vrot.lane.b32.xlu0 %v3508, 7
  %v3556 = vpop.permute.xlu0 %3555
  %3557 = vrot.lane.b32.xlu0 %v3509, 7
  %v3558 = vpop.permute.xlu0 %3557
  %v3559 = vmul.f32 %v3552, %v3240
  %v3560 = vmul.f32 %v3554, %v3240
  %v3561 = vmul.f32 %v3556, %v3240
  %v3562 = vmul.f32 %v3558, %v3240
  %v3563 = vpack.c.bf16 %v3560, %v3559
  %v3564 = vpack.c.bf16 %v3562, %v3561
  %3565 = vst [vmem:[#allocation3 + $0x20] sm:$0xff] %v3563
  %3566 = vst [vmem:[#allocation3 + $0x28] sm:$0xff] %v3564
  %3567 = vrot.lane.b32.xlu0 %v3506, 1
  %v3568 = vpop.permute.xlu0 %3567
  %3569 = vrot.lane.b32.xlu0 %v3507, 1
  %v3570 = vpop.permute.xlu0 %3569
  %3571 = vrot.lane.b32.xlu0 %v3508, 1
  %v3572 = vpop.permute.xlu0 %3571
  %3573 = vrot.lane.b32.xlu0 %v3509, 1
  %v3574 = vpop.permute.xlu0 %3573
  %v3575 = vmul.f32 %v3568, %v3260
  %v3576 = vmul.f32 %v3570, %v3260
  %v3577 = vmul.f32 %v3572, %v3260
  %v3578 = vmul.f32 %v3574, %v3260
  %v3579 = vpack.c.bf16 %v3576, %v3575
  %v3580 = vpack.c.bf16 %v3578, %v3577
  %3581 = vst [vmem:[#allocation3 + $0x30] sm:$0xff] %v3579
  %3582 = vst [vmem:[#allocation3 + $0x38] sm:$0xff] %v3580
  %v3583 = vpack.c.bf16 %v3507, %v3506
  %v3584 = vpack.c.bf16 %v3509, %v3508
  %3585 = vst [vmem:[#allocation3 + $0x40] sm:$0xff] %v3583
  %3586 = vst [vmem:[#allocation3 + $0x48] sm:$0xff] %v3584
  %3587 = vrot.lane.b32.xlu0 %v3506, 127
  %v3588 = vpop.permute.xlu0 %3587
  %3589 = vrot.lane.b32.xlu0 %v3507, 127
  %v3590 = vpop.permute.xlu0 %3589
  %3591 = vrot.lane.b32.xlu0 %v3508, 127
  %v3592 = vpop.permute.xlu0 %3591
  %3593 = vrot.lane.b32.xlu0 %v3509, 127
  %v3594 = vpop.permute.xlu0 %3593
  %v3595 = vmul.f32 %v3588, %v3284
  %v3596 = vmul.f32 %v3590, %v3284
  %v3597 = vmul.f32 %v3592, %v3284
  %v3598 = vmul.f32 %v3594, %v3284
  %v3599 = vpack.c.bf16 %v3596, %v3595
  %v3600 = vpack.c.bf16 %v3598, %v3597
  %3601 = vst [vmem:[#allocation3 + $0x50] sm:$0xff] %v3599
  %3602 = vst [vmem:[#allocation3 + $0x58] sm:$0xff] %v3600
  %3603 = vrot.lane.b32.xlu0 %v3506, 121
  %v3604 = vpop.permute.xlu0 %3603
  %3605 = vrot.lane.b32.xlu0 %v3507, 121
  %v3606 = vpop.permute.xlu0 %3605
  %3607 = vrot.lane.b32.xlu0 %v3508, 121
  %v3608 = vpop.permute.xlu0 %3607
  %3609 = vrot.lane.b32.xlu0 %v3509, 121
  %v3610 = vpop.permute.xlu0 %3609
  %v3611 = vmul.f32 %v3604, %v3304
  %v3612 = vmul.f32 %v3606, %v3304
  %v3613 = vmul.f32 %v3608, %v3304
  %v3614 = vmul.f32 %v3610, %v3304
  %v3615 = vpack.c.bf16 %v3612, %v3611
  %v3616 = vpack.c.bf16 %v3614, %v3613
  %3617 = vst [vmem:[#allocation3 + $0x60] sm:$0xff] %v3615
  %3618 = vst [vmem:[#allocation3 + $0x68] sm:$0xff] %v3616
  %3619 = vrot.lane.b32.xlu0 %v3506, 120
  %v3620 = vpop.permute.xlu0 %3619
  %3621 = vrot.lane.b32.xlu0 %v3507, 120
  %v3622 = vpop.permute.xlu0 %3621
  %3623 = vrot.lane.b32.xlu0 %v3508, 120
  %v3624 = vpop.permute.xlu0 %3623
  %3625 = vrot.lane.b32.xlu0 %v3509, 120
  %v3626 = vpop.permute.xlu0 %3625
  %v3627 = vmul.f32 %v3620, %v3324
  %v3628 = vmul.f32 %v3622, %v3324
  %v3629 = vmul.f32 %v3624, %v3324
  %v3630 = vmul.f32 %v3626, %v3324
  %v3631 = vpack.c.bf16 %v3628, %v3627
  %v3632 = vpack.c.bf16 %v3630, %v3629
  %3633 = vst [vmem:[#allocation3 + $0x70] sm:$0xff] %v3631
  %3634 = vst [vmem:[#allocation3 + $0x78] sm:$0xff] %v3632
  %3635 = vrot.lane.b32.xlu0 %v3506, 119
  %v3636 = vpop.permute.xlu0 %3635
  %3637 = vrot.lane.b32.xlu0 %v3507, 119
  %v3638 = vpop.permute.xlu0 %3637
  %3639 = vrot.lane.b32.xlu0 %v3508, 119
  %v3640 = vpop.permute.xlu0 %3639
  %3641 = vrot.lane.b32.xlu0 %v3509, 119
  %v3642 = vpop.permute.xlu0 %3641
  %v3643 = vmul.f32 %v3636, %v3344
  %v3644 = vmul.f32 %v3638, %v3344
  %v3645 = vmul.f32 %v3640, %v3344
  %v3646 = vmul.f32 %v3642, %v3344
  %v3647 = vpack.c.bf16 %v3644, %v3643
  %v3648 = vpack.c.bf16 %v3646, %v3645
  %3649 = vst [vmem:[#allocation3 + $0x80] sm:$0xff] %v3647
  %3650 = vst [vmem:[#allocation3 + $0x88] sm:$0xff] %v3648
  %v3651 = vld [vmem:[#allocation3] sm:$0xff]
  %v3652 = vld [vmem:[#allocation3 + $0x8] sm:$0xff]
  %v3653 = vld [vmem:[#allocation3 + $0x10] sm:$0xff]
  %v3654 = vld [vmem:[#allocation3 + $0x18] sm:$0xff]
  %v3655 = vld [vmem:[#allocation3 + $0x20] sm:$0xff]
  %v3656 = vld [vmem:[#allocation3 + $0x28] sm:$0xff]
  %v3657 = vld [vmem:[#allocation3 + $0x30] sm:$0xff]
  %v3658 = vld [vmem:[#allocation3 + $0x38] sm:$0xff]
  %v3659 = vld [vmem:[#allocation3 + $0x40] sm:$0xff]
  %v3660 = vld [vmem:[#allocation3 + $0x48] sm:$0xff]
  %v3661 = vld [vmem:[#allocation3 + $0x50] sm:$0xff]
  %v3662 = vld [vmem:[#allocation3 + $0x58] sm:$0xff]
  %v3663 = vld [vmem:[#allocation3 + $0x60] sm:$0xff]
  %v3664 = vld [vmem:[#allocation3 + $0x68] sm:$0xff]
  %v3665 = vld [vmem:[#allocation3 + $0x70] sm:$0xff]
  %v3666 = vld [vmem:[#allocation3 + $0x78] sm:$0xff]
  %v3667 = vld [vmem:[#allocation3 + $0x80] sm:$0xff]
  %v3668 = vld [vmem:[#allocation3 + $0x88] sm:$0xff]
  %v3677 = vunpack.c.l.b16 %v3511
  %v3678 = vunpack.c.h.b16 %v3511
  %v3679 = vunpack.c.l.b16 %v3512
  %v3680 = vunpack.c.l.b16 %v3513
  %v3681 = vunpack.c.h.b16 %v3513
  %v3682 = vunpack.c.l.b16 %v3514
  %v3683 = vunpack.c.l.b16 %v3515
  %v3684 = vunpack.c.h.b16 %v3515
  %v3685 = vunpack.c.l.b16 %v3516
  %v3686 = vunpack.c.l.b16 %v3517
  %v3687 = vunpack.c.h.b16 %v3517
  %v3688 = vunpack.c.l.b16 %v3518
  %v3689 = vpack.c.b16 %v3680, %v3677
  %v3690 = vpack.c.b16 %v3681, %v3678
  %v3691 = vpack.c.b16 %v3682, %v3679
  %v3692 = vpack.c.b16 %v3686, %v3683
  %v3693 = vpack.c.b16 %v3687, %v3684
  %v3694 = vpack.c.b16 %v3688, %v3685
  %v3700 = vsel %vm3401, %v3691, 0
  %v3703 = vsel %vm3401, %v3694, 0
  %3705 = vmatprep.subr.bf16.mxu0 0
  %3706 = vmatpush1.bf16.msra.mxu0 %v3651
  %3707 = vmatprep.subr.bf16.mxu0 0
  %3708 = vmatpush1.bf16.msra.mxu0 %v3652
  %3709 = vmatprep.subr.bf16.mxu0 0
  %3710 = vmatpush1.bf16.msra.mxu0 %v3653
  %3711 = vmatprep.subr.bf16.mxu0 0
  %3712 = vmatpush1.bf16.msra.mxu0 %v3654
  %3713 = vmatprep.subr.bf16.mxu0 0
  %3714 = vmatpush1.bf16.msra.mxu0 %v3655
  %3715 = vmatprep.subr.bf16.mxu0 0
  %3716 = vmatpush1.bf16.msra.mxu0 %v3656
  %3717 = vmatprep.subr.bf16.mxu0 0
  %3718 = vmatpush1.bf16.msra.mxu0 %v3657
  %3719 = vmatprep.subr.bf16.mxu0 0
  %3720 = vmatpush1.bf16.msra.mxu0 %v3658
  %3721 = vmatprep.subr.bf16.mxu0 0
  %3722 = vmatpush1.bf16.msra.mxu0 %v3659
  %3723 = vmatprep.subr.bf16.mxu0 0
  %3724 = vmatpush1.bf16.msra.mxu0 %v3660
  %3725 = vmatprep.subr.bf16.mxu0 0
  %3726 = vmatpush1.bf16.msra.mxu0 %v3661
  %3727 = vmatprep.subr.bf16.mxu0 0
  %3728 = vmatpush1.bf16.msra.mxu0 %v3662
  %3729 = vmatprep.subr.bf16.mxu0 0
  %3730 = vmatpush1.bf16.msra.mxu0 %v3663
  %3731 = vmatprep.subr.bf16.mxu0 0
  %3732 = vmatpush1.bf16.msra.mxu0 %v3664
  %3733 = vmatprep.subr.bf16.mxu0 0
  %3734 = vmatpush1.bf16.msra.mxu0 %v3665
  %3735 = vmatprep.subr.bf16.mxu0 0
  %3736 = vmatpush1.bf16.msra.mxu0 %v3666
  %3737 = vmatprep.mubr.bf16.mxu0 %v3690
  %3738 = vmatmul.mubr.bf16.gmra.mrb[0].mxu0 %v3689
  %v3739 = vpop.f32.mrb[0].mxu0
  %v3740 = vadd.f32 0.0, %v3739
  %v3741 = vpop.f32.mrb[0].mxu0
  %v3742 = vpop.f32.mrb[0].mxu0
  %v3743 = vadd.f32 0.0, %v3742
  %v3744 = vpop.f32.mrb[0].mxu0
  %3745 = vmatprep.mubr.bf16.mxu0 %v3693
  %3746 = vmatmul.mubr.bf16.gmra.mrb[0].mxu0 %v3692
  %v3747 = vpop.f32.mrb[0].mxu0
  %v3748 = vadd.f32 0.0, %v3747
  %v3749 = vpop.f32.mrb[0].mxu0
  %v3750 = vpop.f32.mrb[0].mxu0
  %v3751 = vadd.f32 0.0, %v3750
  %v3752 = vpop.f32.mrb[0].mxu0
  %3753 = vdwg.mxu0
  %3754 = vmatprep.subr.bf16.mxu0 0
  %3755 = vmatpush1.bf16.msra.mxu0 %v3667
  %3756 = vmatprep.subr.bf16.mxu0 0
  %3757 = vmatpush1.bf16.msra.mxu0 %v3668
  %3758 = vmatprep.subr.bf16.mxu0 0
  %3759 = vmatpush1.bf16.msra.mxu0 0
  %3760 = vmatprep.subr.bf16.mxu0 0
  %3761 = vmatpush1.bf16.msra.mxu0 0
  %3762 = vmatprep.subr.bf16.mxu0 0
  %3763 = vmatpush1.bf16.msra.mxu0 0
  %3764 = vmatprep.subr.bf16.mxu0 0
  %3765 = vmatpush1.bf16.msra.mxu0 0
  %3766 = vmatprep.subr.bf16.mxu0 0
  %3767 = vmatpush1.bf16.msra.mxu0 0
  %3768 = vmatprep.subr.bf16.mxu0 0
  %3769 = vmatpush1.bf16.msra.mxu0 0
  %3770 = vmatprep.subr.bf16.mxu0 0
  %3771 = vmatpush1.bf16.msra.mxu0 0
  %3772 = vmatprep.subr.bf16.mxu0 0
  %3773 = vmatpush1.bf16.msra.mxu0 0
  %3774 = vmatprep.subr.bf16.mxu0 0
  %3775 = vmatpush1.bf16.msra.mxu0 0
  %3776 = vmatprep.subr.bf16.mxu0 0
  %3777 = vmatpush1.bf16.msra.mxu0 0
  %3778 = vmatprep.subr.bf16.mxu0 0
  %3779 = vmatpush1.bf16.msra.mxu0 0
  %3780 = vmatprep.subr.bf16.mxu0 0
  %3781 = vmatpush1.bf16.msra.mxu0 0
  %3782 = vmatprep.subr.bf16.mxu0 0
  %3783 = vmatpush1.bf16.msra.mxu0 0
  %3784 = vmatprep.subr.bf16.mxu0 0
  %3785 = vmatpush1.bf16.msra.mxu0 0
  %3786 = vmatprep.mubr.bf16.mxu0 0
  %3787 = vmatmul.mubr.bf16.gmra.mrb[0].mxu0 %v3700
  %v3788 = vpop.f32.mrb[0].mxu0
  %v3789 = vadd.f32 %v3740, %v3788
  %v3790 = vpop.f32.mrb[0].mxu0
  %v3791 = vpop.f32.mrb[0].mxu0
  %v3792 = vadd.f32 %v3743, %v3791
  %v3793 = vpop.f32.mrb[0].mxu0
  %3794 = vmatprep.mubr.bf16.mxu0 0
  %3795 = vmatmul.mubr.bf16.gmra.mrb[0].mxu0 %v3703
  %v3796 = vpop.f32.mrb[0].mxu0
  %v3797 = vadd.f32 %v3748, %v3796
  %v3798 = vpop.f32.mrb[0].mxu0
  %v3799 = vpop.f32.mrb[0].mxu0
  %v3800 = vadd.f32 %v3751, %v3799
  %v3801 = vpop.f32.mrb[0].mxu0
  %3802 = vdwg.mxu0
  %v3803 = vpack.c.bf16 %v3792, %v3789
  %v3804 = vpack.c.bf16 %v3800, %v3797
  %3805 = vmatprep.subr.bf16.mxu0 0
  %3806 = vmatpush1.bf16.xpose.msra.mxu0 %v3175
  %3807 = vmatprep.subr.bf16.mxu0 0
  %3808 = vmatpush1.bf16.xpose.msra.mxu0 0
  %3809 = vmatprep.subr.bf16.mxu0 0
  %3810 = vmatpush1.bf16.xpose.msra.mxu0 0
  %3811 = vmatprep.subr.bf16.mxu0 0
  %3812 = vmatpush1.bf16.xpose.msra.mxu0 0
  %3813 = vmatprep.subr.bf16.mxu0 0
  %3814 = vmatpush1.bf16.xpose.msra.mxu0 0
  %3815 = vmatprep.subr.bf16.mxu0 0
  %3816 = vmatpush1.bf16.xpose.msra.mxu0 0
  %3817 = vmatprep.subr.bf16.mxu0 0
  %3818 = vmatpush1.bf16.xpose.msra.mxu0 0
  %3819 = vmatprep.subr.bf16.mxu0 0
  %3820 = vmatpush1.bf16.xpose.msra.mxu0 0
  %3821 = vmatprep.subr.bf16.mxu0 0
  %3822 = vmatpush1.bf16.xpose.msra.mxu0 0
  %3823 = vmatprep.subr.bf16.mxu0 0
  %3824 = vmatpush1.bf16.xpose.msra.mxu0 0
  %3825 = vmatprep.subr.bf16.mxu0 0
  %3826 = vmatpush1.bf16.xpose.msra.mxu0 0
  %3827 = vmatprep.subr.bf16.mxu0 0
  %3828 = vmatpush1.bf16.xpose.msra.mxu0 0
  %3829 = vmatprep.subr.bf16.mxu0 0
  %3830 = vmatpush1.bf16.xpose.msra.mxu0 0
  %3831 = vmatprep.subr.bf16.mxu0 0
  %3832 = vmatpush1.bf16.xpose.msra.mxu0 0
  %3833 = vmatprep.subr.bf16.mxu0 0
  %3834 = vmatpush1.bf16.xpose.msra.mxu0 0
  %3835 = vmatprep.subr.bf16.mxu0 0
  %3836 = vmatpush1.bf16.xpose.msra.mxu0 0
  %3837 = vmatprep.mubr.bf16.mxu0 0
  %3838 = vmatmul.mubr.bf16.gmra.mrb[0].mxu0 %v3803
  %v3839 = vpop.f32.mrb[0].mxu0
  %v3840 = vadd.f32 0.0, %v3839
  %v3841 = vpop.f32.mrb[0].mxu0
  %v3842 = vpop.f32.mrb[0].mxu0
  %v3843 = vadd.f32 0.0, %v3842
  %v3844 = vpop.f32.mrb[0].mxu0
  %3845 = vmatprep.mubr.bf16.mxu0 0
  %3846 = vmatmul.mubr.bf16.gmra.mrb[0].mxu0 %v3804
  %v3847 = vpop.f32.mrb[0].mxu0
  %v3848 = vadd.f32 0.0, %v3847
  %v3849 = vpop.f32.mrb[0].mxu0
  %v3850 = vpop.f32.mrb[0].mxu0
  %v3851 = vadd.f32 0.0, %v3850
  %v3852 = vpop.f32.mrb[0].mxu0
  %3853 = vdwg.mxu0
  %v3854 = vmul.f32 %v3840, 0.015625
  %v3855 = vmul.f32 %v3843, 0.015625
  %v3856 = vmul.f32 %v3848, 0.015625
  %v3857 = vmul.f32 %v3851, 0.015625
  %v3858 = vpack.c.bf16 %v3855, %v3854
  %v3859 = vpack.c.bf16 %v3857, %v3856
  %v3861 = vsel %vm3401, %v3176, 0
  %3863 = vmatprep.subr.bf16.mxu0 0
  %3864 = vmatpush1.bf16.msra.mxu0 %v3858
  %3865 = vmatprep.subr.bf16.mxu0 0
  %3866 = vmatpush1.bf16.msra.mxu0 %v3859
  %3867 = vmatprep.subr.bf16.mxu0 0
  %3868 = vmatpush1.bf16.msra.mxu0 0
  %3869 = vmatprep.subr.bf16.mxu0 0
  %3870 = vmatpush1.bf16.msra.mxu0 0
  %3871 = vmatprep.subr.bf16.mxu0 0
  %3872 = vmatpush1.bf16.msra.mxu0 0
  %3873 = vmatprep.subr.bf16.mxu0 0
  %3874 = vmatpush1.bf16.msra.mxu0 0
  %3875 = vmatprep.subr.bf16.mxu0 0
  %3876 = vmatpush1.bf16.msra.mxu0 0
  %3877 = vmatprep.subr.bf16.mxu0 0
  %3878 = vmatpush1.bf16.msra.mxu0 0
  %3879 = vmatprep.subr.bf16.mxu0 0
  %3880 = vmatpush1.bf16.msra.mxu0 0
  %3881 = vmatprep.subr.bf16.mxu0 0
  %3882 = vmatpush1.bf16.msra.mxu0 0
  %3883 = vmatprep.subr.bf16.mxu0 0
  %3884 = vmatpush1.bf16.msra.mxu0 0
  %3885 = vmatprep.subr.bf16.mxu0 0
  %3886 = vmatpush1.bf16.msra.mxu0 0
  %3887 = vmatprep.subr.bf16.mxu0 0
  %3888 = vmatpush1.bf16.msra.mxu0 0
  %3889 = vmatprep.subr.bf16.mxu0 0
  %3890 = vmatpush1.bf16.msra.mxu0 0
  %3891 = vmatprep.subr.bf16.mxu0 0
  %3892 = vmatpush1.bf16.msra.mxu0 0
  %3893 = vmatprep.subr.bf16.mxu0 0
  %3894 = vmatpush1.bf16.msra.mxu0 0
  %3895 = vmatprep.mubr.bf16.mxu0 0
  %3896 = vmatmul.mubr.bf16.gmra.mrb[0].mxu0 %v3861
  %v3897 = vpop.f32.mrb[0].mxu0
  %v3898 = vadd.f32 0.0, %v3897
  %v3899 = vpop.f32.mrb[0].mxu0
  %v3900 = vpop.f32.mrb[0].mxu0
  %v3901 = vpop.f32.mrb[0].mxu0
  %3902 = vdwg.mxu0
  %v3903 = vmax.f32 %v3898, 0.0
  %v3904 = vpack.c.bf16 %v3903, %v3903
  %v3909 = vunpack.c.l.b16 %v3177
  %v3910 = vunpack.c.l.b16 %v3178
  %v3911 = vunpack.c.l.b16 %v3179
  %v3912 = vunpack.c.l.b16 %v3180
  %v3913 = vpack.c.b16 %v3910, %v3909
  %v3914 = vpack.c.b16 %v3912, %v3911
  %vm3915 = vcmask 64512
  %v3917 = vsel %vm3915, %v3913, 0
  %v3920 = vsel %vm3915, %v3914, 0
  %vm3922 = vcmask 1043456
  %v3924 = vsel %vm3922, %v3904, 0
  %3926 = vmatprep.subr.bf16.mxu0 0
  %3927 = vmatpush1.bf16.msra.mxu0 %v3924
  %3928 = vmatprep.subr.bf16.mxu0 0
  %3929 = vmatpush1.bf16.msra.mxu0 0
  %3930 = vmatprep.subr.bf16.mxu0 0
  %3931 = vmatpush1.bf16.msra.mxu0 0
  %3932 = vmatprep.subr.bf16.mxu0 0
  %3933 = vmatpush1.bf16.msra.mxu0 0
  %3934 = vmatprep.subr.bf16.mxu0 0
  %3935 = vmatpush1.bf16.msra.mxu0 0
  %3936 = vmatprep.subr.bf16.mxu0 0
  %3937 = vmatpush1.bf16.msra.mxu0 0
  %3938 = vmatprep.subr.bf16.mxu0 0
  %3939 = vmatpush1.bf16.msra.mxu0 0
  %3940 = vmatprep.subr.bf16.mxu0 0
  %3941 = vmatpush1.bf16.msra.mxu0 0
  %3942 = vmatprep.subr.bf16.mxu0 0
  %3943 = vmatpush1.bf16.msra.mxu0 0
  %3944 = vmatprep.subr.bf16.mxu0 0
  %3945 = vmatpush1.bf16.msra.mxu0 0
  %3946 = vmatprep.subr.bf16.mxu0 0
  %3947 = vmatpush1.bf16.msra.mxu0 0
  %3948 = vmatprep.subr.bf16.mxu0 0
  %3949 = vmatpush1.bf16.msra.mxu0 0
  %3950 = vmatprep.subr.bf16.mxu0 0
  %3951 = vmatpush1.bf16.msra.mxu0 0
  %3952 = vmatprep.subr.bf16.mxu0 0
  %3953 = vmatpush1.bf16.msra.mxu0 0
  %3954 = vmatprep.subr.bf16.mxu0 0
  %3955 = vmatpush1.bf16.msra.mxu0 0
  %3956 = vmatprep.subr.bf16.mxu0 0
  %3957 = vmatpush1.bf16.msra.mxu0 0
  %3958 = vmatprep.mubr.bf16.mxu0 0
  %3959 = vmatmul.mubr.bf16.gmra.mrb[0].mxu0 %v3917
  %v3960 = vpop.f32.mrb[0].mxu0
  %v3961 = vadd.f32 0.0, %v3960
  %v3962 = vpop.f32.mrb[0].mxu0
  %v3963 = vpop.f32.mrb[0].mxu0
  %v3964 = vadd.f32 0.0, %v3963
  %v3965 = vpop.f32.mrb[0].mxu0
  %3966 = vmatprep.mubr.bf16.mxu0 0
  %3967 = vmatmul.mubr.bf16.gmra.mrb[0].mxu0 %v3920
  %v3968 = vpop.f32.mrb[0].mxu0
  %v3969 = vadd.f32 0.0, %v3968
  %v3970 = vpop.f32.mrb[0].mxu0
  %v3971 = vpop.f32.mrb[0].mxu0
  %v3972 = vadd.f32 0.0, %v3971
  %v3973 = vpop.f32.mrb[0].mxu0
  %3974 = vdwg.mxu0
  %v3975 = vmul.f32 %v3961, 0.5
  %v3976 = vmul.f32 %v3964, 0.5
  %v3977 = vmul.f32 %v3969, 0.5
  %v3978 = vmul.f32 %v3972, 0.5
  %v3979 = vtanh.pop %v3975
  %v3980 = vtanh.pop %v3976
  %v3981 = vtanh.pop %v3977
  %v3982 = vtanh.pop %v3978
  %v3983 = vadd.f32 %v3979, 1.0
  %v3984 = vadd.f32 %v3980, 1.0
  %v3985 = vadd.f32 %v3981, 1.0
  %v3986 = vadd.f32 %v3982, 1.0
  %v3987 = vmul.f32 %v3983, 0.5
  %v3988 = vmul.f32 %v3984, 0.5
  %v3989 = vmul.f32 %v3985, 0.5
  %v3990 = vmul.f32 %v3986, 0.5
  %v3991 = vpack.c.bf16 %v3988, %v3987
  %v3992 = vpack.c.bf16 %v3990, %v3989
  %v3994 = vsel %vm1391, %v3991, 0
  %v3997 = vsel %vm1391, %v3992, 0
  %v4000 = vsel %vm1395, %v3175, 0
  %4002 = vmatprep.subr.bf16.mxu0 0
  %4003 = vmatpush1.bf16.msra.mxu0 %v4000
  %4004 = vmatprep.subr.bf16.mxu0 0
  %4005 = vmatpush1.bf16.msra.mxu0 0
  %4006 = vmatprep.subr.bf16.mxu0 0
  %4007 = vmatpush1.bf16.msra.mxu0 0
  %4008 = vmatprep.subr.bf16.mxu0 0
  %4009 = vmatpush1.bf16.msra.mxu0 0
  %4010 = vmatprep.subr.bf16.mxu0 0
  %4011 = vmatpush1.bf16.msra.mxu0 0
  %4012 = vmatprep.subr.bf16.mxu0 0
  %4013 = vmatpush1.bf16.msra.mxu0 0
  %4014 = vmatprep.subr.bf16.mxu0 0
  %4015 = vmatpush1.bf16.msra.mxu0 0
  %4016 = vmatprep.subr.bf16.mxu0 0
  %4017 = vmatpush1.bf16.msra.mxu0 0
  %4018 = vmatprep.subr.bf16.mxu0 0
  %4019 = vmatpush1.bf16.msra.mxu0 0
  %4020 = vmatprep.subr.bf16.mxu0 0
  %4021 = vmatpush1.bf16.msra.mxu0 0
  %4022 = vmatprep.subr.bf16.mxu0 0
  %4023 = vmatpush1.bf16.msra.mxu0 0
  %4024 = vmatprep.subr.bf16.mxu0 0
  %4025 = vmatpush1.bf16.msra.mxu0 0
  %4026 = vmatprep.subr.bf16.mxu0 0
  %4027 = vmatpush1.bf16.msra.mxu0 0
  %4028 = vmatprep.subr.bf16.mxu0 0
  %4029 = vmatpush1.bf16.msra.mxu0 0
  %4030 = vmatprep.subr.bf16.mxu0 0
  %4031 = vmatpush1.bf16.msra.mxu0 0
  %4032 = vmatprep.subr.bf16.mxu0 0
  %4033 = vmatpush1.bf16.msra.mxu0 0
  %4034 = vmatprep.mubr.bf16.mxu0 0
  %4035 = vmatmul.mubr.bf16.gmra.mrb[0].mxu0 %v3994
  %v4036 = vpop.f32.mrb[0].mxu0
  %v4037 = vadd.f32 0.0, %v4036
  %v4038 = vpop.f32.mrb[0].mxu0
  %v4039 = vpop.f32.mrb[0].mxu0
  %v4040 = vadd.f32 0.0, %v4039
  %v4041 = vpop.f32.mrb[0].mxu0
  %4042 = vmatprep.mubr.bf16.mxu0 0
  %4043 = vmatmul.mubr.bf16.gmra.mrb[0].mxu0 %v3997
  %v4044 = vpop.f32.mrb[0].mxu0
  %v4045 = vadd.f32 0.0, %v4044
  %v4046 = vpop.f32.mrb[0].mxu0
  %v4047 = vpop.f32.mrb[0].mxu0
  %v4048 = vadd.f32 0.0, %v4047
  %v4049 = vpop.f32.mrb[0].mxu0
  %4050 = vdwg.mxu0
  %v4051 = vmul.f32 %v3789, %v4037
  %v4052 = vmul.f32 %v3792, %v4040
  %v4053 = vmul.f32 %v3797, %v4045
  %v4054 = vmul.f32 %v3800, %v4048
  %v4055 = vadd.f32 %v4051, %v3159
  %v4056 = vadd.f32 %v4052, %v3162
  %v4057 = vadd.f32 %v4053, %v3167
  %v4058 = vadd.f32 %v4054, %v3170
  %s4059 = scalar_lea.vmem %s9, 4
  %v4060 = vld [vmem:[%s4059] sm:$0xf]
  %s4061 = scalar_lea.vmem %s10, 16
  %v4062 = vld [vmem:[%s4061] sm:$0xf]
  %v4063 = vld [vmem:[%s4061 + $0x4] sm:$0xf]
  %v4064 = vld [vmem:[%s4061 + $0x8] sm:$0xf]
  %v4065 = vld [vmem:[%s4061 + $0xc] sm:$0xf]
  %s4066 = scalar_lea.vmem %s8, 96
  %v4067 = vld [vmem:[%s4066] sm:$0xff]
  %v4068 = vld [vmem:[%s4066 + $0x8] sm:$0xf]
  %v4069 = vld [vmem:[%s4066 + $0xc] sm:$0xff]
  %v4070 = vld [vmem:[%s4066 + $0x14] sm:$0xf]
  %v4071 = vld [vmem:[%s4066 + $0x18] sm:$0xff]
  %v4072 = vld [vmem:[%s4066 + $0x20] sm:$0xf]
  %v4073 = vld [vmem:[%s4066 + $0x24] sm:$0xff]
  %v4074 = vld [vmem:[%s4066 + $0x2c] sm:$0xf]
  %4075 = vrot.lane.b32.xlu0 %v4055, 9
  %v4076 = vpop.permute.xlu0 %4075
  %4077 = vrot.lane.b32.xlu0 %v4056, 9
  %v4078 = vpop.permute.xlu0 %4077
  %4079 = vrot.lane.b32.xlu0 %v4057, 9
  %v4080 = vpop.permute.xlu0 %4079
  %4081 = vrot.lane.b32.xlu0 %v4058, 9
  %v4082 = vpop.permute.xlu0 %4081
  %v4083 = vmul.f32 %v4076, %v3200
  %v4084 = vmul.f32 %v4078, %v3200
  %v4085 = vmul.f32 %v4080, %v3200
  %v4086 = vmul.f32 %v4082, %v3200
  %v4087 = vpack.c.bf16 %v4084, %v4083
  %v4088 = vpack.c.bf16 %v4086, %v4085
  %4089 = vst [vmem:[#allocation3] sm:$0xff] %v4087
  %4090 = vst [vmem:[#allocation3 + $0x8] sm:$0xff] %v4088
  %4091 = vrot.lane.b32.xlu0 %v4055, 8
  %v4092 = vpop.permute.xlu0 %4091
  %4093 = vrot.lane.b32.xlu0 %v4056, 8
  %v4094 = vpop.permute.xlu0 %4093
  %4095 = vrot.lane.b32.xlu0 %v4057, 8
  %v4096 = vpop.permute.xlu0 %4095
  %4097 = vrot.lane.b32.xlu0 %v4058, 8
  %v4098 = vpop.permute.xlu0 %4097
  %v4099 = vmul.f32 %v4092, %v3220
  %v4100 = vmul.f32 %v4094, %v3220
  %v4101 = vmul.f32 %v4096, %v3220
  %v4102 = vmul.f32 %v4098, %v3220
  %v4103 = vpack.c.bf16 %v4100, %v4099
  %v4104 = vpack.c.bf16 %v4102, %v4101
  %4105 = vst [vmem:[#allocation3 + $0x10] sm:$0xff] %v4103
  %4106 = vst [vmem:[#allocation3 + $0x18] sm:$0xff] %v4104
  %4107 = vrot.lane.b32.xlu0 %v4055, 7
  %v4108 = vpop.permute.xlu0 %4107
  %4109 = vrot.lane.b32.xlu0 %v4056, 7
  %v4110 = vpop.permute.xlu0 %4109
  %4111 = vrot.lane.b32.xlu0 %v4057, 7
  %v4112 = vpop.permute.xlu0 %4111
  %4113 = vrot.lane.b32.xlu0 %v4058, 7
  %v4114 = vpop.permute.xlu0 %4113
  %v4115 = vmul.f32 %v4108, %v3240
  %v4116 = vmul.f32 %v4110, %v3240
  %v4117 = vmul.f32 %v4112, %v3240
  %v4118 = vmul.f32 %v4114, %v3240
  %v4119 = vpack.c.bf16 %v4116, %v4115
  %v4120 = vpack.c.bf16 %v4118, %v4117
  %4121 = vst [vmem:[#allocation3 + $0x20] sm:$0xff] %v4119
  %4122 = vst [vmem:[#allocation3 + $0x28] sm:$0xff] %v4120
  %4123 = vrot.lane.b32.xlu0 %v4055, 1
  %v4124 = vpop.permute.xlu0 %4123
  %4125 = vrot.lane.b32.xlu0 %v4056, 1
  %v4126 = vpop.permute.xlu0 %4125
  %4127 = vrot.lane.b32.xlu0 %v4057, 1
  %v4128 = vpop.permute.xlu0 %4127
  %4129 = vrot.lane.b32.xlu0 %v4058, 1
  %v4130 = vpop.permute.xlu0 %4129
  %v4131 = vmul.f32 %v4124, %v3260
  %v4132 = vmul.f32 %v4126, %v3260
  %v4133 = vmul.f32 %v4128, %v3260
  %v4134 = vmul.f32 %v4130, %v3260
  %v4135 = vpack.c.bf16 %v4132, %v4131
  %v4136 = vpack.c.bf16 %v4134, %v4133
  %4137 = vst [vmem:[#allocation3 + $0x30] sm:$0xff] %v4135
  %4138 = vst [vmem:[#allocation3 + $0x38] sm:$0xff] %v4136
  %v4139 = vpack.c.bf16 %v4056, %v4055
  %v4140 = vpack.c.bf16 %v4058, %v4057
  %4141 = vst [vmem:[#allocation3 + $0x40] sm:$0xff] %v4139
  %4142 = vst [vmem:[#allocation3 + $0x48] sm:$0xff] %v4140
  %4143 = vrot.lane.b32.xlu0 %v4055, 127
  %v4144 = vpop.permute.xlu0 %4143
  %4145 = vrot.lane.b32.xlu0 %v4056, 127
  %v4146 = vpop.permute.xlu0 %4145
  %4147 = vrot.lane.b32.xlu0 %v4057, 127
  %v4148 = vpop.permute.xlu0 %4147
  %4149 = vrot.lane.b32.xlu0 %v4058, 127
  %v4150 = vpop.permute.xlu0 %4149
  %v4151 = vmul.f32 %v4144, %v3284
  %v4152 = vmul.f32 %v4146, %v3284
  %v4153 = vmul.f32 %v4148, %v3284
  %v4154 = vmul.f32 %v4150, %v3284
  %v4155 = vpack.c.bf16 %v4152, %v4151
  %v4156 = vpack.c.bf16 %v4154, %v4153
  %4157 = vst [vmem:[#allocation3 + $0x50] sm:$0xff] %v4155
  %4158 = vst [vmem:[#allocation3 + $0x58] sm:$0xff] %v4156
  %4159 = vrot.lane.b32.xlu0 %v4055, 121
  %v4160 = vpop.permute.xlu0 %4159
  %4161 = vrot.lane.b32.xlu0 %v4056, 121
  %v4162 = vpop.permute.xlu0 %4161
  %4163 = vrot.lane.b32.xlu0 %v4057, 121
  %v4164 = vpop.permute.xlu0 %4163
  %4165 = vrot.lane.b32.xlu0 %v4058, 121
  %v4166 = vpop.permute.xlu0 %4165
  %v4167 = vmul.f32 %v4160, %v3304
  %v4168 = vmul.f32 %v4162, %v3304
  %v4169 = vmul.f32 %v4164, %v3304
  %v4170 = vmul.f32 %v4166, %v3304
  %v4171 = vpack.c.bf16 %v4168, %v4167
  %v4172 = vpack.c.bf16 %v4170, %v4169
  %4173 = vst [vmem:[#allocation3 + $0x60] sm:$0xff] %v4171
  %4174 = vst [vmem:[#allocation3 + $0x68] sm:$0xff] %v4172
  %4175 = vrot.lane.b32.xlu0 %v4055, 120
  %v4176 = vpop.permute.xlu0 %4175
  %4177 = vrot.lane.b32.xlu0 %v4056, 120
  %v4178 = vpop.permute.xlu0 %4177
  %4179 = vrot.lane.b32.xlu0 %v4057, 120
  %v4180 = vpop.permute.xlu0 %4179
  %4181 = vrot.lane.b32.xlu0 %v4058, 120
  %v4182 = vpop.permute.xlu0 %4181
  %v4183 = vmul.f32 %v4176, %v3324
  %v4184 = vmul.f32 %v4178, %v3324
  %v4185 = vmul.f32 %v4180, %v3324
  %v4186 = vmul.f32 %v4182, %v3324
  %v4187 = vpack.c.bf16 %v4184, %v4183
  %v4188 = vpack.c.bf16 %v4186, %v4185
  %4189 = vst [vmem:[#allocation3 + $0x70] sm:$0xff] %v4187
  %4190 = vst [vmem:[#allocation3 + $0x78] sm:$0xff] %v4188
  %4191 = vrot.lane.b32.xlu0 %v4055, 119
  %v4192 = vpop.permute.xlu0 %4191
  %4193 = vrot.lane.b32.xlu0 %v4056, 119
  %v4194 = vpop.permute.xlu0 %4193
  %4195 = vrot.lane.b32.xlu0 %v4057, 119
  %v4196 = vpop.permute.xlu0 %4195
  %4197 = vrot.lane.b32.xlu0 %v4058, 119
  %v4198 = vpop.permute.xlu0 %4197
  %v4199 = vmul.f32 %v4192, %v3344
  %v4200 = vmul.f32 %v4194, %v3344
  %v4201 = vmul.f32 %v4196, %v3344
  %v4202 = vmul.f32 %v4198, %v3344
  %v4203 = vpack.c.bf16 %v4200, %v4199
  %v4204 = vpack.c.bf16 %v4202, %v4201
  %4205 = vst [vmem:[#allocation3 + $0x80] sm:$0xff] %v4203
  %4206 = vst [vmem:[#allocation3 + $0x88] sm:$0xff] %v4204
  %v4207 = vld [vmem:[#allocation3] sm:$0xff]
  %v4208 = vld [vmem:[#allocation3 + $0x8] sm:$0xff]
  %v4209 = vld [vmem:[#allocation3 + $0x10] sm:$0xff]
  %v4210 = vld [vmem:[#allocation3 + $0x18] sm:$0xff]
  %v4211 = vld [vmem:[#allocation3 + $0x20] sm:$0xff]
  %v4212 = vld [vmem:[#allocation3 + $0x28] sm:$0xff]
  %v4213 = vld [vmem:[#allocation3 + $0x30] sm:$0xff]
  %v4214 = vld [vmem:[#allocation3 + $0x38] sm:$0xff]
  %v4215 = vld [vmem:[#allocation3 + $0x40] sm:$0xff]
  %v4216 = vld [vmem:[#allocation3 + $0x48] sm:$0xff]
  %v4217 = vld [vmem:[#allocation3 + $0x50] sm:$0xff]
  %v4218 = vld [vmem:[#allocation3 + $0x58] sm:$0xff]
  %v4219 = vld [vmem:[#allocation3 + $0x60] sm:$0xff]
  %v4220 = vld [vmem:[#allocation3 + $0x68] sm:$0xff]
  %v4221 = vld [vmem:[#allocation3 + $0x70] sm:$0xff]
  %v4222 = vld [vmem:[#allocation3 + $0x78] sm:$0xff]
  %v4223 = vld [vmem:[#allocation3 + $0x80] sm:$0xff]
  %v4224 = vld [vmem:[#allocation3 + $0x88] sm:$0xff]
  %v4233 = vunpack.c.l.b16 %v4067
  %v4234 = vunpack.c.h.b16 %v4067
  %v4235 = vunpack.c.l.b16 %v4068
  %v4236 = vunpack.c.l.b16 %v4069
  %v4237 = vunpack.c.h.b16 %v4069
  %v4238 = vunpack.c.l.b16 %v4070
  %v4239 = vunpack.c.l.b16 %v4071
  %v4240 = vunpack.c.h.b16 %v4071
  %v4241 = vunpack.c.l.b16 %v4072
  %v4242 = vunpack.c.l.b16 %v4073
  %v4243 = vunpack.c.h.b16 %v4073
  %v4244 = vunpack.c.l.b16 %v4074
  %v4245 = vpack.c.b16 %v4236, %v4233
  %v4246 = vpack.c.b16 %v4237, %v4234
  %v4247 = vpack.c.b16 %v4238, %v4235
  %v4248 = vpack.c.b16 %v4242, %v4239
  %v4249 = vpack.c.b16 %v4243, %v4240
  %v4250 = vpack.c.b16 %v4244, %v4241
  %v4256 = vsel %vm3401, %v4247, 0
  %v4259 = vsel %vm3401, %v4250, 0
  %4261 = vmatprep.subr.bf16.mxu0 0
  %4262 = vmatpush1.bf16.msra.mxu0 %v4207
  %4263 = vmatprep.subr.bf16.mxu0 0
  %4264 = vmatpush1.bf16.msra.mxu0 %v4208
  %4265 = vmatprep.subr.bf16.mxu0 0
  %4266 = vmatpush1.bf16.msra.mxu0 %v4209
  %4267 = vmatprep.subr.bf16.mxu0 0
  %4268 = vmatpush1.bf16.msra.mxu0 %v4210
  %4269 = vmatprep.subr.bf16.mxu0 0
  %4270 = vmatpush1.bf16.msra.mxu0 %v4211
  %4271 = vmatprep.subr.bf16.mxu0 0
  %4272 = vmatpush1.bf16.msra.mxu0 %v4212
  %4273 = vmatprep.subr.bf16.mxu0 0
  %4274 = vmatpush1.bf16.msra.mxu0 %v4213
  %4275 = vmatprep.subr.bf16.mxu0 0
  %4276 = vmatpush1.bf16.msra.mxu0 %v4214
  %4277 = vmatprep.subr.bf16.mxu0 0
  %4278 = vmatpush1.bf16.msra.mxu0 %v4215
  %4279 = vmatprep.subr.bf16.mxu0 0
  %4280 = vmatpush1.bf16.msra.mxu0 %v4216
  %4281 = vmatprep.subr.bf16.mxu0 0
  %4282 = vmatpush1.bf16.msra.mxu0 %v4217
  %4283 = vmatprep.subr.bf16.mxu0 0
  %4284 = vmatpush1.bf16.msra.mxu0 %v4218
  %4285 = vmatprep.subr.bf16.mxu0 0
  %4286 = vmatpush1.bf16.msra.mxu0 %v4219
  %4287 = vmatprep.subr.bf16.mxu0 0
  %4288 = vmatpush1.bf16.msra.mxu0 %v4220
  %4289 = vmatprep.subr.bf16.mxu0 0
  %4290 = vmatpush1.bf16.msra.mxu0 %v4221
  %4291 = vmatprep.subr.bf16.mxu0 0
  %4292 = vmatpush1.bf16.msra.mxu0 %v4222
  %4293 = vmatprep.mubr.bf16.mxu0 %v4246
  %4294 = vmatmul.mubr.bf16.gmra.mrb[0].mxu0 %v4245
  %v4295 = vpop.f32.mrb[0].mxu0
  %v4296 = vadd.f32 0.0, %v4295
  %v4297 = vpop.f32.mrb[0].mxu0
  %v4298 = vpop.f32.mrb[0].mxu0
  %v4299 = vadd.f32 0.0, %v4298
  %v4300 = vpop.f32.mrb[0].mxu0
  %4301 = vmatprep.mubr.bf16.mxu0 %v4249
  %4302 = vmatmul.mubr.bf16.gmra.mrb[0].mxu0 %v4248
  %v4303 = vpop.f32.mrb[0].mxu0
  %v4304 = vadd.f32 0.0, %v4303
  %v4305 = vpop.f32.mrb[0].mxu0
  %v4306 = vpop.f32.mrb[0].mxu0
  %v4307 = vadd.f32 0.0, %v4306
  %v4308 = vpop.f32.mrb[0].mxu0
  %4309 = vdwg.mxu0
  %4310 = vmatprep.subr.bf16.mxu0 0
  %4311 = vmatpush1.bf16.msra.mxu0 %v4223
  %4312 = vmatprep.subr.bf16.mxu0 0
  %4313 = vmatpush1.bf16.msra.mxu0 %v4224
  %4314 = vmatprep.subr.bf16.mxu0 0
  %4315 = vmatpush1.bf16.msra.mxu0 0
  %4316 = vmatprep.subr.bf16.mxu0 0
  %4317 = vmatpush1.bf16.msra.mxu0 0
  %4318 = vmatprep.subr.bf16.mxu0 0
  %4319 = vmatpush1.bf16.msra.mxu0 0
  %4320 = vmatprep.subr.bf16.mxu0 0
  %4321 = vmatpush1.bf16.msra.mxu0 0
  %4322 = vmatprep.subr.bf16.mxu0 0
  %4323 = vmatpush1.bf16.msra.mxu0 0
  %4324 = vmatprep.subr.bf16.mxu0 0
  %4325 = vmatpush1.bf16.msra.mxu0 0
  %4326 = vmatprep.subr.bf16.mxu0 0
  %4327 = vmatpush1.bf16.msra.mxu0 0
  %4328 = vmatprep.subr.bf16.mxu0 0
  %4329 = vmatpush1.bf16.msra.mxu0 0
  %4330 = vmatprep.subr.bf16.mxu0 0
  %4331 = vmatpush1.bf16.msra.mxu0 0
  %4332 = vmatprep.subr.bf16.mxu0 0
  %4333 = vmatpush1.bf16.msra.mxu0 0
  %4334 = vmatprep.subr.bf16.mxu0 0
  %4335 = vmatpush1.bf16.msra.mxu0 0
  %4336 = vmatprep.subr.bf16.mxu0 0
  %4337 = vmatpush1.bf16.msra.mxu0 0
  %4338 = vmatprep.subr.bf16.mxu0 0
  %4339 = vmatpush1.bf16.msra.mxu0 0
  %4340 = vmatprep.subr.bf16.mxu0 0
  %4341 = vmatpush1.bf16.msra.mxu0 0
  %4342 = vmatprep.mubr.bf16.mxu0 0
  %4343 = vmatmul.mubr.bf16.gmra.mrb[0].mxu0 %v4256
  %v4344 = vpop.f32.mrb[0].mxu0
  %v4345 = vadd.f32 %v4296, %v4344
  %v4346 = vpop.f32.mrb[0].mxu0
  %v4347 = vpop.f32.mrb[0].mxu0
  %v4348 = vadd.f32 %v4299, %v4347
  %v4349 = vpop.f32.mrb[0].mxu0
  %4350 = vmatprep.mubr.bf16.mxu0 0
  %4351 = vmatmul.mubr.bf16.gmra.mrb[0].mxu0 %v4259
  %v4352 = vpop.f32.mrb[0].mxu0
  %v4353 = vadd.f32 %v4304, %v4352
  %v4354 = vpop.f32.mrb[0].mxu0
  %v4355 = vpop.f32.mrb[0].mxu0
  %v4356 = vadd.f32 %v4307, %v4355
  %v4357 = vpop.f32.mrb[0].mxu0
  %4358 = vdwg.mxu0
  %v4359 = vmax.f32 %v4345, 0.0
  %v4360 = vmax.f32 %v4348, 0.0
  %v4361 = vmax.f32 %v4353, 0.0
  %v4362 = vmax.f32 %v4356, 0.0
  %s4363 = scalar_lea.vmem %s8, 144
  %v4364 = vld [vmem:[%s4363] sm:$0xff]
  %v4365 = vld [vmem:[%s4363 + $0x8] sm:$0xf]
  %v4366 = vld [vmem:[%s4363 + $0xc] sm:$0xff]
  %v4367 = vld [vmem:[%s4363 + $0x14] sm:$0xf]
  %v4368 = vld [vmem:[%s4363 + $0x18] sm:$0xff]
  %v4369 = vld [vmem:[%s4363 + $0x20] sm:$0xf]
  %v4370 = vld [vmem:[%s4363 + $0x24] sm:$0xff]
  %v4371 = vld [vmem:[%s4363 + $0x2c] sm:$0xf]
  %4372 = vrot.lane.b32.xlu0 %v4359, 9
  %v4373 = vpop.permute.xlu0 %4372
  %4374 = vrot.lane.b32.xlu0 %v4360, 9
  %v4375 = vpop.permute.xlu0 %4374
  %4376 = vrot.lane.b32.xlu0 %v4361, 9
  %v4377 = vpop.permute.xlu0 %4376
  %4378 = vrot.lane.b32.xlu0 %v4362, 9
  %v4379 = vpop.permute.xlu0 %4378
  %v4380 = vmul.f32 %v4373, %v3200
  %v4381 = vmul.f32 %v4375, %v3200
  %v4382 = vmul.f32 %v4377, %v3200
  %v4383 = vmul.f32 %v4379, %v3200
  %v4384 = vpack.c.bf16 %v4381, %v4380
  %v4385 = vpack.c.bf16 %v4383, %v4382
  %4386 = vst [vmem:[#allocation3] sm:$0xff] %v4384
  %4387 = vst [vmem:[#allocation3 + $0x8] sm:$0xff] %v4385
  %4388 = vrot.lane.b32.xlu0 %v4359, 8
  %v4389 = vpop.permute.xlu0 %4388
  %4390 = vrot.lane.b32.xlu0 %v4360, 8
  %v4391 = vpop.permute.xlu0 %4390
  %4392 = vrot.lane.b32.xlu0 %v4361, 8
  %v4393 = vpop.permute.xlu0 %4392
  %4394 = vrot.lane.b32.xlu0 %v4362, 8
  %v4395 = vpop.permute.xlu0 %4394
  %v4396 = vmul.f32 %v4389, %v3220
  %v4397 = vmul.f32 %v4391, %v3220
  %v4398 = vmul.f32 %v4393, %v3220
  %v4399 = vmul.f32 %v4395, %v3220
  %v4400 = vpack.c.bf16 %v4397, %v4396
  %v4401 = vpack.c.bf16 %v4399, %v4398
  %4402 = vst [vmem:[#allocation3 + $0x10] sm:$0xff] %v4400
  %4403 = vst [vmem:[#allocation3 + $0x18] sm:$0xff] %v4401
  %4404 = vrot.lane.b32.xlu0 %v4359, 7
  %v4405 = vpop.permute.xlu0 %4404
  %4406 = vrot.lane.b32.xlu0 %v4360, 7
  %v4407 = vpop.permute.xlu0 %4406
  %4408 = vrot.lane.b32.xlu0 %v4361, 7
  %v4409 = vpop.permute.xlu0 %4408
  %4410 = vrot.lane.b32.xlu0 %v4362, 7
  %v4411 = vpop.permute.xlu0 %4410
  %v4412 = vmul.f32 %v4405, %v3240
  %v4413 = vmul.f32 %v4407, %v3240
  %v4414 = vmul.f32 %v4409, %v3240
  %v4415 = vmul.f32 %v4411, %v3240
  %v4416 = vpack.c.bf16 %v4413, %v4412
  %v4417 = vpack.c.bf16 %v4415, %v4414
  %4418 = vst [vmem:[#allocation3 + $0x20] sm:$0xff] %v4416
  %4419 = vst [vmem:[#allocation3 + $0x28] sm:$0xff] %v4417
  %4420 = vrot.lane.b32.xlu0 %v4359, 1
  %v4421 = vpop.permute.xlu0 %4420
  %4422 = vrot.lane.b32.xlu0 %v4360, 1
  %v4423 = vpop.permute.xlu0 %4422
  %4424 = vrot.lane.b32.xlu0 %v4361, 1
  %v4425 = vpop.permute.xlu0 %4424
  %4426 = vrot.lane.b32.xlu0 %v4362, 1
  %v4427 = vpop.permute.xlu0 %4426
  %v4428 = vmul.f32 %v4421, %v3260
  %v4429 = vmul.f32 %v4423, %v3260
  %v4430 = vmul.f32 %v4425, %v3260
  %v4431 = vmul.f32 %v4427, %v3260
  %v4432 = vpack.c.bf16 %v4429, %v4428
  %v4433 = vpack.c.bf16 %v4431, %v4430
  %4434 = vst [vmem:[#allocation3 + $0x30] sm:$0xff] %v4432
  %4435 = vst [vmem:[#allocation3 + $0x38] sm:$0xff] %v4433
  %v4436 = vpack.c.bf16 %v4360, %v4359
  %v4437 = vpack.c.bf16 %v4362, %v4361
  %4438 = vst [vmem:[#allocation3 + $0x40] sm:$0xff] %v4436
  %4439 = vst [vmem:[#allocation3 + $0x48] sm:$0xff] %v4437
  %4440 = vrot.lane.b32.xlu0 %v4359, 127
  %v4441 = vpop.permute.xlu0 %4440
  %4442 = vrot.lane.b32.xlu0 %v4360, 127
  %v4443 = vpop.permute.xlu0 %4442
  %4444 = vrot.lane.b32.xlu0 %v4361, 127
  %v4445 = vpop.permute.xlu0 %4444
  %4446 = vrot.lane.b32.xlu0 %v4362, 127
  %v4447 = vpop.permute.xlu0 %4446
  %v4448 = vmul.f32 %v4441, %v3284
  %v4449 = vmul.f32 %v4443, %v3284
  %v4450 = vmul.f32 %v4445, %v3284
  %v4451 = vmul.f32 %v4447, %v3284
  %v4452 = vpack.c.bf16 %v4449, %v4448
  %v4453 = vpack.c.bf16 %v4451, %v4450
  %4454 = vst [vmem:[#allocation3 + $0x50] sm:$0xff] %v4452
  %4455 = vst [vmem:[#allocation3 + $0x58] sm:$0xff] %v4453
  %4456 = vrot.lane.b32.xlu0 %v4359, 121
  %v4457 = vpop.permute.xlu0 %4456
  %4458 = vrot.lane.b32.xlu0 %v4360, 121
  %v4459 = vpop.permute.xlu0 %4458
  %4460 = vrot.lane.b32.xlu0 %v4361, 121
  %v4461 = vpop.permute.xlu0 %4460
  %4462 = vrot.lane.b32.xlu0 %v4362, 121
  %v4463 = vpop.permute.xlu0 %4462
  %v4464 = vmul.f32 %v4457, %v3304
  %v4465 = vmul.f32 %v4459, %v3304
  %v4466 = vmul.f32 %v4461, %v3304
  %v4467 = vmul.f32 %v4463, %v3304
  %v4468 = vpack.c.bf16 %v4465, %v4464
  %v4469 = vpack.c.bf16 %v4467, %v4466
  %4470 = vst [vmem:[#allocation3 + $0x60] sm:$0xff] %v4468
  %4471 = vst [vmem:[#allocation3 + $0x68] sm:$0xff] %v4469
  %4472 = vrot.lane.b32.xlu0 %v4359, 120
  %v4473 = vpop.permute.xlu0 %4472
  %4474 = vrot.lane.b32.xlu0 %v4360, 120
  %v4475 = vpop.permute.xlu0 %4474
  %4476 = vrot.lane.b32.xlu0 %v4361, 120
  %v4477 = vpop.permute.xlu0 %4476
  %4478 = vrot.lane.b32.xlu0 %v4362, 120
  %v4479 = vpop.permute.xlu0 %4478
  %v4480 = vmul.f32 %v4473, %v3324
  %v4481 = vmul.f32 %v4475, %v3324
  %v4482 = vmul.f32 %v4477, %v3324
  %v4483 = vmul.f32 %v4479, %v3324
  %v4484 = vpack.c.bf16 %v4481, %v4480
  %v4485 = vpack.c.bf16 %v4483, %v4482
  %4486 = vst [vmem:[#allocation3 + $0x70] sm:$0xff] %v4484
  %4487 = vst [vmem:[#allocation3 + $0x78] sm:$0xff] %v4485
  %4488 = vrot.lane.b32.xlu0 %v4359, 119
  %v4489 = vpop.permute.xlu0 %4488
  %4490 = vrot.lane.b32.xlu0 %v4360, 119
  %v4491 = vpop.permute.xlu0 %4490
  %4492 = vrot.lane.b32.xlu0 %v4361, 119
  %v4493 = vpop.permute.xlu0 %4492
  %4494 = vrot.lane.b32.xlu0 %v4362, 119
  %v4495 = vpop.permute.xlu0 %4494
  %v4496 = vmul.f32 %v4489, %v3344
  %v4497 = vmul.f32 %v4491, %v3344
  %v4498 = vmul.f32 %v4493, %v3344
  %v4499 = vmul.f32 %v4495, %v3344
  %v4500 = vpack.c.bf16 %v4497, %v4496
  %v4501 = vpack.c.bf16 %v4499, %v4498
  %4502 = vst [vmem:[#allocation3 + $0x80] sm:$0xff] %v4500
  %4503 = vst [vmem:[#allocation3 + $0x88] sm:$0xff] %v4501
  %v4504 = vld [vmem:[#allocation3] sm:$0xff]
  %v4505 = vld [vmem:[#allocation3 + $0x8] sm:$0xff]
  %v4506 = vld [vmem:[#allocation3 + $0x10] sm:$0xff]
  %v4507 = vld [vmem:[#allocation3 + $0x18] sm:$0xff]
  %v4508 = vld [vmem:[#allocation3 + $0x20] sm:$0xff]
  %v4509 = vld [vmem:[#allocation3 + $0x28] sm:$0xff]
  %v4510 = vld [vmem:[#allocation3 + $0x30] sm:$0xff]
  %v4511 = vld [vmem:[#allocation3 + $0x38] sm:$0xff]
  %v4512 = vld [vmem:[#allocation3 + $0x40] sm:$0xff]
  %v4513 = vld [vmem:[#allocation3 + $0x48] sm:$0xff]
  %v4514 = vld [vmem:[#allocation3 + $0x50] sm:$0xff]
  %v4515 = vld [vmem:[#allocation3 + $0x58] sm:$0xff]
  %v4516 = vld [vmem:[#allocation3 + $0x60] sm:$0xff]
  %v4517 = vld [vmem:[#allocation3 + $0x68] sm:$0xff]
  %v4518 = vld [vmem:[#allocation3 + $0x70] sm:$0xff]
  %v4519 = vld [vmem:[#allocation3 + $0x78] sm:$0xff]
  %v4520 = vld [vmem:[#allocation3 + $0x80] sm:$0xff]
  %v4521 = vld [vmem:[#allocation3 + $0x88] sm:$0xff]
  %v4530 = vunpack.c.l.b16 %v4364
  %v4531 = vunpack.c.h.b16 %v4364
  %v4532 = vunpack.c.l.b16 %v4365
  %v4533 = vunpack.c.l.b16 %v4366
  %v4534 = vunpack.c.h.b16 %v4366
  %v4535 = vunpack.c.l.b16 %v4367
  %v4536 = vunpack.c.l.b16 %v4368
  %v4537 = vunpack.c.h.b16 %v4368
  %v4538 = vunpack.c.l.b16 %v4369
  %v4539 = vunpack.c.l.b16 %v4370
  %v4540 = vunpack.c.h.b16 %v4370
  %v4541 = vunpack.c.l.b16 %v4371
  %v4542 = vpack.c.b16 %v4533, %v4530
  %v4543 = vpack.c.b16 %v4534, %v4531
  %v4544 = vpack.c.b16 %v4535, %v4532
  %v4545 = vpack.c.b16 %v4539, %v4536
  %v4546 = vpack.c.b16 %v4540, %v4537
  %v4547 = vpack.c.b16 %v4541, %v4538
  %v4553 = vsel %vm3401, %v4544, 0
  %v4556 = vsel %vm3401, %v4547, 0
  %4558 = vmatprep.subr.bf16.mxu0 0
  %4559 = vmatpush1.bf16.msra.mxu0 %v4504
  %4560 = vmatprep.subr.bf16.mxu0 0
  %4561 = vmatpush1.bf16.msra.mxu0 %v4505
  %4562 = vmatprep.subr.bf16.mxu0 0
  %4563 = vmatpush1.bf16.msra.mxu0 %v4506
  %4564 = vmatprep.subr.bf16.mxu0 0
  %4565 = vmatpush1.bf16.msra.mxu0 %v4507
  %4566 = vmatprep.subr.bf16.mxu0 0
  %4567 = vmatpush1.bf16.msra.mxu0 %v4508
  %4568 = vmatprep.subr.bf16.mxu0 0
  %4569 = vmatpush1.bf16.msra.mxu0 %v4509
  %4570 = vmatprep.subr.bf16.mxu0 0
  %4571 = vmatpush1.bf16.msra.mxu0 %v4510
  %4572 = vmatprep.subr.bf16.mxu0 0
  %4573 = vmatpush1.bf16.msra.mxu0 %v4511
  %4574 = vmatprep.subr.bf16.mxu0 0
  %4575 = vmatpush1.bf16.msra.mxu0 %v4512
  %4576 = vmatprep.subr.bf16.mxu0 0
  %4577 = vmatpush1.bf16.msra.mxu0 %v4513
  %4578 = vmatprep.subr.bf16.mxu0 0
  %4579 = vmatpush1.bf16.msra.mxu0 %v4514
  %4580 = vmatprep.subr.bf16.mxu0 0
  %4581 = vmatpush1.bf16.msra.mxu0 %v4515
  %4582 = vmatprep.subr.bf16.mxu0 0
  %4583 = vmatpush1.bf16.msra.mxu0 %v4516
  %4584 = vmatprep.subr.bf16.mxu0 0
  %4585 = vmatpush1.bf16.msra.mxu0 %v4517
  %4586 = vmatprep.subr.bf16.mxu0 0
  %4587 = vmatpush1.bf16.msra.mxu0 %v4518
  %4588 = vmatprep.subr.bf16.mxu0 0
  %4589 = vmatpush1.bf16.msra.mxu0 %v4519
  %4590 = vmatprep.mubr.bf16.mxu0 %v4543
  %4591 = vmatmul.mubr.bf16.gmra.mrb[0].mxu0 %v4542
  %v4592 = vpop.f32.mrb[0].mxu0
  %v4593 = vadd.f32 0.0, %v4592
  %v4594 = vpop.f32.mrb[0].mxu0
  %v4595 = vpop.f32.mrb[0].mxu0
  %v4596 = vadd.f32 0.0, %v4595
  %v4597 = vpop.f32.mrb[0].mxu0
  %4598 = vmatprep.mubr.bf16.mxu0 %v4546
  %4599 = vmatmul.mubr.bf16.gmra.mrb[0].mxu0 %v4545
  %v4600 = vpop.f32.mrb[0].mxu0
  %v4601 = vadd.f32 0.0, %v4600
  %v4602 = vpop.f32.mrb[0].mxu0
  %v4603 = vpop.f32.mrb[0].mxu0
  %v4604 = vadd.f32 0.0, %v4603
  %v4605 = vpop.f32.mrb[0].mxu0
  %4606 = vdwg.mxu0
  %4607 = vmatprep.subr.bf16.mxu0 0
  %4608 = vmatpush1.bf16.msra.mxu0 %v4520
  %4609 = vmatprep.subr.bf16.mxu0 0
  %4610 = vmatpush1.bf16.msra.mxu0 %v4521
  %4611 = vmatprep.subr.bf16.mxu0 0
  %4612 = vmatpush1.bf16.msra.mxu0 0
  %4613 = vmatprep.subr.bf16.mxu0 0
  %4614 = vmatpush1.bf16.msra.mxu0 0
  %4615 = vmatprep.subr.bf16.mxu0 0
  %4616 = vmatpush1.bf16.msra.mxu0 0
  %4617 = vmatprep.subr.bf16.mxu0 0
  %4618 = vmatpush1.bf16.msra.mxu0 0
  %4619 = vmatprep.subr.bf16.mxu0 0
  %4620 = vmatpush1.bf16.msra.mxu0 0
  %4621 = vmatprep.subr.bf16.mxu0 0
  %4622 = vmatpush1.bf16.msra.mxu0 0
  %4623 = vmatprep.subr.bf16.mxu0 0
  %4624 = vmatpush1.bf16.msra.mxu0 0
  %4625 = vmatprep.subr.bf16.mxu0 0
  %4626 = vmatpush1.bf16.msra.mxu0 0
  %4627 = vmatprep.subr.bf16.mxu0 0
  %4628 = vmatpush1.bf16.msra.mxu0 0
  %4629 = vmatprep.subr.bf16.mxu0 0
  %4630 = vmatpush1.bf16.msra.mxu0 0
  %4631 = vmatprep.subr.bf16.mxu0 0
  %4632 = vmatpush1.bf16.msra.mxu0 0
  %4633 = vmatprep.subr.bf16.mxu0 0
  %4634 = vmatpush1.bf16.msra.mxu0 0
  %4635 = vmatprep.subr.bf16.mxu0 0
  %4636 = vmatpush1.bf16.msra.mxu0 0
  %4637 = vmatprep.subr.bf16.mxu0 0
  %4638 = vmatpush1.bf16.msra.mxu0 0
  %4639 = vmatprep.mubr.bf16.mxu0 0
  %4640 = vmatmul.mubr.bf16.gmra.mrb[0].mxu0 %v4553
  %v4641 = vpop.f32.mrb[0].mxu0
  %v4642 = vadd.f32 %v4593, %v4641
  %v4643 = vpop.f32.mrb[0].mxu0
  %v4644 = vpop.f32.mrb[0].mxu0
  %v4645 = vadd.f32 %v4596, %v4644
  %v4646 = vpop.f32.mrb[0].mxu0
  %4647 = vmatprep.mubr.bf16.mxu0 0
  %4648 = vmatmul.mubr.bf16.gmra.mrb[0].mxu0 %v4556
  %v4649 = vpop.f32.mrb[0].mxu0
  %v4650 = vadd.f32 %v4601, %v4649
  %v4651 = vpop.f32.mrb[0].mxu0
  %v4652 = vpop.f32.mrb[0].mxu0
  %v4653 = vadd.f32 %v4604, %v4652
  %v4654 = vpop.f32.mrb[0].mxu0
  %4655 = vdwg.mxu0
  %v4656 = vpack.c.bf16 %v4645, %v4642
  %v4657 = vpack.c.bf16 %v4653, %v4650
  %4658 = vmatprep.subr.bf16.mxu0 0
  %4659 = vmatpush1.bf16.xpose.msra.mxu0 %v3175
  %4660 = vmatprep.subr.bf16.mxu0 0
  %4661 = vmatpush1.bf16.xpose.msra.mxu0 0
  %4662 = vmatprep.subr.bf16.mxu0 0
  %4663 = vmatpush1.bf16.xpose.msra.mxu0 0
  %4664 = vmatprep.subr.bf16.mxu0 0
  %4665 = vmatpush1.bf16.xpose.msra.mxu0 0
  %4666 = vmatprep.subr.bf16.mxu0 0
  %4667 = vmatpush1.bf16.xpose.msra.mxu0 0
  %4668 = vmatprep.subr.bf16.mxu0 0
  %4669 = vmatpush1.bf16.xpose.msra.mxu0 0
  %4670 = vmatprep.subr.bf16.mxu0 0
  %4671 = vmatpush1.bf16.xpose.msra.mxu0 0
  %4672 = vmatprep.subr.bf16.mxu0 0
  %4673 = vmatpush1.bf16.xpose.msra.mxu0 0
  %4674 = vmatprep.subr.bf16.mxu0 0
  %4675 = vmatpush1.bf16.xpose.msra.mxu0 0
  %4676 = vmatprep.subr.bf16.mxu0 0
  %4677 = vmatpush1.bf16.xpose.msra.mxu0 0
  %4678 = vmatprep.subr.bf16.mxu0 0
  %4679 = vmatpush1.bf16.xpose.msra.mxu0 0
  %4680 = vmatprep.subr.bf16.mxu0 0
  %4681 = vmatpush1.bf16.xpose.msra.mxu0 0
  %4682 = vmatprep.subr.bf16.mxu0 0
  %4683 = vmatpush1.bf16.xpose.msra.mxu0 0
  %4684 = vmatprep.subr.bf16.mxu0 0
  %4685 = vmatpush1.bf16.xpose.msra.mxu0 0
  %4686 = vmatprep.subr.bf16.mxu0 0
  %4687 = vmatpush1.bf16.xpose.msra.mxu0 0
  %4688 = vmatprep.subr.bf16.mxu0 0
  %4689 = vmatpush1.bf16.xpose.msra.mxu0 0
  %4690 = vmatprep.mubr.bf16.mxu0 0
  %4691 = vmatmul.mubr.bf16.gmra.mrb[0].mxu0 %v4656
  %v4692 = vpop.f32.mrb[0].mxu0
  %v4693 = vadd.f32 0.0, %v4692
  %v4694 = vpop.f32.mrb[0].mxu0
  %v4695 = vpop.f32.mrb[0].mxu0
  %v4696 = vadd.f32 0.0, %v4695
  %v4697 = vpop.f32.mrb[0].mxu0
  %4698 = vmatprep.mubr.bf16.mxu0 0
  %4699 = vmatmul.mubr.bf16.gmra.mrb[0].mxu0 %v4657
  %v4700 = vpop.f32.mrb[0].mxu0
  %v4701 = vadd.f32 0.0, %v4700
  %v4702 = vpop.f32.mrb[0].mxu0
  %v4703 = vpop.f32.mrb[0].mxu0
  %v4704 = vadd.f32 0.0, %v4703
  %v4705 = vpop.f32.mrb[0].mxu0
  %4706 = vdwg.mxu0
  %v4707 = vmul.f32 %v4693, 0.015625
  %v4708 = vmul.f32 %v4696, 0.015625
  %v4709 = vmul.f32 %v4701, 0.015625
  %v4710 = vmul.f32 %v4704, 0.015625
  %v4711 = vpack.c.bf16 %v4708, %v4707
  %v4712 = vpack.c.bf16 %v4710, %v4709
  %v4714 = vsel %vm3401, %v4060, 0
  %4716 = vmatprep.subr.bf16.mxu0 0
  %4717 = vmatpush1.bf16.msra.mxu0 %v4711
  %4718 = vmatprep.subr.bf16.mxu0 0
  %4719 = vmatpush1.bf16.msra.mxu0 %v4712
  %4720 = vmatprep.subr.bf16.mxu0 0
  %4721 = vmatpush1.bf16.msra.mxu0 0
  %4722 = vmatprep.subr.bf16.mxu0 0
  %4723 = vmatpush1.bf16.msra.mxu0 0
  %4724 = vmatprep.subr.bf16.mxu0 0
  %4725 = vmatpush1.bf16.msra.mxu0 0
  %4726 = vmatprep.subr.bf16.mxu0 0
  %4727 = vmatpush1.bf16.msra.mxu0 0
  %4728 = vmatprep.subr.bf16.mxu0 0
  %4729 = vmatpush1.bf16.msra.mxu0 0
  %4730 = vmatprep.subr.bf16.mxu0 0
  %4731 = vmatpush1.bf16.msra.mxu0 0
  %4732 = vmatprep.subr.bf16.mxu0 0
  %4733 = vmatpush1.bf16.msra.mxu0 0
  %4734 = vmatprep.subr.bf16.mxu0 0
  %4735 = vmatpush1.bf16.msra.mxu0 0
  %4736 = vmatprep.subr.bf16.mxu0 0
  %4737 = vmatpush1.bf16.msra.mxu0 0
  %4738 = vmatprep.subr.bf16.mxu0 0
  %4739 = vmatpush1.bf16.msra.mxu0 0
  %4740 = vmatprep.subr.bf16.mxu0 0
  %4741 = vmatpush1.bf16.msra.mxu0 0
  %4742 = vmatprep.subr.bf16.mxu0 0
  %4743 = vmatpush1.bf16.msra.mxu0 0
  %4744 = vmatprep.subr.bf16.mxu0 0
  %4745 = vmatpush1.bf16.msra.mxu0 0
  %4746 = vmatprep.subr.bf16.mxu0 0
  %4747 = vmatpush1.bf16.msra.mxu0 0
  %4748 = vmatprep.mubr.bf16.mxu0 0
  %4749 = vmatmul.mubr.bf16.gmra.mrb[0].mxu0 %v4714
  %v4750 = vpop.f32.mrb[0].mxu0
  %v4751 = vadd.f32 0.0, %v4750
  %v4752 = vpop.f32.mrb[0].mxu0
  %v4753 = vpop.f32.mrb[0].mxu0
  %v4754 = vpop.f32.mrb[0].mxu0
  %4755 = vdwg.mxu0
  %v4756 = vmax.f32 %v4751, 0.0
  %v4757 = vpack.c.bf16 %v4756, %v4756
  %v4762 = vunpack.c.l.b16 %v4062
  %v4763 = vunpack.c.l.b16 %v4063
  %v4764 = vunpack.c.l.b16 %v4064
  %v4765 = vunpack.c.l.b16 %v4065
  %v4766 = vpack.c.b16 %v4763, %v4762
  %v4767 = vpack.c.b16 %v4765, %v4764
  %v4769 = vsel %vm3915, %v4766, 0
  %v4772 = vsel %vm3915, %v4767, 0
  %v4775 = vsel %vm3922, %v4757, 0
  %4777 = vmatprep.subr.bf16.mxu0 0
  %4778 = vmatpush1.bf16.msra.mxu0 %v4775
  %4779 = vmatprep.subr.bf16.mxu0 0
  %4780 = vmatpush1.bf16.msra.mxu0 0
  %4781 = vmatprep.subr.bf16.mxu0 0
  %4782 = vmatpush1.bf16.msra.mxu0 0
  %4783 = vmatprep.subr.bf16.mxu0 0
  %4784 = vmatpush1.bf16.msra.mxu0 0
  %4785 = vmatprep.subr.bf16.mxu0 0
  %4786 = vmatpush1.bf16.msra.mxu0 0
  %4787 = vmatprep.subr.bf16.mxu0 0
  %4788 = vmatpush1.bf16.msra.mxu0 0
  %4789 = vmatprep.subr.bf16.mxu0 0
  %4790 = vmatpush1.bf16.msra.mxu0 0
  %4791 = vmatprep.subr.bf16.mxu0 0
  %4792 = vmatpush1.bf16.msra.mxu0 0
  %4793 = vmatprep.subr.bf16.mxu0 0
  %4794 = vmatpush1.bf16.msra.mxu0 0
  %4795 = vmatprep.subr.bf16.mxu0 0
  %4796 = vmatpush1.bf16.msra.mxu0 0
  %4797 = vmatprep.subr.bf16.mxu0 0
  %4798 = vmatpush1.bf16.msra.mxu0 0
  %4799 = vmatprep.subr.bf16.mxu0 0
  %4800 = vmatpush1.bf16.msra.mxu0 0
  %4801 = vmatprep.subr.bf16.mxu0 0
  %4802 = vmatpush1.bf16.msra.mxu0 0
  %4803 = vmatprep.subr.bf16.mxu0 0
  %4804 = vmatpush1.bf16.msra.mxu0 0
  %4805 = vmatprep.subr.bf16.mxu0 0
  %4806 = vmatpush1.bf16.msra.mxu0 0
  %4807 = vmatprep.subr.bf16.mxu0 0
  %4808 = vmatpush1.bf16.msra.mxu0 0
  %4809 = vmatprep.mubr.bf16.mxu0 0
  %4810 = vmatmul.mubr.bf16.gmra.mrb[0].mxu0 %v4769
  %v4811 = vpop.f32.mrb[0].mxu0
  %v4812 = vadd.f32 0.0, %v4811
  %v4813 = vpop.f32.mrb[0].mxu0
  %v4814 = vpop.f32.mrb[0].mxu0
  %v4815 = vadd.f32 0.0, %v4814
  %v4816 = vpop.f32.mrb[0].mxu0
  %4817 = vmatprep.mubr.bf16.mxu0 0
  %4818 = vmatmul.mubr.bf16.gmra.mrb[0].mxu0 %v4772
  %v4819 = vpop.f32.mrb[0].mxu0
  %v4820 = vadd.f32 0.0, %v4819
  %v4821 = vpop.f32.mrb[0].mxu0
  %v4822 = vpop.f32.mrb[0].mxu0
  %v4823 = vadd.f32 0.0, %v4822
  %v4824 = vpop.f32.mrb[0].mxu0
  %4825 = vdwg.mxu0
  %v4826 = vmul.f32 %v4812, 0.5
  %v4827 = vmul.f32 %v4815, 0.5
  %v4828 = vmul.f32 %v4820, 0.5
  %v4829 = vmul.f32 %v4823, 0.5
  %v4830 = vtanh.pop %v4826
  %v4831 = vtanh.pop %v4827
  %v4832 = vtanh.pop %v4828
  %v4833 = vtanh.pop %v4829
  %v4834 = vadd.f32 %v4830, 1.0
  %v4835 = vadd.f32 %v4831, 1.0
  %v4836 = vadd.f32 %v4832, 1.0
  %v4837 = vadd.f32 %v4833, 1.0
  %v4838 = vmul.f32 %v4834, 0.5
  %v4839 = vmul.f32 %v4835, 0.5
  %v4840 = vmul.f32 %v4836, 0.5
  %v4841 = vmul.f32 %v4837, 0.5
  %v4842 = vpack.c.bf16 %v4839, %v4838
  %v4843 = vpack.c.bf16 %v4841, %v4840
  %v4845 = vsel %vm1391, %v4842, 0
  %v4848 = vsel %vm1391, %v4843, 0
  %4850 = vmatprep.subr.bf16.mxu0 0
  %4851 = vmatpush1.bf16.msra.mxu0 %v4000
  %4852 = vmatprep.subr.bf16.mxu0 0
  %4853 = vmatpush1.bf16.msra.mxu0 0
  %4854 = vmatprep.subr.bf16.mxu0 0
  %4855 = vmatpush1.bf16.msra.mxu0 0
  %4856 = vmatprep.subr.bf16.mxu0 0
  %4857 = vmatpush1.bf16.msra.mxu0 0
  %4858 = vmatprep.subr.bf16.mxu0 0
  %4859 = vmatpush1.bf16.msra.mxu0 0
  %4860 = vmatprep.subr.bf16.mxu0 0
  %4861 = vmatpush1.bf16.msra.mxu0 0
  %4862 = vmatprep.subr.bf16.mxu0 0
  %4863 = vmatpush1.bf16.msra.mxu0 0
  %4864 = vmatprep.subr.bf16.mxu0 0
  %4865 = vmatpush1.bf16.msra.mxu0 0
  %4866 = vmatprep.subr.bf16.mxu0 0
  %4867 = vmatpush1.bf16.msra.mxu0 0
  %4868 = vmatprep.subr.bf16.mxu0 0
  %4869 = vmatpush1.bf16.msra.mxu0 0
  %4870 = vmatprep.subr.bf16.mxu0 0
  %4871 = vmatpush1.bf16.msra.mxu0 0
  %4872 = vmatprep.subr.bf16.mxu0 0
  %4873 = vmatpush1.bf16.msra.mxu0 0
  %4874 = vmatprep.subr.bf16.mxu0 0
  %4875 = vmatpush1.bf16.msra.mxu0 0
  %4876 = vmatprep.subr.bf16.mxu0 0
  %4877 = vmatpush1.bf16.msra.mxu0 0
  %4878 = vmatprep.subr.bf16.mxu0 0
  %4879 = vmatpush1.bf16.msra.mxu0 0
  %4880 = vmatprep.subr.bf16.mxu0 0
  %4881 = vmatpush1.bf16.msra.mxu0 0
  %4882 = vmatprep.mubr.bf16.mxu0 0
  %4883 = vmatmul.mubr.bf16.gmra.mrb[0].mxu0 %v4845
  %v4884 = vpop.f32.mrb[0].mxu0
  %v4885 = vadd.f32 0.0, %v4884
  %v4886 = vpop.f32.mrb[0].mxu0
  %v4887 = vpop.f32.mrb[0].mxu0
  %v4888 = vadd.f32 0.0, %v4887
  %v4889 = vpop.f32.mrb[0].mxu0
  %4890 = vmatprep.mubr.bf16.mxu0 0
  %4891 = vmatmul.mubr.bf16.gmra.mrb[0].mxu0 %v4848
  %v4892 = vpop.f32.mrb[0].mxu0
  %v4893 = vadd.f32 0.0, %v4892
  %v4894 = vpop.f32.mrb[0].mxu0
  %v4895 = vpop.f32.mrb[0].mxu0
  %v4896 = vadd.f32 0.0, %v4895
  %v4897 = vpop.f32.mrb[0].mxu0
  %4898 = vdwg.mxu0
  %v4899 = vmul.f32 %v4642, %v4885
  %v4900 = vmul.f32 %v4645, %v4888
  %v4901 = vmul.f32 %v4650, %v4893
  %v4902 = vmul.f32 %v4653, %v4896
  %v4903 = vadd.f32 %v4899, %v4055
  %v4904 = vadd.f32 %v4900, %v4056
  %v4905 = vadd.f32 %v4901, %v4057
  %v4906 = vadd.f32 %v4902, %v4058
  %4907 = vst [vmem:[%s21] sm:$0xff] %v4903
  %4908 = vst [vmem:[%s21 + $0x8] sm:$0xff] %v4904
  %4909 = vst [vmem:[%s21 + $0x10] sm:$0xff] %v4905
  %4910 = vst [vmem:[%s21 + $0x18] sm:$0xff] %v4906
  %v4911 = vpack.c.bf16 %v4904, %v4903
  %v4912 = vpack.c.bf16 %v4906, %v4905
  %v4913 = vld [vmem:[%s13] sm:$0xf]
  %v4914 = vld [vmem:[%s13 + $0x4] sm:$0xf]
  %v4915 = vld [vmem:[%s13 + $0x8] sm:$0xf]
  %v4916 = vld [vmem:[%s13 + $0xc] sm:$0xf]
  %v4917 = vld [vmem:[%s13 + $0x10] sm:$0xf]
  %v4918 = vld [vmem:[%s13 + $0x14] sm:$0xf]
  %v4919 = vld [vmem:[%s13 + $0x18] sm:$0xf]
  %v4920 = vld [vmem:[%s13 + $0x1c] sm:$0xf]
  %v4921 = vld [vmem:[%s13 + $0x20] sm:$0xf]
  %v4922 = vld [vmem:[%s13 + $0x24] sm:$0xf]
  %v4923 = vld [vmem:[%s13 + $0x28] sm:$0xf]
  %v4924 = vld [vmem:[%s13 + $0x2c] sm:$0xf]
  %v4925 = vld [vmem:[%s13 + $0x30] sm:$0xf]
  %v4926 = vld [vmem:[%s13 + $0x34] sm:$0xf]
  %v4927 = vld [vmem:[%s13 + $0x38] sm:$0xf]
  %v4928 = vld [vmem:[%s13 + $0x3c] sm:$0xf]
  %v4945 = vunpack.c.l.b16 %v4913
  %v4946 = vunpack.c.l.b16 %v4914
  %v4947 = vunpack.c.l.b16 %v4915
  %v4948 = vunpack.c.l.b16 %v4916
  %v4949 = vunpack.c.l.b16 %v4917
  %v4950 = vunpack.c.l.b16 %v4918
  %v4951 = vunpack.c.l.b16 %v4919
  %v4952 = vunpack.c.l.b16 %v4920
  %v4953 = vunpack.c.l.b16 %v4921
  %v4954 = vunpack.c.l.b16 %v4922
  %v4955 = vunpack.c.l.b16 %v4923
  %v4956 = vunpack.c.l.b16 %v4924
  %v4957 = vunpack.c.l.b16 %v4925
  %v4958 = vunpack.c.l.b16 %v4926
  %v4959 = vunpack.c.l.b16 %v4927
  %v4960 = vunpack.c.l.b16 %v4928
  %v4961 = vpack.c.b16 %v4946, %v4945
  %v4962 = vpack.c.b16 %v4948, %v4947
  %v4963 = vpack.c.b16 %v4950, %v4949
  %v4964 = vpack.c.b16 %v4952, %v4951
  %v4965 = vpack.c.b16 %v4954, %v4953
  %v4966 = vpack.c.b16 %v4956, %v4955
  %v4967 = vpack.c.b16 %v4958, %v4957
  %v4968 = vpack.c.b16 %v4960, %v4959
  %4977 = vmatprep.subr.bf16.mxu0 0
  %4978 = vmatpush1.bf16.msra.mxu0 %v4961
  %4979 = vmatprep.subr.bf16.mxu0 0
  %4980 = vmatpush1.bf16.msra.mxu0 %v4962
  %4981 = vmatprep.subr.bf16.mxu0 0
  %4982 = vmatpush1.bf16.msra.mxu0 %v4963
  %4983 = vmatprep.subr.bf16.mxu0 0
  %4984 = vmatpush1.bf16.msra.mxu0 %v4964
  %4985 = vmatprep.subr.bf16.mxu0 0
  %4986 = vmatpush1.bf16.msra.mxu0 %v4965
  %4987 = vmatprep.subr.bf16.mxu0 0
  %4988 = vmatpush1.bf16.msra.mxu0 %v4966
  %4989 = vmatprep.subr.bf16.mxu0 0
  %4990 = vmatpush1.bf16.msra.mxu0 %v4967
  %4991 = vmatprep.subr.bf16.mxu0 0
  %4992 = vmatpush1.bf16.msra.mxu0 %v4968
  %4993 = vmatprep.subr.bf16.mxu0 0
  %4994 = vmatpush1.bf16.msra.mxu0 0
  %4995 = vmatprep.subr.bf16.mxu0 0
  %4996 = vmatpush1.bf16.msra.mxu0 0
  %4997 = vmatprep.subr.bf16.mxu0 0
  %4998 = vmatpush1.bf16.msra.mxu0 0
  %4999 = vmatprep.subr.bf16.mxu0 0
  %5000 = vmatpush1.bf16.msra.mxu0 0
  %5001 = vmatprep.subr.bf16.mxu0 0
  %5002 = vmatpush1.bf16.msra.mxu0 0
  %5003 = vmatprep.subr.bf16.mxu0 0
  %5004 = vmatpush1.bf16.msra.mxu0 0
  %5005 = vmatprep.subr.bf16.mxu0 0
  %5006 = vmatpush1.bf16.msra.mxu0 0
  %5007 = vmatprep.subr.bf16.mxu0 0
  %5008 = vmatpush1.bf16.msra.mxu0 0
  %5009 = vmatprep.mubr.bf16.mxu0 0
  %5010 = vmatmul.mubr.bf16.gmra.mrb[0].mxu0 %v4911
  %v5011 = vpop.f32.mrb[0].mxu0
  %v5012 = vadd.f32 0.0, %v5011
  %v5013 = vpop.f32.mrb[0].mxu0
  %v5014 = vpop.f32.mrb[0].mxu0
  %v5015 = vadd.f32 0.0, %v5014
  %v5016 = vpop.f32.mrb[0].mxu0
  %5017 = vmatprep.mubr.bf16.mxu0 0
  %5018 = vmatmul.mubr.bf16.gmra.mrb[0].mxu0 %v4912
  %v5019 = vpop.f32.mrb[0].mxu0
  %v5020 = vadd.f32 0.0, %v5019
  %v5021 = vpop.f32.mrb[0].mxu0
  %v5022 = vpop.f32.mrb[0].mxu0
  %v5023 = vadd.f32 0.0, %v5022
  %v5024 = vpop.f32.mrb[0].mxu0
  %5025 = vdwg.mxu0
  %v5026 = vld [vmem:[%s14] sm:$0xf]
  %v5027 = vld [vmem:[%s14 + $0x4] sm:$0xf]
  %v5028 = vld [vmem:[%s14 + $0x8] sm:$0xf]
  %v5029 = vld [vmem:[%s14 + $0xc] sm:$0xf]
  %v5030 = vld [vmem:[%s14 + $0x10] sm:$0xf]
  %v5031 = vld [vmem:[%s14 + $0x14] sm:$0xf]
  %v5032 = vpack.c.bf16 %v5015, %v5012
  %v5033 = vpack.c.bf16 %v5023, %v5020
  %v5040 = vunpack.c.l.b16 %v5026
  %v5041 = vunpack.c.l.b16 %v5027
  %v5042 = vunpack.c.l.b16 %v5028
  %v5043 = vunpack.c.l.b16 %v5029
  %v5044 = vunpack.c.l.b16 %v5030
  %v5045 = vunpack.c.l.b16 %v5031
  %v5046 = vpack.c.b16 %v5041, %v5040
  %v5047 = vpack.c.b16 %v5043, %v5042
  %v5048 = vpack.c.b16 %v5045, %v5044
  %v5050 = vsel %vm3401, %v5046, 0
  %v5053 = vsel %vm3401, %v5047, 0
  %v5056 = vsel %vm3401, %v5048, 0
  %5058 = vmatprep.subr.bf16.mxu0 0
  %5059 = vmatpush1.bf16.msra.mxu0 %v5032
  %5060 = vmatprep.subr.bf16.mxu0 0
  %5061 = vmatpush1.bf16.msra.mxu0 %v5033
  %5062 = vmatprep.subr.bf16.mxu0 0
  %5063 = vmatpush1.bf16.msra.mxu0 0
  %5064 = vmatprep.subr.bf16.mxu0 0
  %5065 = vmatpush1.bf16.msra.mxu0 0
  %5066 = vmatprep.subr.bf16.mxu0 0
  %5067 = vmatpush1.bf16.msra.mxu0 0
  %5068 = vmatprep.subr.bf16.mxu0 0
  %5069 = vmatpush1.bf16.msra.mxu0 0
  %5070 = vmatprep.subr.bf16.mxu0 0
  %5071 = vmatpush1.bf16.msra.mxu0 0
  %5072 = vmatprep.subr.bf16.mxu0 0
  %5073 = vmatpush1.bf16.msra.mxu0 0
  %5074 = vmatprep.subr.bf16.mxu0 0
  %5075 = vmatpush1.bf16.msra.mxu0 0
  %5076 = vmatprep.subr.bf16.mxu0 0
  %5077 = vmatpush1.bf16.msra.mxu0 0
  %5078 = vmatprep.subr.bf16.mxu0 0
  %5079 = vmatpush1.bf16.msra.mxu0 0
  %5080 = vmatprep.subr.bf16.mxu0 0
  %5081 = vmatpush1.bf16.msra.mxu0 0
  %5082 = vmatprep.subr.bf16.mxu0 0
  %5083 = vmatpush1.bf16.msra.mxu0 0
  %5084 = vmatprep.subr.bf16.mxu0 0
  %5085 = vmatpush1.bf16.msra.mxu0 0
  %5086 = vmatprep.subr.bf16.mxu0 0
  %5087 = vmatpush1.bf16.msra.mxu0 0
  %5088 = vmatprep.subr.bf16.mxu0 0
  %5089 = vmatpush1.bf16.msra.mxu0 0
  %5090 = vmatprep.mubr.bf16.mxu0 0
  %5091 = vmatmul.mubr.bf16.gmra.mrb[0].mxu0 %v5050
  %v5092 = vpop.f32.mrb[0].mxu0
  %v5093 = vadd.f32 0.0, %v5092
  %v5094 = vpop.f32.mrb[0].mxu0
  %v5095 = vpop.f32.mrb[0].mxu0
  %v5096 = vadd.f32 0.0, %v5095
  %v5097 = vpop.f32.mrb[0].mxu0
  %5098 = vmatprep.mubr.bf16.mxu0 0
  %5099 = vmatmul.mubr.bf16.gmra.mrb[0].mxu0 %v5053
  %v5100 = vpop.f32.mrb[0].mxu0
  %v5101 = vadd.f32 0.0, %v5100
  %v5102 = vpop.f32.mrb[0].mxu0
  %v5103 = vpop.f32.mrb[0].mxu0
  %v5104 = vadd.f32 0.0, %v5103
  %v5105 = vpop.f32.mrb[0].mxu0
  %5106 = vmatprep.mubr.bf16.mxu0 0
  %5107 = vmatmul.mubr.bf16.gmra.mrb[0].mxu0 %v5056
  %v5108 = vpop.f32.mrb[0].mxu0
  %v5109 = vadd.f32 0.0, %v5108
  %v5110 = vpop.f32.mrb[0].mxu0
  %v5111 = vpop.f32.mrb[0].mxu0
  %v5112 = vadd.f32 0.0, %v5111
  %v5113 = vpop.f32.mrb[0].mxu0
  %5114 = vdwg.mxu0
  %v5115 = vld [vmem:[%s18] sm:$0xff]
  %v5116 = vld [vmem:[%s18 + $0x8] sm:$0xff]
  %v5117 = vld [vmem:[%s19] sm:$0x1]
  %v5118 = vld [vmem:[%s16] sm:$0xf]
  %v5119 = vld [vmem:[%s16 + $0x4] sm:$0x3]
  %v5120 = vld [vmem:[%s17] sm:$0xf]
  %v5121 = vld [vmem:[%s17 + $0x4] sm:$0xf]
  %v5122 = vld [vmem:[%s17 + $0x8] sm:$0xf]
  %v5123 = vld [vmem:[%s17 + $0xc] sm:$0xf]
  %v5124 = vld [vmem:[%s17 + $0x10] sm:$0xf]
  %v5125 = vld [vmem:[%s17 + $0x14] sm:$0xf]
  %v5126 = vld [vmem:[%s15] sm:$0xff]
  %v5127 = vld [vmem:[%s15 + $0x8] sm:$0xff]
  %v5128 = vld [vmem:[%s15 + $0x10] sm:$0xff]
  %v5129 = vld [vmem:[%s15 + $0x18] sm:$0xff]
  %v5130 = vld [vmem:[%s15 + $0x20] sm:$0xff]
  %v5131 = vld [vmem:[%s15 + $0x28] sm:$0xff]
  %v5132 = vld [vmem:[%s15 + $0x30] sm:$0xff]
  %v5133 = vld [vmem:[%s15 + $0x38] sm:$0xff]
  %v5134 = vld [vmem:[%s15 + $0x40] sm:$0xff]
  %v5135 = vld [vmem:[%s15 + $0x48] sm:$0xff]
  %v5136 = vld [vmem:[%s15 + $0x50] sm:$0xff]
  %v5137 = vld [vmem:[%s15 + $0x58] sm:$0xff]
  %vm5138 = vcmask 1047808
  %5139 = vrot.lane.b32.xlu0 %v5093, 32
  %v5140 = vpop.permute.xlu0 %5139
  %v5141 = vsel %vm5138, %v5140, %v5093
  %5142 = vrot.lane.b32.xlu0 %v5096, 32
  %v5143 = vpop.permute.xlu0 %5142
  %v5144 = vsel %vm5138, %v5143, %v5096
  %5145 = vrot.lane.b32.xlu0 %v5101, 32
  %v5146 = vpop.permute.xlu0 %5145
  %v5147 = vsel %vm5138, %v5146, %v5101
  %5148 = vrot.lane.b32.xlu0 %v5104, 32
  %v5149 = vpop.permute.xlu0 %5148
  %v5150 = vsel %vm5138, %v5149, %v5104
  %5151 = vrot.lane.b32.xlu0 %v5109, 32
  %v5152 = vpop.permute.xlu0 %5151
  %v5153 = vsel %vm5138, %v5152, %v5109
  %5154 = vrot.lane.b32.xlu0 %v5112, 32
  %v5155 = vpop.permute.xlu0 %5154
  %v5156 = vsel %vm5138, %v5155, %v5112
  %5157 = vrot.lane.b32.xlu0 %v5141, 32
  %v5158 = vpop.permute.xlu0 %5157
  %5159 = vrot.lane.b32.xlu0 %v5144, 32
  %v5160 = vpop.permute.xlu0 %5159
  %5161 = vrot.lane.b32.xlu0 %v5147, 32
  %v5162 = vpop.permute.xlu0 %5161
  %5163 = vrot.lane.b32.xlu0 %v5150, 32
  %v5164 = vpop.permute.xlu0 %5163
  %5165 = vrot.lane.b32.xlu0 %v5153, 32
  %v5166 = vpop.permute.xlu0 %5165
  %5167 = vrot.lane.b32.xlu0 %v5156, 32
  %v5168 = vpop.permute.xlu0 %5167
  %v5169 = vsel %vm5138, %v5158, %v5093
  %v5170 = vsel %vm5138, %v5160, %v5096
  %v5171 = vsel %vm5138, %v5162, %v5101
  %v5172 = vsel %vm5138, %v5164, %v5104
  %v5173 = vsel %vm5138, %v5166, %v5109
  %v5174 = vsel %vm5138, %v5168, %v5112
  %v5175 = vlaneseq
  %v5176 = vshrl.u32 %v5175, 7
  %v5177 = vsub.s32 0, %v5176
  %v5178 = vrot.slane %v5115, %v5177
  %5180 = vrot.lane.b32.xlu0 %v5178, 27
  %v5181 = vpop.permute.xlu0 %5180
  %v5183 = vmul.f32 %v5169, %v5181
  %v5184 = vmul.f32 %v5170, %v5181
  %v5185 = vmul.f32 %v5171, %v5181
  %v5186 = vmul.f32 %v5172, %v5181
  %v5187 = vmul.f32 %v5173, %v5181
  %v5188 = vmul.f32 %v5174, %v5181
  %v5189 = vpack.c.bf16 %v5184, %v5183
  %v5190 = vpack.c.bf16 %v5186, %v5185
  %v5191 = vpack.c.bf16 %v5188, %v5187
  %5195 = vrot.lane.b32.xlu0 %v5189, 101
  %v5196 = vpop.permute.xlu0 %5195
  %5197 = vrot.lane.b32.xlu0 %v5190, 101
  %v5198 = vpop.permute.xlu0 %5197
  %5199 = vrot.lane.b32.xlu0 %v5191, 101
  %v5200 = vpop.permute.xlu0 %5199
  %5204 = vst.msk [vmem:[#allocation4] sm:$0xff] %vm3401, %v5196
  %5205 = vst.msk [vmem:[#allocation4 + $0x8] sm:$0xff] %vm3401, %v5198
  %5206 = vst.msk [vmem:[#allocation4 + $0x10] sm:$0xff] %vm3401, %v5200
  %v5207 = vlaneseq
  %v5208 = vshrl.u32 %v5207, 7
  %v5209 = vsub.s32 1, %v5208
  %v5210 = vrot.slane %v5115, %v5209
  %5212 = vrot.lane.b32.xlu0 %v5210, 28
  %v5213 = vpop.permute.xlu0 %5212
  %v5215 = vmul.f32 %v5169, %v5213
  %v5216 = vmul.f32 %v5170, %v5213
  %v5217 = vmul.f32 %v5171, %v5213
  %v5218 = vmul.f32 %v5172, %v5213
  %v5219 = vmul.f32 %v5173, %v5213
  %v5220 = vmul.f32 %v5174, %v5213
  %v5221 = vpack.c.bf16 %v5216, %v5215
  %v5222 = vpack.c.bf16 %v5218, %v5217
  %v5223 = vpack.c.bf16 %v5220, %v5219
  %5227 = vrot.lane.b32.xlu0 %v5221, 100
  %v5228 = vpop.permute.xlu0 %5227
  %5229 = vrot.lane.b32.xlu0 %v5222, 100
  %v5230 = vpop.permute.xlu0 %5229
  %5231 = vrot.lane.b32.xlu0 %v5223, 100
  %v5232 = vpop.permute.xlu0 %5231
  %5236 = vst.msk [vmem:[#allocation4 + $0x18] sm:$0xff] %vm3401, %v5228
  %5237 = vst.msk [vmem:[#allocation4 + $0x20] sm:$0xff] %vm3401, %v5230
  %5238 = vst.msk [vmem:[#allocation4 + $0x28] sm:$0xff] %vm3401, %v5232
  %v5239 = vlaneseq
  %v5240 = vshrl.u32 %v5239, 7
  %v5241 = vsub.s32 2, %v5240
  %v5242 = vrot.slane %v5115, %v5241
  %5244 = vrot.lane.b32.xlu0 %v5242, 29
  %v5245 = vpop.permute.xlu0 %5244
  %v5247 = vmul.f32 %v5169, %v5245
  %v5248 = vmul.f32 %v5170, %v5245
  %v5249 = vmul.f32 %v5171, %v5245
  %v5250 = vmul.f32 %v5172, %v5245
  %v5251 = vmul.f32 %v5173, %v5245
  %v5252 = vmul.f32 %v5174, %v5245
  %v5253 = vpack.c.bf16 %v5248, %v5247
  %v5254 = vpack.c.bf16 %v5250, %v5249
  %v5255 = vpack.c.bf16 %v5252, %v5251
  %5259 = vrot.lane.b32.xlu0 %v5253, 99
  %v5260 = vpop.permute.xlu0 %5259
  %5261 = vrot.lane.b32.xlu0 %v5254, 99
  %v5262 = vpop.permute.xlu0 %5261
  %5263 = vrot.lane.b32.xlu0 %v5255, 99
  %v5264 = vpop.permute.xlu0 %5263
  %5268 = vst.msk [vmem:[#allocation4 + $0x30] sm:$0xff] %vm3401, %v5260
  %5269 = vst.msk [vmem:[#allocation4 + $0x38] sm:$0xff] %vm3401, %v5262
  %5270 = vst.msk [vmem:[#allocation4 + $0x40] sm:$0xff] %vm3401, %v5264
  %v5271 = vlaneseq
  %v5272 = vshrl.u32 %v5271, 7
  %v5273 = vsub.s32 3, %v5272
  %v5274 = vrot.slane %v5115, %v5273
  %5276 = vrot.lane.b32.xlu0 %v5274, 31
  %v5277 = vpop.permute.xlu0 %5276
  %v5279 = vmul.f32 %v5169, %v5277
  %v5280 = vmul.f32 %v5170, %v5277
  %v5281 = vmul.f32 %v5171, %v5277
  %v5282 = vmul.f32 %v5172, %v5277
  %v5283 = vmul.f32 %v5173, %v5277
  %v5284 = vmul.f32 %v5174, %v5277
  %v5285 = vpack.c.bf16 %v5280, %v5279
  %v5286 = vpack.c.bf16 %v5282, %v5281
  %v5287 = vpack.c.bf16 %v5284, %v5283
  %5291 = vrot.lane.b32.xlu0 %v5285, 97
  %v5292 = vpop.permute.xlu0 %5291
  %5293 = vrot.lane.b32.xlu0 %v5286, 97
  %v5294 = vpop.permute.xlu0 %5293
  %5295 = vrot.lane.b32.xlu0 %v5287, 97
  %v5296 = vpop.permute.xlu0 %5295
  %5300 = vst.msk [vmem:[#allocation4 + $0x48] sm:$0xff] %vm3401, %v5292
  %5301 = vst.msk [vmem:[#allocation4 + $0x50] sm:$0xff] %vm3401, %v5294
  %5302 = vst.msk [vmem:[#allocation4 + $0x58] sm:$0xff] %vm3401, %v5296
  %v5303 = vpack.c.bf16 %v5096, %v5093
  %v5304 = vpack.c.bf16 %v5104, %v5101
  %v5305 = vpack.c.bf16 %v5112, %v5109
  %5306 = vst.msk [vmem:[#allocation4 + $0x60] sm:$0xff] %vm3401, %v5303
  %5307 = vst.msk [vmem:[#allocation4 + $0x68] sm:$0xff] %vm3401, %v5304
  %5308 = vst.msk [vmem:[#allocation4 + $0x70] sm:$0xff] %vm3401, %v5305
  %v5309 = vlaneseq
  %v5310 = vshrl.u32 %v5309, 7
  %v5311 = vsub.s32 5, %v5310
  %v5312 = vrot.slane %v5115, %v5311
  %5314 = vrot.lane.b32.xlu0 %v5312, 1
  %v5315 = vpop.permute.xlu0 %5314
  %v5317 = vmul.f32 %v5169, %v5315
  %v5318 = vmul.f32 %v5170, %v5315
  %v5319 = vmul.f32 %v5171, %v5315
  %v5320 = vmul.f32 %v5172, %v5315
  %v5321 = vmul.f32 %v5173, %v5315
  %v5322 = vmul.f32 %v5174, %v5315
  %v5323 = vpack.c.bf16 %v5318, %v5317
  %v5324 = vpack.c.bf16 %v5320, %v5319
  %v5325 = vpack.c.bf16 %v5322, %v5321
  %5329 = vrot.lane.b32.xlu0 %v5323, 127
  %v5330 = vpop.permute.xlu0 %5329
  %5331 = vrot.lane.b32.xlu0 %v5324, 127
  %v5332 = vpop.permute.xlu0 %5331
  %5333 = vrot.lane.b32.xlu0 %v5325, 127
  %v5334 = vpop.permute.xlu0 %5333
  %5338 = vst.msk [vmem:[#allocation4 + $0x78] sm:$0xff] %vm3401, %v5330
  %5339 = vst.msk [vmem:[#allocation4 + $0x80] sm:$0xff] %vm3401, %v5332
  %5340 = vst.msk [vmem:[#allocation4 + $0x88] sm:$0xff] %vm3401, %v5334
  %v5341 = vlaneseq
  %v5342 = vshrl.u32 %v5341, 7
  %v5343 = vsub.s32 6, %v5342
  %v5344 = vrot.slane %v5115, %v5343
  %5346 = vrot.lane.b32.xlu0 %v5344, 3
  %v5347 = vpop.permute.xlu0 %5346
  %v5349 = vmul.f32 %v5169, %v5347
  %v5350 = vmul.f32 %v5170, %v5347
  %v5351 = vmul.f32 %v5171, %v5347
  %v5352 = vmul.f32 %v5172, %v5347
  %v5353 = vmul.f32 %v5173, %v5347
  %v5354 = vmul.f32 %v5174, %v5347
  %v5355 = vpack.c.bf16 %v5350, %v5349
  %v5356 = vpack.c.bf16 %v5352, %v5351
  %v5357 = vpack.c.bf16 %v5354, %v5353
  %5361 = vrot.lane.b32.xlu0 %v5355, 125
  %v5362 = vpop.permute.xlu0 %5361
  %5363 = vrot.lane.b32.xlu0 %v5356, 125
  %v5364 = vpop.permute.xlu0 %5363
  %5365 = vrot.lane.b32.xlu0 %v5357, 125
  %v5366 = vpop.permute.xlu0 %5365
  %5370 = vst.msk [vmem:[#allocation4 + $0x90] sm:$0xff] %vm3401, %v5362
  %5371 = vst.msk [vmem:[#allocation4 + $0x98] sm:$0xff] %vm3401, %v5364
  %5372 = vst.msk [vmem:[#allocation4 + $0xa0] sm:$0xff] %vm3401, %v5366
  %v5373 = vlaneseq
  %v5374 = vshrl.u32 %v5373, 7
  %v5375 = vsub.s32 7, %v5374
  %v5376 = vrot.slane %v5115, %v5375
  %5378 = vrot.lane.b32.xlu0 %v5376, 4
  %v5379 = vpop.permute.xlu0 %5378
  %v5381 = vmul.f32 %v5169, %v5379
  %v5382 = vmul.f32 %v5170, %v5379
  %v5383 = vmul.f32 %v5171, %v5379
  %v5384 = vmul.f32 %v5172, %v5379
  %v5385 = vmul.f32 %v5173, %v5379
  %v5386 = vmul.f32 %v5174, %v5379
  %v5387 = vpack.c.bf16 %v5382, %v5381
  %v5388 = vpack.c.bf16 %v5384, %v5383
  %v5389 = vpack.c.bf16 %v5386, %v5385
  %5393 = vrot.lane.b32.xlu0 %v5387, 124
  %v5394 = vpop.permute.xlu0 %5393
  %5395 = vrot.lane.b32.xlu0 %v5388, 124
  %v5396 = vpop.permute.xlu0 %5395
  %5397 = vrot.lane.b32.xlu0 %v5389, 124
  %v5398 = vpop.permute.xlu0 %5397
  %5402 = vst.msk [vmem:[#allocation4 + $0xa8] sm:$0xff] %vm3401, %v5394
  %5403 = vst.msk [vmem:[#allocation4 + $0xb0] sm:$0xff] %vm3401, %v5396
  %5404 = vst.msk [vmem:[#allocation4 + $0xb8] sm:$0xff] %vm3401, %v5398
  %v5405 = vlaneseq
  %v5406 = vshrl.u32 %v5405, 7
  %v5407 = vsub.s32 0, %v5406
  %v5408 = vrot.slane %v5116, %v5407
  %5410 = vrot.lane.b32.xlu0 %v5408, 5
  %v5411 = vpop.permute.xlu0 %5410
  %v5413 = vmul.f32 %v5169, %v5411
  %v5414 = vmul.f32 %v5170, %v5411
  %v5415 = vmul.f32 %v5171, %v5411
  %v5416 = vmul.f32 %v5172, %v5411
  %v5417 = vmul.f32 %v5173, %v5411
  %v5418 = vmul.f32 %v5174, %v5411
  %v5419 = vpack.c.bf16 %v5414, %v5413
  %v5420 = vpack.c.bf16 %v5416, %v5415
  %v5421 = vpack.c.bf16 %v5418, %v5417
  %5425 = vrot.lane.b32.xlu0 %v5419, 123
  %v5426 = vpop.permute.xlu0 %5425
  %5427 = vrot.lane.b32.xlu0 %v5420, 123
  %v5428 = vpop.permute.xlu0 %5427
  %5429 = vrot.lane.b32.xlu0 %v5421, 123
  %v5430 = vpop.permute.xlu0 %5429
  %5434 = vst.msk [vmem:[#allocation4 + $0xc0] sm:$0xff] %vm3401, %v5426
  %5435 = vst.msk [vmem:[#allocation4 + $0xc8] sm:$0xff] %vm3401, %v5428
  %5436 = vst.msk [vmem:[#allocation4 + $0xd0] sm:$0xff] %vm3401, %v5430
  %v5437 = vld [vmem:[#allocation4] sm:$0xff]
  %v5438 = vld [vmem:[#allocation4 + $0x8] sm:$0xff]
  %v5439 = vld [vmem:[#allocation4 + $0x10] sm:$0xff]
  %v5440 = vld [vmem:[#allocation4 + $0x18] sm:$0xff]
  %v5441 = vld [vmem:[#allocation4 + $0x20] sm:$0xff]
  %v5442 = vld [vmem:[#allocation4 + $0x28] sm:$0xff]
  %v5443 = vld [vmem:[#allocation4 + $0x30] sm:$0xff]
  %v5444 = vld [vmem:[#allocation4 + $0x38] sm:$0xff]
  %v5445 = vld [vmem:[#allocation4 + $0x40] sm:$0xff]
  %v5446 = vld [vmem:[#allocation4 + $0x48] sm:$0xff]
  %v5447 = vld [vmem:[#allocation4 + $0x50] sm:$0xff]
  %v5448 = vld [vmem:[#allocation4 + $0x58] sm:$0xff]
  %v5449 = vld [vmem:[#allocation4 + $0x60] sm:$0xff]
  %v5450 = vld [vmem:[#allocation4 + $0x68] sm:$0xff]
  %v5451 = vld [vmem:[#allocation4 + $0x70] sm:$0xff]
  %v5452 = vld [vmem:[#allocation4 + $0x78] sm:$0xff]
  %v5453 = vld [vmem:[#allocation4 + $0x80] sm:$0xff]
  %v5454 = vld [vmem:[#allocation4 + $0x88] sm:$0xff]
  %v5455 = vld [vmem:[#allocation4 + $0x90] sm:$0xff]
  %v5456 = vld [vmem:[#allocation4 + $0x98] sm:$0xff]
  %v5457 = vld [vmem:[#allocation4 + $0xa0] sm:$0xff]
  %v5458 = vld [vmem:[#allocation4 + $0xa8] sm:$0xff]
  %v5459 = vld [vmem:[#allocation4 + $0xb0] sm:$0xff]
  %v5460 = vld [vmem:[#allocation4 + $0xb8] sm:$0xff]
  %v5461 = vld [vmem:[#allocation4 + $0xc0] sm:$0xff]
  %v5462 = vld [vmem:[#allocation4 + $0xc8] sm:$0xff]
  %v5463 = vld [vmem:[#allocation4 + $0xd0] sm:$0xff]
  %v5476 = vunpack.c.l.b16 %v5126
  %v5477 = vunpack.c.h.b16 %v5126
  %v5478 = vunpack.c.l.b16 %v5127
  %v5479 = vunpack.c.h.b16 %v5127
  %v5480 = vunpack.c.l.b16 %v5128
  %v5481 = vunpack.c.h.b16 %v5128
  %v5482 = vunpack.c.l.b16 %v5129
  %v5483 = vunpack.c.h.b16 %v5129
  %v5484 = vunpack.c.l.b16 %v5130
  %v5485 = vunpack.c.h.b16 %v5130
  %v5486 = vunpack.c.l.b16 %v5131
  %v5487 = vunpack.c.h.b16 %v5131
  %v5488 = vunpack.c.l.b16 %v5132
  %v5489 = vunpack.c.h.b16 %v5132
  %v5490 = vunpack.c.l.b16 %v5133
  %v5491 = vunpack.c.h.b16 %v5133
  %v5492 = vunpack.c.l.b16 %v5134
  %v5493 = vunpack.c.h.b16 %v5134
  %v5494 = vunpack.c.l.b16 %v5135
  %v5495 = vunpack.c.h.b16 %v5135
  %v5496 = vunpack.c.l.b16 %v5136
  %v5497 = vunpack.c.h.b16 %v5136
  %v5498 = vunpack.c.l.b16 %v5137
  %v5499 = vunpack.c.h.b16 %v5137
  %v5500 = vpack.c.b16 %v5480, %v5476
  %v5501 = vpack.c.b16 %v5481, %v5477
  %v5502 = vpack.c.b16 %v5482, %v5478
  %v5503 = vpack.c.b16 %v5483, %v5479
  %v5504 = vpack.c.b16 %v5488, %v5484
  %v5505 = vpack.c.b16 %v5489, %v5485
  %v5506 = vpack.c.b16 %v5490, %v5486
  %v5507 = vpack.c.b16 %v5491, %v5487
  %v5508 = vpack.c.b16 %v5496, %v5492
  %v5509 = vpack.c.b16 %v5497, %v5493
  %v5510 = vpack.c.b16 %v5498, %v5494
  %v5511 = vpack.c.b16 %v5499, %v5495
  %vm5521 = vcmask 392192
  %v5523 = vsel %vm5521, %v5503, 0
  %v5526 = vsel %vm5521, %v5507, 0
  %v5529 = vsel %vm5521, %v5511, 0
  %5531 = vmatprep.subr.bf16.mxu0 0
  %5532 = vmatpush1.bf16.msra.mxu0 %v5437
  %5533 = vmatprep.subr.bf16.mxu0 0
  %5534 = vmatpush1.bf16.msra.mxu0 %v5438
  %5535 = vmatprep.subr.bf16.mxu0 0
  %5536 = vmatpush1.bf16.msra.mxu0 %v5439
  %5537 = vmatprep.subr.bf16.mxu0 0
  %5538 = vmatpush1.bf16.msra.mxu0 %v5440
  %5539 = vmatprep.subr.bf16.mxu0 0
  %5540 = vmatpush1.bf16.msra.mxu0 %v5441
  %5541 = vmatprep.subr.bf16.mxu0 0
  %5542 = vmatpush1.bf16.msra.mxu0 %v5442
  %5543 = vmatprep.subr.bf16.mxu0 0
  %5544 = vmatpush1.bf16.msra.mxu0 %v5443
  %5545 = vmatprep.subr.bf16.mxu0 0
  %5546 = vmatpush1.bf16.msra.mxu0 %v5444
  %5547 = vmatprep.subr.bf16.mxu0 0
  %5548 = vmatpush1.bf16.msra.mxu0 %v5445
  %5549 = vmatprep.subr.bf16.mxu0 0
  %5550 = vmatpush1.bf16.msra.mxu0 %v5446
  %5551 = vmatprep.subr.bf16.mxu0 0
  %5552 = vmatpush1.bf16.msra.mxu0 %v5447
  %5553 = vmatprep.subr.bf16.mxu0 0
  %5554 = vmatpush1.bf16.msra.mxu0 %v5448
  %5555 = vmatprep.subr.bf16.mxu0 0
  %5556 = vmatpush1.bf16.msra.mxu0 %v5449
  %5557 = vmatprep.subr.bf16.mxu0 0
  %5558 = vmatpush1.bf16.msra.mxu0 %v5450
  %5559 = vmatprep.subr.bf16.mxu0 0
  %5560 = vmatpush1.bf16.msra.mxu0 %v5451
  %5561 = vmatprep.subr.bf16.mxu0 0
  %5562 = vmatpush1.bf16.msra.mxu0 %v5452
  %5563 = vmatprep.mubr.bf16.mxu0 %v5501
  %5564 = vmatmul.mubr.bf16.gmra.mrb[0].mxu0 %v5500
  %v5565 = vpop.f32.mrb[0].mxu0
  %v5566 = vadd.f32 0.0, %v5565
  %v5567 = vpop.f32.mrb[0].mxu0
  %v5568 = vpop.f32.mrb[0].mxu0
  %v5569 = vadd.f32 0.0, %v5568
  %v5570 = vpop.f32.mrb[0].mxu0
  %5571 = vmatprep.mubr.bf16.mxu0 %v5505
  %5572 = vmatmul.mubr.bf16.gmra.mrb[0].mxu0 %v5504
  %v5573 = vpop.f32.mrb[0].mxu0
  %v5574 = vadd.f32 0.0, %v5573
  %v5575 = vpop.f32.mrb[0].mxu0
  %v5576 = vpop.f32.mrb[0].mxu0
  %v5577 = vadd.f32 0.0, %v5576
  %v5578 = vpop.f32.mrb[0].mxu0
  %5579 = vmatprep.mubr.bf16.mxu0 %v5509
  %5580 = vmatmul.mubr.bf16.gmra.mrb[0].mxu0 %v5508
  %v5581 = vpop.f32.mrb[0].mxu0
  %v5582 = vadd.f32 0.0, %v5581
  %v5583 = vpop.f32.mrb[0].mxu0
  %v5584 = vpop.f32.mrb[0].mxu0
  %v5585 = vadd.f32 0.0, %v5584
  %v5586 = vpop.f32.mrb[0].mxu0
  %5587 = vdwg.mxu0
  %5588 = vmatprep.subr.bf16.mxu0 0
  %5589 = vmatpush1.bf16.msra.mxu0 %v5453
  %5590 = vmatprep.subr.bf16.mxu0 0
  %5591 = vmatpush1.bf16.msra.mxu0 %v5454
  %5592 = vmatprep.subr.bf16.mxu0 0
  %5593 = vmatpush1.bf16.msra.mxu0 %v5455
  %5594 = vmatprep.subr.bf16.mxu0 0
  %5595 = vmatpush1.bf16.msra.mxu0 %v5456
  %5596 = vmatprep.subr.bf16.mxu0 0
  %5597 = vmatpush1.bf16.msra.mxu0 %v5457
  %5598 = vmatprep.subr.bf16.mxu0 0
  %5599 = vmatpush1.bf16.msra.mxu0 %v5458
  %5600 = vmatprep.subr.bf16.mxu0 0
  %5601 = vmatpush1.bf16.msra.mxu0 %v5459
  %5602 = vmatprep.subr.bf16.mxu0 0
  %5603 = vmatpush1.bf16.msra.mxu0 %v5460
  %5604 = vmatprep.subr.bf16.mxu0 0
  %5605 = vmatpush1.bf16.msra.mxu0 %v5461
  %5606 = vmatprep.subr.bf16.mxu0 0
  %5607 = vmatpush1.bf16.msra.mxu0 %v5462
  %5608 = vmatprep.subr.bf16.mxu0 0
  %5609 = vmatpush1.bf16.msra.mxu0 %v5463
  %5610 = vmatprep.subr.bf16.mxu0 0
  %5611 = vmatpush1.bf16.msra.mxu0 0
  %5612 = vmatprep.subr.bf16.mxu0 0
  %5613 = vmatpush1.bf16.msra.mxu0 0
  %5614 = vmatprep.subr.bf16.mxu0 0
  %5615 = vmatpush1.bf16.msra.mxu0 0
  %5616 = vmatprep.subr.bf16.mxu0 0
  %5617 = vmatpush1.bf16.msra.mxu0 0
  %5618 = vmatprep.subr.bf16.mxu0 0
  %5619 = vmatpush1.bf16.msra.mxu0 0
  %5620 = vmatprep.mubr.bf16.mxu0 %v5523
  %5621 = vmatmul.mubr.bf16.gmra.mrb[0].mxu0 %v5502
  %v5622 = vpop.f32.mrb[0].mxu0
  %v5623 = vadd.f32 %v5566, %v5622
  %v5624 = vpop.f32.mrb[0].mxu0
  %v5625 = vpop.f32.mrb[0].mxu0
  %v5626 = vadd.f32 %v5569, %v5625
  %v5627 = vpop.f32.mrb[0].mxu0
  %5628 = vmatprep.mubr.bf16.mxu0 %v5526
  %5629 = vmatmul.mubr.bf16.gmra.mrb[0].mxu0 %v5506
  %v5630 = vpop.f32.mrb[0].mxu0
  %v5631 = vadd.f32 %v5574, %v5630
  %v5632 = vpop.f32.mrb[0].mxu0
  %v5633 = vpop.f32.mrb[0].mxu0
  %v5634 = vadd.f32 %v5577, %v5633
  %v5635 = vpop.f32.mrb[0].mxu0
  %5636 = vmatprep.mubr.bf16.mxu0 %v5529
  %5637 = vmatmul.mubr.bf16.gmra.mrb[0].mxu0 %v5510
  %v5638 = vpop.f32.mrb[0].mxu0
  %v5639 = vadd.f32 %v5582, %v5638
  %v5640 = vpop.f32.mrb[0].mxu0
  %v5641 = vpop.f32.mrb[0].mxu0
  %v5642 = vadd.f32 %v5585, %v5641
  %v5643 = vpop.f32.mrb[0].mxu0
  %5644 = vdwg.mxu0
  %v5645 = vmax.f32 %v5623, 0.0
  %v5646 = vmax.f32 %v5626, 0.0
  %v5647 = vmax.f32 %v5631, 0.0
  %v5648 = vmax.f32 %v5634, 0.0
  %v5649 = vmax.f32 %v5639, 0.0
  %v5650 = vmax.f32 %v5642, 0.0
  %s5651 = scalar_lea.vmem %s15, 96
  %v5652 = vld [vmem:[%s5651] sm:$0xff]
  %v5653 = vld [vmem:[%s5651 + $0x8] sm:$0xff]
  %v5654 = vld [vmem:[%s5651 + $0x10] sm:$0xff]
  %v5655 = vld [vmem:[%s5651 + $0x18] sm:$0xff]
  %v5656 = vld [vmem:[%s5651 + $0x20] sm:$0xff]
  %v5657 = vld [vmem:[%s5651 + $0x28] sm:$0xff]
  %v5658 = vld [vmem:[%s5651 + $0x30] sm:$0xff]
  %v5659 = vld [vmem:[%s5651 + $0x38] sm:$0xff]
  %v5660 = vld [vmem:[%s5651 + $0x40] sm:$0xff]
  %v5661 = vld [vmem:[%s5651 + $0x48] sm:$0xff]
  %v5662 = vld [vmem:[%s5651 + $0x50] sm:$0xff]
  %v5663 = vld [vmem:[%s5651 + $0x58] sm:$0xff]
  %5664 = vrot.lane.b32.xlu0 %v5645, 32
  %v5665 = vpop.permute.xlu0 %5664
  %v5666 = vsel %vm5138, %v5665, %v5645
  %5667 = vrot.lane.b32.xlu0 %v5646, 32
  %v5668 = vpop.permute.xlu0 %5667
  %v5669 = vsel %vm5138, %v5668, %v5646
  %5670 = vrot.lane.b32.xlu0 %v5647, 32
  %v5671 = vpop.permute.xlu0 %5670
  %v5672 = vsel %vm5138, %v5671, %v5647
  %5673 = vrot.lane.b32.xlu0 %v5648, 32
  %v5674 = vpop.permute.xlu0 %5673
  %v5675 = vsel %vm5138, %v5674, %v5648
  %5676 = vrot.lane.b32.xlu0 %v5649, 32
  %v5677 = vpop.permute.xlu0 %5676
  %v5678 = vsel %vm5138, %v5677, %v5649
  %5679 = vrot.lane.b32.xlu0 %v5650, 32
  %v5680 = vpop.permute.xlu0 %5679
  %v5681 = vsel %vm5138, %v5680, %v5650
  %5682 = vrot.lane.b32.xlu0 %v5666, 32
  %v5683 = vpop.permute.xlu0 %5682
  %5684 = vrot.lane.b32.xlu0 %v5669, 32
  %v5685 = vpop.permute.xlu0 %5684
  %5686 = vrot.lane.b32.xlu0 %v5672, 32
  %v5687 = vpop.permute.xlu0 %5686
  %5688 = vrot.lane.b32.xlu0 %v5675, 32
  %v5689 = vpop.permute.xlu0 %5688
  %5690 = vrot.lane.b32.xlu0 %v5678, 32
  %v5691 = vpop.permute.xlu0 %5690
  %5692 = vrot.lane.b32.xlu0 %v5681, 32
  %v5693 = vpop.permute.xlu0 %5692
  %v5694 = vsel %vm5138, %v5683, %v5645
  %v5695 = vsel %vm5138, %v5685, %v5646
  %v5696 = vsel %vm5138, %v5687, %v5647
  %v5697 = vsel %vm5138, %v5689, %v5648
  %v5698 = vsel %vm5138, %v5691, %v5649
  %v5699 = vsel %vm5138, %v5693, %v5650
  %v5700 = vmul.f32 %v5694, %v5181
  %v5701 = vmul.f32 %v5695, %v5181
  %v5702 = vmul.f32 %v5696, %v5181
  %v5703 = vmul.f32 %v5697, %v5181
  %v5704 = vmul.f32 %v5698, %v5181
  %v5705 = vmul.f32 %v5699, %v5181
  %v5706 = vpack.c.bf16 %v5701, %v5700
  %v5707 = vpack.c.bf16 %v5703, %v5702
  %v5708 = vpack.c.bf16 %v5705, %v5704
  %5712 = vrot.lane.b32.xlu0 %v5706, 101
  %v5713 = vpop.permute.xlu0 %5712
  %5714 = vrot.lane.b32.xlu0 %v5707, 101
  %v5715 = vpop.permute.xlu0 %5714
  %5716 = vrot.lane.b32.xlu0 %v5708, 101
  %v5717 = vpop.permute.xlu0 %5716
  %5721 = vst.msk [vmem:[#allocation4] sm:$0xff] %vm3401, %v5713
  %5722 = vst.msk [vmem:[#allocation4 + $0x8] sm:$0xff] %vm3401, %v5715
  %5723 = vst.msk [vmem:[#allocation4 + $0x10] sm:$0xff] %vm3401, %v5717
  %v5724 = vmul.f32 %v5694, %v5213
  %v5725 = vmul.f32 %v5695, %v5213
  %v5726 = vmul.f32 %v5696, %v5213
  %v5727 = vmul.f32 %v5697, %v5213
  %v5728 = vmul.f32 %v5698, %v5213
  %v5729 = vmul.f32 %v5699, %v5213
  %v5730 = vpack.c.bf16 %v5725, %v5724
  %v5731 = vpack.c.bf16 %v5727, %v5726
  %v5732 = vpack.c.bf16 %v5729, %v5728
  %5736 = vrot.lane.b32.xlu0 %v5730, 100
  %v5737 = vpop.permute.xlu0 %5736
  %5738 = vrot.lane.b32.xlu0 %v5731, 100
  %v5739 = vpop.permute.xlu0 %5738
  %5740 = vrot.lane.b32.xlu0 %v5732, 100
  %v5741 = vpop.permute.xlu0 %5740
  %5745 = vst.msk [vmem:[#allocation4 + $0x18] sm:$0xff] %vm3401, %v5737
  %5746 = vst.msk [vmem:[#allocation4 + $0x20] sm:$0xff] %vm3401, %v5739
  %5747 = vst.msk [vmem:[#allocation4 + $0x28] sm:$0xff] %vm3401, %v5741
  %v5748 = vmul.f32 %v5694, %v5245
  %v5749 = vmul.f32 %v5695, %v5245
  %v5750 = vmul.f32 %v5696, %v5245
  %v5751 = vmul.f32 %v5697, %v5245
  %v5752 = vmul.f32 %v5698, %v5245
  %v5753 = vmul.f32 %v5699, %v5245
  %v5754 = vpack.c.bf16 %v5749, %v5748
  %v5755 = vpack.c.bf16 %v5751, %v5750
  %v5756 = vpack.c.bf16 %v5753, %v5752
  %5760 = vrot.lane.b32.xlu0 %v5754, 99
  %v5761 = vpop.permute.xlu0 %5760
  %5762 = vrot.lane.b32.xlu0 %v5755, 99
  %v5763 = vpop.permute.xlu0 %5762
  %5764 = vrot.lane.b32.xlu0 %v5756, 99
  %v5765 = vpop.permute.xlu0 %5764
  %5769 = vst.msk [vmem:[#allocation4 + $0x30] sm:$0xff] %vm3401, %v5761
  %5770 = vst.msk [vmem:[#allocation4 + $0x38] sm:$0xff] %vm3401, %v5763
  %5771 = vst.msk [vmem:[#allocation4 + $0x40] sm:$0xff] %vm3401, %v5765
  %v5772 = vmul.f32 %v5694, %v5277
  %v5773 = vmul.f32 %v5695, %v5277
  %v5774 = vmul.f32 %v5696, %v5277
  %v5775 = vmul.f32 %v5697, %v5277
  %v5776 = vmul.f32 %v5698, %v5277
  %v5777 = vmul.f32 %v5699, %v5277
  %v5778 = vpack.c.bf16 %v5773, %v5772
  %v5779 = vpack.c.bf16 %v5775, %v5774
  %v5780 = vpack.c.bf16 %v5777, %v5776
  %5784 = vrot.lane.b32.xlu0 %v5778, 97
  %v5785 = vpop.permute.xlu0 %5784
  %5786 = vrot.lane.b32.xlu0 %v5779, 97
  %v5787 = vpop.permute.xlu0 %5786
  %5788 = vrot.lane.b32.xlu0 %v5780, 97
  %v5789 = vpop.permute.xlu0 %5788
  %5793 = vst.msk [vmem:[#allocation4 + $0x48] sm:$0xff] %vm3401, %v5785
  %5794 = vst.msk [vmem:[#allocation4 + $0x50] sm:$0xff] %vm3401, %v5787
  %5795 = vst.msk [vmem:[#allocation4 + $0x58] sm:$0xff] %vm3401, %v5789
  %v5796 = vpack.c.bf16 %v5646, %v5645
  %v5797 = vpack.c.bf16 %v5648, %v5647
  %v5798 = vpack.c.bf16 %v5650, %v5649
  %5799 = vst.msk [vmem:[#allocation4 + $0x60] sm:$0xff] %vm3401, %v5796
  %5800 = vst.msk [vmem:[#allocation4 + $0x68] sm:$0xff] %vm3401, %v5797
  %5801 = vst.msk [vmem:[#allocation4 + $0x70] sm:$0xff] %vm3401, %v5798
  %v5802 = vmul.f32 %v5694, %v5315
  %v5803 = vmul.f32 %v5695, %v5315
  %v5804 = vmul.f32 %v5696, %v5315
  %v5805 = vmul.f32 %v5697, %v5315
  %v5806 = vmul.f32 %v5698, %v5315
  %v5807 = vmul.f32 %v5699, %v5315
  %v5808 = vpack.c.bf16 %v5803, %v5802
  %v5809 = vpack.c.bf16 %v5805, %v5804
  %v5810 = vpack.c.bf16 %v5807, %v5806
  %5814 = vrot.lane.b32.xlu0 %v5808, 127
  %v5815 = vpop.permute.xlu0 %5814
  %5816 = vrot.lane.b32.xlu0 %v5809, 127
  %v5817 = vpop.permute.xlu0 %5816
  %5818 = vrot.lane.b32.xlu0 %v5810, 127
  %v5819 = vpop.permute.xlu0 %5818
  %5823 = vst.msk [vmem:[#allocation4 + $0x78] sm:$0xff] %vm3401, %v5815
  %5824 = vst.msk [vmem:[#allocation4 + $0x80] sm:$0xff] %vm3401, %v5817
  %5825 = vst.msk [vmem:[#allocation4 + $0x88] sm:$0xff] %vm3401, %v5819
  %v5826 = vmul.f32 %v5694, %v5347
  %v5827 = vmul.f32 %v5695, %v5347
  %v5828 = vmul.f32 %v5696, %v5347
  %v5829 = vmul.f32 %v5697, %v5347
  %v5830 = vmul.f32 %v5698, %v5347
  %v5831 = vmul.f32 %v5699, %v5347
  %v5832 = vpack.c.bf16 %v5827, %v5826
  %v5833 = vpack.c.bf16 %v5829, %v5828
  %v5834 = vpack.c.bf16 %v5831, %v5830
  %5838 = vrot.lane.b32.xlu0 %v5832, 125
  %v5839 = vpop.permute.xlu0 %5838
  %5840 = vrot.lane.b32.xlu0 %v5833, 125
  %v5841 = vpop.permute.xlu0 %5840
  %5842 = vrot.lane.b32.xlu0 %v5834, 125
  %v5843 = vpop.permute.xlu0 %5842
  %5847 = vst.msk [vmem:[#allocation4 + $0x90] sm:$0xff] %vm3401, %v5839
  %5848 = vst.msk [vmem:[#allocation4 + $0x98] sm:$0xff] %vm3401, %v5841
  %5849 = vst.msk [vmem:[#allocation4 + $0xa0] sm:$0xff] %vm3401, %v5843
  %v5850 = vmul.f32 %v5694, %v5379
  %v5851 = vmul.f32 %v5695, %v5379
  %v5852 = vmul.f32 %v5696, %v5379
  %v5853 = vmul.f32 %v5697, %v5379
  %v5854 = vmul.f32 %v5698, %v5379
  %v5855 = vmul.f32 %v5699, %v5379
  %v5856 = vpack.c.bf16 %v5851, %v5850
  %v5857 = vpack.c.bf16 %v5853, %v5852
  %v5858 = vpack.c.bf16 %v5855, %v5854
  %5862 = vrot.lane.b32.xlu0 %v5856, 124
  %v5863 = vpop.permute.xlu0 %5862
  %5864 = vrot.lane.b32.xlu0 %v5857, 124
  %v5865 = vpop.permute.xlu0 %5864
  %5866 = vrot.lane.b32.xlu0 %v5858, 124
  %v5867 = vpop.permute.xlu0 %5866
  %5871 = vst.msk [vmem:[#allocation4 + $0xa8] sm:$0xff] %vm3401, %v5863
  %5872 = vst.msk [vmem:[#allocation4 + $0xb0] sm:$0xff] %vm3401, %v5865
  %5873 = vst.msk [vmem:[#allocation4 + $0xb8] sm:$0xff] %vm3401, %v5867
  %v5874 = vmul.f32 %v5694, %v5411
  %v5875 = vmul.f32 %v5695, %v5411
  %v5876 = vmul.f32 %v5696, %v5411
  %v5877 = vmul.f32 %v5697, %v5411
  %v5878 = vmul.f32 %v5698, %v5411
  %v5879 = vmul.f32 %v5699, %v5411
  %v5880 = vpack.c.bf16 %v5875, %v5874
  %v5881 = vpack.c.bf16 %v5877, %v5876
  %v5882 = vpack.c.bf16 %v5879, %v5878
  %5886 = vrot.lane.b32.xlu0 %v5880, 123
  %v5887 = vpop.permute.xlu0 %5886
  %5888 = vrot.lane.b32.xlu0 %v5881, 123
  %v5889 = vpop.permute.xlu0 %5888
  %5890 = vrot.lane.b32.xlu0 %v5882, 123
  %v5891 = vpop.permute.xlu0 %5890
  %5895 = vst.msk [vmem:[#allocation4 + $0xc0] sm:$0xff] %vm3401, %v5887
  %5896 = vst.msk [vmem:[#allocation4 + $0xc8] sm:$0xff] %vm3401, %v5889
  %5897 = vst.msk [vmem:[#allocation4 + $0xd0] sm:$0xff] %vm3401, %v5891
  %v5898 = vld [vmem:[#allocation4] sm:$0xff]
  %v5899 = vld [vmem:[#allocation4 + $0x8] sm:$0xff]
  %v5900 = vld [vmem:[#allocation4 + $0x10] sm:$0xff]
  %v5901 = vld [vmem:[#allocation4 + $0x18] sm:$0xff]
  %v5902 = vld [vmem:[#allocation4 + $0x20] sm:$0xff]
  %v5903 = vld [vmem:[#allocation4 + $0x28] sm:$0xff]
  %v5904 = vld [vmem:[#allocation4 + $0x30] sm:$0xff]
  %v5905 = vld [vmem:[#allocation4 + $0x38] sm:$0xff]
  %v5906 = vld [vmem:[#allocation4 + $0x40] sm:$0xff]
  %v5907 = vld [vmem:[#allocation4 + $0x48] sm:$0xff]
  %v5908 = vld [vmem:[#allocation4 + $0x50] sm:$0xff]
  %v5909 = vld [vmem:[#allocation4 + $0x58] sm:$0xff]
  %v5910 = vld [vmem:[#allocation4 + $0x60] sm:$0xff]
  %v5911 = vld [vmem:[#allocation4 + $0x68] sm:$0xff]
  %v5912 = vld [vmem:[#allocation4 + $0x70] sm:$0xff]
  %v5913 = vld [vmem:[#allocation4 + $0x78] sm:$0xff]
  %v5914 = vld [vmem:[#allocation4 + $0x80] sm:$0xff]
  %v5915 = vld [vmem:[#allocation4 + $0x88] sm:$0xff]
  %v5916 = vld [vmem:[#allocation4 + $0x90] sm:$0xff]
  %v5917 = vld [vmem:[#allocation4 + $0x98] sm:$0xff]
  %v5918 = vld [vmem:[#allocation4 + $0xa0] sm:$0xff]
  %v5919 = vld [vmem:[#allocation4 + $0xa8] sm:$0xff]
  %v5920 = vld [vmem:[#allocation4 + $0xb0] sm:$0xff]
  %v5921 = vld [vmem:[#allocation4 + $0xb8] sm:$0xff]
  %v5922 = vld [vmem:[#allocation4 + $0xc0] sm:$0xff]
  %v5923 = vld [vmem:[#allocation4 + $0xc8] sm:$0xff]
  %v5924 = vld [vmem:[#allocation4 + $0xd0] sm:$0xff]
  %v5937 = vunpack.c.l.b16 %v5652
  %v5938 = vunpack.c.h.b16 %v5652
  %v5939 = vunpack.c.l.b16 %v5653
  %v5940 = vunpack.c.h.b16 %v5653
  %v5941 = vunpack.c.l.b16 %v5654
  %v5942 = vunpack.c.h.b16 %v5654
  %v5943 = vunpack.c.l.b16 %v5655
  %v5944 = vunpack.c.h.b16 %v5655
  %v5945 = vunpack.c.l.b16 %v5656
  %v5946 = vunpack.c.h.b16 %v5656
  %v5947 = vunpack.c.l.b16 %v5657
  %v5948 = vunpack.c.h.b16 %v5657
  %v5949 = vunpack.c.l.b16 %v5658
  %v5950 = vunpack.c.h.b16 %v5658
  %v5951 = vunpack.c.l.b16 %v5659
  %v5952 = vunpack.c.h.b16 %v5659
  %v5953 = vunpack.c.l.b16 %v5660
  %v5954 = vunpack.c.h.b16 %v5660
  %v5955 = vunpack.c.l.b16 %v5661
  %v5956 = vunpack.c.h.b16 %v5661
  %v5957 = vunpack.c.l.b16 %v5662
  %v5958 = vunpack.c.h.b16 %v5662
  %v5959 = vunpack.c.l.b16 %v5663
  %v5960 = vunpack.c.h.b16 %v5663
  %v5961 = vpack.c.b16 %v5941, %v5937
  %v5962 = vpack.c.b16 %v5942, %v5938
  %v5963 = vpack.c.b16 %v5943, %v5939
  %v5964 = vpack.c.b16 %v5944, %v5940
  %v5965 = vpack.c.b16 %v5949, %v5945
  %v5966 = vpack.c.b16 %v5950, %v5946
  %v5967 = vpack.c.b16 %v5951, %v5947
  %v5968 = vpack.c.b16 %v5952, %v5948
  %v5969 = vpack.c.b16 %v5957, %v5953
  %v5970 = vpack.c.b16 %v5958, %v5954
  %v5971 = vpack.c.b16 %v5959, %v5955
  %v5972 = vpack.c.b16 %v5960, %v5956
  %v5983 = vsel %vm5521, %v5964, 0
  %v5986 = vsel %vm5521, %v5968, 0
  %v5989 = vsel %vm5521, %v5972, 0
  %5991 = vmatprep.subr.bf16.mxu0 0
  %5992 = vmatpush1.bf16.msra.mxu0 %v5898
  %5993 = vmatprep.subr.bf16.mxu0 0
  %5994 = vmatpush1.bf16.msra.mxu0 %v5899
  %5995 = vmatprep.subr.bf16.mxu0 0
  %5996 = vmatpush1.bf16.msra.mxu0 %v5900
  %5997 = vmatprep.subr.bf16.mxu0 0
  %5998 = vmatpush1.bf16.msra.mxu0 %v5901
  %5999 = vmatprep.subr.bf16.mxu0 0
  %6000 = vmatpush1.bf16.msra.mxu0 %v5902
  %6001 = vmatprep.subr.bf16.mxu0 0
  %6002 = vmatpush1.bf16.msra.mxu0 %v5903
  %6003 = vmatprep.subr.bf16.mxu0 0
  %6004 = vmatpush1.bf16.msra.mxu0 %v5904
  %6005 = vmatprep.subr.bf16.mxu0 0
  %6006 = vmatpush1.bf16.msra.mxu0 %v5905
  %6007 = vmatprep.subr.bf16.mxu0 0
  %6008 = vmatpush1.bf16.msra.mxu0 %v5906
  %6009 = vmatprep.subr.bf16.mxu0 0
  %6010 = vmatpush1.bf16.msra.mxu0 %v5907
  %6011 = vmatprep.subr.bf16.mxu0 0
  %6012 = vmatpush1.bf16.msra.mxu0 %v5908
  %6013 = vmatprep.subr.bf16.mxu0 0
  %6014 = vmatpush1.bf16.msra.mxu0 %v5909
  %6015 = vmatprep.subr.bf16.mxu0 0
  %6016 = vmatpush1.bf16.msra.mxu0 %v5910
  %6017 = vmatprep.subr.bf16.mxu0 0
  %6018 = vmatpush1.bf16.msra.mxu0 %v5911
  %6019 = vmatprep.subr.bf16.mxu0 0
  %6020 = vmatpush1.bf16.msra.mxu0 %v5912
  %6021 = vmatprep.subr.bf16.mxu0 0
  %6022 = vmatpush1.bf16.msra.mxu0 %v5913
  %6023 = vmatprep.mubr.bf16.mxu0 %v5962
  %6024 = vmatmul.mubr.bf16.gmra.mrb[0].mxu0 %v5961
  %v6025 = vpop.f32.mrb[0].mxu0
  %v6026 = vadd.f32 0.0, %v6025
  %v6027 = vpop.f32.mrb[0].mxu0
  %v6028 = vpop.f32.mrb[0].mxu0
  %v6029 = vadd.f32 0.0, %v6028
  %v6030 = vpop.f32.mrb[0].mxu0
  %6031 = vmatprep.mubr.bf16.mxu0 %v5966
  %6032 = vmatmul.mubr.bf16.gmra.mrb[0].mxu0 %v5965
  %v6033 = vpop.f32.mrb[0].mxu0
  %v6034 = vadd.f32 0.0, %v6033
  %v6035 = vpop.f32.mrb[0].mxu0
  %v6036 = vpop.f32.mrb[0].mxu0
  %v6037 = vadd.f32 0.0, %v6036
  %v6038 = vpop.f32.mrb[0].mxu0
  %6039 = vmatprep.mubr.bf16.mxu0 %v5970
  %6040 = vmatmul.mubr.bf16.gmra.mrb[0].mxu0 %v5969
  %v6041 = vpop.f32.mrb[0].mxu0
  %v6042 = vadd.f32 0.0, %v6041
  %v6043 = vpop.f32.mrb[0].mxu0
  %v6044 = vpop.f32.mrb[0].mxu0
  %v6045 = vadd.f32 0.0, %v6044
  %v6046 = vpop.f32.mrb[0].mxu0
  %6047 = vdwg.mxu0
  %6048 = vmatprep.subr.bf16.mxu0 0
  %6049 = vmatpush1.bf16.msra.mxu0 %v5914
  %6050 = vmatprep.subr.bf16.mxu0 0
  %6051 = vmatpush1.bf16.msra.mxu0 %v5915
  %6052 = vmatprep.subr.bf16.mxu0 0
  %6053 = vmatpush1.bf16.msra.mxu0 %v5916
  %6054 = vmatprep.subr.bf16.mxu0 0
  %6055 = vmatpush1.bf16.msra.mxu0 %v5917
  %6056 = vmatprep.subr.bf16.mxu0 0
  %6057 = vmatpush1.bf16.msra.mxu0 %v5918
  %6058 = vmatprep.subr.bf16.mxu0 0
  %6059 = vmatpush1.bf16.msra.mxu0 %v5919
  %6060 = vmatprep.subr.bf16.mxu0 0
  %6061 = vmatpush1.bf16.msra.mxu0 %v5920
  %6062 = vmatprep.subr.bf16.mxu0 0
  %6063 = vmatpush1.bf16.msra.mxu0 %v5921
  %6064 = vmatprep.subr.bf16.mxu0 0
  %6065 = vmatpush1.bf16.msra.mxu0 %v5922
  %6066 = vmatprep.subr.bf16.mxu0 0
  %6067 = vmatpush1.bf16.msra.mxu0 %v5923
  %6068 = vmatprep.subr.bf16.mxu0 0
  %6069 = vmatpush1.bf16.msra.mxu0 %v5924
  %6070 = vmatprep.subr.bf16.mxu0 0
  %6071 = vmatpush1.bf16.msra.mxu0 0
  %6072 = vmatprep.subr.bf16.mxu0 0
  %6073 = vmatpush1.bf16.msra.mxu0 0
  %6074 = vmatprep.subr.bf16.mxu0 0
  %6075 = vmatpush1.bf16.msra.mxu0 0
  %6076 = vmatprep.subr.bf16.mxu0 0
  %6077 = vmatpush1.bf16.msra.mxu0 0
  %6078 = vmatprep.subr.bf16.mxu0 0
  %6079 = vmatpush1.bf16.msra.mxu0 0
  %6080 = vmatprep.mubr.bf16.mxu0 %v5983
  %6081 = vmatmul.mubr.bf16.gmra.mrb[0].mxu0 %v5963
  %v6082 = vpop.f32.mrb[0].mxu0
  %v6083 = vadd.f32 %v6026, %v6082
  %v6084 = vpop.f32.mrb[0].mxu0
  %v6085 = vpop.f32.mrb[0].mxu0
  %v6086 = vadd.f32 %v6029, %v6085
  %v6087 = vpop.f32.mrb[0].mxu0
  %6088 = vmatprep.mubr.bf16.mxu0 %v5986
  %6089 = vmatmul.mubr.bf16.gmra.mrb[0].mxu0 %v5967
  %v6090 = vpop.f32.mrb[0].mxu0
  %v6091 = vadd.f32 %v6034, %v6090
  %v6092 = vpop.f32.mrb[0].mxu0
  %v6093 = vpop.f32.mrb[0].mxu0
  %v6094 = vadd.f32 %v6037, %v6093
  %v6095 = vpop.f32.mrb[0].mxu0
  %6096 = vmatprep.mubr.bf16.mxu0 %v5989
  %6097 = vmatmul.mubr.bf16.gmra.mrb[0].mxu0 %v5971
  %v6098 = vpop.f32.mrb[0].mxu0
  %v6099 = vadd.f32 %v6042, %v6098
  %v6100 = vpop.f32.mrb[0].mxu0
  %v6101 = vpop.f32.mrb[0].mxu0
  %v6102 = vadd.f32 %v6045, %v6101
  %v6103 = vpop.f32.mrb[0].mxu0
  %6104 = vdwg.mxu0
  %v6105 = vpack.c.bf16 %v6086, %v6083
  %v6106 = vpack.c.bf16 %v6094, %v6091
  %v6107 = vpack.c.bf16 %v6102, %v6099
  %v6109 = vsel %vm3401, %v6105, 0
  %v6112 = vsel %vm3401, %v6106, 0
  %v6115 = vsel %vm3401, %v6107, 0
  %v6118 = vsel %vm3401, %v5117, 0
  %6120 = vmatprep.subr.bf16.mxu0 0
  %6121 = vmatpush1.bf16.xpose.msra.mxu0 %v6118
  %6122 = vmatprep.subr.bf16.mxu0 0
  %6123 = vmatpush1.bf16.xpose.msra.mxu0 0
  %6124 = vmatprep.subr.bf16.mxu0 0
  %6125 = vmatpush1.bf16.xpose.msra.mxu0 0
  %6126 = vmatprep.subr.bf16.mxu0 0
  %6127 = vmatpush1.bf16.xpose.msra.mxu0 0
  %6128 = vmatprep.subr.bf16.mxu0 0
  %6129 = vmatpush1.bf16.xpose.msra.mxu0 0
  %6130 = vmatprep.subr.bf16.mxu0 0
  %6131 = vmatpush1.bf16.xpose.msra.mxu0 0
  %6132 = vmatprep.subr.bf16.mxu0 0
  %6133 = vmatpush1.bf16.xpose.msra.mxu0 0
  %6134 = vmatprep.subr.bf16.mxu0 0
  %6135 = vmatpush1.bf16.xpose.msra.mxu0 0
  %6136 = vmatprep.subr.bf16.mxu0 0
  %6137 = vmatpush1.bf16.xpose.msra.mxu0 0
  %6138 = vmatprep.subr.bf16.mxu0 0
  %6139 = vmatpush1.bf16.xpose.msra.mxu0 0
  %6140 = vmatprep.subr.bf16.mxu0 0
  %6141 = vmatpush1.bf16.xpose.msra.mxu0 0
  %6142 = vmatprep.subr.bf16.mxu0 0
  %6143 = vmatpush1.bf16.xpose.msra.mxu0 0
  %6144 = vmatprep.subr.bf16.mxu0 0
  %6145 = vmatpush1.bf16.xpose.msra.mxu0 0
  %6146 = vmatprep.subr.bf16.mxu0 0
  %6147 = vmatpush1.bf16.xpose.msra.mxu0 0
  %6148 = vmatprep.subr.bf16.mxu0 0
  %6149 = vmatpush1.bf16.xpose.msra.mxu0 0
  %6150 = vmatprep.subr.bf16.mxu0 0
  %6151 = vmatpush1.bf16.xpose.msra.mxu0 0
  %6152 = vmatprep.mubr.bf16.mxu0 0
  %6153 = vmatmul.mubr.bf16.gmra.mrb[0].mxu0 %v6109
  %v6154 = vpop.f32.mrb[0].mxu0
  %v6155 = vadd.f32 0.0, %v6154
  %v6156 = vpop.f32.mrb[0].mxu0
  %v6157 = vpop.f32.mrb[0].mxu0
  %v6158 = vadd.f32 0.0, %v6157
  %v6159 = vpop.f32.mrb[0].mxu0
  %6160 = vmatprep.mubr.bf16.mxu0 0
  %6161 = vmatmul.mubr.bf16.gmra.mrb[0].mxu0 %v6112
  %v6162 = vpop.f32.mrb[0].mxu0
  %v6163 = vadd.f32 0.0, %v6162
  %v6164 = vpop.f32.mrb[0].mxu0
  %v6165 = vpop.f32.mrb[0].mxu0
  %v6166 = vadd.f32 0.0, %v6165
  %v6167 = vpop.f32.mrb[0].mxu0
  %6168 = vmatprep.mubr.bf16.mxu0 0
  %6169 = vmatmul.mubr.bf16.gmra.mrb[0].mxu0 %v6115
  %v6170 = vpop.f32.mrb[0].mxu0
  %v6171 = vadd.f32 0.0, %v6170
  %v6172 = vpop.f32.mrb[0].mxu0
  %v6173 = vpop.f32.mrb[0].mxu0
  %v6174 = vadd.f32 0.0, %v6173
  %v6175 = vpop.f32.mrb[0].mxu0
  %6176 = vdwg.mxu0
  %v6177 = vmul.f32 %v6155, 0.0625
  %v6178 = vmul.f32 %v6158, 0.0625
  %v6179 = vmul.f32 %v6163, 0.0625
  %v6180 = vmul.f32 %v6166, 0.0625
  %v6181 = vmul.f32 %v6171, 0.0625
  %v6182 = vmul.f32 %v6174, 0.0625
  %v6183 = vpack.c.bf16 %v6178, %v6177
  %v6184 = vpack.c.bf16 %v6180, %v6179
  %v6185 = vpack.c.bf16 %v6182, %v6181
  %v6188 = vunpack.c.l.b16 %v5118
  %v6189 = vunpack.c.l.b16 %v5119
  %v6190 = vpack.c.b16 %v6189, %v6188
  %v6192 = vsel %vm5521, %v6190, 0
  %6194 = vmatprep.subr.bf16.mxu0 0
  %6195 = vmatpush1.bf16.msra.mxu0 %v6183
  %6196 = vmatprep.subr.bf16.mxu0 0
  %6197 = vmatpush1.bf16.msra.mxu0 %v6184
  %6198 = vmatprep.subr.bf16.mxu0 0
  %6199 = vmatpush1.bf16.msra.mxu0 %v6185
  %6200 = vmatprep.subr.bf16.mxu0 0
  %6201 = vmatpush1.bf16.msra.mxu0 0
  %6202 = vmatprep.subr.bf16.mxu0 0
  %6203 = vmatpush1.bf16.msra.mxu0 0
  %6204 = vmatprep.subr.bf16.mxu0 0
  %6205 = vmatpush1.bf16.msra.mxu0 0
  %6206 = vmatprep.subr.bf16.mxu0 0
  %6207 = vmatpush1.bf16.msra.mxu0 0
  %6208 = vmatprep.subr.bf16.mxu0 0
  %6209 = vmatpush1.bf16.msra.mxu0 0
  %6210 = vmatprep.subr.bf16.mxu0 0
  %6211 = vmatpush1.bf16.msra.mxu0 0
  %6212 = vmatprep.subr.bf16.mxu0 0
  %6213 = vmatpush1.bf16.msra.mxu0 0
  %6214 = vmatprep.subr.bf16.mxu0 0
  %6215 = vmatpush1.bf16.msra.mxu0 0
  %6216 = vmatprep.subr.bf16.mxu0 0
  %6217 = vmatpush1.bf16.msra.mxu0 0
  %6218 = vmatprep.subr.bf16.mxu0 0
  %6219 = vmatpush1.bf16.msra.mxu0 0
  %6220 = vmatprep.subr.bf16.mxu0 0
  %6221 = vmatpush1.bf16.msra.mxu0 0
  %6222 = vmatprep.subr.bf16.mxu0 0
  %6223 = vmatpush1.bf16.msra.mxu0 0
  %6224 = vmatprep.subr.bf16.mxu0 0
  %6225 = vmatpush1.bf16.msra.mxu0 0
  %6226 = vmatprep.mubr.bf16.mxu0 0
  %6227 = vmatmul.mubr.bf16.gmra.mrb[0].mxu0 %v6192
  %v6228 = vpop.f32.mrb[0].mxu0
  %v6229 = vadd.f32 0.0, %v6228
  %v6230 = vpop.f32.mrb[0].mxu0
  %v6231 = vpop.f32.mrb[0].mxu0
  %v6232 = vadd.f32 0.0, %v6231
  %v6233 = vpop.f32.mrb[0].mxu0
  %6234 = vdwg.mxu0
  %v6235 = vmax.f32 %v6229, 0.0
  %v6236 = vmax.f32 %v6232, 0.0
  %v6237 = vpack.c.bf16 %v6236, %v6235
  %v6244 = vunpack.c.l.b16 %v5120
  %v6245 = vunpack.c.l.b16 %v5121
  %v6246 = vunpack.c.l.b16 %v5122
  %v6247 = vunpack.c.l.b16 %v5123
  %v6248 = vunpack.c.l.b16 %v5124
  %v6249 = vunpack.c.l.b16 %v5125
  %v6250 = vpack.c.b16 %v6245, %v6244
  %v6251 = vpack.c.b16 %v6247, %v6246
  %v6252 = vpack.c.b16 %v6249, %v6248
  %vm6253 = vcmask 97280
  %v6255 = vsel %vm6253, %v6250, 0
  %v6258 = vsel %vm6253, %v6251, 0
  %v6261 = vsel %vm6253, %v6252, 0
  %vm6263 = vcmask 1045504
  %v6265 = vsel %vm6263, %v6237, 0
  %6267 = vmatprep.subr.bf16.mxu0 0
  %6268 = vmatpush1.bf16.msra.mxu0 %v6265
  %6269 = vmatprep.subr.bf16.mxu0 0
  %6270 = vmatpush1.bf16.msra.mxu0 0
  %6271 = vmatprep.subr.bf16.mxu0 0
  %6272 = vmatpush1.bf16.msra.mxu0 0
  %6273 = vmatprep.subr.bf16.mxu0 0
  %6274 = vmatpush1.bf16.msra.mxu0 0
  %6275 = vmatprep.subr.bf16.mxu0 0
  %6276 = vmatpush1.bf16.msra.mxu0 0
  %6277 = vmatprep.subr.bf16.mxu0 0
  %6278 = vmatpush1.bf16.msra.mxu0 0
  %6279 = vmatprep.subr.bf16.mxu0 0
  %6280 = vmatpush1.bf16.msra.mxu0 0
  %6281 = vmatprep.subr.bf16.mxu0 0
  %6282 = vmatpush1.bf16.msra.mxu0 0
  %6283 = vmatprep.subr.bf16.mxu0 0
  %6284 = vmatpush1.bf16.msra.mxu0 0
  %6285 = vmatprep.subr.bf16.mxu0 0
  %6286 = vmatpush1.bf16.msra.mxu0 0
  %6287 = vmatprep.subr.bf16.mxu0 0
  %6288 = vmatpush1.bf16.msra.mxu0 0
  %6289 = vmatprep.subr.bf16.mxu0 0
  %6290 = vmatpush1.bf16.msra.mxu0 0
  %6291 = vmatprep.subr.bf16.mxu0 0
  %6292 = vmatpush1.bf16.msra.mxu0 0
  %6293 = vmatprep.subr.bf16.mxu0 0
  %6294 = vmatpush1.bf16.msra.mxu0 0
  %6295 = vmatprep.subr.bf16.mxu0 0
  %6296 = vmatpush1.bf16.msra.mxu0 0
  %6297 = vmatprep.subr.bf16.mxu0 0
  %6298 = vmatpush1.bf16.msra.mxu0 0
  %6299 = vmatprep.mubr.bf16.mxu0 0
  %6300 = vmatmul.mubr.bf16.gmra.mrb[0].mxu0 %v6255
  %v6301 = vpop.f32.mrb[0].mxu0
  %v6302 = vadd.f32 0.0, %v6301
  %v6303 = vpop.f32.mrb[0].mxu0
  %v6304 = vpop.f32.mrb[0].mxu0
  %v6305 = vadd.f32 0.0, %v6304
  %v6306 = vpop.f32.mrb[0].mxu0
  %6307 = vmatprep.mubr.bf16.mxu0 0
  %6308 = vmatmul.mubr.bf16.gmra.mrb[0].mxu0 %v6258
  %v6309 = vpop.f32.mrb[0].mxu0
  %v6310 = vadd.f32 0.0, %v6309
  %v6311 = vpop.f32.mrb[0].mxu0
  %v6312 = vpop.f32.mrb[0].mxu0
  %v6313 = vadd.f32 0.0, %v6312
  %v6314 = vpop.f32.mrb[0].mxu0
  %6315 = vmatprep.mubr.bf16.mxu0 0
  %6316 = vmatmul.mubr.bf16.gmra.mrb[0].mxu0 %v6261
  %v6317 = vpop.f32.mrb[0].mxu0
  %v6318 = vadd.f32 0.0, %v6317
  %v6319 = vpop.f32.mrb[0].mxu0
  %v6320 = vpop.f32.mrb[0].mxu0
  %v6321 = vadd.f32 0.0, %v6320
  %v6322 = vpop.f32.mrb[0].mxu0
  %6323 = vdwg.mxu0
  %v6324 = vmul.f32 %v6302, 0.5
  %v6325 = vmul.f32 %v6305, 0.5
  %v6326 = vmul.f32 %v6310, 0.5
  %v6327 = vmul.f32 %v6313, 0.5
  %v6328 = vmul.f32 %v6318, 0.5
  %v6329 = vmul.f32 %v6321, 0.5
  %v6330 = vtanh.pop %v6324
  %v6331 = vtanh.pop %v6325
  %v6332 = vtanh.pop %v6326
  %v6333 = vtanh.pop %v6327
  %v6334 = vtanh.pop %v6328
  %v6335 = vtanh.pop %v6329
  %v6336 = vadd.f32 %v6330, 1.0
  %v6337 = vadd.f32 %v6331, 1.0
  %v6338 = vadd.f32 %v6332, 1.0
  %v6339 = vadd.f32 %v6333, 1.0
  %v6340 = vadd.f32 %v6334, 1.0
  %v6341 = vadd.f32 %v6335, 1.0
  %v6342 = vmul.f32 %v6336, 0.5
  %v6343 = vmul.f32 %v6337, 0.5
  %v6344 = vmul.f32 %v6338, 0.5
  %v6345 = vmul.f32 %v6339, 0.5
  %v6346 = vmul.f32 %v6340, 0.5
  %v6347 = vmul.f32 %v6341, 0.5
  %v6348 = vpack.c.bf16 %v6343, %v6342
  %v6349 = vpack.c.bf16 %v6345, %v6344
  %v6350 = vpack.c.bf16 %v6347, %v6346
  %v6352 = vsel %vm1391, %v6348, 0
  %v6355 = vsel %vm1391, %v6349, 0
  %v6358 = vsel %vm1391, %v6350, 0
  %v6360 = vsel %vm1395, %v5117, 0
  %6362 = vmatprep.subr.bf16.mxu0 0
  %6363 = vmatpush1.bf16.msra.mxu0 %v6360
  %6364 = vmatprep.subr.bf16.mxu0 0
  %6365 = vmatpush1.bf16.msra.mxu0 0
  %6366 = vmatprep.subr.bf16.mxu0 0
  %6367 = vmatpush1.bf16.msra.mxu0 0
  %6368 = vmatprep.subr.bf16.mxu0 0
  %6369 = vmatpush1.bf16.msra.mxu0 0
  %6370 = vmatprep.subr.bf16.mxu0 0
  %6371 = vmatpush1.bf16.msra.mxu0 0
  %6372 = vmatprep.subr.bf16.mxu0 0
  %6373 = vmatpush1.bf16.msra.mxu0 0
  %6374 = vmatprep.subr.bf16.mxu0 0
  %6375 = vmatpush1.bf16.msra.mxu0 0
  %6376 = vmatprep.subr.bf16.mxu0 0
  %6377 = vmatpush1.bf16.msra.mxu0 0
  %6378 = vmatprep.subr.bf16.mxu0 0
  %6379 = vmatpush1.bf16.msra.mxu0 0
  %6380 = vmatprep.subr.bf16.mxu0 0
  %6381 = vmatpush1.bf16.msra.mxu0 0
  %6382 = vmatprep.subr.bf16.mxu0 0
  %6383 = vmatpush1.bf16.msra.mxu0 0
  %6384 = vmatprep.subr.bf16.mxu0 0
  %6385 = vmatpush1.bf16.msra.mxu0 0
  %6386 = vmatprep.subr.bf16.mxu0 0
  %6387 = vmatpush1.bf16.msra.mxu0 0
  %6388 = vmatprep.subr.bf16.mxu0 0
  %6389 = vmatpush1.bf16.msra.mxu0 0
  %6390 = vmatprep.subr.bf16.mxu0 0
  %6391 = vmatpush1.bf16.msra.mxu0 0
  %6392 = vmatprep.subr.bf16.mxu0 0
  %6393 = vmatpush1.bf16.msra.mxu0 0
  %6394 = vmatprep.mubr.bf16.mxu0 0
  %6395 = vmatmul.mubr.bf16.gmra.mrb[0].mxu0 %v6352
  %v6396 = vpop.f32.mrb[0].mxu0
  %v6397 = vadd.f32 0.0, %v6396
  %v6398 = vpop.f32.mrb[0].mxu0
  %v6399 = vpop.f32.mrb[0].mxu0
  %v6400 = vadd.f32 0.0, %v6399
  %v6401 = vpop.f32.mrb[0].mxu0
  %6402 = vmatprep.mubr.bf16.mxu0 0
  %6403 = vmatmul.mubr.bf16.gmra.mrb[0].mxu0 %v6355
  %v6404 = vpop.f32.mrb[0].mxu0
  %v6405 = vadd.f32 0.0, %v6404
  %v6406 = vpop.f32.mrb[0].mxu0
  %v6407 = vpop.f32.mrb[0].mxu0
  %v6408 = vadd.f32 0.0, %v6407
  %v6409 = vpop.f32.mrb[0].mxu0
  %6410 = vmatprep.mubr.bf16.mxu0 0
  %6411 = vmatmul.mubr.bf16.gmra.mrb[0].mxu0 %v6358
  %v6412 = vpop.f32.mrb[0].mxu0
  %v6413 = vadd.f32 0.0, %v6412
  %v6414 = vpop.f32.mrb[0].mxu0
  %v6415 = vpop.f32.mrb[0].mxu0
  %v6416 = vadd.f32 0.0, %v6415
  %v6417 = vpop.f32.mrb[0].mxu0
  %6418 = vdwg.mxu0
  %v6419 = vmul.f32 %v6083, %v6397
  %v6420 = vmul.f32 %v6086, %v6400
  %v6421 = vmul.f32 %v6091, %v6405
  %v6422 = vmul.f32 %v6094, %v6408
  %v6423 = vmul.f32 %v6099, %v6413
  %v6424 = vmul.f32 %v6102, %v6416
  %v6425 = vadd.f32 %v6419, %v5093
  %v6426 = vadd.f32 %v6420, %v5096
  %v6427 = vadd.f32 %v6421, %v5101
  %v6428 = vadd.f32 %v6422, %v5104
  %v6429 = vadd.f32 %v6423, %v5109
  %v6430 = vadd.f32 %v6424, %v5112
  %s6431 = scalar_lea.vmem %s16, 8
  %v6432 = vld [vmem:[%s6431] sm:$0xf]
  %v6433 = vld [vmem:[%s6431 + $0x4] sm:$0x3]
  %s6434 = scalar_lea.vmem %s17, 24
  %v6435 = vld [vmem:[%s6434] sm:$0xf]
  %v6436 = vld [vmem:[%s6434 + $0x4] sm:$0xf]
  %v6437 = vld [vmem:[%s6434 + $0x8] sm:$0xf]
  %v6438 = vld [vmem:[%s6434 + $0xc] sm:$0xf]
  %v6439 = vld [vmem:[%s6434 + $0x10] sm:$0xf]
  %v6440 = vld [vmem:[%s6434 + $0x14] sm:$0xf]
  %s6441 = scalar_lea.vmem %s15, 192
  %v6442 = vld [vmem:[%s6441] sm:$0xff]
  %v6443 = vld [vmem:[%s6441 + $0x8] sm:$0xff]
  %v6444 = vld [vmem:[%s6441 + $0x10] sm:$0xff]
  %v6445 = vld [vmem:[%s6441 + $0x18] sm:$0xff]
  %v6446 = vld [vmem:[%s6441 + $0x20] sm:$0xff]
  %v6447 = vld [vmem:[%s6441 + $0x28] sm:$0xff]
  %v6448 = vld [vmem:[%s6441 + $0x30] sm:$0xff]
  %v6449 = vld [vmem:[%s6441 + $0x38] sm:$0xff]
  %v6450 = vld [vmem:[%s6441 + $0x40] sm:$0xff]
  %v6451 = vld [vmem:[%s6441 + $0x48] sm:$0xff]
  %v6452 = vld [vmem:[%s6441 + $0x50] sm:$0xff]
  %v6453 = vld [vmem:[%s6441 + $0x58] sm:$0xff]
  %6454 = vrot.lane.b32.xlu0 %v6425, 32
  %v6455 = vpop.permute.xlu0 %6454
  %v6456 = vsel %vm5138, %v6455, %v6425
  %6457 = vrot.lane.b32.xlu0 %v6426, 32
  %v6458 = vpop.permute.xlu0 %6457
  %v6459 = vsel %vm5138, %v6458, %v6426
  %6460 = vrot.lane.b32.xlu0 %v6427, 32
  %v6461 = vpop.permute.xlu0 %6460
  %v6462 = vsel %vm5138, %v6461, %v6427
  %6463 = vrot.lane.b32.xlu0 %v6428, 32
  %v6464 = vpop.permute.xlu0 %6463
  %v6465 = vsel %vm5138, %v6464, %v6428
  %6466 = vrot.lane.b32.xlu0 %v6429, 32
  %v6467 = vpop.permute.xlu0 %6466
  %v6468 = vsel %vm5138, %v6467, %v6429
  %6469 = vrot.lane.b32.xlu0 %v6430, 32
  %v6470 = vpop.permute.xlu0 %6469
  %v6471 = vsel %vm5138, %v6470, %v6430
  %6472 = vrot.lane.b32.xlu0 %v6456, 32
  %v6473 = vpop.permute.xlu0 %6472
  %6474 = vrot.lane.b32.xlu0 %v6459, 32
  %v6475 = vpop.permute.xlu0 %6474
  %6476 = vrot.lane.b32.xlu0 %v6462, 32
  %v6477 = vpop.permute.xlu0 %6476
  %6478 = vrot.lane.b32.xlu0 %v6465, 32
  %v6479 = vpop.permute.xlu0 %6478
  %6480 = vrot.lane.b32.xlu0 %v6468, 32
  %v6481 = vpop.permute.xlu0 %6480
  %6482 = vrot.lane.b32.xlu0 %v6471, 32
  %v6483 = vpop.permute.xlu0 %6482
  %v6484 = vsel %vm5138, %v6473, %v6425
  %v6485 = vsel %vm5138, %v6475, %v6426
  %v6486 = vsel %vm5138, %v6477, %v6427
  %v6487 = vsel %vm5138, %v6479, %v6428
  %v6488 = vsel %vm5138, %v6481, %v6429
  %v6489 = vsel %vm5138, %v6483, %v6430
  %v6490 = vmul.f32 %v6484, %v5181
  %v6491 = vmul.f32 %v6485, %v5181
  %v6492 = vmul.f32 %v6486, %v5181
  %v6493 = vmul.f32 %v6487, %v5181
  %v6494 = vmul.f32 %v6488, %v5181
  %v6495 = vmul.f32 %v6489, %v5181
  %v6496 = vpack.c.bf16 %v6491, %v6490
  %v6497 = vpack.c.bf16 %v6493, %v6492
  %v6498 = vpack.c.bf16 %v6495, %v6494
  %6502 = vrot.lane.b32.xlu0 %v6496, 101
  %v6503 = vpop.permute.xlu0 %6502
  %6504 = vrot.lane.b32.xlu0 %v6497, 101
  %v6505 = vpop.permute.xlu0 %6504
  %6506 = vrot.lane.b32.xlu0 %v6498, 101
  %v6507 = vpop.permute.xlu0 %6506
  %6511 = vst.msk [vmem:[#allocation4] sm:$0xff] %vm3401, %v6503
  %6512 = vst.msk [vmem:[#allocation4 + $0x8] sm:$0xff] %vm3401, %v6505
  %6513 = vst.msk [vmem:[#allocation4 + $0x10] sm:$0xff] %vm3401, %v6507
  %v6514 = vmul.f32 %v6484, %v5213
  %v6515 = vmul.f32 %v6485, %v5213
  %v6516 = vmul.f32 %v6486, %v5213
  %v6517 = vmul.f32 %v6487, %v5213
  %v6518 = vmul.f32 %v6488, %v5213
  %v6519 = vmul.f32 %v6489, %v5213
  %v6520 = vpack.c.bf16 %v6515, %v6514
  %v6521 = vpack.c.bf16 %v6517, %v6516
  %v6522 = vpack.c.bf16 %v6519, %v6518
  %6526 = vrot.lane.b32.xlu0 %v6520, 100
  %v6527 = vpop.permute.xlu0 %6526
  %6528 = vrot.lane.b32.xlu0 %v6521, 100
  %v6529 = vpop.permute.xlu0 %6528
  %6530 = vrot.lane.b32.xlu0 %v6522, 100
  %v6531 = vpop.permute.xlu0 %6530
  %6535 = vst.msk [vmem:[#allocation4 + $0x18] sm:$0xff] %vm3401, %v6527
  %6536 = vst.msk [vmem:[#allocation4 + $0x20] sm:$0xff] %vm3401, %v6529
  %6537 = vst.msk [vmem:[#allocation4 + $0x28] sm:$0xff] %vm3401, %v6531
  %v6538 = vmul.f32 %v6484, %v5245
  %v6539 = vmul.f32 %v6485, %v5245
  %v6540 = vmul.f32 %v6486, %v5245
  %v6541 = vmul.f32 %v6487, %v5245
  %v6542 = vmul.f32 %v6488, %v5245
  %v6543 = vmul.f32 %v6489, %v5245
  %v6544 = vpack.c.bf16 %v6539, %v6538
  %v6545 = vpack.c.bf16 %v6541, %v6540
  %v6546 = vpack.c.bf16 %v6543, %v6542
  %6550 = vrot.lane.b32.xlu0 %v6544, 99
  %v6551 = vpop.permute.xlu0 %6550
  %6552 = vrot.lane.b32.xlu0 %v6545, 99
  %v6553 = vpop.permute.xlu0 %6552
  %6554 = vrot.lane.b32.xlu0 %v6546, 99
  %v6555 = vpop.permute.xlu0 %6554
  %6559 = vst.msk [vmem:[#allocation4 + $0x30] sm:$0xff] %vm3401, %v6551
  %6560 = vst.msk [vmem:[#allocation4 + $0x38] sm:$0xff] %vm3401, %v6553
  %6561 = vst.msk [vmem:[#allocation4 + $0x40] sm:$0xff] %vm3401, %v6555
  %v6562 = vmul.f32 %v6484, %v5277
  %v6563 = vmul.f32 %v6485, %v5277
  %v6564 = vmul.f32 %v6486, %v5277
  %v6565 = vmul.f32 %v6487, %v5277
  %v6566 = vmul.f32 %v6488, %v5277
  %v6567 = vmul.f32 %v6489, %v5277
  %v6568 = vpack.c.bf16 %v6563, %v6562
  %v6569 = vpack.c.bf16 %v6565, %v6564
  %v6570 = vpack.c.bf16 %v6567, %v6566
  %6574 = vrot.lane.b32.xlu0 %v6568, 97
  %v6575 = vpop.permute.xlu0 %6574
  %6576 = vrot.lane.b32.xlu0 %v6569, 97
  %v6577 = vpop.permute.xlu0 %6576
  %6578 = vrot.lane.b32.xlu0 %v6570, 97
  %v6579 = vpop.permute.xlu0 %6578
  %6583 = vst.msk [vmem:[#allocation4 + $0x48] sm:$0xff] %vm3401, %v6575
  %6584 = vst.msk [vmem:[#allocation4 + $0x50] sm:$0xff] %vm3401, %v6577
  %6585 = vst.msk [vmem:[#allocation4 + $0x58] sm:$0xff] %vm3401, %v6579
  %v6586 = vpack.c.bf16 %v6426, %v6425
  %v6587 = vpack.c.bf16 %v6428, %v6427
  %v6588 = vpack.c.bf16 %v6430, %v6429
  %6589 = vst.msk [vmem:[#allocation4 + $0x60] sm:$0xff] %vm3401, %v6586
  %6590 = vst.msk [vmem:[#allocation4 + $0x68] sm:$0xff] %vm3401, %v6587
  %6591 = vst.msk [vmem:[#allocation4 + $0x70] sm:$0xff] %vm3401, %v6588
  %v6592 = vmul.f32 %v6484, %v5315
  %v6593 = vmul.f32 %v6485, %v5315
  %v6594 = vmul.f32 %v6486, %v5315
  %v6595 = vmul.f32 %v6487, %v5315
  %v6596 = vmul.f32 %v6488, %v5315
  %v6597 = vmul.f32 %v6489, %v5315
  %v6598 = vpack.c.bf16 %v6593, %v6592
  %v6599 = vpack.c.bf16 %v6595, %v6594
  %v6600 = vpack.c.bf16 %v6597, %v6596
  %6604 = vrot.lane.b32.xlu0 %v6598, 127
  %v6605 = vpop.permute.xlu0 %6604
  %6606 = vrot.lane.b32.xlu0 %v6599, 127
  %v6607 = vpop.permute.xlu0 %6606
  %6608 = vrot.lane.b32.xlu0 %v6600, 127
  %v6609 = vpop.permute.xlu0 %6608
  %6613 = vst.msk [vmem:[#allocation4 + $0x78] sm:$0xff] %vm3401, %v6605
  %6614 = vst.msk [vmem:[#allocation4 + $0x80] sm:$0xff] %vm3401, %v6607
  %6615 = vst.msk [vmem:[#allocation4 + $0x88] sm:$0xff] %vm3401, %v6609
  %v6616 = vmul.f32 %v6484, %v5347
  %v6617 = vmul.f32 %v6485, %v5347
  %v6618 = vmul.f32 %v6486, %v5347
  %v6619 = vmul.f32 %v6487, %v5347
  %v6620 = vmul.f32 %v6488, %v5347
  %v6621 = vmul.f32 %v6489, %v5347
  %v6622 = vpack.c.bf16 %v6617, %v6616
  %v6623 = vpack.c.bf16 %v6619, %v6618
  %v6624 = vpack.c.bf16 %v6621, %v6620
  %6628 = vrot.lane.b32.xlu0 %v6622, 125
  %v6629 = vpop.permute.xlu0 %6628
  %6630 = vrot.lane.b32.xlu0 %v6623, 125
  %v6631 = vpop.permute.xlu0 %6630
  %6632 = vrot.lane.b32.xlu0 %v6624, 125
  %v6633 = vpop.permute.xlu0 %6632
  %6637 = vst.msk [vmem:[#allocation4 + $0x90] sm:$0xff] %vm3401, %v6629
  %6638 = vst.msk [vmem:[#allocation4 + $0x98] sm:$0xff] %vm3401, %v6631
  %6639 = vst.msk [vmem:[#allocation4 + $0xa0] sm:$0xff] %vm3401, %v6633
  %v6640 = vmul.f32 %v6484, %v5379
  %v6641 = vmul.f32 %v6485, %v5379
  %v6642 = vmul.f32 %v6486, %v5379
  %v6643 = vmul.f32 %v6487, %v5379
  %v6644 = vmul.f32 %v6488, %v5379
  %v6645 = vmul.f32 %v6489, %v5379
  %v6646 = vpack.c.bf16 %v6641, %v6640
  %v6647 = vpack.c.bf16 %v6643, %v6642
  %v6648 = vpack.c.bf16 %v6645, %v6644
  %6652 = vrot.lane.b32.xlu0 %v6646, 124
  %v6653 = vpop.permute.xlu0 %6652
  %6654 = vrot.lane.b32.xlu0 %v6647, 124
  %v6655 = vpop.permute.xlu0 %6654
  %6656 = vrot.lane.b32.xlu0 %v6648, 124
  %v6657 = vpop.permute.xlu0 %6656
  %6661 = vst.msk [vmem:[#allocation4 + $0xa8] sm:$0xff] %vm3401, %v6653
  %6662 = vst.msk [vmem:[#allocation4 + $0xb0] sm:$0xff] %vm3401, %v6655
  %6663 = vst.msk [vmem:[#allocation4 + $0xb8] sm:$0xff] %vm3401, %v6657
  %v6664 = vmul.f32 %v6484, %v5411
  %v6665 = vmul.f32 %v6485, %v5411
  %v6666 = vmul.f32 %v6486, %v5411
  %v6667 = vmul.f32 %v6487, %v5411
  %v6668 = vmul.f32 %v6488, %v5411
  %v6669 = vmul.f32 %v6489, %v5411
  %v6670 = vpack.c.bf16 %v6665, %v6664
  %v6671 = vpack.c.bf16 %v6667, %v6666
  %v6672 = vpack.c.bf16 %v6669, %v6668
  %6676 = vrot.lane.b32.xlu0 %v6670, 123
  %v6677 = vpop.permute.xlu0 %6676
  %6678 = vrot.lane.b32.xlu0 %v6671, 123
  %v6679 = vpop.permute.xlu0 %6678
  %6680 = vrot.lane.b32.xlu0 %v6672, 123
  %v6681 = vpop.permute.xlu0 %6680
  %6685 = vst.msk [vmem:[#allocation4 + $0xc0] sm:$0xff] %vm3401, %v6677
  %6686 = vst.msk [vmem:[#allocation4 + $0xc8] sm:$0xff] %vm3401, %v6679
  %6687 = vst.msk [vmem:[#allocation4 + $0xd0] sm:$0xff] %vm3401, %v6681
  %v6688 = vld [vmem:[#allocation4] sm:$0xff]
  %v6689 = vld [vmem:[#allocation4 + $0x8] sm:$0xff]
  %v6690 = vld [vmem:[#allocation4 + $0x10] sm:$0xff]
  %v6691 = vld [vmem:[#allocation4 + $0x18] sm:$0xff]
  %v6692 = vld [vmem:[#allocation4 + $0x20] sm:$0xff]
  %v6693 = vld [vmem:[#allocation4 + $0x28] sm:$0xff]
  %v6694 = vld [vmem:[#allocation4 + $0x30] sm:$0xff]
  %v6695 = vld [vmem:[#allocation4 + $0x38] sm:$0xff]
  %v6696 = vld [vmem:[#allocation4 + $0x40] sm:$0xff]
  %v6697 = vld [vmem:[#allocation4 + $0x48] sm:$0xff]
  %v6698 = vld [vmem:[#allocation4 + $0x50] sm:$0xff]
  %v6699 = vld [vmem:[#allocation4 + $0x58] sm:$0xff]
  %v6700 = vld [vmem:[#allocation4 + $0x60] sm:$0xff]
  %v6701 = vld [vmem:[#allocation4 + $0x68] sm:$0xff]
  %v6702 = vld [vmem:[#allocation4 + $0x70] sm:$0xff]
  %v6703 = vld [vmem:[#allocation4 + $0x78] sm:$0xff]
  %v6704 = vld [vmem:[#allocation4 + $0x80] sm:$0xff]
  %v6705 = vld [vmem:[#allocation4 + $0x88] sm:$0xff]
  %v6706 = vld [vmem:[#allocation4 + $0x90] sm:$0xff]
  %v6707 = vld [vmem:[#allocation4 + $0x98] sm:$0xff]
  %v6708 = vld [vmem:[#allocation4 + $0xa0] sm:$0xff]
  %v6709 = vld [vmem:[#allocation4 + $0xa8] sm:$0xff]
  %v6710 = vld [vmem:[#allocation4 + $0xb0] sm:$0xff]
  %v6711 = vld [vmem:[#allocation4 + $0xb8] sm:$0xff]
  %v6712 = vld [vmem:[#allocation4 + $0xc0] sm:$0xff]
  %v6713 = vld [vmem:[#allocation4 + $0xc8] sm:$0xff]
  %v6714 = vld [vmem:[#allocation4 + $0xd0] sm:$0xff]
  %v6727 = vunpack.c.l.b16 %v6442
  %v6728 = vunpack.c.h.b16 %v6442
  %v6729 = vunpack.c.l.b16 %v6443
  %v6730 = vunpack.c.h.b16 %v6443
  %v6731 = vunpack.c.l.b16 %v6444
  %v6732 = vunpack.c.h.b16 %v6444
  %v6733 = vunpack.c.l.b16 %v6445
  %v6734 = vunpack.c.h.b16 %v6445
  %v6735 = vunpack.c.l.b16 %v6446
  %v6736 = vunpack.c.h.b16 %v6446
  %v6737 = vunpack.c.l.b16 %v6447
  %v6738 = vunpack.c.h.b16 %v6447
  %v6739 = vunpack.c.l.b16 %v6448
  %v6740 = vunpack.c.h.b16 %v6448
  %v6741 = vunpack.c.l.b16 %v6449
  %v6742 = vunpack.c.h.b16 %v6449
  %v6743 = vunpack.c.l.b16 %v6450
  %v6744 = vunpack.c.h.b16 %v6450
  %v6745 = vunpack.c.l.b16 %v6451
  %v6746 = vunpack.c.h.b16 %v6451
  %v6747 = vunpack.c.l.b16 %v6452
  %v6748 = vunpack.c.h.b16 %v6452
  %v6749 = vunpack.c.l.b16 %v6453
  %v6750 = vunpack.c.h.b16 %v6453
  %v6751 = vpack.c.b16 %v6731, %v6727
  %v6752 = vpack.c.b16 %v6732, %v6728
  %v6753 = vpack.c.b16 %v6733, %v6729
  %v6754 = vpack.c.b16 %v6734, %v6730
  %v6755 = vpack.c.b16 %v6739, %v6735
  %v6756 = vpack.c.b16 %v6740, %v6736
  %v6757 = vpack.c.b16 %v6741, %v6737
  %v6758 = vpack.c.b16 %v6742, %v6738
  %v6759 = vpack.c.b16 %v6747, %v6743
  %v6760 = vpack.c.b16 %v6748, %v6744
  %v6761 = vpack.c.b16 %v6749, %v6745
  %v6762 = vpack.c.b16 %v6750, %v6746
  %v6773 = vsel %vm5521, %v6754, 0
  %v6776 = vsel %vm5521, %v6758, 0
  %v6779 = vsel %vm5521, %v6762, 0
  %6781 = vmatprep.subr.bf16.mxu0 0
  %6782 = vmatpush1.bf16.msra.mxu0 %v6688
  %6783 = vmatprep.subr.bf16.mxu0 0
  %6784 = vmatpush1.bf16.msra.mxu0 %v6689
  %6785 = vmatprep.subr.bf16.mxu0 0
  %6786 = vmatpush1.bf16.msra.mxu0 %v6690
  %6787 = vmatprep.subr.bf16.mxu0 0
  %6788 = vmatpush1.bf16.msra.mxu0 %v6691
  %6789 = vmatprep.subr.bf16.mxu0 0
  %6790 = vmatpush1.bf16.msra.mxu0 %v6692
  %6791 = vmatprep.subr.bf16.mxu0 0
  %6792 = vmatpush1.bf16.msra.mxu0 %v6693
  %6793 = vmatprep.subr.bf16.mxu0 0
  %6794 = vmatpush1.bf16.msra.mxu0 %v6694
  %6795 = vmatprep.subr.bf16.mxu0 0
  %6796 = vmatpush1.bf16.msra.mxu0 %v6695
  %6797 = vmatprep.subr.bf16.mxu0 0
  %6798 = vmatpush1.bf16.msra.mxu0 %v6696
  %6799 = vmatprep.subr.bf16.mxu0 0
  %6800 = vmatpush1.bf16.msra.mxu0 %v6697
  %6801 = vmatprep.subr.bf16.mxu0 0
  %6802 = vmatpush1.bf16.msra.mxu0 %v6698
  %6803 = vmatprep.subr.bf16.mxu0 0
  %6804 = vmatpush1.bf16.msra.mxu0 %v6699
  %6805 = vmatprep.subr.bf16.mxu0 0
  %6806 = vmatpush1.bf16.msra.mxu0 %v6700
  %6807 = vmatprep.subr.bf16.mxu0 0
  %6808 = vmatpush1.bf16.msra.mxu0 %v6701
  %6809 = vmatprep.subr.bf16.mxu0 0
  %6810 = vmatpush1.bf16.msra.mxu0 %v6702
  %6811 = vmatprep.subr.bf16.mxu0 0
  %6812 = vmatpush1.bf16.msra.mxu0 %v6703
  %6813 = vmatprep.mubr.bf16.mxu0 %v6752
  %6814 = vmatmul.mubr.bf16.gmra.mrb[0].mxu0 %v6751
  %v6815 = vpop.f32.mrb[0].mxu0
  %v6816 = vadd.f32 0.0, %v6815
  %v6817 = vpop.f32.mrb[0].mxu0
  %v6818 = vpop.f32.mrb[0].mxu0
  %v6819 = vadd.f32 0.0, %v6818
  %v6820 = vpop.f32.mrb[0].mxu0
  %6821 = vmatprep.mubr.bf16.mxu0 %v6756
  %6822 = vmatmul.mubr.bf16.gmra.mrb[0].mxu0 %v6755
  %v6823 = vpop.f32.mrb[0].mxu0
  %v6824 = vadd.f32 0.0, %v6823
  %v6825 = vpop.f32.mrb[0].mxu0
  %v6826 = vpop.f32.mrb[0].mxu0
  %v6827 = vadd.f32 0.0, %v6826
  %v6828 = vpop.f32.mrb[0].mxu0
  %6829 = vmatprep.mubr.bf16.mxu0 %v6760
  %6830 = vmatmul.mubr.bf16.gmra.mrb[0].mxu0 %v6759
  %v6831 = vpop.f32.mrb[0].mxu0
  %v6832 = vadd.f32 0.0, %v6831
  %v6833 = vpop.f32.mrb[0].mxu0
  %v6834 = vpop.f32.mrb[0].mxu0
  %v6835 = vadd.f32 0.0, %v6834
  %v6836 = vpop.f32.mrb[0].mxu0
  %6837 = vdwg.mxu0
  %6838 = vmatprep.subr.bf16.mxu0 0
  %6839 = vmatpush1.bf16.msra.mxu0 %v6704
  %6840 = vmatprep.subr.bf16.mxu0 0
  %6841 = vmatpush1.bf16.msra.mxu0 %v6705
  %6842 = vmatprep.subr.bf16.mxu0 0
  %6843 = vmatpush1.bf16.msra.mxu0 %v6706
  %6844 = vmatprep.subr.bf16.mxu0 0
  %6845 = vmatpush1.bf16.msra.mxu0 %v6707
  %6846 = vmatprep.subr.bf16.mxu0 0
  %6847 = vmatpush1.bf16.msra.mxu0 %v6708
  %6848 = vmatprep.subr.bf16.mxu0 0
  %6849 = vmatpush1.bf16.msra.mxu0 %v6709
  %6850 = vmatprep.subr.bf16.mxu0 0
  %6851 = vmatpush1.bf16.msra.mxu0 %v6710
  %6852 = vmatprep.subr.bf16.mxu0 0
  %6853 = vmatpush1.bf16.msra.mxu0 %v6711
  %6854 = vmatprep.subr.bf16.mxu0 0
  %6855 = vmatpush1.bf16.msra.mxu0 %v6712
  %6856 = vmatprep.subr.bf16.mxu0 0
  %6857 = vmatpush1.bf16.msra.mxu0 %v6713
  %6858 = vmatprep.subr.bf16.mxu0 0
  %6859 = vmatpush1.bf16.msra.mxu0 %v6714
  %6860 = vmatprep.subr.bf16.mxu0 0
  %6861 = vmatpush1.bf16.msra.mxu0 0
  %6862 = vmatprep.subr.bf16.mxu0 0
  %6863 = vmatpush1.bf16.msra.mxu0 0
  %6864 = vmatprep.subr.bf16.mxu0 0
  %6865 = vmatpush1.bf16.msra.mxu0 0
  %6866 = vmatprep.subr.bf16.mxu0 0
  %6867 = vmatpush1.bf16.msra.mxu0 0
  %6868 = vmatprep.subr.bf16.mxu0 0
  %6869 = vmatpush1.bf16.msra.mxu0 0
  %6870 = vmatprep.mubr.bf16.mxu0 %v6773
  %6871 = vmatmul.mubr.bf16.gmra.mrb[0].mxu0 %v6753
  %v6872 = vpop.f32.mrb[0].mxu0
  %v6873 = vadd.f32 %v6816, %v6872
  %v6874 = vpop.f32.mrb[0].mxu0
  %v6875 = vpop.f32.mrb[0].mxu0
  %v6876 = vadd.f32 %v6819, %v6875
  %v6877 = vpop.f32.mrb[0].mxu0
  %6878 = vmatprep.mubr.bf16.mxu0 %v6776
  %6879 = vmatmul.mubr.bf16.gmra.mrb[0].mxu0 %v6757
  %v6880 = vpop.f32.mrb[0].mxu0
  %v6881 = vadd.f32 %v6824, %v6880
  %v6882 = vpop.f32.mrb[0].mxu0
  %v6883 = vpop.f32.mrb[0].mxu0
  %v6884 = vadd.f32 %v6827, %v6883
  %v6885 = vpop.f32.mrb[0].mxu0
  %6886 = vmatprep.mubr.bf16.mxu0 %v6779
  %6887 = vmatmul.mubr.bf16.gmra.mrb[0].mxu0 %v6761
  %v6888 = vpop.f32.mrb[0].mxu0
  %v6889 = vadd.f32 %v6832, %v6888
  %v6890 = vpop.f32.mrb[0].mxu0
  %v6891 = vpop.f32.mrb[0].mxu0
  %v6892 = vadd.f32 %v6835, %v6891
  %v6893 = vpop.f32.mrb[0].mxu0
  %6894 = vdwg.mxu0
  %v6895 = vmax.f32 %v6873, 0.0
  %v6896 = vmax.f32 %v6876, 0.0
  %v6897 = vmax.f32 %v6881, 0.0
  %v6898 = vmax.f32 %v6884, 0.0
  %v6899 = vmax.f32 %v6889, 0.0
  %v6900 = vmax.f32 %v6892, 0.0
  %s6901 = scalar_lea.vmem %s15, 288
  %v6902 = vld [vmem:[%s6901] sm:$0xff]
  %v6903 = vld [vmem:[%s6901 + $0x8] sm:$0xff]
  %v6904 = vld [vmem:[%s6901 + $0x10] sm:$0xff]
  %v6905 = vld [vmem:[%s6901 + $0x18] sm:$0xff]
  %v6906 = vld [vmem:[%s6901 + $0x20] sm:$0xff]
  %v6907 = vld [vmem:[%s6901 + $0x28] sm:$0xff]
  %v6908 = vld [vmem:[%s6901 + $0x30] sm:$0xff]
  %v6909 = vld [vmem:[%s6901 + $0x38] sm:$0xff]
  %v6910 = vld [vmem:[%s6901 + $0x40] sm:$0xff]
  %v6911 = vld [vmem:[%s6901 + $0x48] sm:$0xff]
  %v6912 = vld [vmem:[%s6901 + $0x50] sm:$0xff]
  %v6913 = vld [vmem:[%s6901 + $0x58] sm:$0xff]
  %6914 = vrot.lane.b32.xlu0 %v6895, 32
  %v6915 = vpop.permute.xlu0 %6914
  %v6916 = vsel %vm5138, %v6915, %v6895
  %6917 = vrot.lane.b32.xlu0 %v6896, 32
  %v6918 = vpop.permute.xlu0 %6917
  %v6919 = vsel %vm5138, %v6918, %v6896
  %6920 = vrot.lane.b32.xlu0 %v6897, 32
  %v6921 = vpop.permute.xlu0 %6920
  %v6922 = vsel %vm5138, %v6921, %v6897
  %6923 = vrot.lane.b32.xlu0 %v6898, 32
  %v6924 = vpop.permute.xlu0 %6923
  %v6925 = vsel %vm5138, %v6924, %v6898
  %6926 = vrot.lane.b32.xlu0 %v6899, 32
  %v6927 = vpop.permute.xlu0 %6926
  %v6928 = vsel %vm5138, %v6927, %v6899
  %6929 = vrot.lane.b32.xlu0 %v6900, 32
  %v6930 = vpop.permute.xlu0 %6929
  %v6931 = vsel %vm5138, %v6930, %v6900
  %6932 = vrot.lane.b32.xlu0 %v6916, 32
  %v6933 = vpop.permute.xlu0 %6932
  %6934 = vrot.lane.b32.xlu0 %v6919, 32
  %v6935 = vpop.permute.xlu0 %6934
  %6936 = vrot.lane.b32.xlu0 %v6922, 32
  %v6937 = vpop.permute.xlu0 %6936
  %6938 = vrot.lane.b32.xlu0 %v6925, 32
  %v6939 = vpop.permute.xlu0 %6938
  %6940 = vrot.lane.b32.xlu0 %v6928, 32
  %v6941 = vpop.permute.xlu0 %6940
  %6942 = vrot.lane.b32.xlu0 %v6931, 32
  %v6943 = vpop.permute.xlu0 %6942
  %v6944 = vsel %vm5138, %v6933, %v6895
  %v6945 = vsel %vm5138, %v6935, %v6896
  %v6946 = vsel %vm5138, %v6937, %v6897
  %v6947 = vsel %vm5138, %v6939, %v6898
  %v6948 = vsel %vm5138, %v6941, %v6899
  %v6949 = vsel %vm5138, %v6943, %v6900
  %v6950 = vmul.f32 %v6944, %v5181
  %v6951 = vmul.f32 %v6945, %v5181
  %v6952 = vmul.f32 %v6946, %v5181
  %v6953 = vmul.f32 %v6947, %v5181
  %v6954 = vmul.f32 %v6948, %v5181
  %v6955 = vmul.f32 %v6949, %v5181
  %v6956 = vpack.c.bf16 %v6951, %v6950
  %v6957 = vpack.c.bf16 %v6953, %v6952
  %v6958 = vpack.c.bf16 %v6955, %v6954
  %6962 = vrot.lane.b32.xlu0 %v6956, 101
  %v6963 = vpop.permute.xlu0 %6962
  %6964 = vrot.lane.b32.xlu0 %v6957, 101
  %v6965 = vpop.permute.xlu0 %6964
  %6966 = vrot.lane.b32.xlu0 %v6958, 101
  %v6967 = vpop.permute.xlu0 %6966
  %6971 = vst.msk [vmem:[#allocation4] sm:$0xff] %vm3401, %v6963
  %6972 = vst.msk [vmem:[#allocation4 + $0x8] sm:$0xff] %vm3401, %v6965
  %6973 = vst.msk [vmem:[#allocation4 + $0x10] sm:$0xff] %vm3401, %v6967
  %v6974 = vmul.f32 %v6944, %v5213
  %v6975 = vmul.f32 %v6945, %v5213
  %v6976 = vmul.f32 %v6946, %v5213
  %v6977 = vmul.f32 %v6947, %v5213
  %v6978 = vmul.f32 %v6948, %v5213
  %v6979 = vmul.f32 %v6949, %v5213
  %v6980 = vpack.c.bf16 %v6975, %v6974
  %v6981 = vpack.c.bf16 %v6977, %v6976
  %v6982 = vpack.c.bf16 %v6979, %v6978
  %6986 = vrot.lane.b32.xlu0 %v6980, 100
  %v6987 = vpop.permute.xlu0 %6986
  %6988 = vrot.lane.b32.xlu0 %v6981, 100
  %v6989 = vpop.permute.xlu0 %6988
  %6990 = vrot.lane.b32.xlu0 %v6982, 100
  %v6991 = vpop.permute.xlu0 %6990
  %6995 = vst.msk [vmem:[#allocation4 + $0x18] sm:$0xff] %vm3401, %v6987
  %6996 = vst.msk [vmem:[#allocation4 + $0x20] sm:$0xff] %vm3401, %v6989
  %6997 = vst.msk [vmem:[#allocation4 + $0x28] sm:$0xff] %vm3401, %v6991
  %v6998 = vmul.f32 %v6944, %v5245
  %v6999 = vmul.f32 %v6945, %v5245
  %v7000 = vmul.f32 %v6946, %v5245
  %v7001 = vmul.f32 %v6947, %v5245
  %v7002 = vmul.f32 %v6948, %v5245
  %v7003 = vmul.f32 %v6949, %v5245
  %v7004 = vpack.c.bf16 %v6999, %v6998
  %v7005 = vpack.c.bf16 %v7001, %v7000
  %v7006 = vpack.c.bf16 %v7003, %v7002
  %7010 = vrot.lane.b32.xlu0 %v7004, 99
  %v7011 = vpop.permute.xlu0 %7010
  %7012 = vrot.lane.b32.xlu0 %v7005, 99
  %v7013 = vpop.permute.xlu0 %7012
  %7014 = vrot.lane.b32.xlu0 %v7006, 99
  %v7015 = vpop.permute.xlu0 %7014
  %7019 = vst.msk [vmem:[#allocation4 + $0x30] sm:$0xff] %vm3401, %v7011
  %7020 = vst.msk [vmem:[#allocation4 + $0x38] sm:$0xff] %vm3401, %v7013
  %7021 = vst.msk [vmem:[#allocation4 + $0x40] sm:$0xff] %vm3401, %v7015
  %v7022 = vmul.f32 %v6944, %v5277
  %v7023 = vmul.f32 %v6945, %v5277
  %v7024 = vmul.f32 %v6946, %v5277
  %v7025 = vmul.f32 %v6947, %v5277
  %v7026 = vmul.f32 %v6948, %v5277
  %v7027 = vmul.f32 %v6949, %v5277
  %v7028 = vpack.c.bf16 %v7023, %v7022
  %v7029 = vpack.c.bf16 %v7025, %v7024
  %v7030 = vpack.c.bf16 %v7027, %v7026
  %7034 = vrot.lane.b32.xlu0 %v7028, 97
  %v7035 = vpop.permute.xlu0 %7034
  %7036 = vrot.lane.b32.xlu0 %v7029, 97
  %v7037 = vpop.permute.xlu0 %7036
  %7038 = vrot.lane.b32.xlu0 %v7030, 97
  %v7039 = vpop.permute.xlu0 %7038
  %7043 = vst.msk [vmem:[#allocation4 + $0x48] sm:$0xff] %vm3401, %v7035
  %7044 = vst.msk [vmem:[#allocation4 + $0x50] sm:$0xff] %vm3401, %v7037
  %7045 = vst.msk [vmem:[#allocation4 + $0x58] sm:$0xff] %vm3401, %v7039
  %v7046 = vpack.c.bf16 %v6896, %v6895
  %v7047 = vpack.c.bf16 %v6898, %v6897
  %v7048 = vpack.c.bf16 %v6900, %v6899
  %7049 = vst.msk [vmem:[#allocation4 + $0x60] sm:$0xff] %vm3401, %v7046
  %7050 = vst.msk [vmem:[#allocation4 + $0x68] sm:$0xff] %vm3401, %v7047
  %7051 = vst.msk [vmem:[#allocation4 + $0x70] sm:$0xff] %vm3401, %v7048
  %v7052 = vmul.f32 %v6944, %v5315
  %v7053 = vmul.f32 %v6945, %v5315
  %v7054 = vmul.f32 %v6946, %v5315
  %v7055 = vmul.f32 %v6947, %v5315
  %v7056 = vmul.f32 %v6948, %v5315
  %v7057 = vmul.f32 %v6949, %v5315
  %v7058 = vpack.c.bf16 %v7053, %v7052
  %v7059 = vpack.c.bf16 %v7055, %v7054
  %v7060 = vpack.c.bf16 %v7057, %v7056
  %7064 = vrot.lane.b32.xlu0 %v7058, 127
  %v7065 = vpop.permute.xlu0 %7064
  %7066 = vrot.lane.b32.xlu0 %v7059, 127
  %v7067 = vpop.permute.xlu0 %7066
  %7068 = vrot.lane.b32.xlu0 %v7060, 127
  %v7069 = vpop.permute.xlu0 %7068
  %7073 = vst.msk [vmem:[#allocation4 + $0x78] sm:$0xff] %vm3401, %v7065
  %7074 = vst.msk [vmem:[#allocation4 + $0x80] sm:$0xff] %vm3401, %v7067
  %7075 = vst.msk [vmem:[#allocation4 + $0x88] sm:$0xff] %vm3401, %v7069
  %v7076 = vmul.f32 %v6944, %v5347
  %v7077 = vmul.f32 %v6945, %v5347
  %v7078 = vmul.f32 %v6946, %v5347
  %v7079 = vmul.f32 %v6947, %v5347
  %v7080 = vmul.f32 %v6948, %v5347
  %v7081 = vmul.f32 %v6949, %v5347
  %v7082 = vpack.c.bf16 %v7077, %v7076
  %v7083 = vpack.c.bf16 %v7079, %v7078
  %v7084 = vpack.c.bf16 %v7081, %v7080
  %7088 = vrot.lane.b32.xlu0 %v7082, 125
  %v7089 = vpop.permute.xlu0 %7088
  %7090 = vrot.lane.b32.xlu0 %v7083, 125
  %v7091 = vpop.permute.xlu0 %7090
  %7092 = vrot.lane.b32.xlu0 %v7084, 125
  %v7093 = vpop.permute.xlu0 %7092
  %7097 = vst.msk [vmem:[#allocation4 + $0x90] sm:$0xff] %vm3401, %v7089
  %7098 = vst.msk [vmem:[#allocation4 + $0x98] sm:$0xff] %vm3401, %v7091
  %7099 = vst.msk [vmem:[#allocation4 + $0xa0] sm:$0xff] %vm3401, %v7093
  %v7100 = vmul.f32 %v6944, %v5379
  %v7101 = vmul.f32 %v6945, %v5379
  %v7102 = vmul.f32 %v6946, %v5379
  %v7103 = vmul.f32 %v6947, %v5379
  %v7104 = vmul.f32 %v6948, %v5379
  %v7105 = vmul.f32 %v6949, %v5379
  %v7106 = vpack.c.bf16 %v7101, %v7100
  %v7107 = vpack.c.bf16 %v7103, %v7102
  %v7108 = vpack.c.bf16 %v7105, %v7104
  %7112 = vrot.lane.b32.xlu0 %v7106, 124
  %v7113 = vpop.permute.xlu0 %7112
  %7114 = vrot.lane.b32.xlu0 %v7107, 124
  %v7115 = vpop.permute.xlu0 %7114
  %7116 = vrot.lane.b32.xlu0 %v7108, 124
  %v7117 = vpop.permute.xlu0 %7116
  %7121 = vst.msk [vmem:[#allocation4 + $0xa8] sm:$0xff] %vm3401, %v7113
  %7122 = vst.msk [vmem:[#allocation4 + $0xb0] sm:$0xff] %vm3401, %v7115
  %7123 = vst.msk [vmem:[#allocation4 + $0xb8] sm:$0xff] %vm3401, %v7117
  %v7124 = vmul.f32 %v6944, %v5411
  %v7125 = vmul.f32 %v6945, %v5411
  %v7126 = vmul.f32 %v6946, %v5411
  %v7127 = vmul.f32 %v6947, %v5411
  %v7128 = vmul.f32 %v6948, %v5411
  %v7129 = vmul.f32 %v6949, %v5411
  %v7130 = vpack.c.bf16 %v7125, %v7124
  %v7131 = vpack.c.bf16 %v7127, %v7126
  %v7132 = vpack.c.bf16 %v7129, %v7128
  %7136 = vrot.lane.b32.xlu0 %v7130, 123
  %v7137 = vpop.permute.xlu0 %7136
  %7138 = vrot.lane.b32.xlu0 %v7131, 123
  %v7139 = vpop.permute.xlu0 %7138
  %7140 = vrot.lane.b32.xlu0 %v7132, 123
  %v7141 = vpop.permute.xlu0 %7140
  %7145 = vst.msk [vmem:[#allocation4 + $0xc0] sm:$0xff] %vm3401, %v7137
  %7146 = vst.msk [vmem:[#allocation4 + $0xc8] sm:$0xff] %vm3401, %v7139
  %7147 = vst.msk [vmem:[#allocation4 + $0xd0] sm:$0xff] %vm3401, %v7141
  %v7148 = vld [vmem:[#allocation4] sm:$0xff]
  %v7149 = vld [vmem:[#allocation4 + $0x8] sm:$0xff]
  %v7150 = vld [vmem:[#allocation4 + $0x10] sm:$0xff]
  %v7151 = vld [vmem:[#allocation4 + $0x18] sm:$0xff]
  %v7152 = vld [vmem:[#allocation4 + $0x20] sm:$0xff]
  %v7153 = vld [vmem:[#allocation4 + $0x28] sm:$0xff]
  %v7154 = vld [vmem:[#allocation4 + $0x30] sm:$0xff]
  %v7155 = vld [vmem:[#allocation4 + $0x38] sm:$0xff]
  %v7156 = vld [vmem:[#allocation4 + $0x40] sm:$0xff]
  %v7157 = vld [vmem:[#allocation4 + $0x48] sm:$0xff]
  %v7158 = vld [vmem:[#allocation4 + $0x50] sm:$0xff]
  %v7159 = vld [vmem:[#allocation4 + $0x58] sm:$0xff]
  %v7160 = vld [vmem:[#allocation4 + $0x60] sm:$0xff]
  %v7161 = vld [vmem:[#allocation4 + $0x68] sm:$0xff]
  %v7162 = vld [vmem:[#allocation4 + $0x70] sm:$0xff]
  %v7163 = vld [vmem:[#allocation4 + $0x78] sm:$0xff]
  %v7164 = vld [vmem:[#allocation4 + $0x80] sm:$0xff]
  %v7165 = vld [vmem:[#allocation4 + $0x88] sm:$0xff]
  %v7166 = vld [vmem:[#allocation4 + $0x90] sm:$0xff]
  %v7167 = vld [vmem:[#allocation4 + $0x98] sm:$0xff]
  %v7168 = vld [vmem:[#allocation4 + $0xa0] sm:$0xff]
  %v7169 = vld [vmem:[#allocation4 + $0xa8] sm:$0xff]
  %v7170 = vld [vmem:[#allocation4 + $0xb0] sm:$0xff]
  %v7171 = vld [vmem:[#allocation4 + $0xb8] sm:$0xff]
  %v7172 = vld [vmem:[#allocation4 + $0xc0] sm:$0xff]
  %v7173 = vld [vmem:[#allocation4 + $0xc8] sm:$0xff]
  %v7174 = vld [vmem:[#allocation4 + $0xd0] sm:$0xff]
  %v7187 = vunpack.c.l.b16 %v6902
  %v7188 = vunpack.c.h.b16 %v6902
  %v7189 = vunpack.c.l.b16 %v6903
  %v7190 = vunpack.c.h.b16 %v6903
  %v7191 = vunpack.c.l.b16 %v6904
  %v7192 = vunpack.c.h.b16 %v6904
  %v7193 = vunpack.c.l.b16 %v6905
  %v7194 = vunpack.c.h.b16 %v6905
  %v7195 = vunpack.c.l.b16 %v6906
  %v7196 = vunpack.c.h.b16 %v6906
  %v7197 = vunpack.c.l.b16 %v6907
  %v7198 = vunpack.c.h.b16 %v6907
  %v7199 = vunpack.c.l.b16 %v6908
  %v7200 = vunpack.c.h.b16 %v6908
  %v7201 = vunpack.c.l.b16 %v6909
  %v7202 = vunpack.c.h.b16 %v6909
  %v7203 = vunpack.c.l.b16 %v6910
  %v7204 = vunpack.c.h.b16 %v6910
  %v7205 = vunpack.c.l.b16 %v6911
  %v7206 = vunpack.c.h.b16 %v6911
  %v7207 = vunpack.c.l.b16 %v6912
  %v7208 = vunpack.c.h.b16 %v6912
  %v7209 = vunpack.c.l.b16 %v6913
  %v7210 = vunpack.c.h.b16 %v6913
  %v7211 = vpack.c.b16 %v7191, %v7187
  %v7212 = vpack.c.b16 %v7192, %v7188
  %v7213 = vpack.c.b16 %v7193, %v7189
  %v7214 = vpack.c.b16 %v7194, %v7190
  %v7215 = vpack.c.b16 %v7199, %v7195
  %v7216 = vpack.c.b16 %v7200, %v7196
  %v7217 = vpack.c.b16 %v7201, %v7197
  %v7218 = vpack.c.b16 %v7202, %v7198
  %v7219 = vpack.c.b16 %v7207, %v7203
  %v7220 = vpack.c.b16 %v7208, %v7204
  %v7221 = vpack.c.b16 %v7209, %v7205
  %v7222 = vpack.c.b16 %v7210, %v7206
  %v7233 = vsel %vm5521, %v7214, 0
  %v7236 = vsel %vm5521, %v7218, 0
  %v7239 = vsel %vm5521, %v7222, 0
  %7241 = vmatprep.subr.bf16.mxu0 0
  %7242 = vmatpush1.bf16.msra.mxu0 %v7148
  %7243 = vmatprep.subr.bf16.mxu0 0
  %7244 = vmatpush1.bf16.msra.mxu0 %v7149
  %7245 = vmatprep.subr.bf16.mxu0 0
  %7246 = vmatpush1.bf16.msra.mxu0 %v7150
  %7247 = vmatprep.subr.bf16.mxu0 0
  %7248 = vmatpush1.bf16.msra.mxu0 %v7151
  %7249 = vmatprep.subr.bf16.mxu0 0
  %7250 = vmatpush1.bf16.msra.mxu0 %v7152
  %7251 = vmatprep.subr.bf16.mxu0 0
  %7252 = vmatpush1.bf16.msra.mxu0 %v7153
  %7253 = vmatprep.subr.bf16.mxu0 0
  %7254 = vmatpush1.bf16.msra.mxu0 %v7154
  %7255 = vmatprep.subr.bf16.mxu0 0
  %7256 = vmatpush1.bf16.msra.mxu0 %v7155
  %7257 = vmatprep.subr.bf16.mxu0 0
  %7258 = vmatpush1.bf16.msra.mxu0 %v7156
  %7259 = vmatprep.subr.bf16.mxu0 0
  %7260 = vmatpush1.bf16.msra.mxu0 %v7157
  %7261 = vmatprep.subr.bf16.mxu0 0
  %7262 = vmatpush1.bf16.msra.mxu0 %v7158
  %7263 = vmatprep.subr.bf16.mxu0 0
  %7264 = vmatpush1.bf16.msra.mxu0 %v7159
  %7265 = vmatprep.subr.bf16.mxu0 0
  %7266 = vmatpush1.bf16.msra.mxu0 %v7160
  %7267 = vmatprep.subr.bf16.mxu0 0
  %7268 = vmatpush1.bf16.msra.mxu0 %v7161
  %7269 = vmatprep.subr.bf16.mxu0 0
  %7270 = vmatpush1.bf16.msra.mxu0 %v7162
  %7271 = vmatprep.subr.bf16.mxu0 0
  %7272 = vmatpush1.bf16.msra.mxu0 %v7163
  %7273 = vmatprep.mubr.bf16.mxu0 %v7212
  %7274 = vmatmul.mubr.bf16.gmra.mrb[0].mxu0 %v7211
  %v7275 = vpop.f32.mrb[0].mxu0
  %v7276 = vadd.f32 0.0, %v7275
  %v7277 = vpop.f32.mrb[0].mxu0
  %v7278 = vpop.f32.mrb[0].mxu0
  %v7279 = vadd.f32 0.0, %v7278
  %v7280 = vpop.f32.mrb[0].mxu0
  %7281 = vmatprep.mubr.bf16.mxu0 %v7216
  %7282 = vmatmul.mubr.bf16.gmra.mrb[0].mxu0 %v7215
  %v7283 = vpop.f32.mrb[0].mxu0
  %v7284 = vadd.f32 0.0, %v7283
  %v7285 = vpop.f32.mrb[0].mxu0
  %v7286 = vpop.f32.mrb[0].mxu0
  %v7287 = vadd.f32 0.0, %v7286
  %v7288 = vpop.f32.mrb[0].mxu0
  %7289 = vmatprep.mubr.bf16.mxu0 %v7220
  %7290 = vmatmul.mubr.bf16.gmra.mrb[0].mxu0 %v7219
  %v7291 = vpop.f32.mrb[0].mxu0
  %v7292 = vadd.f32 0.0, %v7291
  %v7293 = vpop.f32.mrb[0].mxu0
  %v7294 = vpop.f32.mrb[0].mxu0
  %v7295 = vadd.f32 0.0, %v7294
  %v7296 = vpop.f32.mrb[0].mxu0
  %7297 = vdwg.mxu0
  %7298 = vmatprep.subr.bf16.mxu0 0
  %7299 = vmatpush1.bf16.msra.mxu0 %v7164
  %7300 = vmatprep.subr.bf16.mxu0 0
  %7301 = vmatpush1.bf16.msra.mxu0 %v7165
  %7302 = vmatprep.subr.bf16.mxu0 0
  %7303 = vmatpush1.bf16.msra.mxu0 %v7166
  %7304 = vmatprep.subr.bf16.mxu0 0
  %7305 = vmatpush1.bf16.msra.mxu0 %v7167
  %7306 = vmatprep.subr.bf16.mxu0 0
  %7307 = vmatpush1.bf16.msra.mxu0 %v7168
  %7308 = vmatprep.subr.bf16.mxu0 0
  %7309 = vmatpush1.bf16.msra.mxu0 %v7169
  %7310 = vmatprep.subr.bf16.mxu0 0
  %7311 = vmatpush1.bf16.msra.mxu0 %v7170
  %7312 = vmatprep.subr.bf16.mxu0 0
  %7313 = vmatpush1.bf16.msra.mxu0 %v7171
  %7314 = vmatprep.subr.bf16.mxu0 0
  %7315 = vmatpush1.bf16.msra.mxu0 %v7172
  %7316 = vmatprep.subr.bf16.mxu0 0
  %7317 = vmatpush1.bf16.msra.mxu0 %v7173
  %7318 = vmatprep.subr.bf16.mxu0 0
  %7319 = vmatpush1.bf16.msra.mxu0 %v7174
  %7320 = vmatprep.subr.bf16.mxu0 0
  %7321 = vmatpush1.bf16.msra.mxu0 0
  %7322 = vmatprep.subr.bf16.mxu0 0
  %7323 = vmatpush1.bf16.msra.mxu0 0
  %7324 = vmatprep.subr.bf16.mxu0 0
  %7325 = vmatpush1.bf16.msra.mxu0 0
  %7326 = vmatprep.subr.bf16.mxu0 0
  %7327 = vmatpush1.bf16.msra.mxu0 0
  %7328 = vmatprep.subr.bf16.mxu0 0
  %7329 = vmatpush1.bf16.msra.mxu0 0
  %7330 = vmatprep.mubr.bf16.mxu0 %v7233
  %7331 = vmatmul.mubr.bf16.gmra.mrb[0].mxu0 %v7213
  %v7332 = vpop.f32.mrb[0].mxu0
  %v7333 = vadd.f32 %v7276, %v7332
  %v7334 = vpop.f32.mrb[0].mxu0
  %v7335 = vpop.f32.mrb[0].mxu0
  %v7336 = vadd.f32 %v7279, %v7335
  %v7337 = vpop.f32.mrb[0].mxu0
  %7338 = vmatprep.mubr.bf16.mxu0 %v7236
  %7339 = vmatmul.mubr.bf16.gmra.mrb[0].mxu0 %v7217
  %v7340 = vpop.f32.mrb[0].mxu0
  %v7341 = vadd.f32 %v7284, %v7340
  %v7342 = vpop.f32.mrb[0].mxu0
  %v7343 = vpop.f32.mrb[0].mxu0
  %v7344 = vadd.f32 %v7287, %v7343
  %v7345 = vpop.f32.mrb[0].mxu0
  %7346 = vmatprep.mubr.bf16.mxu0 %v7239
  %7347 = vmatmul.mubr.bf16.gmra.mrb[0].mxu0 %v7221
  %v7348 = vpop.f32.mrb[0].mxu0
  %v7349 = vadd.f32 %v7292, %v7348
  %v7350 = vpop.f32.mrb[0].mxu0
  %v7351 = vpop.f32.mrb[0].mxu0
  %v7352 = vadd.f32 %v7295, %v7351
  %v7353 = vpop.f32.mrb[0].mxu0
  %7354 = vdwg.mxu0
  %v7355 = vpack.c.bf16 %v7336, %v7333
  %v7356 = vpack.c.bf16 %v7344, %v7341
  %v7357 = vpack.c.bf16 %v7352, %v7349
  %v7359 = vsel %vm3401, %v7355, 0
  %v7362 = vsel %vm3401, %v7356, 0
  %v7365 = vsel %vm3401, %v7357, 0
  %7367 = vmatprep.subr.bf16.mxu0 0
  %7368 = vmatpush1.bf16.xpose.msra.mxu0 %v6118
  %7369 = vmatprep.subr.bf16.mxu0 0
  %7370 = vmatpush1.bf16.xpose.msra.mxu0 0
  %7371 = vmatprep.subr.bf16.mxu0 0
  %7372 = vmatpush1.bf16.xpose.msra.mxu0 0
  %7373 = vmatprep.subr.bf16.mxu0 0
  %7374 = vmatpush1.bf16.xpose.msra.mxu0 0
  %7375 = vmatprep.subr.bf16.mxu0 0
  %7376 = vmatpush1.bf16.xpose.msra.mxu0 0
  %7377 = vmatprep.subr.bf16.mxu0 0
  %7378 = vmatpush1.bf16.xpose.msra.mxu0 0
  %7379 = vmatprep.subr.bf16.mxu0 0
  %7380 = vmatpush1.bf16.xpose.msra.mxu0 0
  %7381 = vmatprep.subr.bf16.mxu0 0
  %7382 = vmatpush1.bf16.xpose.msra.mxu0 0
  %7383 = vmatprep.subr.bf16.mxu0 0
  %7384 = vmatpush1.bf16.xpose.msra.mxu0 0
  %7385 = vmatprep.subr.bf16.mxu0 0
  %7386 = vmatpush1.bf16.xpose.msra.mxu0 0
  %7387 = vmatprep.subr.bf16.mxu0 0
  %7388 = vmatpush1.bf16.xpose.msra.mxu0 0
  %7389 = vmatprep.subr.bf16.mxu0 0
  %7390 = vmatpush1.bf16.xpose.msra.mxu0 0
  %7391 = vmatprep.subr.bf16.mxu0 0
  %7392 = vmatpush1.bf16.xpose.msra.mxu0 0
  %7393 = vmatprep.subr.bf16.mxu0 0
  %7394 = vmatpush1.bf16.xpose.msra.mxu0 0
  %7395 = vmatprep.subr.bf16.mxu0 0
  %7396 = vmatpush1.bf16.xpose.msra.mxu0 0
  %7397 = vmatprep.subr.bf16.mxu0 0
  %7398 = vmatpush1.bf16.xpose.msra.mxu0 0
  %7399 = vmatprep.mubr.bf16.mxu0 0
  %7400 = vmatmul.mubr.bf16.gmra.mrb[0].mxu0 %v7359
  %v7401 = vpop.f32.mrb[0].mxu0
  %v7402 = vadd.f32 0.0, %v7401
  %v7403 = vpop.f32.mrb[0].mxu0
  %v7404 = vpop.f32.mrb[0].mxu0
  %v7405 = vadd.f32 0.0, %v7404
  %v7406 = vpop.f32.mrb[0].mxu0
  %7407 = vmatprep.mubr.bf16.mxu0 0
  %7408 = vmatmul.mubr.bf16.gmra.mrb[0].mxu0 %v7362
  %v7409 = vpop.f32.mrb[0].mxu0
  %v7410 = vadd.f32 0.0, %v7409
  %v7411 = vpop.f32.mrb[0].mxu0
  %v7412 = vpop.f32.mrb[0].mxu0
  %v7413 = vadd.f32 0.0, %v7412
  %v7414 = vpop.f32.mrb[0].mxu0
  %7415 = vmatprep.mubr.bf16.mxu0 0
  %7416 = vmatmul.mubr.bf16.gmra.mrb[0].mxu0 %v7365
  %v7417 = vpop.f32.mrb[0].mxu0
  %v7418 = vadd.f32 0.0, %v7417
  %v7419 = vpop.f32.mrb[0].mxu0
  %v7420 = vpop.f32.mrb[0].mxu0
  %v7421 = vadd.f32 0.0, %v7420
  %v7422 = vpop.f32.mrb[0].mxu0
  %7423 = vdwg.mxu0
  %v7424 = vmul.f32 %v7402, 0.0625
  %v7425 = vmul.f32 %v7405, 0.0625
  %v7426 = vmul.f32 %v7410, 0.0625
  %v7427 = vmul.f32 %v7413, 0.0625
  %v7428 = vmul.f32 %v7418, 0.0625
  %v7429 = vmul.f32 %v7421, 0.0625
  %v7430 = vpack.c.bf16 %v7425, %v7424
  %v7431 = vpack.c.bf16 %v7427, %v7426
  %v7432 = vpack.c.bf16 %v7429, %v7428
  %v7435 = vunpack.c.l.b16 %v6432
  %v7436 = vunpack.c.l.b16 %v6433
  %v7437 = vpack.c.b16 %v7436, %v7435
  %v7439 = vsel %vm5521, %v7437, 0
  %7441 = vmatprep.subr.bf16.mxu0 0
  %7442 = vmatpush1.bf16.msra.mxu0 %v7430
  %7443 = vmatprep.subr.bf16.mxu0 0
  %7444 = vmatpush1.bf16.msra.mxu0 %v7431
  %7445 = vmatprep.subr.bf16.mxu0 0
  %7446 = vmatpush1.bf16.msra.mxu0 %v7432
  %7447 = vmatprep.subr.bf16.mxu0 0
  %7448 = vmatpush1.bf16.msra.mxu0 0
  %7449 = vmatprep.subr.bf16.mxu0 0
  %7450 = vmatpush1.bf16.msra.mxu0 0
  %7451 = vmatprep.subr.bf16.mxu0 0
  %7452 = vmatpush1.bf16.msra.mxu0 0
  %7453 = vmatprep.subr.bf16.mxu0 0
  %7454 = vmatpush1.bf16.msra.mxu0 0
  %7455 = vmatprep.subr.bf16.mxu0 0
  %7456 = vmatpush1.bf16.msra.mxu0 0
  %7457 = vmatprep.subr.bf16.mxu0 0
  %7458 = vmatpush1.bf16.msra.mxu0 0
  %7459 = vmatprep.subr.bf16.mxu0 0
  %7460 = vmatpush1.bf16.msra.mxu0 0
  %7461 = vmatprep.subr.bf16.mxu0 0
  %7462 = vmatpush1.bf16.msra.mxu0 0
  %7463 = vmatprep.subr.bf16.mxu0 0
  %7464 = vmatpush1.bf16.msra.mxu0 0
  %7465 = vmatprep.subr.bf16.mxu0 0
  %7466 = vmatpush1.bf16.msra.mxu0 0
  %7467 = vmatprep.subr.bf16.mxu0 0
  %7468 = vmatpush1.bf16.msra.mxu0 0
  %7469 = vmatprep.subr.bf16.mxu0 0
  %7470 = vmatpush1.bf16.msra.mxu0 0
  %7471 = vmatprep.subr.bf16.mxu0 0
  %7472 = vmatpush1.bf16.msra.mxu0 0
  %7473 = vmatprep.mubr.bf16.mxu0 0
  %7474 = vmatmul.mubr.bf16.gmra.mrb[0].mxu0 %v7439
  %v7475 = vpop.f32.mrb[0].mxu0
  %v7476 = vadd.f32 0.0, %v7475
  %v7477 = vpop.f32.mrb[0].mxu0
  %v7478 = vpop.f32.mrb[0].mxu0
  %v7479 = vadd.f32 0.0, %v7478
  %v7480 = vpop.f32.mrb[0].mxu0
  %7481 = vdwg.mxu0
  %v7482 = vmax.f32 %v7476, 0.0
  %v7483 = vmax.f32 %v7479, 0.0
  %v7484 = vpack.c.bf16 %v7483, %v7482
  %v7491 = vunpack.c.l.b16 %v6435
  %v7492 = vunpack.c.l.b16 %v6436
  %v7493 = vunpack.c.l.b16 %v6437
  %v7494 = vunpack.c.l.b16 %v6438
  %v7495 = vunpack.c.l.b16 %v6439
  %v7496 = vunpack.c.l.b16 %v6440
  %v7497 = vpack.c.b16 %v7492, %v7491
  %v7498 = vpack.c.b16 %v7494, %v7493
  %v7499 = vpack.c.b16 %v7496, %v7495
  %v7501 = vsel %vm6253, %v7497, 0
  %v7504 = vsel %vm6253, %v7498, 0
  %v7507 = vsel %vm6253, %v7499, 0
  %v7510 = vsel %vm6263, %v7484, 0
  %7512 = vmatprep.subr.bf16.mxu0 0
  %7513 = vmatpush1.bf16.msra.mxu0 %v7510
  %7514 = vmatprep.subr.bf16.mxu0 0
  %7515 = vmatpush1.bf16.msra.mxu0 0
  %7516 = vmatprep.subr.bf16.mxu0 0
  %7517 = vmatpush1.bf16.msra.mxu0 0
  %7518 = vmatprep.subr.bf16.mxu0 0
  %7519 = vmatpush1.bf16.msra.mxu0 0
  %7520 = vmatprep.subr.bf16.mxu0 0
  %7521 = vmatpush1.bf16.msra.mxu0 0
  %7522 = vmatprep.subr.bf16.mxu0 0
  %7523 = vmatpush1.bf16.msra.mxu0 0
  %7524 = vmatprep.subr.bf16.mxu0 0
  %7525 = vmatpush1.bf16.msra.mxu0 0
  %7526 = vmatprep.subr.bf16.mxu0 0
  %7527 = vmatpush1.bf16.msra.mxu0 0
  %7528 = vmatprep.subr.bf16.mxu0 0
  %7529 = vmatpush1.bf16.msra.mxu0 0
  %7530 = vmatprep.subr.bf16.mxu0 0
  %7531 = vmatpush1.bf16.msra.mxu0 0
  %7532 = vmatprep.subr.bf16.mxu0 0
  %7533 = vmatpush1.bf16.msra.mxu0 0
  %7534 = vmatprep.subr.bf16.mxu0 0
  %7535 = vmatpush1.bf16.msra.mxu0 0
  %7536 = vmatprep.subr.bf16.mxu0 0
  %7537 = vmatpush1.bf16.msra.mxu0 0
  %7538 = vmatprep.subr.bf16.mxu0 0
  %7539 = vmatpush1.bf16.msra.mxu0 0
  %7540 = vmatprep.subr.bf16.mxu0 0
  %7541 = vmatpush1.bf16.msra.mxu0 0
  %7542 = vmatprep.subr.bf16.mxu0 0
  %7543 = vmatpush1.bf16.msra.mxu0 0
  %7544 = vmatprep.mubr.bf16.mxu0 0
  %7545 = vmatmul.mubr.bf16.gmra.mrb[0].mxu0 %v7501
  %v7546 = vpop.f32.mrb[0].mxu0
  %v7547 = vadd.f32 0.0, %v7546
  %v7548 = vpop.f32.mrb[0].mxu0
  %v7549 = vpop.f32.mrb[0].mxu0
  %v7550 = vadd.f32 0.0, %v7549
  %v7551 = vpop.f32.mrb[0].mxu0
  %7552 = vmatprep.mubr.bf16.mxu0 0
  %7553 = vmatmul.mubr.bf16.gmra.mrb[0].mxu0 %v7504
  %v7554 = vpop.f32.mrb[0].mxu0
  %v7555 = vadd.f32 0.0, %v7554
  %v7556 = vpop.f32.mrb[0].mxu0
  %v7557 = vpop.f32.mrb[0].mxu0
  %v7558 = vadd.f32 0.0, %v7557
  %v7559 = vpop.f32.mrb[0].mxu0
  %7560 = vmatprep.mubr.bf16.mxu0 0
  %7561 = vmatmul.mubr.bf16.gmra.mrb[0].mxu0 %v7507
  %v7562 = vpop.f32.mrb[0].mxu0
  %v7563 = vadd.f32 0.0, %v7562
  %v7564 = vpop.f32.mrb[0].mxu0
  %v7565 = vpop.f32.mrb[0].mxu0
  %v7566 = vadd.f32 0.0, %v7565
  %v7567 = vpop.f32.mrb[0].mxu0
  %7568 = vdwg.mxu0
  %v7569 = vmul.f32 %v7547, 0.5
  %v7570 = vmul.f32 %v7550, 0.5
  %v7571 = vmul.f32 %v7555, 0.5
  %v7572 = vmul.f32 %v7558, 0.5
  %v7573 = vmul.f32 %v7563, 0.5
  %v7574 = vmul.f32 %v7566, 0.5
  %v7575 = vtanh.pop %v7569
  %v7576 = vtanh.pop %v7570
  %v7577 = vtanh.pop %v7571
  %v7578 = vtanh.pop %v7572
  %v7579 = vtanh.pop %v7573
  %v7580 = vtanh.pop %v7574
  %v7581 = vadd.f32 %v7575, 1.0
  %v7582 = vadd.f32 %v7576, 1.0
  %v7583 = vadd.f32 %v7577, 1.0
  %v7584 = vadd.f32 %v7578, 1.0
  %v7585 = vadd.f32 %v7579, 1.0
  %v7586 = vadd.f32 %v7580, 1.0
  %v7587 = vmul.f32 %v7581, 0.5
  %v7588 = vmul.f32 %v7582, 0.5
  %v7589 = vmul.f32 %v7583, 0.5
  %v7590 = vmul.f32 %v7584, 0.5
  %v7591 = vmul.f32 %v7585, 0.5
  %v7592 = vmul.f32 %v7586, 0.5
  %v7593 = vpack.c.bf16 %v7588, %v7587
  %v7594 = vpack.c.bf16 %v7590, %v7589
  %v7595 = vpack.c.bf16 %v7592, %v7591
  %v7597 = vsel %vm1391, %v7593, 0
  %v7600 = vsel %vm1391, %v7594, 0
  %v7603 = vsel %vm1391, %v7595, 0
  %7605 = vmatprep.subr.bf16.mxu0 0
  %7606 = vmatpush1.bf16.msra.mxu0 %v6360
  %7607 = vmatprep.subr.bf16.mxu0 0
  %7608 = vmatpush1.bf16.msra.mxu0 0
  %7609 = vmatprep.subr.bf16.mxu0 0
  %7610 = vmatpush1.bf16.msra.mxu0 0
  %7611 = vmatprep.subr.bf16.mxu0 0
  %7612 = vmatpush1.bf16.msra.mxu0 0
  %7613 = vmatprep.subr.bf16.mxu0 0
  %7614 = vmatpush1.bf16.msra.mxu0 0
  %7615 = vmatprep.subr.bf16.mxu0 0
  %7616 = vmatpush1.bf16.msra.mxu0 0
  %7617 = vmatprep.subr.bf16.mxu0 0
  %7618 = vmatpush1.bf16.msra.mxu0 0
  %7619 = vmatprep.subr.bf16.mxu0 0
  %7620 = vmatpush1.bf16.msra.mxu0 0
  %7621 = vmatprep.subr.bf16.mxu0 0
  %7622 = vmatpush1.bf16.msra.mxu0 0
  %7623 = vmatprep.subr.bf16.mxu0 0
  %7624 = vmatpush1.bf16.msra.mxu0 0
  %7625 = vmatprep.subr.bf16.mxu0 0
  %7626 = vmatpush1.bf16.msra.mxu0 0
  %7627 = vmatprep.subr.bf16.mxu0 0
  %7628 = vmatpush1.bf16.msra.mxu0 0
  %7629 = vmatprep.subr.bf16.mxu0 0
  %7630 = vmatpush1.bf16.msra.mxu0 0
  %7631 = vmatprep.subr.bf16.mxu0 0
  %7632 = vmatpush1.bf16.msra.mxu0 0
  %7633 = vmatprep.subr.bf16.mxu0 0
  %7634 = vmatpush1.bf16.msra.mxu0 0
  %7635 = vmatprep.subr.bf16.mxu0 0
  %7636 = vmatpush1.bf16.msra.mxu0 0
  %7637 = vmatprep.mubr.bf16.mxu0 0
  %7638 = vmatmul.mubr.bf16.gmra.mrb[0].mxu0 %v7597
  %v7639 = vpop.f32.mrb[0].mxu0
  %v7640 = vadd.f32 0.0, %v7639
  %v7641 = vpop.f32.mrb[0].mxu0
  %v7642 = vpop.f32.mrb[0].mxu0
  %v7643 = vadd.f32 0.0, %v7642
  %v7644 = vpop.f32.mrb[0].mxu0
  %7645 = vmatprep.mubr.bf16.mxu0 0
  %7646 = vmatmul.mubr.bf16.gmra.mrb[0].mxu0 %v7600
  %v7647 = vpop.f32.mrb[0].mxu0
  %v7648 = vadd.f32 0.0, %v7647
  %v7649 = vpop.f32.mrb[0].mxu0
  %v7650 = vpop.f32.mrb[0].mxu0
  %v7651 = vadd.f32 0.0, %v7650
  %v7652 = vpop.f32.mrb[0].mxu0
  %7653 = vmatprep.mubr.bf16.mxu0 0
  %7654 = vmatmul.mubr.bf16.gmra.mrb[0].mxu0 %v7603
  %v7655 = vpop.f32.mrb[0].mxu0
  %v7656 = vadd.f32 0.0, %v7655
  %v7657 = vpop.f32.mrb[0].mxu0
  %v7658 = vpop.f32.mrb[0].mxu0
  %v7659 = vadd.f32 0.0, %v7658
  %v7660 = vpop.f32.mrb[0].mxu0
  %7661 = vdwg.mxu0
  %v7662 = vmul.f32 %v7333, %v7640
  %v7663 = vmul.f32 %v7336, %v7643
  %v7664 = vmul.f32 %v7341, %v7648
  %v7665 = vmul.f32 %v7344, %v7651
  %v7666 = vmul.f32 %v7349, %v7656
  %v7667 = vmul.f32 %v7352, %v7659
  %v7668 = vadd.f32 %v7662, %v6425
  %v7669 = vadd.f32 %v7663, %v6426
  %v7670 = vadd.f32 %v7664, %v6427
  %v7671 = vadd.f32 %v7665, %v6428
  %v7672 = vadd.f32 %v7666, %v6429
  %v7673 = vadd.f32 %v7667, %v6430
  %7674 = vst.msk [vmem:[%s22] sm:$0xff] %vm3401, %v7668
  %7675 = vst.msk [vmem:[%s22 + $0x8] sm:$0xff] %vm3401, %v7669
  %7676 = vst.msk [vmem:[%s22 + $0x10] sm:$0xff] %vm3401, %v7670
  %7677 = vst.msk [vmem:[%s22 + $0x18] sm:$0xff] %vm3401, %v7671
  %7678 = vst.msk [vmem:[%s22 + $0x20] sm:$0xff] %vm3401, %v7672
  %7679 = vst.msk [vmem:[%s22 + $0x28] sm:$0xff] %vm3401, %v7673
  // Predicated region
  $region82: #{encoder_forward.1} parent=0 // pred_check
    _
  $region83: #{encoder_forward.1} parent=0 // pred_check_branch
    %7681 = sbr.rel (0) target = $region85
  $region84: #{encoder_forward.1} parent=0 // pred_region
    _
  $region85: #{encoder_forward.1} parent=0 // pred_fallthru
    _
  // Predicated region
  $region86: #{encoder_forward.1} parent=0 // pred_check
    _
  $region87: #{encoder_forward.1} parent=0 // pred_check_branch
    %7683 = sbr.rel (0) target = $region89
  $region88: #{encoder_forward.1} parent=0 // pred_region
    _
  $region89: #{encoder_forward.1} parent=0 // pred_fallthru
    _
  // Predicated region
  $region90: #{encoder_forward.1} parent=0 // pred_check
    _
  $region91: #{encoder_forward.1} parent=0 // pred_check_branch
    %7685 = sbr.rel (0) target = $region93
  $region92: #{encoder_forward.1} parent=0 // pred_region
    _
  $region93: #{encoder_forward.1} parent=0 // pred_fallthru
    _
  // Predicated region
  $region94: #{encoder_forward.1} parent=0 // pred_check
    _
  $region95: #{encoder_forward.1} parent=0 // pred_check_branch
    %7687 = sbr.rel (0) target = $region97
  $region96: #{encoder_forward.1} parent=0 // pred_region
    _
  $region97: #{encoder_forward.1} parent=0 // pred_fallthru
    _
  // Predicated region
  $region98: #{encoder_forward.1} parent=0 // pred_check
    _
  $region99: #{encoder_forward.1} parent=0 // pred_check_branch
    %7689 = sbr.rel (0) target = $region101
  $region100: #{encoder_forward.1} parent=0 // pred_region
    _
  $region101: #{encoder_forward.1} parent=0 // pred_fallthru
    _
  // Predicated region
  $region102: #{encoder_forward.1} parent=0 // pred_check
    _
  $region103: #{encoder_forward.1} parent=0 // pred_check_branch
    %7691 = sbr.rel (0) target = $region105
  $region104: #{encoder_forward.1} parent=0 // pred_region
    _
  $region105: #{encoder_forward.1} parent=0 // pred_fallthru
    _

</llo_original>
